<compile_context>
chip_gen: v5e
topology: v5e:2x2
jax: 0.10.0
libtpu: 0.0.40
codegen_flags: <defaults>
</compile_context>

<pallas_src>
import numpy as np
import jax
import jax.numpy as jnp
from jax.experimental import pallas as pl
from jax.experimental.pallas import tpu as pltpu

SIDE = 16
NUM_CHANNELS = 8
BN_EPS = 1e-5
BATCH = 256          # fills the MXU M dimension (>=256 for v6e/v7x, >=128 for v5e)
PAD_C = 128          # channel-indicator / gamma / beta lane padding
PAD_OUT = 128        # lane padding of the 1-wide sigmoid score output


def _conv_dense_matrix(weight, hin, win, stride, pad):
    """Dense (Cin*Hin*Win, Cout*Hout*Wout) matrix equivalent to Conv2d (NCHW, row-major)."""
    cout, cin, kh, kw = weight.shape
    hout = (hin + 2 * pad - kh) // stride + 1
    wout = (win + 2 * pad - kw) // stride + 1
    A = np.zeros((cin * hin * win, cout * hout * wout), np.float32)
    for oh in range(hout):
        for ow in range(wout):
            for dh in range(kh):
                for dw in range(kw):
                    ih = oh * stride - pad + dh
                    iw = ow * stride - pad + dw
                    if 0 <= ih < hin and 0 <= iw < win:
                        rows = np.arange(cin) * hin * win + ih * win + iw
                        cols = np.arange(cout) * hout * wout + oh * wout + ow
                        A[rows[:, None], cols[None, :]] += weight[:, :, dh, dw].T
    return A, hout, wout


# --------------------------------------------------------------------------
# Pallas kernel: 3x fused (bf16 GEMM -> batch-stat BN -> LeakyReLU), then
# final bf16 GEMM + bias + sigmoid.  Emits both seq(x) and seq_info(x).
# --------------------------------------------------------------------------
def discriminator_kernel(x_ref,
                         a1_ref, m1_ref, mt1_ref, g1_ref, be1_ref,
                         a2_ref, m2_ref, mt2_ref, g2_ref, be2_ref,
                         a3_ref, m3_ref, mt3_ref, g3_ref, be3_ref,
                         a4_ref, b4_ref,
                         score_ref, info_ref):
    f32 = jnp.float32
    bf16 = jnp.bfloat16

    def conv_bn_lrelu(h_prev, a_ref, m_ref, mt_ref, g_ref, be_ref, hw):
        # Conv2d (bias=False) as a GEMM: bf16 operands, f32 accumulation (MXU).
        h = jnp.dot(h_prev.astype(bf16), a_ref[...], preferred_element_type=f32)
        # BatchNorm2d with training-mode batch statistics (biased variance), all f32.
        n = float(h.shape[0] * hw)
        s1 = jnp.sum(h, axis=0, keepdims=True)                       # (1, Dout)
        s2 = jnp.sum(h * h, axis=0, keepdims=True)                   # (1, Dout)
        sum_c = jnp.dot(s1, m_ref[...], preferred_element_type=f32)  # (1, PAD_C)
        sq_c = jnp.dot(s2, m_ref[...], preferred_element_type=f32)   # (1, PAD_C)
        mean_c = sum_c / n
        var_c = jnp.maximum(sq_c / n - mean_c * mean_c, 0.0)
        scale_c = g_ref[...] * jax.lax.rsqrt(var_c + BN_EPS)
        shift_c = be_ref[...] - mean_c * scale_c
        scale = jnp.dot(scale_c, mt_ref[...], preferred_element_type=f32)  # (1, Dout)
        shift = jnp.dot(shift_c, mt_ref[...], preferred_element_type=f32)  # (1, Dout)
        hn = h * scale + shift
        return jnp.maximum(hn, 0.2 * hn)                             # LeakyReLU(0.2)

    x = x_ref[...]
    h1 = conv_bn_lrelu(x, a1_ref, m1_ref, mt1_ref, g1_ref, be1_ref, (SIDE // 2) ** 2)
    h2 = conv_bn_lrelu(h1, a2_ref, m2_ref, mt2_ref, g2_ref, be2_ref, (SIDE // 4) ** 2)
    h3 = conv_bn_lrelu(h2, a3_ref, m3_ref, mt3_ref, g3_ref, be3_ref, (SIDE // 8) ** 2)
    info_ref[...] = h3                                               # seq_info(x)
    logits = jnp.dot(h3.astype(bf16), a4_ref[...], preferred_element_type=f32) + b4_ref[...]
    score_ref[...] = 1.0 / (1.0 + jnp.exp(-logits))                  # Sigmoid -> seq(x)


def build_params():
    # layer_dims for side=16, num_channels=8: [(1,16),(8,8),(16,4),(32,2)]
    dims = [(1, SIDE), (NUM_CHANNELS, SIDE // 2),
            (2 * NUM_CHANNELS, SIDE // 4), (4 * NUM_CHANNELS, SIDE // 8)]
    key = jax.random.PRNGKey(0)
    raw = {}

    for li in range(1, 4):
        cin, cout = dims[li - 1][0], dims[li][0]
        key, k1, k2, k3 = jax.random.split(key, 4)
        raw[f"w{li}"] = np.asarray(0.05 * jax.random.normal(k1, (cout, cin, 4, 4)), np.float32)
        raw[f"gamma{li}"] = np.asarray(1.0 + 0.1 * jax.random.normal(k2, (cout,)), np.float32)
        raw[f"beta{li}"] = np.asarray(0.1 * jax.random.normal(k3, (cout,)), np.float32)
    key, k1, k2 = jax.random.split(key, 3)
    raw["w4"] = np.asarray(
        0.05 * jax.random.normal(k1, (1, dims[-1][0], dims[-1][1], dims[-1][1])), np.float32)
    raw["b4"] = np.asarray(0.1 * jax.random.normal(k2, (1,)), np.float32)

    # Flatten each Conv2d into a GEMM matrix (bf16) + padded BN helper matrices (f32).
    flat = []
    hin = SIDE
    for li in range(1, 4):
        A, hout, wout = _conv_dense_matrix(raw[f"w{li}"], hin, hin, stride=2, pad=1)
        cout = raw[f"w{li}"].shape[0]
        hw = hout * wout
        dout = cout * hw
        M = np.zeros((dout, PAD_C), np.float32)
        M[np.arange(dout), np.arange(dout) // hw] = 1.0     # padded channels: all-zero cols/rows
        g = np.zeros((1, PAD_C), np.float32)
        g[0, :cout] = raw[f"gamma{li}"]
        be = np.zeros((1, PAD_C), np.float32)
        be[0, :cout] = raw[f"beta{li}"]
        flat += [jnp.asarray(A, dtype=jnp.bfloat16),
                 jnp.asarray(M), jnp.asarray(M.T),
                 jnp.asarray(g), jnp.asarray(be)]
        hin = hout

    # Final Conv2d(32, 1, k=2, s=1, p=0) + bias: a plain (128 -> 1) linear layer,
    # padded to 128 output lanes so the store is unmasked (wrapper slices col 0).
    A4_dense, _, _ = _conv_dense_matrix(raw["w4"], hin, hin, stride=1, pad=0)  # (128, 1)
    A4 = np.zeros((A4_dense.shape[0], PAD_OUT), np.float32)
    A4[:, :1] = A4_dense
    b4 = np.zeros((1, PAD_OUT), np.float32)
    b4[0, 0] = raw["b4"][0]
    flat += [jnp.asarray(A4, dtype=jnp.bfloat16), jnp.asarray(b4)]
    return flat, raw


def discriminator_forward(x, flat_params):
    b = x.shape[0]
    x_flat = x.reshape(b, SIDE * SIDE).astype(jnp.float32)     # (B, 256): lane dim already 128-multiple
    inputs = [x_flat] + list(flat_params)
    info_dim = 4 * NUM_CHANNELS * (SIDE // 8) ** 2             # 32*2*2 = 128
    score_pad, info_flat = pl.pallas_call(
        discriminator_kernel,
        out_shape=(jax.ShapeDtypeStruct((b, PAD_OUT), jnp.float32),
                   jax.ShapeDtypeStruct((b, info_dim), jnp.float32)),
        in_specs=[pl.BlockSpec(memory_space=pltpu.MemorySpace.VMEM)] * len(inputs),
        out_specs=(pl.BlockSpec(memory_space=pltpu.MemorySpace.VMEM),
                   pl.BlockSpec(memory_space=pltpu.MemorySpace.VMEM)),
    )(*inputs)
    score = score_pad[:, :1].reshape(b, 1, 1, 1)
    info = info_flat.reshape(b, 4 * NUM_CHANNELS, SIDE // 8, SIDE // 8)
    return score, info


# --------------------------------------------------------------------------
# NumPy reference (direct Conv2d loops + training-mode BatchNorm + LeakyReLU + Sigmoid)
# --------------------------------------------------------------------------
def _conv2d_ref(x, weight, stride, pad):
    bsz, cin, hin, win = x.shape
    cout, _, kh, kw = weight.shape
    hout = (hin + 2 * pad - kh) // stride + 1
    wout = (win + 2 * pad - kw) // stride + 1
    out = np.zeros((bsz, cout, hout, wout), np.float32)
    for oh in range(hout):
        for ow in range(wout):
            for dh in range(kh):
                for dw in range(kw):
                    ih = oh * stride - pad + dh
                    iw = ow * stride - pad + dw
                    if 0 <= ih < hin and 0 <= iw < win:
                        out[:, :, oh, ow] += x[:, :, ih, iw] @ weight[:, :, dh, dw].T
    return out


def reference_forward(x_np, raw):
    h = x_np.astype(np.float32)
    for li in range(1, 4):
        h = _conv2d_ref(h, raw[f"w{li}"], stride=2, pad=1)
        mean = h.mean(axis=(0, 2, 3))
        var = h.var(axis=(0, 2, 3))  # biased, as PyTorch BN training-mode normalization
        h = (h - mean[None, :, None, None]) / np.sqrt(var[None, :, None, None] + BN_EPS)
        h = h * raw[f"gamma{li}"][None, :, None, None] + raw[f"beta{li}"][None, :, None, None]
        h = np.where(h > 0.0, h, 0.2 * h)  # LeakyReLU(0.2)
    info = h.copy()                                        # seq_info(x): (B,32,2,2)
    logits = np.einsum("bchw,ochw->bo", h, raw["w4"]) + raw["b4"][None, :]
    score = 1.0 / (1.0 + np.exp(-logits))
    return score.reshape(-1, 1, 1, 1), info


if __name__ == "__main__":
    flat_params, raw = build_params()
    x = jax.random.normal(jax.random.PRNGKey(0), (BATCH, 1, SIDE, SIDE), jnp.float32)

    score, info = discriminator_forward(x, flat_params)
    score = jax.block_until_ready(score)
    info = jax.block_until_ready(info)
    assert score.shape == (BATCH, 1, 1, 1)
    assert info.shape == (BATCH, 4 * NUM_CHANNELS, SIDE // 8, SIDE // 8)

    ref_score, ref_info = reference_forward(np.asarray(x), raw)
    np.testing.assert_allclose(np.asarray(score), ref_score, rtol=5e-2, atol=3e-2)
    np.testing.assert_allclose(np.asarray(info), ref_info, rtol=5e-2, atol=3e-2)

    print("KERNEL_OK")
</pallas_src>

<mosaic_0001>
module attributes {stable_mosaic.version = 11 : i64} {
  func.func @discriminator_kernel(%arg0: memref<256x256xf32, #tpu.memory_space<vmem>>, %arg1: memref<256x512xbf16, #tpu.memory_space<vmem>>, %arg2: memref<512x128xf32, #tpu.memory_space<vmem>>, %arg3: memref<128x512xf32, #tpu.memory_space<vmem>>, %arg4: memref<1x128xf32, #tpu.memory_space<vmem>>, %arg5: memref<1x128xf32, #tpu.memory_space<vmem>>, %arg6: memref<512x256xbf16, #tpu.memory_space<vmem>>, %arg7: memref<256x128xf32, #tpu.memory_space<vmem>>, %arg8: memref<128x256xf32, #tpu.memory_space<vmem>>, %arg9: memref<1x128xf32, #tpu.memory_space<vmem>>, %arg10: memref<1x128xf32, #tpu.memory_space<vmem>>, %arg11: memref<256x128xbf16, #tpu.memory_space<vmem>>, %arg12: memref<128x128xf32, #tpu.memory_space<vmem>>, %arg13: memref<128x128xf32, #tpu.memory_space<vmem>>, %arg14: memref<1x128xf32, #tpu.memory_space<vmem>>, %arg15: memref<1x128xf32, #tpu.memory_space<vmem>>, %arg16: memref<128x128xbf16, #tpu.memory_space<vmem>>, %arg17: memref<1x128xf32, #tpu.memory_space<vmem>>, %arg18: memref<256x128xf32, #tpu.memory_space<vmem>>, %arg19: memref<256x128xf32, #tpu.memory_space<vmem>>) attributes {dimension_semantics = [], scalar_prefetch = 0 : i64, scratch_operands = 0 : i64, tpu.core_type = #tpu.core_type<tc>} {
    %c0 = arith.constant 0 : index
    %c0_0 = arith.constant 0 : index
    %0 = vector.load %arg0[%c0, %c0_0] : memref<256x256xf32, #tpu.memory_space<vmem>>, vector<256x256xf32>
    %1 = arith.truncf %0 : vector<256x256xf32> to vector<256x256xbf16>
    %c0_1 = arith.constant 0 : index
    %c0_2 = arith.constant 0 : index
    %2 = vector.load %arg1[%c0_1, %c0_2] : memref<256x512xbf16, #tpu.memory_space<vmem>>, vector<256x512xbf16>
    %cst = arith.constant dense<0.000000e+00> : vector<256x512xf32>
    %3 = tpu.matmul %1, %2, %cst {dimension_numbers = #tpu.dot_dimension_numbers<[1], [0], [0], [1], [0, 0, 1, 1], [], []>} : vector<256x256xbf16>, vector<256x512xbf16>, vector<256x512xf32> -> vector<256x512xf32>
    %cst_3 = arith.constant dense<0.000000e+00> : vector<512xf32>
    %4 = vector.multi_reduction <add>, %3, %cst_3 [0] : vector<256x512xf32> to vector<512xf32>
    %5 = vector.shape_cast %4 : vector<512xf32> to vector<1x512xf32>
    %6 = arith.mulf %3, %3 : vector<256x512xf32>
    %cst_4 = arith.constant dense<0.000000e+00> : vector<512xf32>
    %7 = vector.multi_reduction <add>, %6, %cst_4 [0] : vector<256x512xf32> to vector<512xf32>
    %8 = vector.shape_cast %7 : vector<512xf32> to vector<1x512xf32>
    %c0_5 = arith.constant 0 : index
    %c0_6 = arith.constant 0 : index
    %9 = vector.load %arg2[%c0_5, %c0_6] : memref<512x128xf32, #tpu.memory_space<vmem>>, vector<512x128xf32>
    %cst_7 = arith.constant dense<0.000000e+00> : vector<1x128xf32>
    %10 = tpu.matmul %5, %9, %cst_7 {dimension_numbers = #tpu.dot_dimension_numbers<[1], [0], [0], [1], [0, 0, 1, 1], [], []>} : vector<1x512xf32>, vector<512x128xf32>, vector<1x128xf32> -> vector<1x128xf32>
    %c0_8 = arith.constant 0 : index
    %c0_9 = arith.constant 0 : index
    %11 = vector.load %arg2[%c0_8, %c0_9] : memref<512x128xf32, #tpu.memory_space<vmem>>, vector<512x128xf32>
    %cst_10 = arith.constant dense<0.000000e+00> : vector<1x128xf32>
    %12 = tpu.matmul %8, %11, %cst_10 {dimension_numbers = #tpu.dot_dimension_numbers<[1], [0], [0], [1], [0, 0, 1, 1], [], []>} : vector<1x512xf32>, vector<512x128xf32>, vector<1x128xf32> -> vector<1x128xf32>
    %cst_11 = arith.constant 1.638400e+04 : f32
    %13 = vector.broadcast %cst_11 : f32 to vector<1x128xf32>
    %14 = arith.divf %10, %13 : vector<1x128xf32>
    %cst_12 = arith.constant 1.638400e+04 : f32
    %15 = vector.broadcast %cst_12 : f32 to vector<1x128xf32>
    %16 = arith.divf %12, %15 : vector<1x128xf32>
    %17 = arith.mulf %14, %14 : vector<1x128xf32>
    %18 = arith.subf %16, %17 : vector<1x128xf32>
    %cst_13 = arith.constant 0.000000e+00 : f32
    %19 = vector.broadcast %cst_13 : f32 to vector<1x128xf32>
    %20 = arith.maximumf %18, %19 : vector<1x128xf32>
    %c0_14 = arith.constant 0 : index
    %c0_15 = arith.constant 0 : index
    %21 = vector.load %arg4[%c0_14, %c0_15] : memref<1x128xf32, #tpu.memory_space<vmem>>, vector<1x128xf32>
    %cst_16 = arith.constant 9.99999974E-6 : f32
    %22 = vector.broadcast %cst_16 : f32 to vector<1x128xf32>
    %23 = arith.addf %20, %22 : vector<1x128xf32>
    %24 = math.rsqrt %23 : vector<1x128xf32>
    %25 = arith.mulf %21, %24 : vector<1x128xf32>
    %c0_17 = arith.constant 0 : index
    %c0_18 = arith.constant 0 : index
    %26 = vector.load %arg5[%c0_17, %c0_18] : memref<1x128xf32, #tpu.memory_space<vmem>>, vector<1x128xf32>
    %27 = arith.mulf %14, %25 : vector<1x128xf32>
    %28 = arith.subf %26, %27 : vector<1x128xf32>
    %c0_19 = arith.constant 0 : index
    %c0_20 = arith.constant 0 : index
    %29 = vector.load %arg3[%c0_19, %c0_20] : memref<128x512xf32, #tpu.memory_space<vmem>>, vector<128x512xf32>
    %cst_21 = arith.constant dense<0.000000e+00> : vector<1x512xf32>
    %30 = tpu.matmul %25, %29, %cst_21 {dimension_numbers = #tpu.dot_dimension_numbers<[1], [0], [0], [1], [0, 0, 1, 1], [], []>} : vector<1x128xf32>, vector<128x512xf32>, vector<1x512xf32> -> vector<1x512xf32>
    %c0_22 = arith.constant 0 : index
    %c0_23 = arith.constant 0 : index
    %31 = vector.load %arg3[%c0_22, %c0_23] : memref<128x512xf32, #tpu.memory_space<vmem>>, vector<128x512xf32>
    %cst_24 = arith.constant dense<0.000000e+00> : vector<1x512xf32>
    %32 = tpu.matmul %28, %31, %cst_24 {dimension_numbers = #tpu.dot_dimension_numbers<[1], [0], [0], [1], [0, 0, 1, 1], [], []>} : vector<1x128xf32>, vector<128x512xf32>, vector<1x512xf32> -> vector<1x512xf32>
    %33 = vector.broadcast %30 : vector<1x512xf32> to vector<256x512xf32>
    %34 = arith.mulf %3, %33 : vector<256x512xf32>
    %35 = vector.broadcast %32 : vector<1x512xf32> to vector<256x512xf32>
    %36 = arith.addf %34, %35 : vector<256x512xf32>
    %cst_25 = arith.constant 2.000000e-01 : f32
    %37 = vector.broadcast %cst_25 : f32 to vector<256x512xf32>
    %38 = arith.mulf %37, %36 : vector<256x512xf32>
    %39 = arith.maximumf %36, %38 : vector<256x512xf32>
    %40 = arith.truncf %39 : vector<256x512xf32> to vector<256x512xbf16>
    %c0_26 = arith.constant 0 : index
    %c0_27 = arith.constant 0 : index
    %41 = vector.load %arg6[%c0_26, %c0_27] : memref<512x256xbf16, #tpu.memory_space<vmem>>, vector<512x256xbf16>
    %cst_28 = arith.constant dense<0.000000e+00> : vector<256x256xf32>
    %42 = tpu.matmul %40, %41, %cst_28 {dimension_numbers = #tpu.dot_dimension_numbers<[1], [0], [0], [1], [0, 0, 1, 1], [], []>} : vector<256x512xbf16>, vector<512x256xbf16>, vector<256x256xf32> -> vector<256x256xf32>
    %cst_29 = arith.constant dense<0.000000e+00> : vector<256xf32>
    %43 = vector.multi_reduction <add>, %42, %cst_29 [0] : vector<256x256xf32> to vector<256xf32>
    %44 = vector.shape_cast %43 : vector<256xf32> to vector<1x256xf32>
    %45 = arith.mulf %42, %42 : vector<256x256xf32>
    %cst_30 = arith.constant dense<0.000000e+00> : vector<256xf32>
    %46 = vector.multi_reduction <add>, %45, %cst_30 [0] : vector<256x256xf32> to vector<256xf32>
    %47 = vector.shape_cast %46 : vector<256xf32> to vector<1x256xf32>
    %c0_31 = arith.constant 0 : index
    %c0_32 = arith.constant 0 : index
    %48 = vector.load %arg7[%c0_31, %c0_32] : memref<256x128xf32, #tpu.memory_space<vmem>>, vector<256x128xf32>
    %cst_33 = arith.constant dense<0.000000e+00> : vector<1x128xf32>
    %49 = tpu.matmul %44, %48, %cst_33 {dimension_numbers = #tpu.dot_dimension_numbers<[1], [0], [0], [1], [0, 0, 1, 1], [], []>} : vector<1x256xf32>, vector<256x128xf32>, vector<1x128xf32> -> vector<1x128xf32>
    %c0_34 = arith.constant 0 : index
    %c0_35 = arith.constant 0 : index
    %50 = vector.load %arg7[%c0_34, %c0_35] : memref<256x128xf32, #tpu.memory_space<vmem>>, vector<256x128xf32>
    %cst_36 = arith.constant dense<0.000000e+00> : vector<1x128xf32>
    %51 = tpu.matmul %47, %50, %cst_36 {dimension_numbers = #tpu.dot_dimension_numbers<[1], [0], [0], [1], [0, 0, 1, 1], [], []>} : vector<1x256xf32>, vector<256x128xf32>, vector<1x128xf32> -> vector<1x128xf32>
    %cst_37 = arith.constant 4.096000e+03 : f32
    %52 = vector.broadcast %cst_37 : f32 to vector<1x128xf32>
    %53 = arith.divf %49, %52 : vector<1x128xf32>
    %cst_38 = arith.constant 4.096000e+03 : f32
    %54 = vector.broadcast %cst_38 : f32 to vector<1x128xf32>
    %55 = arith.divf %51, %54 : vector<1x128xf32>
    %56 = arith.mulf %53, %53 : vector<1x128xf32>
    %57 = arith.subf %55, %56 : vector<1x128xf32>
    %cst_39 = arith.constant 0.000000e+00 : f32
    %58 = vector.broadcast %cst_39 : f32 to vector<1x128xf32>
    %59 = arith.maximumf %57, %58 : vector<1x128xf32>
    %c0_40 = arith.constant 0 : index
    %c0_41 = arith.constant 0 : index
    %60 = vector.load %arg9[%c0_40, %c0_41] : memref<1x128xf32, #tpu.memory_space<vmem>>, vector<1x128xf32>
    %cst_42 = arith.constant 9.99999974E-6 : f32
    %61 = vector.broadcast %cst_42 : f32 to vector<1x128xf32>
    %62 = arith.addf %59, %61 : vector<1x128xf32>
    %63 = math.rsqrt %62 : vector<1x128xf32>
    %64 = arith.mulf %60, %63 : vector<1x128xf32>
    %c0_43 = arith.constant 0 : index
    %c0_44 = arith.constant 0 : index
    %65 = vector.load %arg10[%c0_43, %c0_44] : memref<1x128xf32, #tpu.memory_space<vmem>>, vector<1x128xf32>
    %66 = arith.mulf %53, %64 : vector<1x128xf32>
    %67 = arith.subf %65, %66 : vector<1x128xf32>
    %c0_45 = arith.constant 0 : index
    %c0_46 = arith.constant 0 : index
    %68 = vector.load %arg8[%c0_45, %c0_46] : memref<128x256xf32, #tpu.memory_space<vmem>>, vector<128x256xf32>
    %cst_47 = arith.constant dense<0.000000e+00> : vector<1x256xf32>
    %69 = tpu.matmul %64, %68, %cst_47 {dimension_numbers = #tpu.dot_dimension_numbers<[1], [0], [0], [1], [0, 0, 1, 1], [], []>} : vector<1x128xf32>, vector<128x256xf32>, vector<1x256xf32> -> vector<1x256xf32>
    %c0_48 = arith.constant 0 : index
    %c0_49 = arith.constant 0 : index
    %70 = vector.load %arg8[%c0_48, %c0_49] : memref<128x256xf32, #tpu.memory_space<vmem>>, vector<128x256xf32>
    %cst_50 = arith.constant dense<0.000000e+00> : vector<1x256xf32>
    %71 = tpu.matmul %67, %70, %cst_50 {dimension_numbers = #tpu.dot_dimension_numbers<[1], [0], [0], [1], [0, 0, 1, 1], [], []>} : vector<1x128xf32>, vector<128x256xf32>, vector<1x256xf32> -> vector<1x256xf32>
    %72 = vector.broadcast %69 : vector<1x256xf32> to vector<256x256xf32>
    %73 = arith.mulf %42, %72 : vector<256x256xf32>
    %74 = vector.broadcast %71 : vector<1x256xf32> to vector<256x256xf32>
    %75 = arith.addf %73, %74 : vector<256x256xf32>
    %cst_51 = arith.constant 2.000000e-01 : f32
    %76 = vector.broadcast %cst_51 : f32 to vector<256x256xf32>
    %77 = arith.mulf %76, %75 : vector<256x256xf32>
    %78 = arith.maximumf %75, %77 : vector<256x256xf32>
    %79 = arith.truncf %78 : vector<256x256xf32> to vector<256x256xbf16>
    %c0_52 = arith.constant 0 : index
    %c0_53 = arith.constant 0 : index
    %80 = vector.load %arg11[%c0_52, %c0_53] : memref<256x128xbf16, #tpu.memory_space<vmem>>, vector<256x128xbf16>
    %cst_54 = arith.constant dense<0.000000e+00> : vector<256x128xf32>
    %81 = tpu.matmul %79, %80, %cst_54 {dimension_numbers = #tpu.dot_dimension_numbers<[1], [0], [0], [1], [0, 0, 1, 1], [], []>} : vector<256x256xbf16>, vector<256x128xbf16>, vector<256x128xf32> -> vector<256x128xf32>
    %cst_55 = arith.constant dense<0.000000e+00> : vector<128xf32>
    %82 = vector.multi_reduction <add>, %81, %cst_55 [0] : vector<256x128xf32> to vector<128xf32>
    %83 = vector.shape_cast %82 : vector<128xf32> to vector<1x128xf32>
    %84 = arith.mulf %81, %81 : vector<256x128xf32>
    %cst_56 = arith.constant dense<0.000000e+00> : vector<128xf32>
    %85 = vector.multi_reduction <add>, %84, %cst_56 [0] : vector<256x128xf32> to vector<128xf32>
    %86 = vector.shape_cast %85 : vector<128xf32> to vector<1x128xf32>
    %c0_57 = arith.constant 0 : index
    %c0_58 = arith.constant 0 : index
    %87 = vector.load %arg12[%c0_57, %c0_58] : memref<128x128xf32, #tpu.memory_space<vmem>>, vector<128x128xf32>
    %cst_59 = arith.constant dense<0.000000e+00> : vector<1x128xf32>
    %88 = tpu.matmul %83, %87, %cst_59 {dimension_numbers = #tpu.dot_dimension_numbers<[1], [0], [0], [1], [0, 0, 1, 1], [], []>} : vector<1x128xf32>, vector<128x128xf32>, vector<1x128xf32> -> vector<1x128xf32>
    %c0_60 = arith.constant 0 : index
    %c0_61 = arith.constant 0 : index
    %89 = vector.load %arg12[%c0_60, %c0_61] : memref<128x128xf32, #tpu.memory_space<vmem>>, vector<128x128xf32>
    %cst_62 = arith.constant dense<0.000000e+00> : vector<1x128xf32>
    %90 = tpu.matmul %86, %89, %cst_62 {dimension_numbers = #tpu.dot_dimension_numbers<[1], [0], [0], [1], [0, 0, 1, 1], [], []>} : vector<1x128xf32>, vector<128x128xf32>, vector<1x128xf32> -> vector<1x128xf32>
    %cst_63 = arith.constant 1.024000e+03 : f32
    %91 = vector.broadcast %cst_63 : f32 to vector<1x128xf32>
    %92 = arith.divf %88, %91 : vector<1x128xf32>
    %cst_64 = arith.constant 1.024000e+03 : f32
    %93 = vector.broadcast %cst_64 : f32 to vector<1x128xf32>
    %94 = arith.divf %90, %93 : vector<1x128xf32>
    %95 = arith.mulf %92, %92 : vector<1x128xf32>
    %96 = arith.subf %94, %95 : vector<1x128xf32>
    %cst_65 = arith.constant 0.000000e+00 : f32
    %97 = vector.broadcast %cst_65 : f32 to vector<1x128xf32>
    %98 = arith.maximumf %96, %97 : vector<1x128xf32>
    %c0_66 = arith.constant 0 : index
    %c0_67 = arith.constant 0 : index
    %99 = vector.load %arg14[%c0_66, %c0_67] : memref<1x128xf32, #tpu.memory_space<vmem>>, vector<1x128xf32>
    %cst_68 = arith.constant 9.99999974E-6 : f32
    %100 = vector.broadcast %cst_68 : f32 to vector<1x128xf32>
    %101 = arith.addf %98, %100 : vector<1x128xf32>
    %102 = math.rsqrt %101 : vector<1x128xf32>
    %103 = arith.mulf %99, %102 : vector<1x128xf32>
    %c0_69 = arith.constant 0 : index
    %c0_70 = arith.constant 0 : index
    %104 = vector.load %arg15[%c0_69, %c0_70] : memref<1x128xf32, #tpu.memory_space<vmem>>, vector<1x128xf32>
    %105 = arith.mulf %92, %103 : vector<1x128xf32>
    %106 = arith.subf %104, %105 : vector<1x128xf32>
    %c0_71 = arith.constant 0 : index
    %c0_72 = arith.constant 0 : index
    %107 = vector.load %arg13[%c0_71, %c0_72] : memref<128x128xf32, #tpu.memory_space<vmem>>, vector<128x128xf32>
    %cst_73 = arith.constant dense<0.000000e+00> : vector<1x128xf32>
    %108 = tpu.matmul %103, %107, %cst_73 {dimension_numbers = #tpu.dot_dimension_numbers<[1], [0], [0], [1], [0, 0, 1, 1], [], []>} : vector<1x128xf32>, vector<128x128xf32>, vector<1x128xf32> -> vector<1x128xf32>
    %c0_74 = arith.constant 0 : index
    %c0_75 = arith.constant 0 : index
    %109 = vector.load %arg13[%c0_74, %c0_75] : memref<128x128xf32, #tpu.memory_space<vmem>>, vector<128x128xf32>
    %cst_76 = arith.constant dense<0.000000e+00> : vector<1x128xf32>
    %110 = tpu.matmul %106, %109, %cst_76 {dimension_numbers = #tpu.dot_dimension_numbers<[1], [0], [0], [1], [0, 0, 1, 1], [], []>} : vector<1x128xf32>, vector<128x128xf32>, vector<1x128xf32> -> vector<1x128xf32>
    %111 = vector.broadcast %108 : vector<1x128xf32> to vector<256x128xf32>
    %112 = arith.mulf %81, %111 : vector<256x128xf32>
    %113 = vector.broadcast %110 : vector<1x128xf32> to vector<256x128xf32>
    %114 = arith.addf %112, %113 : vector<256x128xf32>
    %cst_77 = arith.constant 2.000000e-01 : f32
    %115 = vector.broadcast %cst_77 : f32 to vector<256x128xf32>
    %116 = arith.mulf %115, %114 : vector<256x128xf32>
    %117 = arith.maximumf %114, %116 : vector<256x128xf32>
    %c0_78 = arith.constant 0 : index
    %c0_79 = arith.constant 0 : index
    %118 = vector.load %arg19[%c0_78, %c0_79] : memref<256x128xf32, #tpu.memory_space<vmem>>, vector<256x128xf32>
    tpu.vector_store %arg19[%c0_78, %c0_79], %117 {strides = array<i32>} : memref<256x128xf32, #tpu.memory_space<vmem>>, vector<256x128xf32>,
    %119 = arith.truncf %117 : vector<256x128xf32> to vector<256x128xbf16>
    %c0_80 = arith.constant 0 : index
    %c0_81 = arith.constant 0 : index
    %120 = vector.load %arg16[%c0_80, %c0_81] : memref<128x128xbf16, #tpu.memory_space<vmem>>, vector<128x128xbf16>
    %cst_82 = arith.constant dense<0.000000e+00> : vector<256x128xf32>
    %121 = tpu.matmul %119, %120, %cst_82 {dimension_numbers = #tpu.dot_dimension_numbers<[1], [0], [0], [1], [0, 0, 1, 1], [], []>} : vector<256x128xbf16>, vector<128x128xbf16>, vector<256x128xf32> -> vector<256x128xf32>
    %c0_83 = arith.constant 0 : index
    %c0_84 = arith.constant 0 : index
    %122 = vector.load %arg17[%c0_83, %c0_84] : memref<1x128xf32, #tpu.memory_space<vmem>>, vector<1x128xf32>
    %123 = vector.broadcast %122 : vector<1x128xf32> to vector<256x128xf32>
    %124 = arith.addf %121, %123 : vector<256x128xf32>
    %cst_85 = arith.constant 0.000000e+00 : f32
    %125 = vector.broadcast %cst_85 : f32 to vector<256x128xf32>
    %126 = arith.subf %125, %124 : vector<256x128xf32>
    %127 = math.exp %126 : vector<256x128xf32>
    %cst_86 = arith.constant 1.000000e+00 : f32
    %128 = vector.broadcast %cst_86 : f32 to vector<256x128xf32>
    %129 = arith.addf %128, %127 : vector<256x128xf32>
    %cst_87 = arith.constant 1.000000e+00 : f32
    %130 = vector.broadcast %cst_87 : f32 to vector<256x128xf32>
    %131 = arith.divf %130, %129 : vector<256x128xf32>
    %c0_88 = arith.constant 0 : index
    %c0_89 = arith.constant 0 : index
    %132 = vector.load %arg18[%c0_88, %c0_89] : memref<256x128xf32, #tpu.memory_space<vmem>>, vector<256x128xf32>
    tpu.vector_store %arg18[%c0_88, %c0_89], %131 {strides = array<i32>} : memref<256x128xf32, #tpu.memory_space<vmem>>, vector<256x128xf32>,
    return
  }
}

</mosaic_0001>

<llo_original>
// kernel: tpu_custom_call.1
$region0: #{tpu_custom_call.1}
  #allocation0 [shape = 'u32[]', space=smem, size = 0x4, offset = 0x4, fixed_abs, tag = 'smem constant byte address 0x4 - core index']
  #allocation1 [shape = 'u32[72,128]{1,0:T(1,128)}', space=vmem, size = 0x9000, scoped, tag = 'internal scratch']
  %s0 = inlined_call_operand.hbm [shape: f32[256,256], index: 0, kind: input, shape index: {}]
  %s1 = inlined_call_operand.hbm [shape: bf16[256,512], index: 1, kind: input, shape index: {}]
  %s2 = inlined_call_operand.hbm [shape: f32[512,128], index: 2, kind: input, shape index: {}]
  %s3 = inlined_call_operand.hbm [shape: f32[128,512], index: 3, kind: input, shape index: {}]
  %s4 = inlined_call_operand.vmem [shape: f32[1,128], index: 4, kind: input, shape index: {}]
  %s5 = inlined_call_operand.vmem [shape: f32[1,128], index: 5, kind: input, shape index: {}]
  %s6 = inlined_call_operand.hbm [shape: bf16[512,256], index: 6, kind: input, shape index: {}]
  %s7 = inlined_call_operand.hbm [shape: f32[256,128], index: 7, kind: input, shape index: {}]
  %s8 = inlined_call_operand.hbm [shape: f32[128,256], index: 8, kind: input, shape index: {}]
  %s9 = inlined_call_operand.vmem [shape: f32[1,128], index: 9, kind: input, shape index: {}]
  %s10 = inlined_call_operand.vmem [shape: f32[1,128], index: 10, kind: input, shape index: {}]
  %s11 = inlined_call_operand.hbm [shape: bf16[256,128], index: 11, kind: input, shape index: {}]
  %s12 = inlined_call_operand.hbm [shape: f32[128,128], index: 12, kind: input, shape index: {}]
  %s13 = inlined_call_operand.hbm [shape: f32[128,128], index: 13, kind: input, shape index: {}]
  %s14 = inlined_call_operand.vmem [shape: f32[1,128], index: 14, kind: input, shape index: {}]
  %s15 = inlined_call_operand.vmem [shape: f32[1,128], index: 15, kind: input, shape index: {}]
  %s16 = inlined_call_operand.hbm [shape: bf16[128,128], index: 16, kind: input, shape index: {}]
  %s17 = inlined_call_operand.vmem [shape: f32[1,128], index: 17, kind: input, shape index: {}]
  %s18 = inlined_call_operand.hbm [shape: f32[256,128], index: 18, kind: output, shape index: {0}]
  %s19 = inlined_call_operand.hbm [shape: f32[256,128], index: 19, kind: output, shape index: {1}]
  %20 = xla_tuple %s18, %s19
  %s21 = sld [smem:[#allocation0]]
  $region134: #{tpu_custom_call.1} parent=0
    _
  %s23 = ssub.s32 1, %s21
  %s24 = scalar_select 0, %s23, %s21
  $region1: #{tpu_custom_call.1} parent=0
    #allocation2 [shape = 'u8[262144]{0}', space=vmem, size = 0x40000, scoped, tag = 'input window, operand 0, single buffered']
    #allocation3 [shape = 's32[1]{0}', space=sflag, size = 0x4, scoped, tag = 'scoped memory for tpu_custom_call.1']
    #allocation4 [shape = 's32[1]{0}', space=sflag, size = 0x4, scoped, tag = 'scoped memory for tpu_custom_call.1']
    #allocation5 [shape = 'u8[262144]{0}', space=vmem, size = 0x40000, scoped, tag = 'input window, operand 1, single buffered']
    #allocation6 [shape = 's32[1]{0}', space=sflag, size = 0x4, scoped, tag = 'scoped memory for tpu_custom_call.1']
    #allocation7 [shape = 'u8[262144]{0}', space=vmem, size = 0x40000, scoped, tag = 'input window, operand 2, single buffered']
    #allocation8 [shape = 'u8[262144]{0}', space=vmem, size = 0x40000, scoped, tag = 'input window, operand 3, single buffered']
    #allocation9 [shape = 's32[1]{0}', space=sflag, size = 0x4, scoped, tag = 'scoped memory for tpu_custom_call.1']
    #allocation10 [shape = 'u8[262144]{0}', space=vmem, size = 0x40000, scoped, tag = 'input window, operand 6, single buffered']
    #allocation11 [shape = 'u8[131072]{0}', space=vmem, size = 0x20000, scoped, tag = 'input window, operand 7, single buffered']
    #allocation12 [shape = 's32[1]{0}', space=sflag, size = 0x4, scoped, tag = 'scoped memory for tpu_custom_call.1']
    #allocation13 [shape = 'u8[131072]{0}', space=vmem, size = 0x20000, scoped, tag = 'input window, operand 8, single buffered']
    #allocation14 [shape = 'u8[65536]{0}', space=vmem, size = 0x10000, scoped, tag = 'input window, operand 11, single buffered']
    #allocation15 [shape = 's32[1]{0}', space=sflag, size = 0x4, scoped, tag = 'scoped memory for tpu_custom_call.1']
    #allocation16 [shape = 'u8[65536]{0}', space=vmem, size = 0x10000, scoped, tag = 'input window, operand 12, single buffered']
    #allocation17 [shape = 'u8[65536]{0}', space=vmem, size = 0x10000, scoped, tag = 'input window, operand 13, single buffered']
    #allocation18 [shape = 's32[1]{0}', space=sflag, size = 0x4, scoped, tag = 'scoped memory for tpu_custom_call.1']
    #allocation19 [shape = 'u8[32768]{0}', space=vmem, size = 0x8000, scoped, tag = 'input window, operand 16, single buffered']
    #allocation20 [shape = 'u8[131072]{0}', space=vmem, size = 0x20000, scoped, tag = 'output window, operand 0, single buffered']
    #allocation21 [shape = 'u8[131072]{0}', space=vmem, size = 0x20000, scoped, tag = 'output window, operand 1, single buffered']
    #allocation22 [shape = 's32[1]{0}', space=sflag, size = 0x4, scoped, tag = 'scoped memory for tpu_custom_call.1']
    %25 = vsyncpa [#allocation3], 0
    %26 = vsyncpa [#allocation6], 0
    %27 = vsyncpa [#allocation9], 0
    %28 = vsyncpa [#allocation12], 0
    %29 = vsyncpa [#allocation15], 0
    %30 = vsyncpa [#allocation18], 0
    %31 = vsyncpa [#allocation4], 0
    %32 = vsyncpa [#allocation22], 0
    // Predicated region
    $region2: #{tpu_custom_call.1} parent=1 // pred_check
      _
    $region3: #{tpu_custom_call.1} parent=1 // pred_check_branch
      %34 = sbr.rel (0) target = $region5
    $region4: #{tpu_custom_call.1} parent=1 // pred_region
      %36 = vsyncadd [#allocation3], 0
      %s37 = sshll.u32 %s0, 4
      %s38 = int_to_ptr.hbm [resolvable:$true] %s37
      %s39 = sshll.u32 [#allocation2], 4
      %s40 = int_to_ptr.vmem [resolvable:$true] %s39
      %45 = dma.hbm_to_vmem [thread:$0]  %s38, 8192, %s40, [#allocation3], 256, 256, 16
    $region5: #{tpu_custom_call.1} parent=1 // pred_fallthru
      _
    // Predicated region
    $region6: #{tpu_custom_call.1} parent=1 // pred_check
      _
    $region7: #{tpu_custom_call.1} parent=1 // pred_check_branch
      %47 = sbr.rel (0) target = $region9
    $region8: #{tpu_custom_call.1} parent=1 // pred_region
      %49 = vsyncadd [#allocation6], 0
      %s50 = sshll.u32 %s1, 4
      %s51 = int_to_ptr.hbm [resolvable:$true] %s50
      %s52 = sshll.u32 [#allocation5], 4
      %s53 = int_to_ptr.vmem [resolvable:$true] %s52
      %58 = dma.hbm_to_vmem [thread:$0]  %s51, 8192, %s53, [#allocation6], 256, 256, 16
    $region9: #{tpu_custom_call.1} parent=1 // pred_fallthru
      _
    // Predicated region
    $region10: #{tpu_custom_call.1} parent=1 // pred_check
      _
    $region11: #{tpu_custom_call.1} parent=1 // pred_check_branch
      %60 = sbr.rel (0) target = $region13
    $region12: #{tpu_custom_call.1} parent=1 // pred_region
      %62 = vsyncadd [#allocation6], 0
      %s63 = sshll.u32 %s2, 4
      %s64 = int_to_ptr.hbm [resolvable:$true] %s63
      %s65 = sshll.u32 [#allocation7], 4
      %s66 = int_to_ptr.vmem [resolvable:$true] %s65
      %71 = dma.hbm_to_vmem [thread:$0]  %s64, 8192, %s66, [#allocation6], 128, 128, 8
    $region13: #{tpu_custom_call.1} parent=1 // pred_fallthru
      _
    // Predicated region
    $region14: #{tpu_custom_call.1} parent=1 // pred_check
      _
    $region15: #{tpu_custom_call.1} parent=1 // pred_check_branch
      %73 = sbr.rel (0) target = $region17
    $region16: #{tpu_custom_call.1} parent=1 // pred_region
      %75 = vsyncadd [#allocation9], 0
      %s76 = sshll.u32 %s3, 4
      %s77 = int_to_ptr.hbm [resolvable:$true] %s76
      %s78 = sshll.u32 [#allocation8], 4
      %s79 = int_to_ptr.vmem [resolvable:$true] %s78
      %84 = dma.hbm_to_vmem [thread:$0]  %s77, 8192, %s79, [#allocation9], 512, 512, 32
    $region17: #{tpu_custom_call.1} parent=1 // pred_fallthru
      _
    // Predicated region
    $region18: #{tpu_custom_call.1} parent=1 // pred_check
      _
    $region19: #{tpu_custom_call.1} parent=1 // pred_check_branch
      %86 = sbr.rel (0) target = $region21
    $region20: #{tpu_custom_call.1} parent=1 // pred_region
      _
    $region21: #{tpu_custom_call.1} parent=1 // pred_fallthru
      _
    // Predicated region
    $region22: #{tpu_custom_call.1} parent=1 // pred_check
      _
    $region23: #{tpu_custom_call.1} parent=1 // pred_check_branch
      %88 = sbr.rel (0) target = $region25
    $region24: #{tpu_custom_call.1} parent=1 // pred_region
      _
    $region25: #{tpu_custom_call.1} parent=1 // pred_fallthru
      _
    // Predicated region
    $region26: #{tpu_custom_call.1} parent=1 // pred_check
      _
    $region27: #{tpu_custom_call.1} parent=1 // pred_check_branch
      %90 = sbr.rel (0) target = $region29
    $region28: #{tpu_custom_call.1} parent=1 // pred_region
      %92 = vsyncadd [#allocation9], 0
      %s93 = sshll.u32 %s6, 4
      %s94 = int_to_ptr.hbm [resolvable:$true] %s93
      %s95 = sshll.u32 [#allocation10], 4
      %s96 = int_to_ptr.vmem [resolvable:$true] %s95
      %101 = dma.hbm_to_vmem [thread:$0]  %s94, 8192, %s96, [#allocation9], 128, 128, 8
    $region29: #{tpu_custom_call.1} parent=1 // pred_fallthru
      _
    // Predicated region
    $region30: #{tpu_custom_call.1} parent=1 // pred_check
      _
    $region31: #{tpu_custom_call.1} parent=1 // pred_check_branch
      %103 = sbr.rel (0) target = $region33
    $region32: #{tpu_custom_call.1} parent=1 // pred_region
      %105 = vsyncadd [#allocation12], 0
      %s106 = sshll.u32 %s7, 4
      %s107 = int_to_ptr.hbm [resolvable:$true] %s106
      %s108 = sshll.u32 [#allocation11], 4
      %s109 = int_to_ptr.vmem [resolvable:$true] %s108
      %114 = dma.hbm_to_vmem [thread:$0]  %s107, 4096, %s109, [#allocation12], 128, 128, 8
    $region33: #{tpu_custom_call.1} parent=1 // pred_fallthru
      _
    // Predicated region
    $region34: #{tpu_custom_call.1} parent=1 // pred_check
      _
    $region35: #{tpu_custom_call.1} parent=1 // pred_check_branch
      %116 = sbr.rel (0) target = $region37
    $region36: #{tpu_custom_call.1} parent=1 // pred_region
      %118 = vsyncadd [#allocation12], 0
      %s119 = sshll.u32 %s8, 4
      %s120 = int_to_ptr.hbm [resolvable:$true] %s119
      %s121 = sshll.u32 [#allocation13], 4
      %s122 = int_to_ptr.vmem [resolvable:$true] %s121
      %127 = dma.hbm_to_vmem [thread:$0]  %s120, 4096, %s122, [#allocation12], 256, 256, 16
    $region37: #{tpu_custom_call.1} parent=1 // pred_fallthru
      _
    // Predicated region
    $region38: #{tpu_custom_call.1} parent=1 // pred_check
      _
    $region39: #{tpu_custom_call.1} parent=1 // pred_check_branch
      %129 = sbr.rel (0) target = $region41
    $region40: #{tpu_custom_call.1} parent=1 // pred_region
      _
    $region41: #{tpu_custom_call.1} parent=1 // pred_fallthru
      _
    // Predicated region
    $region42: #{tpu_custom_call.1} parent=1 // pred_check
      _
    $region43: #{tpu_custom_call.1} parent=1 // pred_check_branch
      %131 = sbr.rel (0) target = $region45
    $region44: #{tpu_custom_call.1} parent=1 // pred_region
      _
    $region45: #{tpu_custom_call.1} parent=1 // pred_fallthru
      _
    // Predicated region
    $region46: #{tpu_custom_call.1} parent=1 // pred_check
      _
    $region47: #{tpu_custom_call.1} parent=1 // pred_check_branch
      %133 = sbr.rel (0) target = $region49
    $region48: #{tpu_custom_call.1} parent=1 // pred_region
      %135 = vsyncadd [#allocation15], 0
      %s136 = sshll.u32 %s11, 4
      %s137 = int_to_ptr.hbm [resolvable:$true] %s136
      %s138 = sshll.u32 [#allocation14], 4
      %s139 = int_to_ptr.vmem [resolvable:$true] %s138
      %144 = dma.hbm_to_vmem [thread:$0]  %s137, 2048, %s139, [#allocation15], 64, 64, 4
    $region49: #{tpu_custom_call.1} parent=1 // pred_fallthru
      _
    // Predicated region
    $region50: #{tpu_custom_call.1} parent=1 // pred_check
      _
    $region51: #{tpu_custom_call.1} parent=1 // pred_check_branch
      %146 = sbr.rel (0) target = $region53
    $region52: #{tpu_custom_call.1} parent=1 // pred_region
      %148 = vsyncadd [#allocation15], 0
      %s149 = sshll.u32 %s12, 4
      %s150 = int_to_ptr.hbm [resolvable:$true] %s149
      %s151 = sshll.u32 [#allocation16], 4
      %s152 = int_to_ptr.vmem [resolvable:$true] %s151
      %157 = dma.hbm_to_vmem [thread:$0]  %s150, 2048, %s152, [#allocation15], 128, 128, 8
    $region53: #{tpu_custom_call.1} parent=1 // pred_fallthru
      _
    // Predicated region
    $region54: #{tpu_custom_call.1} parent=1 // pred_check
      _
    $region55: #{tpu_custom_call.1} parent=1 // pred_check_branch
      %159 = sbr.rel (0) target = $region57
    $region56: #{tpu_custom_call.1} parent=1 // pred_region
      %161 = vsyncadd [#allocation18], 0
      %s162 = sshll.u32 %s13, 4
      %s163 = int_to_ptr.hbm [resolvable:$true] %s162
      %s164 = sshll.u32 [#allocation17], 4
      %s165 = int_to_ptr.vmem [resolvable:$true] %s164
      %170 = dma.hbm_to_vmem [thread:$0]  %s163, 2048, %s165, [#allocation18], 128, 128, 8
    $region57: #{tpu_custom_call.1} parent=1 // pred_fallthru
      _
    // Predicated region
    $region58: #{tpu_custom_call.1} parent=1 // pred_check
      _
    $region59: #{tpu_custom_call.1} parent=1 // pred_check_branch
      %172 = sbr.rel (0) target = $region61
    $region60: #{tpu_custom_call.1} parent=1 // pred_region
      _
    $region61: #{tpu_custom_call.1} parent=1 // pred_fallthru
      _
    // Predicated region
    $region62: #{tpu_custom_call.1} parent=1 // pred_check
      _
    $region63: #{tpu_custom_call.1} parent=1 // pred_check_branch
      %174 = sbr.rel (0) target = $region65
    $region64: #{tpu_custom_call.1} parent=1 // pred_region
      _
    $region65: #{tpu_custom_call.1} parent=1 // pred_fallthru
      _
    // Predicated region
    $region66: #{tpu_custom_call.1} parent=1 // pred_check
      _
    $region67: #{tpu_custom_call.1} parent=1 // pred_check_branch
      %176 = sbr.rel (0) target = $region69
    $region68: #{tpu_custom_call.1} parent=1 // pred_region
      %178 = vsyncadd [#allocation18], 0
      %s179 = sshll.u32 %s16, 4
      %s180 = int_to_ptr.hbm [resolvable:$true] %s179
      %s181 = sshll.u32 [#allocation19], 4
      %s182 = int_to_ptr.vmem [resolvable:$true] %s181
      %187 = dma.hbm_to_vmem [thread:$0]  %s180, 1024, %s182, [#allocation18], 64, 64, 4
    $region69: #{tpu_custom_call.1} parent=1 // pred_fallthru
      _
    // Predicated region
    $region70: #{tpu_custom_call.1} parent=1 // pred_check
      _
    $region71: #{tpu_custom_call.1} parent=1 // pred_check_branch
      %189 = sbr.rel (0) target = $region73
    $region72: #{tpu_custom_call.1} parent=1 // pred_region
      _
    $region73: #{tpu_custom_call.1} parent=1 // pred_fallthru
      _
    // Predicated region
    $region74: #{tpu_custom_call.1} parent=1 // pred_check
      _
    $region75: #{tpu_custom_call.1} parent=1 // pred_check_branch
      %191 = sbr.rel (0) target = $region77
    $region76: #{tpu_custom_call.1} parent=1 // pred_region
      %193 = dma.done [#allocation3], 8192
    $region77: #{tpu_custom_call.1} parent=1 // pred_fallthru
      _
    // Predicated region
    $region78: #{tpu_custom_call.1} parent=1 // pred_check
      _
    $region79: #{tpu_custom_call.1} parent=1 // pred_check_branch
      %195 = sbr.rel (0) target = $region81
    $region80: #{tpu_custom_call.1} parent=1 // pred_region
      %197 = dma.done [#allocation6], 8192
    $region81: #{tpu_custom_call.1} parent=1 // pred_fallthru
      _
    // Predicated region
    $region82: #{tpu_custom_call.1} parent=1 // pred_check
      _
    $region83: #{tpu_custom_call.1} parent=1 // pred_check_branch
      %199 = sbr.rel (0) target = $region85
    $region84: #{tpu_custom_call.1} parent=1 // pred_region
      %201 = dma.done [#allocation6], 8192
    $region85: #{tpu_custom_call.1} parent=1 // pred_fallthru
      _
    // Predicated region
    $region86: #{tpu_custom_call.1} parent=1 // pred_check
      _
    $region87: #{tpu_custom_call.1} parent=1 // pred_check_branch
      %203 = sbr.rel (0) target = $region89
    $region88: #{tpu_custom_call.1} parent=1 // pred_region
      %205 = dma.done [#allocation9], 8192
    $region89: #{tpu_custom_call.1} parent=1 // pred_fallthru
      _
    // Predicated region
    $region90: #{tpu_custom_call.1} parent=1 // pred_check
      _
    $region91: #{tpu_custom_call.1} parent=1 // pred_check_branch
      %207 = sbr.rel (0) target = $region93
    $region92: #{tpu_custom_call.1} parent=1 // pred_region
      %209 = dma.done [#allocation9], 8192
    $region93: #{tpu_custom_call.1} parent=1 // pred_fallthru
      _
    // Predicated region
    $region94: #{tpu_custom_call.1} parent=1 // pred_check
      _
    $region95: #{tpu_custom_call.1} parent=1 // pred_check_branch
      %211 = sbr.rel (0) target = $region97
    $region96: #{tpu_custom_call.1} parent=1 // pred_region
      %213 = dma.done [#allocation12], 4096
    $region97: #{tpu_custom_call.1} parent=1 // pred_fallthru
      _
    // Predicated region
    $region98: #{tpu_custom_call.1} parent=1 // pred_check
      _
    $region99: #{tpu_custom_call.1} parent=1 // pred_check_branch
      %215 = sbr.rel (0) target = $region101
    $region100: #{tpu_custom_call.1} parent=1 // pred_region
      %217 = dma.done [#allocation12], 4096
    $region101: #{tpu_custom_call.1} parent=1 // pred_fallthru
      _
    // Predicated region
    $region102: #{tpu_custom_call.1} parent=1 // pred_check
      _
    $region103: #{tpu_custom_call.1} parent=1 // pred_check_branch
      %219 = sbr.rel (0) target = $region105
    $region104: #{tpu_custom_call.1} parent=1 // pred_region
      %221 = dma.done [#allocation15], 2048
    $region105: #{tpu_custom_call.1} parent=1 // pred_fallthru
      _
    // Predicated region
    $region106: #{tpu_custom_call.1} parent=1 // pred_check
      _
    $region107: #{tpu_custom_call.1} parent=1 // pred_check_branch
      %223 = sbr.rel (0) target = $region109
    $region108: #{tpu_custom_call.1} parent=1 // pred_region
      %225 = dma.done [#allocation15], 2048
    $region109: #{tpu_custom_call.1} parent=1 // pred_fallthru
      _
    // Predicated region
    $region110: #{tpu_custom_call.1} parent=1 // pred_check
      _
    $region111: #{tpu_custom_call.1} parent=1 // pred_check_branch
      %227 = sbr.rel (0) target = $region113
    $region112: #{tpu_custom_call.1} parent=1 // pred_region
      %229 = dma.done [#allocation18], 2048
    $region113: #{tpu_custom_call.1} parent=1 // pred_fallthru
      _
    // Predicated region
    $region114: #{tpu_custom_call.1} parent=1 // pred_check
      _
    $region115: #{tpu_custom_call.1} parent=1 // pred_check_branch
      %231 = sbr.rel (0) target = $region117
    $region116: #{tpu_custom_call.1} parent=1 // pred_region
      %233 = dma.done [#allocation18], 1024
    $region117: #{tpu_custom_call.1} parent=1 // pred_fallthru
      _
    %v234 = vld [vmem:[#allocation2] sm:$0xff]
    %v235 = vld [vmem:[#allocation2 + $0x8] sm:$0xff]
    %v236 = vld [vmem:[#allocation2 + $0x10] sm:$0xff]
    %v237 = vld [vmem:[#allocation2 + $0x18] sm:$0xff]
    %v238 = vld [vmem:[#allocation2 + $0x20] sm:$0xff]
    %v239 = vld [vmem:[#allocation2 + $0x28] sm:$0xff]
    %v240 = vld [vmem:[#allocation2 + $0x30] sm:$0xff]
    %v241 = vld [vmem:[#allocation2 + $0x38] sm:$0xff]
    %v242 = vld [vmem:[#allocation2 + $0x40] sm:$0xff]
    %v243 = vld [vmem:[#allocation2 + $0x48] sm:$0xff]
    %v244 = vld [vmem:[#allocation2 + $0x50] sm:$0xff]
    %v245 = vld [vmem:[#allocation2 + $0x58] sm:$0xff]
    %v246 = vld [vmem:[#allocation2 + $0x60] sm:$0xff]
    %v247 = vld [vmem:[#allocation2 + $0x68] sm:$0xff]
    %v248 = vld [vmem:[#allocation2 + $0x70] sm:$0xff]
    %v249 = vld [vmem:[#allocation2 + $0x78] sm:$0xff]
    %v250 = vld [vmem:[#allocation2 + $0x80] sm:$0xff]
    %v251 = vld [vmem:[#allocation2 + $0x88] sm:$0xff]
    %v252 = vld [vmem:[#allocation2 + $0x90] sm:$0xff]
    %v253 = vld [vmem:[#allocation2 + $0x98] sm:$0xff]
    %v254 = vld [vmem:[#allocation2 + $0xa0] sm:$0xff]
    %v255 = vld [vmem:[#allocation2 + $0xa8] sm:$0xff]
    %v256 = vld [vmem:[#allocation2 + $0xb0] sm:$0xff]
    %v257 = vld [vmem:[#allocation2 + $0xb8] sm:$0xff]
    %v258 = vld [vmem:[#allocation2 + $0xc0] sm:$0xff]
    %v259 = vld [vmem:[#allocation2 + $0xc8] sm:$0xff]
    %v260 = vld [vmem:[#allocation2 + $0xd0] sm:$0xff]
    %v261 = vld [vmem:[#allocation2 + $0xd8] sm:$0xff]
    %v262 = vld [vmem:[#allocation2 + $0xe0] sm:$0xff]
    %v263 = vld [vmem:[#allocation2 + $0xe8] sm:$0xff]
    %v264 = vld [vmem:[#allocation2 + $0xf0] sm:$0xff]
    %v265 = vld [vmem:[#allocation2 + $0xf8] sm:$0xff]
    %v266 = vld [vmem:[#allocation2 + $0x100] sm:$0xff]
    %v267 = vld [vmem:[#allocation2 + $0x108] sm:$0xff]
    %v268 = vld [vmem:[#allocation2 + $0x110] sm:$0xff]
    %v269 = vld [vmem:[#allocation2 + $0x118] sm:$0xff]
    %v270 = vld [vmem:[#allocation2 + $0x120] sm:$0xff]
    %v271 = vld [vmem:[#allocation2 + $0x128] sm:$0xff]
    %v272 = vld [vmem:[#allocation2 + $0x130] sm:$0xff]
    %v273 = vld [vmem:[#allocation2 + $0x138] sm:$0xff]
    %v274 = vld [vmem:[#allocation2 + $0x140] sm:$0xff]
    %v275 = vld [vmem:[#allocation2 + $0x148] sm:$0xff]
    %v276 = vld [vmem:[#allocation2 + $0x150] sm:$0xff]
    %v277 = vld [vmem:[#allocation2 + $0x158] sm:$0xff]
    %v278 = vld [vmem:[#allocation2 + $0x160] sm:$0xff]
    %v279 = vld [vmem:[#allocation2 + $0x168] sm:$0xff]
    %v280 = vld [vmem:[#allocation2 + $0x170] sm:$0xff]
    %v281 = vld [vmem:[#allocation2 + $0x178] sm:$0xff]
    %v282 = vld [vmem:[#allocation2 + $0x180] sm:$0xff]
    %v283 = vld [vmem:[#allocation2 + $0x188] sm:$0xff]
    %v284 = vld [vmem:[#allocation2 + $0x190] sm:$0xff]
    %v285 = vld [vmem:[#allocation2 + $0x198] sm:$0xff]
    %v286 = vld [vmem:[#allocation2 + $0x1a0] sm:$0xff]
    %v287 = vld [vmem:[#allocation2 + $0x1a8] sm:$0xff]
    %v288 = vld [vmem:[#allocation2 + $0x1b0] sm:$0xff]
    %v289 = vld [vmem:[#allocation2 + $0x1b8] sm:$0xff]
    %v290 = vld [vmem:[#allocation2 + $0x1c0] sm:$0xff]
    %v291 = vld [vmem:[#allocation2 + $0x1c8] sm:$0xff]
    %v292 = vld [vmem:[#allocation2 + $0x1d0] sm:$0xff]
    %v293 = vld [vmem:[#allocation2 + $0x1d8] sm:$0xff]
    %v294 = vld [vmem:[#allocation2 + $0x1e0] sm:$0xff]
    %v295 = vld [vmem:[#allocation2 + $0x1e8] sm:$0xff]
    %v296 = vld [vmem:[#allocation2 + $0x1f0] sm:$0xff]
    %v297 = vld [vmem:[#allocation2 + $0x1f8] sm:$0xff]
    %v298 = vpack.c.bf16 %v236, %v234
    %v299 = vpack.c.bf16 %v237, %v235
    %v300 = vpack.c.bf16 %v240, %v238
    %v301 = vpack.c.bf16 %v241, %v239
    %v302 = vpack.c.bf16 %v244, %v242
    %v303 = vpack.c.bf16 %v245, %v243
    %v304 = vpack.c.bf16 %v248, %v246
    %v305 = vpack.c.bf16 %v249, %v247
    %v306 = vpack.c.bf16 %v252, %v250
    %v307 = vpack.c.bf16 %v253, %v251
    %v308 = vpack.c.bf16 %v256, %v254
    %v309 = vpack.c.bf16 %v257, %v255
    %v310 = vpack.c.bf16 %v260, %v258
    %v311 = vpack.c.bf16 %v261, %v259
    %v312 = vpack.c.bf16 %v264, %v262
    %v313 = vpack.c.bf16 %v265, %v263
    %v314 = vpack.c.bf16 %v268, %v266
    %v315 = vpack.c.bf16 %v269, %v267
    %v316 = vpack.c.bf16 %v272, %v270
    %v317 = vpack.c.bf16 %v273, %v271
    %v318 = vpack.c.bf16 %v276, %v274
    %v319 = vpack.c.bf16 %v277, %v275
    %v320 = vpack.c.bf16 %v280, %v278
    %v321 = vpack.c.bf16 %v281, %v279
    %v322 = vpack.c.bf16 %v284, %v282
    %v323 = vpack.c.bf16 %v285, %v283
    %v324 = vpack.c.bf16 %v288, %v286
    %v325 = vpack.c.bf16 %v289, %v287
    %v326 = vpack.c.bf16 %v292, %v290
    %v327 = vpack.c.bf16 %v293, %v291
    %v328 = vpack.c.bf16 %v296, %v294
    %v329 = vpack.c.bf16 %v297, %v295
    %v330 = vld [vmem:[#allocation5] sm:$0xff]
    %v331 = vld [vmem:[#allocation5 + $0x8] sm:$0xff]
    %v332 = vld [vmem:[#allocation5 + $0x10] sm:$0xff]
    %v333 = vld [vmem:[#allocation5 + $0x18] sm:$0xff]
    %v334 = vld [vmem:[#allocation5 + $0x20] sm:$0xff]
    %v335 = vld [vmem:[#allocation5 + $0x28] sm:$0xff]
    %v336 = vld [vmem:[#allocation5 + $0x30] sm:$0xff]
    %v337 = vld [vmem:[#allocation5 + $0x38] sm:$0xff]
    %v338 = vld [vmem:[#allocation5 + $0x40] sm:$0xff]
    %v339 = vld [vmem:[#allocation5 + $0x48] sm:$0xff]
    %v340 = vld [vmem:[#allocation5 + $0x50] sm:$0xff]
    %v341 = vld [vmem:[#allocation5 + $0x58] sm:$0xff]
    %v342 = vld [vmem:[#allocation5 + $0x60] sm:$0xff]
    %v343 = vld [vmem:[#allocation5 + $0x68] sm:$0xff]
    %v344 = vld [vmem:[#allocation5 + $0x70] sm:$0xff]
    %v345 = vld [vmem:[#allocation5 + $0x78] sm:$0xff]
    %v346 = vld [vmem:[#allocation5 + $0x80] sm:$0xff]
    %v347 = vld [vmem:[#allocation5 + $0x88] sm:$0xff]
    %v348 = vld [vmem:[#allocation5 + $0x90] sm:$0xff]
    %v349 = vld [vmem:[#allocation5 + $0x98] sm:$0xff]
    %v350 = vld [vmem:[#allocation5 + $0xa0] sm:$0xff]
    %v351 = vld [vmem:[#allocation5 + $0xa8] sm:$0xff]
    %v352 = vld [vmem:[#allocation5 + $0xb0] sm:$0xff]
    %v353 = vld [vmem:[#allocation5 + $0xb8] sm:$0xff]
    %v354 = vld [vmem:[#allocation5 + $0xc0] sm:$0xff]
    %v355 = vld [vmem:[#allocation5 + $0xc8] sm:$0xff]
    %v356 = vld [vmem:[#allocation5 + $0xd0] sm:$0xff]
    %v357 = vld [vmem:[#allocation5 + $0xd8] sm:$0xff]
    %v358 = vld [vmem:[#allocation5 + $0xe0] sm:$0xff]
    %v359 = vld [vmem:[#allocation5 + $0xe8] sm:$0xff]
    %v360 = vld [vmem:[#allocation5 + $0xf0] sm:$0xff]
    %v361 = vld [vmem:[#allocation5 + $0xf8] sm:$0xff]
    %v362 = vld [vmem:[#allocation5 + $0x100] sm:$0xff]
    %v363 = vld [vmem:[#allocation5 + $0x108] sm:$0xff]
    %v364 = vld [vmem:[#allocation5 + $0x110] sm:$0xff]
    %v365 = vld [vmem:[#allocation5 + $0x118] sm:$0xff]
    %v366 = vld [vmem:[#allocation5 + $0x120] sm:$0xff]
    %v367 = vld [vmem:[#allocation5 + $0x128] sm:$0xff]
    %v368 = vld [vmem:[#allocation5 + $0x130] sm:$0xff]
    %v369 = vld [vmem:[#allocation5 + $0x138] sm:$0xff]
    %v370 = vld [vmem:[#allocation5 + $0x140] sm:$0xff]
    %v371 = vld [vmem:[#allocation5 + $0x148] sm:$0xff]
    %v372 = vld [vmem:[#allocation5 + $0x150] sm:$0xff]
    %v373 = vld [vmem:[#allocation5 + $0x158] sm:$0xff]
    %v374 = vld [vmem:[#allocation5 + $0x160] sm:$0xff]
    %v375 = vld [vmem:[#allocation5 + $0x168] sm:$0xff]
    %v376 = vld [vmem:[#allocation5 + $0x170] sm:$0xff]
    %v377 = vld [vmem:[#allocation5 + $0x178] sm:$0xff]
    %v378 = vld [vmem:[#allocation5 + $0x180] sm:$0xff]
    %v379 = vld [vmem:[#allocation5 + $0x188] sm:$0xff]
    %v380 = vld [vmem:[#allocation5 + $0x190] sm:$0xff]
    %v381 = vld [vmem:[#allocation5 + $0x198] sm:$0xff]
    %v382 = vld [vmem:[#allocation5 + $0x1a0] sm:$0xff]
    %v383 = vld [vmem:[#allocation5 + $0x1a8] sm:$0xff]
    %v384 = vld [vmem:[#allocation5 + $0x1b0] sm:$0xff]
    %v385 = vld [vmem:[#allocation5 + $0x1b8] sm:$0xff]
    %v386 = vld [vmem:[#allocation5 + $0x1c0] sm:$0xff]
    %v387 = vld [vmem:[#allocation5 + $0x1c8] sm:$0xff]
    %v388 = vld [vmem:[#allocation5 + $0x1d0] sm:$0xff]
    %v389 = vld [vmem:[#allocation5 + $0x1d8] sm:$0xff]
    %v390 = vld [vmem:[#allocation5 + $0x1e0] sm:$0xff]
    %v391 = vld [vmem:[#allocation5 + $0x1e8] sm:$0xff]
    %v392 = vld [vmem:[#allocation5 + $0x1f0] sm:$0xff]
    %v393 = vld [vmem:[#allocation5 + $0x1f8] sm:$0xff]
    %v458 = vunpack.c.l.b16 %v330
    %v459 = vunpack.c.h.b16 %v330
    %v460 = vunpack.c.l.b16 %v331
    %v461 = vunpack.c.h.b16 %v331
    %v462 = vunpack.c.l.b16 %v332
    %v463 = vunpack.c.h.b16 %v332
    %v464 = vunpack.c.l.b16 %v333
    %v465 = vunpack.c.h.b16 %v333
    %v466 = vunpack.c.l.b16 %v334
    %v467 = vunpack.c.h.b16 %v334
    %v468 = vunpack.c.l.b16 %v335
    %v469 = vunpack.c.h.b16 %v335
    %v470 = vunpack.c.l.b16 %v336
    %v471 = vunpack.c.h.b16 %v336
    %v472 = vunpack.c.l.b16 %v337
    %v473 = vunpack.c.h.b16 %v337
    %v474 = vunpack.c.l.b16 %v338
    %v475 = vunpack.c.h.b16 %v338
    %v476 = vunpack.c.l.b16 %v339
    %v477 = vunpack.c.h.b16 %v339
    %v478 = vunpack.c.l.b16 %v340
    %v479 = vunpack.c.h.b16 %v340
    %v480 = vunpack.c.l.b16 %v341
    %v481 = vunpack.c.h.b16 %v341
    %v482 = vunpack.c.l.b16 %v342
    %v483 = vunpack.c.h.b16 %v342
    %v484 = vunpack.c.l.b16 %v343
    %v485 = vunpack.c.h.b16 %v343
    %v486 = vunpack.c.l.b16 %v344
    %v487 = vunpack.c.h.b16 %v344
    %v488 = vunpack.c.l.b16 %v345
    %v489 = vunpack.c.h.b16 %v345
    %v490 = vunpack.c.l.b16 %v346
    %v491 = vunpack.c.h.b16 %v346
    %v492 = vunpack.c.l.b16 %v347
    %v493 = vunpack.c.h.b16 %v347
    %v494 = vunpack.c.l.b16 %v348
    %v495 = vunpack.c.h.b16 %v348
    %v496 = vunpack.c.l.b16 %v349
    %v497 = vunpack.c.h.b16 %v349
    %v498 = vunpack.c.l.b16 %v350
    %v499 = vunpack.c.h.b16 %v350
    %v500 = vunpack.c.l.b16 %v351
    %v501 = vunpack.c.h.b16 %v351
    %v502 = vunpack.c.l.b16 %v352
    %v503 = vunpack.c.h.b16 %v352
    %v504 = vunpack.c.l.b16 %v353
    %v505 = vunpack.c.h.b16 %v353
    %v506 = vunpack.c.l.b16 %v354
    %v507 = vunpack.c.h.b16 %v354
    %v508 = vunpack.c.l.b16 %v355
    %v509 = vunpack.c.h.b16 %v355
    %v510 = vunpack.c.l.b16 %v356
    %v511 = vunpack.c.h.b16 %v356
    %v512 = vunpack.c.l.b16 %v357
    %v513 = vunpack.c.h.b16 %v357
    %v514 = vunpack.c.l.b16 %v358
    %v515 = vunpack.c.h.b16 %v358
    %v516 = vunpack.c.l.b16 %v359
    %v517 = vunpack.c.h.b16 %v359
    %v518 = vunpack.c.l.b16 %v360
    %v519 = vunpack.c.h.b16 %v360
    %v520 = vunpack.c.l.b16 %v361
    %v521 = vunpack.c.h.b16 %v361
    %v522 = vunpack.c.l.b16 %v362
    %v523 = vunpack.c.h.b16 %v362
    %v524 = vunpack.c.l.b16 %v363
    %v525 = vunpack.c.h.b16 %v363
    %v526 = vunpack.c.l.b16 %v364
    %v527 = vunpack.c.h.b16 %v364
    %v528 = vunpack.c.l.b16 %v365
    %v529 = vunpack.c.h.b16 %v365
    %v530 = vunpack.c.l.b16 %v366
    %v531 = vunpack.c.h.b16 %v366
    %v532 = vunpack.c.l.b16 %v367
    %v533 = vunpack.c.h.b16 %v367
    %v534 = vunpack.c.l.b16 %v368
    %v535 = vunpack.c.h.b16 %v368
    %v536 = vunpack.c.l.b16 %v369
    %v537 = vunpack.c.h.b16 %v369
    %v538 = vunpack.c.l.b16 %v370
    %v539 = vunpack.c.h.b16 %v370
    %v540 = vunpack.c.l.b16 %v371
    %v541 = vunpack.c.h.b16 %v371
    %v542 = vunpack.c.l.b16 %v372
    %v543 = vunpack.c.h.b16 %v372
    %v544 = vunpack.c.l.b16 %v373
    %v545 = vunpack.c.h.b16 %v373
    %v546 = vunpack.c.l.b16 %v374
    %v547 = vunpack.c.h.b16 %v374
    %v548 = vunpack.c.l.b16 %v375
    %v549 = vunpack.c.h.b16 %v375
    %v550 = vunpack.c.l.b16 %v376
    %v551 = vunpack.c.h.b16 %v376
    %v552 = vunpack.c.l.b16 %v377
    %v553 = vunpack.c.h.b16 %v377
    %v554 = vunpack.c.l.b16 %v378
    %v555 = vunpack.c.h.b16 %v378
    %v556 = vunpack.c.l.b16 %v379
    %v557 = vunpack.c.h.b16 %v379
    %v558 = vunpack.c.l.b16 %v380
    %v559 = vunpack.c.h.b16 %v380
    %v560 = vunpack.c.l.b16 %v381
    %v561 = vunpack.c.h.b16 %v381
    %v562 = vunpack.c.l.b16 %v382
    %v563 = vunpack.c.h.b16 %v382
    %v564 = vunpack.c.l.b16 %v383
    %v565 = vunpack.c.h.b16 %v383
    %v566 = vunpack.c.l.b16 %v384
    %v567 = vunpack.c.h.b16 %v384
    %v568 = vunpack.c.l.b16 %v385
    %v569 = vunpack.c.h.b16 %v385
    %v570 = vunpack.c.l.b16 %v386
    %v571 = vunpack.c.h.b16 %v386
    %v572 = vunpack.c.l.b16 %v387
    %v573 = vunpack.c.h.b16 %v387
    %v574 = vunpack.c.l.b16 %v388
    %v575 = vunpack.c.h.b16 %v388
    %v576 = vunpack.c.l.b16 %v389
    %v577 = vunpack.c.h.b16 %v389
    %v578 = vunpack.c.l.b16 %v390
    %v579 = vunpack.c.h.b16 %v390
    %v580 = vunpack.c.l.b16 %v391
    %v581 = vunpack.c.h.b16 %v391
    %v582 = vunpack.c.l.b16 %v392
    %v583 = vunpack.c.h.b16 %v392
    %v584 = vunpack.c.l.b16 %v393
    %v585 = vunpack.c.h.b16 %v393
    %v586 = vpack.c.b16 %v462, %v458
    %v587 = vpack.c.b16 %v463, %v459
    %v588 = vpack.c.b16 %v464, %v460
    %v589 = vpack.c.b16 %v465, %v461
    %v590 = vpack.c.b16 %v470, %v466
    %v591 = vpack.c.b16 %v471, %v467
    %v592 = vpack.c.b16 %v472, %v468
    %v593 = vpack.c.b16 %v473, %v469
    %v594 = vpack.c.b16 %v478, %v474
    %v595 = vpack.c.b16 %v479, %v475
    %v596 = vpack.c.b16 %v480, %v476
    %v597 = vpack.c.b16 %v481, %v477
    %v598 = vpack.c.b16 %v486, %v482
    %v599 = vpack.c.b16 %v487, %v483
    %v600 = vpack.c.b16 %v488, %v484
    %v601 = vpack.c.b16 %v489, %v485
    %v602 = vpack.c.b16 %v494, %v490
    %v603 = vpack.c.b16 %v495, %v491
    %v604 = vpack.c.b16 %v496, %v492
    %v605 = vpack.c.b16 %v497, %v493
    %v606 = vpack.c.b16 %v502, %v498
    %v607 = vpack.c.b16 %v503, %v499
    %v608 = vpack.c.b16 %v504, %v500
    %v609 = vpack.c.b16 %v505, %v501
    %v610 = vpack.c.b16 %v510, %v506
    %v611 = vpack.c.b16 %v511, %v507
    %v612 = vpack.c.b16 %v512, %v508
    %v613 = vpack.c.b16 %v513, %v509
    %v614 = vpack.c.b16 %v518, %v514
    %v615 = vpack.c.b16 %v519, %v515
    %v616 = vpack.c.b16 %v520, %v516
    %v617 = vpack.c.b16 %v521, %v517
    %v618 = vpack.c.b16 %v526, %v522
    %v619 = vpack.c.b16 %v527, %v523
    %v620 = vpack.c.b16 %v528, %v524
    %v621 = vpack.c.b16 %v529, %v525
    %v622 = vpack.c.b16 %v534, %v530
    %v623 = vpack.c.b16 %v535, %v531
    %v624 = vpack.c.b16 %v536, %v532
    %v625 = vpack.c.b16 %v537, %v533
    %v626 = vpack.c.b16 %v542, %v538
    %v627 = vpack.c.b16 %v543, %v539
    %v628 = vpack.c.b16 %v544, %v540
    %v629 = vpack.c.b16 %v545, %v541
    %v630 = vpack.c.b16 %v550, %v546
    %v631 = vpack.c.b16 %v551, %v547
    %v632 = vpack.c.b16 %v552, %v548
    %v633 = vpack.c.b16 %v553, %v549
    %v634 = vpack.c.b16 %v558, %v554
    %v635 = vpack.c.b16 %v559, %v555
    %v636 = vpack.c.b16 %v560, %v556
    %v637 = vpack.c.b16 %v561, %v557
    %v638 = vpack.c.b16 %v566, %v562
    %v639 = vpack.c.b16 %v567, %v563
    %v640 = vpack.c.b16 %v568, %v564
    %v641 = vpack.c.b16 %v569, %v565
    %v642 = vpack.c.b16 %v574, %v570
    %v643 = vpack.c.b16 %v575, %v571
    %v644 = vpack.c.b16 %v576, %v572
    %v645 = vpack.c.b16 %v577, %v573
    %v646 = vpack.c.b16 %v582, %v578
    %v647 = vpack.c.b16 %v583, %v579
    %v648 = vpack.c.b16 %v584, %v580
    %v649 = vpack.c.b16 %v585, %v581
    %714 = vmatpush.bf16.msra.mxu0 %v614
    %715 = vmatpush.bf16.msra.mxu0 %v610
    %716 = vmatpush.bf16.msra.mxu0 %v606
    %717 = vmatpush.bf16.msra.mxu0 %v602
    %718 = vmatpush.bf16.msra.mxu0 %v598
    %719 = vmatpush.bf16.msra.mxu0 %v594
    %720 = vmatpush.bf16.msra.mxu0 %v590
    %721 = vmatpush.bf16.msra.mxu0 %v586
    %722 = vmatmul.bf16.gmra.mxu0 %v298
    %v723 = vpop.f32.mrf.mxu0
    %v724 = vadd.f32 0.0, %v723
    %v725 = vpop.f32.mrf.mxu0
    %v726 = vadd.f32 0.0, %v725
    %727 = vmatmul.bf16.gmra.mxu0 %v300
    %v728 = vpop.f32.mrf.mxu0
    %v729 = vadd.f32 0.0, %v728
    %v730 = vpop.f32.mrf.mxu0
    %v731 = vadd.f32 0.0, %v730
    %732 = vmatmul.bf16.gmra.mxu0 %v302
    %v733 = vpop.f32.mrf.mxu0
    %v734 = vadd.f32 0.0, %v733
    %v735 = vpop.f32.mrf.mxu0
    %v736 = vadd.f32 0.0, %v735
    %737 = vmatmul.bf16.gmra.mxu0 %v304
    %v738 = vpop.f32.mrf.mxu0
    %v739 = vadd.f32 0.0, %v738
    %v740 = vpop.f32.mrf.mxu0
    %v741 = vadd.f32 0.0, %v740
    %742 = vmatmul.bf16.gmra.mxu0 %v306
    %v743 = vpop.f32.mrf.mxu0
    %v744 = vadd.f32 0.0, %v743
    %v745 = vpop.f32.mrf.mxu0
    %v746 = vadd.f32 0.0, %v745
    %747 = vmatmul.bf16.gmra.mxu0 %v308
    %v748 = vpop.f32.mrf.mxu0
    %v749 = vadd.f32 0.0, %v748
    %v750 = vpop.f32.mrf.mxu0
    %v751 = vadd.f32 0.0, %v750
    %752 = vmatmul.bf16.gmra.mxu0 %v310
    %v753 = vpop.f32.mrf.mxu0
    %v754 = vadd.f32 0.0, %v753
    %v755 = vpop.f32.mrf.mxu0
    %v756 = vadd.f32 0.0, %v755
    %757 = vmatmul.bf16.gmra.mxu0 %v312
    %v758 = vpop.f32.mrf.mxu0
    %v759 = vadd.f32 0.0, %v758
    %v760 = vpop.f32.mrf.mxu0
    %v761 = vadd.f32 0.0, %v760
    %762 = vmatmul.bf16.gmra.mxu0 %v314
    %v763 = vpop.f32.mrf.mxu0
    %v764 = vadd.f32 0.0, %v763
    %v765 = vpop.f32.mrf.mxu0
    %v766 = vadd.f32 0.0, %v765
    %767 = vmatmul.bf16.gmra.mxu0 %v316
    %v768 = vpop.f32.mrf.mxu0
    %v769 = vadd.f32 0.0, %v768
    %v770 = vpop.f32.mrf.mxu0
    %v771 = vadd.f32 0.0, %v770
    %772 = vmatmul.bf16.gmra.mxu0 %v318
    %v773 = vpop.f32.mrf.mxu0
    %v774 = vadd.f32 0.0, %v773
    %v775 = vpop.f32.mrf.mxu0
    %v776 = vadd.f32 0.0, %v775
    %777 = vmatmul.bf16.gmra.mxu0 %v320
    %v778 = vpop.f32.mrf.mxu0
    %v779 = vadd.f32 0.0, %v778
    %v780 = vpop.f32.mrf.mxu0
    %v781 = vadd.f32 0.0, %v780
    %782 = vmatmul.bf16.gmra.mxu0 %v322
    %v783 = vpop.f32.mrf.mxu0
    %v784 = vadd.f32 0.0, %v783
    %v785 = vpop.f32.mrf.mxu0
    %v786 = vadd.f32 0.0, %v785
    %787 = vmatmul.bf16.gmra.mxu0 %v324
    %v788 = vpop.f32.mrf.mxu0
    %v789 = vadd.f32 0.0, %v788
    %v790 = vpop.f32.mrf.mxu0
    %v791 = vadd.f32 0.0, %v790
    %792 = vmatmul.bf16.gmra.mxu0 %v326
    %v793 = vpop.f32.mrf.mxu0
    %v794 = vadd.f32 0.0, %v793
    %v795 = vpop.f32.mrf.mxu0
    %v796 = vadd.f32 0.0, %v795
    %797 = vmatmul.bf16.gmra.mxu0 %v328
    %v798 = vpop.f32.mrf.mxu0
    %v799 = vadd.f32 0.0, %v798
    %v800 = vpop.f32.mrf.mxu0
    %v801 = vadd.f32 0.0, %v800
    %802 = vdwg.mxu0
    %803 = vmatpush.bf16.msra.mxu0 %v646
    %804 = vmatpush.bf16.msra.mxu0 %v642
    %805 = vmatpush.bf16.msra.mxu0 %v638
    %806 = vmatpush.bf16.msra.mxu0 %v634
    %807 = vmatpush.bf16.msra.mxu0 %v630
    %808 = vmatpush.bf16.msra.mxu0 %v626
    %809 = vmatpush.bf16.msra.mxu0 %v622
    %810 = vmatpush.bf16.msra.mxu0 %v618
    %811 = vmatmul.bf16.gmra.mxu0 %v299
    %v812 = vpop.f32.mrf.mxu0
    %v813 = vadd.f32 %v724, %v812
    %v814 = vpop.f32.mrf.mxu0
    %v815 = vadd.f32 %v726, %v814
    %816 = vmatmul.bf16.gmra.mxu0 %v301
    %v817 = vpop.f32.mrf.mxu0
    %v818 = vadd.f32 %v729, %v817
    %v819 = vpop.f32.mrf.mxu0
    %v820 = vadd.f32 %v731, %v819
    %821 = vmatmul.bf16.gmra.mxu0 %v303
    %v822 = vpop.f32.mrf.mxu0
    %v823 = vadd.f32 %v734, %v822
    %v824 = vpop.f32.mrf.mxu0
    %v825 = vadd.f32 %v736, %v824
    %826 = vmatmul.bf16.gmra.mxu0 %v305
    %v827 = vpop.f32.mrf.mxu0
    %v828 = vadd.f32 %v739, %v827
    %v829 = vpop.f32.mrf.mxu0
    %v830 = vadd.f32 %v741, %v829
    %831 = vmatmul.bf16.gmra.mxu0 %v307
    %v832 = vpop.f32.mrf.mxu0
    %v833 = vadd.f32 %v744, %v832
    %v834 = vpop.f32.mrf.mxu0
    %v835 = vadd.f32 %v746, %v834
    %836 = vmatmul.bf16.gmra.mxu0 %v309
    %v837 = vpop.f32.mrf.mxu0
    %v838 = vadd.f32 %v749, %v837
    %v839 = vpop.f32.mrf.mxu0
    %v840 = vadd.f32 %v751, %v839
    %841 = vmatmul.bf16.gmra.mxu0 %v311
    %v842 = vpop.f32.mrf.mxu0
    %v843 = vadd.f32 %v754, %v842
    %v844 = vpop.f32.mrf.mxu0
    %v845 = vadd.f32 %v756, %v844
    %846 = vmatmul.bf16.gmra.mxu0 %v313
    %v847 = vpop.f32.mrf.mxu0
    %v848 = vadd.f32 %v759, %v847
    %v849 = vpop.f32.mrf.mxu0
    %v850 = vadd.f32 %v761, %v849
    %851 = vmatmul.bf16.gmra.mxu0 %v315
    %v852 = vpop.f32.mrf.mxu0
    %v853 = vadd.f32 %v764, %v852
    %v854 = vpop.f32.mrf.mxu0
    %v855 = vadd.f32 %v766, %v854
    %856 = vmatmul.bf16.gmra.mxu0 %v317
    %v857 = vpop.f32.mrf.mxu0
    %v858 = vadd.f32 %v769, %v857
    %v859 = vpop.f32.mrf.mxu0
    %v860 = vadd.f32 %v771, %v859
    %861 = vmatmul.bf16.gmra.mxu0 %v319
    %v862 = vpop.f32.mrf.mxu0
    %v863 = vadd.f32 %v774, %v862
    %v864 = vpop.f32.mrf.mxu0
    %v865 = vadd.f32 %v776, %v864
    %866 = vmatmul.bf16.gmra.mxu0 %v321
    %v867 = vpop.f32.mrf.mxu0
    %v868 = vadd.f32 %v779, %v867
    %v869 = vpop.f32.mrf.mxu0
    %v870 = vadd.f32 %v781, %v869
    %871 = vmatmul.bf16.gmra.mxu0 %v323
    %v872 = vpop.f32.mrf.mxu0
    %v873 = vadd.f32 %v784, %v872
    %v874 = vpop.f32.mrf.mxu0
    %v875 = vadd.f32 %v786, %v874
    %876 = vmatmul.bf16.gmra.mxu0 %v325
    %v877 = vpop.f32.mrf.mxu0
    %v878 = vadd.f32 %v789, %v877
    %v879 = vpop.f32.mrf.mxu0
    %v880 = vadd.f32 %v791, %v879
    %881 = vmatmul.bf16.gmra.mxu0 %v327
    %v882 = vpop.f32.mrf.mxu0
    %v883 = vadd.f32 %v794, %v882
    %v884 = vpop.f32.mrf.mxu0
    %v885 = vadd.f32 %v796, %v884
    %886 = vmatmul.bf16.gmra.mxu0 %v329
    %v887 = vpop.f32.mrf.mxu0
    %v888 = vadd.f32 %v799, %v887
    %v889 = vpop.f32.mrf.mxu0
    %v890 = vadd.f32 %v801, %v889
    %891 = vdwg.mxu0
    %892 = vmatpush.bf16.msra.mxu0 %v615
    %893 = vmatpush.bf16.msra.mxu0 %v611
    %894 = vmatpush.bf16.msra.mxu0 %v607
    %895 = vmatpush.bf16.msra.mxu0 %v603
    %896 = vmatpush.bf16.msra.mxu0 %v599
    %897 = vmatpush.bf16.msra.mxu0 %v595
    %898 = vmatpush.bf16.msra.mxu0 %v591
    %899 = vmatpush.bf16.msra.mxu0 %v587
    %900 = vmatmul.bf16.gmra.mxu0 %v298
    %v901 = vpop.f32.mrf.mxu0
    %v902 = vadd.f32 0.0, %v901
    %v903 = vpop.f32.mrf.mxu0
    %v904 = vadd.f32 0.0, %v903
    %905 = vmatmul.bf16.gmra.mxu0 %v300
    %v906 = vpop.f32.mrf.mxu0
    %v907 = vadd.f32 0.0, %v906
    %v908 = vpop.f32.mrf.mxu0
    %v909 = vadd.f32 0.0, %v908
    %910 = vmatmul.bf16.gmra.mxu0 %v302
    %v911 = vpop.f32.mrf.mxu0
    %v912 = vadd.f32 0.0, %v911
    %v913 = vpop.f32.mrf.mxu0
    %v914 = vadd.f32 0.0, %v913
    %915 = vmatmul.bf16.gmra.mxu0 %v304
    %v916 = vpop.f32.mrf.mxu0
    %v917 = vadd.f32 0.0, %v916
    %v918 = vpop.f32.mrf.mxu0
    %v919 = vadd.f32 0.0, %v918
    %920 = vmatmul.bf16.gmra.mxu0 %v306
    %v921 = vpop.f32.mrf.mxu0
    %v922 = vadd.f32 0.0, %v921
    %v923 = vpop.f32.mrf.mxu0
    %v924 = vadd.f32 0.0, %v923
    %925 = vmatmul.bf16.gmra.mxu0 %v308
    %v926 = vpop.f32.mrf.mxu0
    %v927 = vadd.f32 0.0, %v926
    %v928 = vpop.f32.mrf.mxu0
    %v929 = vadd.f32 0.0, %v928
    %930 = vmatmul.bf16.gmra.mxu0 %v310
    %v931 = vpop.f32.mrf.mxu0
    %v932 = vadd.f32 0.0, %v931
    %v933 = vpop.f32.mrf.mxu0
    %v934 = vadd.f32 0.0, %v933
    %935 = vmatmul.bf16.gmra.mxu0 %v312
    %v936 = vpop.f32.mrf.mxu0
    %v937 = vadd.f32 0.0, %v936
    %v938 = vpop.f32.mrf.mxu0
    %v939 = vadd.f32 0.0, %v938
    %940 = vmatmul.bf16.gmra.mxu0 %v314
    %v941 = vpop.f32.mrf.mxu0
    %v942 = vadd.f32 0.0, %v941
    %v943 = vpop.f32.mrf.mxu0
    %v944 = vadd.f32 0.0, %v943
    %945 = vmatmul.bf16.gmra.mxu0 %v316
    %v946 = vpop.f32.mrf.mxu0
    %v947 = vadd.f32 0.0, %v946
    %v948 = vpop.f32.mrf.mxu0
    %v949 = vadd.f32 0.0, %v948
    %950 = vmatmul.bf16.gmra.mxu0 %v318
    %v951 = vpop.f32.mrf.mxu0
    %v952 = vadd.f32 0.0, %v951
    %v953 = vpop.f32.mrf.mxu0
    %v954 = vadd.f32 0.0, %v953
    %955 = vmatmul.bf16.gmra.mxu0 %v320
    %v956 = vpop.f32.mrf.mxu0
    %v957 = vadd.f32 0.0, %v956
    %v958 = vpop.f32.mrf.mxu0
    %v959 = vadd.f32 0.0, %v958
    %960 = vmatmul.bf16.gmra.mxu0 %v322
    %v961 = vpop.f32.mrf.mxu0
    %v962 = vadd.f32 0.0, %v961
    %v963 = vpop.f32.mrf.mxu0
    %v964 = vadd.f32 0.0, %v963
    %965 = vmatmul.bf16.gmra.mxu0 %v324
    %v966 = vpop.f32.mrf.mxu0
    %v967 = vadd.f32 0.0, %v966
    %v968 = vpop.f32.mrf.mxu0
    %v969 = vadd.f32 0.0, %v968
    %970 = vmatmul.bf16.gmra.mxu0 %v326
    %v971 = vpop.f32.mrf.mxu0
    %v972 = vadd.f32 0.0, %v971
    %v973 = vpop.f32.mrf.mxu0
    %v974 = vadd.f32 0.0, %v973
    %975 = vmatmul.bf16.gmra.mxu0 %v328
    %v976 = vpop.f32.mrf.mxu0
    %v977 = vadd.f32 0.0, %v976
    %v978 = vpop.f32.mrf.mxu0
    %v979 = vadd.f32 0.0, %v978
    %980 = vdwg.mxu0
    %981 = vmatpush.bf16.msra.mxu0 %v647
    %982 = vmatpush.bf16.msra.mxu0 %v643
    %983 = vmatpush.bf16.msra.mxu0 %v639
    %984 = vmatpush.bf16.msra.mxu0 %v635
    %985 = vmatpush.bf16.msra.mxu0 %v631
    %986 = vmatpush.bf16.msra.mxu0 %v627
    %987 = vmatpush.bf16.msra.mxu0 %v623
    %988 = vmatpush.bf16.msra.mxu0 %v619
    %989 = vmatmul.bf16.gmra.mxu0 %v299
    %v990 = vpop.f32.mrf.mxu0
    %v991 = vadd.f32 %v902, %v990
    %v992 = vpop.f32.mrf.mxu0
    %v993 = vadd.f32 %v904, %v992
    %994 = vmatmul.bf16.gmra.mxu0 %v301
    %v995 = vpop.f32.mrf.mxu0
    %v996 = vadd.f32 %v907, %v995
    %v997 = vpop.f32.mrf.mxu0
    %v998 = vadd.f32 %v909, %v997
    %999 = vmatmul.bf16.gmra.mxu0 %v303
    %v1000 = vpop.f32.mrf.mxu0
    %v1001 = vadd.f32 %v912, %v1000
    %v1002 = vpop.f32.mrf.mxu0
    %v1003 = vadd.f32 %v914, %v1002
    %1004 = vmatmul.bf16.gmra.mxu0 %v305
    %v1005 = vpop.f32.mrf.mxu0
    %v1006 = vadd.f32 %v917, %v1005
    %v1007 = vpop.f32.mrf.mxu0
    %v1008 = vadd.f32 %v919, %v1007
    %1009 = vmatmul.bf16.gmra.mxu0 %v307
    %v1010 = vpop.f32.mrf.mxu0
    %v1011 = vadd.f32 %v922, %v1010
    %v1012 = vpop.f32.mrf.mxu0
    %v1013 = vadd.f32 %v924, %v1012
    %1014 = vmatmul.bf16.gmra.mxu0 %v309
    %v1015 = vpop.f32.mrf.mxu0
    %v1016 = vadd.f32 %v927, %v1015
    %v1017 = vpop.f32.mrf.mxu0
    %v1018 = vadd.f32 %v929, %v1017
    %1019 = vmatmul.bf16.gmra.mxu0 %v311
    %v1020 = vpop.f32.mrf.mxu0
    %v1021 = vadd.f32 %v932, %v1020
    %v1022 = vpop.f32.mrf.mxu0
    %v1023 = vadd.f32 %v934, %v1022
    %1024 = vmatmul.bf16.gmra.mxu0 %v313
    %v1025 = vpop.f32.mrf.mxu0
    %v1026 = vadd.f32 %v937, %v1025
    %v1027 = vpop.f32.mrf.mxu0
    %v1028 = vadd.f32 %v939, %v1027
    %1029 = vmatmul.bf16.gmra.mxu0 %v315
    %v1030 = vpop.f32.mrf.mxu0
    %v1031 = vadd.f32 %v942, %v1030
    %v1032 = vpop.f32.mrf.mxu0
    %v1033 = vadd.f32 %v944, %v1032
    %1034 = vmatmul.bf16.gmra.mxu0 %v317
    %v1035 = vpop.f32.mrf.mxu0
    %v1036 = vadd.f32 %v947, %v1035
    %v1037 = vpop.f32.mrf.mxu0
    %v1038 = vadd.f32 %v949, %v1037
    %1039 = vmatmul.bf16.gmra.mxu0 %v319
    %v1040 = vpop.f32.mrf.mxu0
    %v1041 = vadd.f32 %v952, %v1040
    %v1042 = vpop.f32.mrf.mxu0
    %v1043 = vadd.f32 %v954, %v1042
    %1044 = vmatmul.bf16.gmra.mxu0 %v321
    %v1045 = vpop.f32.mrf.mxu0
    %v1046 = vadd.f32 %v957, %v1045
    %v1047 = vpop.f32.mrf.mxu0
    %v1048 = vadd.f32 %v959, %v1047
    %1049 = vmatmul.bf16.gmra.mxu0 %v323
    %v1050 = vpop.f32.mrf.mxu0
    %v1051 = vadd.f32 %v962, %v1050
    %v1052 = vpop.f32.mrf.mxu0
    %v1053 = vadd.f32 %v964, %v1052
    %1054 = vmatmul.bf16.gmra.mxu0 %v325
    %v1055 = vpop.f32.mrf.mxu0
    %v1056 = vadd.f32 %v967, %v1055
    %v1057 = vpop.f32.mrf.mxu0
    %v1058 = vadd.f32 %v969, %v1057
    %1059 = vmatmul.bf16.gmra.mxu0 %v327
    %v1060 = vpop.f32.mrf.mxu0
    %v1061 = vadd.f32 %v972, %v1060
    %v1062 = vpop.f32.mrf.mxu0
    %v1063 = vadd.f32 %v974, %v1062
    %1064 = vmatmul.bf16.gmra.mxu0 %v329
    %v1065 = vpop.f32.mrf.mxu0
    %v1066 = vadd.f32 %v977, %v1065
    %v1067 = vpop.f32.mrf.mxu0
    %v1068 = vadd.f32 %v979, %v1067
    %1069 = vdwg.mxu0
    %1070 = vmatpush.bf16.msra.mxu0 %v616
    %1071 = vmatpush.bf16.msra.mxu0 %v612
    %1072 = vmatpush.bf16.msra.mxu0 %v608
    %1073 = vmatpush.bf16.msra.mxu0 %v604
    %1074 = vmatpush.bf16.msra.mxu0 %v600
    %1075 = vmatpush.bf16.msra.mxu0 %v596
    %1076 = vmatpush.bf16.msra.mxu0 %v592
    %1077 = vmatpush.bf16.msra.mxu0 %v588
    %1078 = vmatmul.bf16.gmra.mxu0 %v298
    %v1079 = vpop.f32.mrf.mxu0
    %v1080 = vadd.f32 0.0, %v1079
    %v1081 = vpop.f32.mrf.mxu0
    %v1082 = vadd.f32 0.0, %v1081
    %1083 = vmatmul.bf16.gmra.mxu0 %v300
    %v1084 = vpop.f32.mrf.mxu0
    %v1085 = vadd.f32 0.0, %v1084
    %v1086 = vpop.f32.mrf.mxu0
    %v1087 = vadd.f32 0.0, %v1086
    %1088 = vmatmul.bf16.gmra.mxu0 %v302
    %v1089 = vpop.f32.mrf.mxu0
    %v1090 = vadd.f32 0.0, %v1089
    %v1091 = vpop.f32.mrf.mxu0
    %v1092 = vadd.f32 0.0, %v1091
    %1093 = vmatmul.bf16.gmra.mxu0 %v304
    %v1094 = vpop.f32.mrf.mxu0
    %v1095 = vadd.f32 0.0, %v1094
    %v1096 = vpop.f32.mrf.mxu0
    %v1097 = vadd.f32 0.0, %v1096
    %1098 = vmatmul.bf16.gmra.mxu0 %v306
    %v1099 = vpop.f32.mrf.mxu0
    %v1100 = vadd.f32 0.0, %v1099
    %v1101 = vpop.f32.mrf.mxu0
    %v1102 = vadd.f32 0.0, %v1101
    %1103 = vmatmul.bf16.gmra.mxu0 %v308
    %v1104 = vpop.f32.mrf.mxu0
    %v1105 = vadd.f32 0.0, %v1104
    %v1106 = vpop.f32.mrf.mxu0
    %v1107 = vadd.f32 0.0, %v1106
    %1108 = vmatmul.bf16.gmra.mxu0 %v310
    %v1109 = vpop.f32.mrf.mxu0
    %v1110 = vadd.f32 0.0, %v1109
    %v1111 = vpop.f32.mrf.mxu0
    %v1112 = vadd.f32 0.0, %v1111
    %1113 = vmatmul.bf16.gmra.mxu0 %v312
    %v1114 = vpop.f32.mrf.mxu0
    %v1115 = vadd.f32 0.0, %v1114
    %v1116 = vpop.f32.mrf.mxu0
    %v1117 = vadd.f32 0.0, %v1116
    %1118 = vmatmul.bf16.gmra.mxu0 %v314
    %v1119 = vpop.f32.mrf.mxu0
    %v1120 = vadd.f32 0.0, %v1119
    %v1121 = vpop.f32.mrf.mxu0
    %v1122 = vadd.f32 0.0, %v1121
    %1123 = vmatmul.bf16.gmra.mxu0 %v316
    %v1124 = vpop.f32.mrf.mxu0
    %v1125 = vadd.f32 0.0, %v1124
    %v1126 = vpop.f32.mrf.mxu0
    %v1127 = vadd.f32 0.0, %v1126
    %1128 = vmatmul.bf16.gmra.mxu0 %v318
    %v1129 = vpop.f32.mrf.mxu0
    %v1130 = vadd.f32 0.0, %v1129
    %v1131 = vpop.f32.mrf.mxu0
    %v1132 = vadd.f32 0.0, %v1131
    %1133 = vmatmul.bf16.gmra.mxu0 %v320
    %v1134 = vpop.f32.mrf.mxu0
    %v1135 = vadd.f32 0.0, %v1134
    %v1136 = vpop.f32.mrf.mxu0
    %v1137 = vadd.f32 0.0, %v1136
    %1138 = vmatmul.bf16.gmra.mxu0 %v322
    %v1139 = vpop.f32.mrf.mxu0
    %v1140 = vadd.f32 0.0, %v1139
    %v1141 = vpop.f32.mrf.mxu0
    %v1142 = vadd.f32 0.0, %v1141
    %1143 = vmatmul.bf16.gmra.mxu0 %v324
    %v1144 = vpop.f32.mrf.mxu0
    %v1145 = vadd.f32 0.0, %v1144
    %v1146 = vpop.f32.mrf.mxu0
    %v1147 = vadd.f32 0.0, %v1146
    %1148 = vmatmul.bf16.gmra.mxu0 %v326
    %v1149 = vpop.f32.mrf.mxu0
    %v1150 = vadd.f32 0.0, %v1149
    %v1151 = vpop.f32.mrf.mxu0
    %v1152 = vadd.f32 0.0, %v1151
    %1153 = vmatmul.bf16.gmra.mxu0 %v328
    %v1154 = vpop.f32.mrf.mxu0
    %v1155 = vadd.f32 0.0, %v1154
    %v1156 = vpop.f32.mrf.mxu0
    %v1157 = vadd.f32 0.0, %v1156
    %1158 = vdwg.mxu0
    %1159 = vmatpush.bf16.msra.mxu0 %v648
    %1160 = vmatpush.bf16.msra.mxu0 %v644
    %1161 = vmatpush.bf16.msra.mxu0 %v640
    %1162 = vmatpush.bf16.msra.mxu0 %v636
    %1163 = vmatpush.bf16.msra.mxu0 %v632
    %1164 = vmatpush.bf16.msra.mxu0 %v628
    %1165 = vmatpush.bf16.msra.mxu0 %v624
    %1166 = vmatpush.bf16.msra.mxu0 %v620
    %1167 = vmatmul.bf16.gmra.mxu0 %v299
    %v1168 = vpop.f32.mrf.mxu0
    %v1169 = vadd.f32 %v1080, %v1168
    %v1170 = vpop.f32.mrf.mxu0
    %v1171 = vadd.f32 %v1082, %v1170
    %1172 = vmatmul.bf16.gmra.mxu0 %v301
    %v1173 = vpop.f32.mrf.mxu0
    %v1174 = vadd.f32 %v1085, %v1173
    %v1175 = vpop.f32.mrf.mxu0
    %v1176 = vadd.f32 %v1087, %v1175
    %1177 = vmatmul.bf16.gmra.mxu0 %v303
    %v1178 = vpop.f32.mrf.mxu0
    %v1179 = vadd.f32 %v1090, %v1178
    %v1180 = vpop.f32.mrf.mxu0
    %v1181 = vadd.f32 %v1092, %v1180
    %1182 = vmatmul.bf16.gmra.mxu0 %v305
    %v1183 = vpop.f32.mrf.mxu0
    %v1184 = vadd.f32 %v1095, %v1183
    %v1185 = vpop.f32.mrf.mxu0
    %v1186 = vadd.f32 %v1097, %v1185
    %1187 = vmatmul.bf16.gmra.mxu0 %v307
    %v1188 = vpop.f32.mrf.mxu0
    %v1189 = vadd.f32 %v1100, %v1188
    %v1190 = vpop.f32.mrf.mxu0
    %v1191 = vadd.f32 %v1102, %v1190
    %1192 = vmatmul.bf16.gmra.mxu0 %v309
    %v1193 = vpop.f32.mrf.mxu0
    %v1194 = vadd.f32 %v1105, %v1193
    %v1195 = vpop.f32.mrf.mxu0
    %v1196 = vadd.f32 %v1107, %v1195
    %1197 = vmatmul.bf16.gmra.mxu0 %v311
    %v1198 = vpop.f32.mrf.mxu0
    %v1199 = vadd.f32 %v1110, %v1198
    %v1200 = vpop.f32.mrf.mxu0
    %v1201 = vadd.f32 %v1112, %v1200
    %1202 = vmatmul.bf16.gmra.mxu0 %v313
    %v1203 = vpop.f32.mrf.mxu0
    %v1204 = vadd.f32 %v1115, %v1203
    %v1205 = vpop.f32.mrf.mxu0
    %v1206 = vadd.f32 %v1117, %v1205
    %1207 = vmatmul.bf16.gmra.mxu0 %v315
    %v1208 = vpop.f32.mrf.mxu0
    %v1209 = vadd.f32 %v1120, %v1208
    %v1210 = vpop.f32.mrf.mxu0
    %v1211 = vadd.f32 %v1122, %v1210
    %1212 = vmatmul.bf16.gmra.mxu0 %v317
    %v1213 = vpop.f32.mrf.mxu0
    %v1214 = vadd.f32 %v1125, %v1213
    %v1215 = vpop.f32.mrf.mxu0
    %v1216 = vadd.f32 %v1127, %v1215
    %1217 = vmatmul.bf16.gmra.mxu0 %v319
    %v1218 = vpop.f32.mrf.mxu0
    %v1219 = vadd.f32 %v1130, %v1218
    %v1220 = vpop.f32.mrf.mxu0
    %v1221 = vadd.f32 %v1132, %v1220
    %1222 = vmatmul.bf16.gmra.mxu0 %v321
    %v1223 = vpop.f32.mrf.mxu0
    %v1224 = vadd.f32 %v1135, %v1223
    %v1225 = vpop.f32.mrf.mxu0
    %v1226 = vadd.f32 %v1137, %v1225
    %1227 = vmatmul.bf16.gmra.mxu0 %v323
    %v1228 = vpop.f32.mrf.mxu0
    %v1229 = vadd.f32 %v1140, %v1228
    %v1230 = vpop.f32.mrf.mxu0
    %v1231 = vadd.f32 %v1142, %v1230
    %1232 = vmatmul.bf16.gmra.mxu0 %v325
    %v1233 = vpop.f32.mrf.mxu0
    %v1234 = vadd.f32 %v1145, %v1233
    %v1235 = vpop.f32.mrf.mxu0
    %v1236 = vadd.f32 %v1147, %v1235
    %1237 = vmatmul.bf16.gmra.mxu0 %v327
    %v1238 = vpop.f32.mrf.mxu0
    %v1239 = vadd.f32 %v1150, %v1238
    %v1240 = vpop.f32.mrf.mxu0
    %v1241 = vadd.f32 %v1152, %v1240
    %1242 = vmatmul.bf16.gmra.mxu0 %v329
    %v1243 = vpop.f32.mrf.mxu0
    %v1244 = vadd.f32 %v1155, %v1243
    %v1245 = vpop.f32.mrf.mxu0
    %v1246 = vadd.f32 %v1157, %v1245
    %1247 = vdwg.mxu0
    %1248 = vmatpush.bf16.msra.mxu0 %v617
    %1249 = vmatpush.bf16.msra.mxu0 %v613
    %1250 = vmatpush.bf16.msra.mxu0 %v609
    %1251 = vmatpush.bf16.msra.mxu0 %v605
    %1252 = vmatpush.bf16.msra.mxu0 %v601
    %1253 = vmatpush.bf16.msra.mxu0 %v597
    %1254 = vmatpush.bf16.msra.mxu0 %v593
    %1255 = vmatpush.bf16.msra.mxu0 %v589
    %1256 = vmatmul.bf16.gmra.mxu0 %v298
    %v1257 = vpop.f32.mrf.mxu0
    %v1258 = vadd.f32 0.0, %v1257
    %v1259 = vpop.f32.mrf.mxu0
    %v1260 = vadd.f32 0.0, %v1259
    %1261 = vmatmul.bf16.gmra.mxu0 %v300
    %v1262 = vpop.f32.mrf.mxu0
    %v1263 = vadd.f32 0.0, %v1262
    %v1264 = vpop.f32.mrf.mxu0
    %v1265 = vadd.f32 0.0, %v1264
    %1266 = vmatmul.bf16.gmra.mxu0 %v302
    %v1267 = vpop.f32.mrf.mxu0
    %v1268 = vadd.f32 0.0, %v1267
    %v1269 = vpop.f32.mrf.mxu0
    %v1270 = vadd.f32 0.0, %v1269
    %1271 = vmatmul.bf16.gmra.mxu0 %v304
    %v1272 = vpop.f32.mrf.mxu0
    %v1273 = vadd.f32 0.0, %v1272
    %v1274 = vpop.f32.mrf.mxu0
    %v1275 = vadd.f32 0.0, %v1274
    %1276 = vmatmul.bf16.gmra.mxu0 %v306
    %v1277 = vpop.f32.mrf.mxu0
    %v1278 = vadd.f32 0.0, %v1277
    %v1279 = vpop.f32.mrf.mxu0
    %v1280 = vadd.f32 0.0, %v1279
    %1281 = vmatmul.bf16.gmra.mxu0 %v308
    %v1282 = vpop.f32.mrf.mxu0
    %v1283 = vadd.f32 0.0, %v1282
    %v1284 = vpop.f32.mrf.mxu0
    %v1285 = vadd.f32 0.0, %v1284
    %1286 = vmatmul.bf16.gmra.mxu0 %v310
    %v1287 = vpop.f32.mrf.mxu0
    %v1288 = vadd.f32 0.0, %v1287
    %v1289 = vpop.f32.mrf.mxu0
    %v1290 = vadd.f32 0.0, %v1289
    %1291 = vmatmul.bf16.gmra.mxu0 %v312
    %v1292 = vpop.f32.mrf.mxu0
    %v1293 = vadd.f32 0.0, %v1292
    %v1294 = vpop.f32.mrf.mxu0
    %v1295 = vadd.f32 0.0, %v1294
    %1296 = vmatmul.bf16.gmra.mxu0 %v314
    %v1297 = vpop.f32.mrf.mxu0
    %v1298 = vadd.f32 0.0, %v1297
    %v1299 = vpop.f32.mrf.mxu0
    %v1300 = vadd.f32 0.0, %v1299
    %1301 = vmatmul.bf16.gmra.mxu0 %v316
    %v1302 = vpop.f32.mrf.mxu0
    %v1303 = vadd.f32 0.0, %v1302
    %v1304 = vpop.f32.mrf.mxu0
    %v1305 = vadd.f32 0.0, %v1304
    %1306 = vmatmul.bf16.gmra.mxu0 %v318
    %v1307 = vpop.f32.mrf.mxu0
    %v1308 = vadd.f32 0.0, %v1307
    %v1309 = vpop.f32.mrf.mxu0
    %v1310 = vadd.f32 0.0, %v1309
    %1311 = vmatmul.bf16.gmra.mxu0 %v320
    %v1312 = vpop.f32.mrf.mxu0
    %v1313 = vadd.f32 0.0, %v1312
    %v1314 = vpop.f32.mrf.mxu0
    %v1315 = vadd.f32 0.0, %v1314
    %1316 = vmatmul.bf16.gmra.mxu0 %v322
    %v1317 = vpop.f32.mrf.mxu0
    %v1318 = vadd.f32 0.0, %v1317
    %v1319 = vpop.f32.mrf.mxu0
    %v1320 = vadd.f32 0.0, %v1319
    %1321 = vmatmul.bf16.gmra.mxu0 %v324
    %v1322 = vpop.f32.mrf.mxu0
    %v1323 = vadd.f32 0.0, %v1322
    %v1324 = vpop.f32.mrf.mxu0
    %v1325 = vadd.f32 0.0, %v1324
    %1326 = vmatmul.bf16.gmra.mxu0 %v326
    %v1327 = vpop.f32.mrf.mxu0
    %v1328 = vadd.f32 0.0, %v1327
    %v1329 = vpop.f32.mrf.mxu0
    %v1330 = vadd.f32 0.0, %v1329
    %1331 = vmatmul.bf16.gmra.mxu0 %v328
    %v1332 = vpop.f32.mrf.mxu0
    %v1333 = vadd.f32 0.0, %v1332
    %v1334 = vpop.f32.mrf.mxu0
    %v1335 = vadd.f32 0.0, %v1334
    %1336 = vdwg.mxu0
    %1337 = vmatpush.bf16.msra.mxu0 %v649
    %1338 = vmatpush.bf16.msra.mxu0 %v645
    %1339 = vmatpush.bf16.msra.mxu0 %v641
    %1340 = vmatpush.bf16.msra.mxu0 %v637
    %1341 = vmatpush.bf16.msra.mxu0 %v633
    %1342 = vmatpush.bf16.msra.mxu0 %v629
    %1343 = vmatpush.bf16.msra.mxu0 %v625
    %1344 = vmatpush.bf16.msra.mxu0 %v621
    %1345 = vmatmul.bf16.gmra.mxu0 %v299
    %v1346 = vpop.f32.mrf.mxu0
    %v1347 = vadd.f32 %v1258, %v1346
    %v1348 = vpop.f32.mrf.mxu0
    %v1349 = vadd.f32 %v1260, %v1348
    %1350 = vmatmul.bf16.gmra.mxu0 %v301
    %v1351 = vpop.f32.mrf.mxu0
    %v1352 = vadd.f32 %v1263, %v1351
    %v1353 = vpop.f32.mrf.mxu0
    %v1354 = vadd.f32 %v1265, %v1353
    %1355 = vmatmul.bf16.gmra.mxu0 %v303
    %v1356 = vpop.f32.mrf.mxu0
    %v1357 = vadd.f32 %v1268, %v1356
    %v1358 = vpop.f32.mrf.mxu0
    %v1359 = vadd.f32 %v1270, %v1358
    %1360 = vmatmul.bf16.gmra.mxu0 %v305
    %v1361 = vpop.f32.mrf.mxu0
    %v1362 = vadd.f32 %v1273, %v1361
    %v1363 = vpop.f32.mrf.mxu0
    %v1364 = vadd.f32 %v1275, %v1363
    %1365 = vmatmul.bf16.gmra.mxu0 %v307
    %v1366 = vpop.f32.mrf.mxu0
    %v1367 = vadd.f32 %v1278, %v1366
    %v1368 = vpop.f32.mrf.mxu0
    %v1369 = vadd.f32 %v1280, %v1368
    %1370 = vmatmul.bf16.gmra.mxu0 %v309
    %v1371 = vpop.f32.mrf.mxu0
    %v1372 = vadd.f32 %v1283, %v1371
    %v1373 = vpop.f32.mrf.mxu0
    %v1374 = vadd.f32 %v1285, %v1373
    %1375 = vmatmul.bf16.gmra.mxu0 %v311
    %v1376 = vpop.f32.mrf.mxu0
    %v1377 = vadd.f32 %v1288, %v1376
    %v1378 = vpop.f32.mrf.mxu0
    %v1379 = vadd.f32 %v1290, %v1378
    %1380 = vmatmul.bf16.gmra.mxu0 %v313
    %v1381 = vpop.f32.mrf.mxu0
    %v1382 = vadd.f32 %v1293, %v1381
    %v1383 = vpop.f32.mrf.mxu0
    %v1384 = vadd.f32 %v1295, %v1383
    %1385 = vmatmul.bf16.gmra.mxu0 %v315
    %v1386 = vpop.f32.mrf.mxu0
    %v1387 = vadd.f32 %v1298, %v1386
    %v1388 = vpop.f32.mrf.mxu0
    %v1389 = vadd.f32 %v1300, %v1388
    %1390 = vmatmul.bf16.gmra.mxu0 %v317
    %v1391 = vpop.f32.mrf.mxu0
    %v1392 = vadd.f32 %v1303, %v1391
    %v1393 = vpop.f32.mrf.mxu0
    %v1394 = vadd.f32 %v1305, %v1393
    %1395 = vmatmul.bf16.gmra.mxu0 %v319
    %v1396 = vpop.f32.mrf.mxu0
    %v1397 = vadd.f32 %v1308, %v1396
    %v1398 = vpop.f32.mrf.mxu0
    %v1399 = vadd.f32 %v1310, %v1398
    %1400 = vmatmul.bf16.gmra.mxu0 %v321
    %v1401 = vpop.f32.mrf.mxu0
    %v1402 = vadd.f32 %v1313, %v1401
    %v1403 = vpop.f32.mrf.mxu0
    %v1404 = vadd.f32 %v1315, %v1403
    %1405 = vmatmul.bf16.gmra.mxu0 %v323
    %v1406 = vpop.f32.mrf.mxu0
    %v1407 = vadd.f32 %v1318, %v1406
    %v1408 = vpop.f32.mrf.mxu0
    %v1409 = vadd.f32 %v1320, %v1408
    %1410 = vmatmul.bf16.gmra.mxu0 %v325
    %v1411 = vpop.f32.mrf.mxu0
    %v1412 = vadd.f32 %v1323, %v1411
    %v1413 = vpop.f32.mrf.mxu0
    %v1414 = vadd.f32 %v1325, %v1413
    %1415 = vmatmul.bf16.gmra.mxu0 %v327
    %v1416 = vpop.f32.mrf.mxu0
    %v1417 = vadd.f32 %v1328, %v1416
    %v1418 = vpop.f32.mrf.mxu0
    %v1419 = vadd.f32 %v1330, %v1418
    %1420 = vmatmul.bf16.gmra.mxu0 %v329
    %v1421 = vpop.f32.mrf.mxu0
    %v1422 = vadd.f32 %v1333, %v1421
    %v1423 = vpop.f32.mrf.mxu0
    %v1424 = vadd.f32 %v1335, %v1423
    %1425 = vdwg.mxu0
    %v1426 = vadd.f32 %v813, %v815
    %v1427 = vadd.f32 %v1426, %v818
    %v1428 = vadd.f32 %v1427, %v820
    %v1429 = vadd.f32 %v1428, %v823
    %v1430 = vadd.f32 %v1429, %v825
    %v1431 = vadd.f32 %v1430, %v828
    %v1432 = vadd.f32 %v1431, %v830
    %v1433 = vadd.f32 %v1432, %v833
    %v1434 = vadd.f32 %v1433, %v835
    %v1435 = vadd.f32 %v1434, %v838
    %v1436 = vadd.f32 %v1435, %v840
    %v1437 = vadd.f32 %v1436, %v843
    %v1438 = vadd.f32 %v1437, %v845
    %v1439 = vadd.f32 %v1438, %v848
    %v1440 = vadd.f32 %v1439, %v850
    %v1441 = vadd.f32 %v1440, %v853
    %v1442 = vadd.f32 %v1441, %v855
    %v1443 = vadd.f32 %v1442, %v858
    %v1444 = vadd.f32 %v1443, %v860
    %v1445 = vadd.f32 %v1444, %v863
    %v1446 = vadd.f32 %v1445, %v865
    %v1447 = vadd.f32 %v1446, %v868
    %v1448 = vadd.f32 %v1447, %v870
    %v1449 = vadd.f32 %v1448, %v873
    %v1450 = vadd.f32 %v1449, %v875
    %v1451 = vadd.f32 %v1450, %v878
    %v1452 = vadd.f32 %v1451, %v880
    %v1453 = vadd.f32 %v1452, %v883
    %v1454 = vadd.f32 %v1453, %v885
    %v1455 = vadd.f32 %v1454, %v888
    %v1456 = vadd.f32 %v1455, %v890
    %v1457 = vrot.slane %v1456, 4
    %v1458 = vadd.f32 %v1456, %v1457
    %v1459 = vrot.slane %v1458, 2
    %v1460 = vadd.f32 %v1458, %v1459
    %v1461 = vrot.slane %v1460, 1
    %v1462 = vadd.f32 %v1460, %v1461
    %v1463 = vadd.f32 %v991, %v993
    %v1464 = vadd.f32 %v1463, %v996
    %v1465 = vadd.f32 %v1464, %v998
    %v1466 = vadd.f32 %v1465, %v1001
    %v1467 = vadd.f32 %v1466, %v1003
    %v1468 = vadd.f32 %v1467, %v1006
    %v1469 = vadd.f32 %v1468, %v1008
    %v1470 = vadd.f32 %v1469, %v1011
    %v1471 = vadd.f32 %v1470, %v1013
    %v1472 = vadd.f32 %v1471, %v1016
    %v1473 = vadd.f32 %v1472, %v1018
    %v1474 = vadd.f32 %v1473, %v1021
    %v1475 = vadd.f32 %v1474, %v1023
    %v1476 = vadd.f32 %v1475, %v1026
    %v1477 = vadd.f32 %v1476, %v1028
    %v1478 = vadd.f32 %v1477, %v1031
    %v1479 = vadd.f32 %v1478, %v1033
    %v1480 = vadd.f32 %v1479, %v1036
    %v1481 = vadd.f32 %v1480, %v1038
    %v1482 = vadd.f32 %v1481, %v1041
    %v1483 = vadd.f32 %v1482, %v1043
    %v1484 = vadd.f32 %v1483, %v1046
    %v1485 = vadd.f32 %v1484, %v1048
    %v1486 = vadd.f32 %v1485, %v1051
    %v1487 = vadd.f32 %v1486, %v1053
    %v1488 = vadd.f32 %v1487, %v1056
    %v1489 = vadd.f32 %v1488, %v1058
    %v1490 = vadd.f32 %v1489, %v1061
    %v1491 = vadd.f32 %v1490, %v1063
    %v1492 = vadd.f32 %v1491, %v1066
    %v1493 = vadd.f32 %v1492, %v1068
    %v1494 = vrot.slane %v1493, 4
    %v1495 = vadd.f32 %v1493, %v1494
    %v1496 = vrot.slane %v1495, 2
    %v1497 = vadd.f32 %v1495, %v1496
    %v1498 = vrot.slane %v1497, 1
    %v1499 = vadd.f32 %v1497, %v1498
    %v1500 = vadd.f32 %v1169, %v1171
    %v1501 = vadd.f32 %v1500, %v1174
    %v1502 = vadd.f32 %v1501, %v1176
    %v1503 = vadd.f32 %v1502, %v1179
    %v1504 = vadd.f32 %v1503, %v1181
    %v1505 = vadd.f32 %v1504, %v1184
    %v1506 = vadd.f32 %v1505, %v1186
    %v1507 = vadd.f32 %v1506, %v1189
    %v1508 = vadd.f32 %v1507, %v1191
    %v1509 = vadd.f32 %v1508, %v1194
    %v1510 = vadd.f32 %v1509, %v1196
    %v1511 = vadd.f32 %v1510, %v1199
    %v1512 = vadd.f32 %v1511, %v1201
    %v1513 = vadd.f32 %v1512, %v1204
    %v1514 = vadd.f32 %v1513, %v1206
    %v1515 = vadd.f32 %v1514, %v1209
    %v1516 = vadd.f32 %v1515, %v1211
    %v1517 = vadd.f32 %v1516, %v1214
    %v1518 = vadd.f32 %v1517, %v1216
    %v1519 = vadd.f32 %v1518, %v1219
    %v1520 = vadd.f32 %v1519, %v1221
    %v1521 = vadd.f32 %v1520, %v1224
    %v1522 = vadd.f32 %v1521, %v1226
    %v1523 = vadd.f32 %v1522, %v1229
    %v1524 = vadd.f32 %v1523, %v1231
    %v1525 = vadd.f32 %v1524, %v1234
    %v1526 = vadd.f32 %v1525, %v1236
    %v1527 = vadd.f32 %v1526, %v1239
    %v1528 = vadd.f32 %v1527, %v1241
    %v1529 = vadd.f32 %v1528, %v1244
    %v1530 = vadd.f32 %v1529, %v1246
    %v1531 = vrot.slane %v1530, 4
    %v1532 = vadd.f32 %v1530, %v1531
    %v1533 = vrot.slane %v1532, 2
    %v1534 = vadd.f32 %v1532, %v1533
    %v1535 = vrot.slane %v1534, 1
    %v1536 = vadd.f32 %v1534, %v1535
    %v1537 = vadd.f32 %v1347, %v1349
    %v1538 = vadd.f32 %v1537, %v1352
    %v1539 = vadd.f32 %v1538, %v1354
    %v1540 = vadd.f32 %v1539, %v1357
    %v1541 = vadd.f32 %v1540, %v1359
    %v1542 = vadd.f32 %v1541, %v1362
    %v1543 = vadd.f32 %v1542, %v1364
    %v1544 = vadd.f32 %v1543, %v1367
    %v1545 = vadd.f32 %v1544, %v1369
    %v1546 = vadd.f32 %v1545, %v1372
    %v1547 = vadd.f32 %v1546, %v1374
    %v1548 = vadd.f32 %v1547, %v1377
    %v1549 = vadd.f32 %v1548, %v1379
    %v1550 = vadd.f32 %v1549, %v1382
    %v1551 = vadd.f32 %v1550, %v1384
    %v1552 = vadd.f32 %v1551, %v1387
    %v1553 = vadd.f32 %v1552, %v1389
    %v1554 = vadd.f32 %v1553, %v1392
    %v1555 = vadd.f32 %v1554, %v1394
    %v1556 = vadd.f32 %v1555, %v1397
    %v1557 = vadd.f32 %v1556, %v1399
    %v1558 = vadd.f32 %v1557, %v1402
    %v1559 = vadd.f32 %v1558, %v1404
    %v1560 = vadd.f32 %v1559, %v1407
    %v1561 = vadd.f32 %v1560, %v1409
    %v1562 = vadd.f32 %v1561, %v1412
    %v1563 = vadd.f32 %v1562, %v1414
    %v1564 = vadd.f32 %v1563, %v1417
    %v1565 = vadd.f32 %v1564, %v1419
    %v1566 = vadd.f32 %v1565, %v1422
    %v1567 = vadd.f32 %v1566, %v1424
    %v1568 = vrot.slane %v1567, 4
    %v1569 = vadd.f32 %v1567, %v1568
    %v1570 = vrot.slane %v1569, 2
    %v1571 = vadd.f32 %v1569, %v1570
    %v1572 = vrot.slane %v1571, 1
    %v1573 = vadd.f32 %v1571, %v1572
    %v1574 = vmul.f32 %v813, %v813
    %v1575 = vmul.f32 %v991, %v991
    %v1576 = vmul.f32 %v1169, %v1169
    %v1577 = vmul.f32 %v1347, %v1347
    %v1578 = vmul.f32 %v815, %v815
    %v1579 = vmul.f32 %v993, %v993
    %v1580 = vmul.f32 %v1171, %v1171
    %v1581 = vmul.f32 %v1349, %v1349
    %v1582 = vmul.f32 %v818, %v818
    %v1583 = vmul.f32 %v996, %v996
    %v1584 = vmul.f32 %v1174, %v1174
    %v1585 = vmul.f32 %v1352, %v1352
    %v1586 = vmul.f32 %v820, %v820
    %v1587 = vmul.f32 %v998, %v998
    %v1588 = vmul.f32 %v1176, %v1176
    %v1589 = vmul.f32 %v1354, %v1354
    %v1590 = vmul.f32 %v823, %v823
    %v1591 = vmul.f32 %v1001, %v1001
    %v1592 = vmul.f32 %v1179, %v1179
    %v1593 = vmul.f32 %v1357, %v1357
    %v1594 = vmul.f32 %v825, %v825
    %v1595 = vmul.f32 %v1003, %v1003
    %v1596 = vmul.f32 %v1181, %v1181
    %v1597 = vmul.f32 %v1359, %v1359
    %v1598 = vmul.f32 %v828, %v828
    %v1599 = vmul.f32 %v1006, %v1006
    %v1600 = vmul.f32 %v1184, %v1184
    %v1601 = vmul.f32 %v1362, %v1362
    %v1602 = vmul.f32 %v830, %v830
    %v1603 = vmul.f32 %v1008, %v1008
    %v1604 = vmul.f32 %v1186, %v1186
    %v1605 = vmul.f32 %v1364, %v1364
    %v1606 = vmul.f32 %v833, %v833
    %v1607 = vmul.f32 %v1011, %v1011
    %v1608 = vmul.f32 %v1189, %v1189
    %v1609 = vmul.f32 %v1367, %v1367
    %v1610 = vmul.f32 %v835, %v835
    %v1611 = vmul.f32 %v1013, %v1013
    %v1612 = vmul.f32 %v1191, %v1191
    %v1613 = vmul.f32 %v1369, %v1369
    %v1614 = vmul.f32 %v838, %v838
    %v1615 = vmul.f32 %v1016, %v1016
    %v1616 = vmul.f32 %v1194, %v1194
    %v1617 = vmul.f32 %v1372, %v1372
    %v1618 = vmul.f32 %v840, %v840
    %v1619 = vmul.f32 %v1018, %v1018
    %v1620 = vmul.f32 %v1196, %v1196
    %v1621 = vmul.f32 %v1374, %v1374
    %v1622 = vmul.f32 %v843, %v843
    %v1623 = vmul.f32 %v1021, %v1021
    %v1624 = vmul.f32 %v1199, %v1199
    %v1625 = vmul.f32 %v1377, %v1377
    %v1626 = vmul.f32 %v845, %v845
    %v1627 = vmul.f32 %v1023, %v1023
    %v1628 = vmul.f32 %v1201, %v1201
    %v1629 = vmul.f32 %v1379, %v1379
    %v1630 = vmul.f32 %v848, %v848
    %v1631 = vmul.f32 %v1026, %v1026
    %v1632 = vmul.f32 %v1204, %v1204
    %v1633 = vmul.f32 %v1382, %v1382
    %v1634 = vmul.f32 %v850, %v850
    %v1635 = vmul.f32 %v1028, %v1028
    %v1636 = vmul.f32 %v1206, %v1206
    %v1637 = vmul.f32 %v1384, %v1384
    %v1638 = vmul.f32 %v853, %v853
    %v1639 = vmul.f32 %v1031, %v1031
    %v1640 = vmul.f32 %v1209, %v1209
    %v1641 = vmul.f32 %v1387, %v1387
    %v1642 = vmul.f32 %v855, %v855
    %v1643 = vmul.f32 %v1033, %v1033
    %v1644 = vmul.f32 %v1211, %v1211
    %v1645 = vmul.f32 %v1389, %v1389
    %v1646 = vmul.f32 %v858, %v858
    %v1647 = vmul.f32 %v1036, %v1036
    %v1648 = vmul.f32 %v1214, %v1214
    %v1649 = vmul.f32 %v1392, %v1392
    %v1650 = vmul.f32 %v860, %v860
    %v1651 = vmul.f32 %v1038, %v1038
    %v1652 = vmul.f32 %v1216, %v1216
    %v1653 = vmul.f32 %v1394, %v1394
    %v1654 = vmul.f32 %v863, %v863
    %v1655 = vmul.f32 %v1041, %v1041
    %v1656 = vmul.f32 %v1219, %v1219
    %v1657 = vmul.f32 %v1397, %v1397
    %v1658 = vmul.f32 %v865, %v865
    %v1659 = vmul.f32 %v1043, %v1043
    %v1660 = vmul.f32 %v1221, %v1221
    %v1661 = vmul.f32 %v1399, %v1399
    %v1662 = vmul.f32 %v868, %v868
    %v1663 = vmul.f32 %v1046, %v1046
    %v1664 = vmul.f32 %v1224, %v1224
    %v1665 = vmul.f32 %v1402, %v1402
    %v1666 = vmul.f32 %v870, %v870
    %v1667 = vmul.f32 %v1048, %v1048
    %v1668 = vmul.f32 %v1226, %v1226
    %v1669 = vmul.f32 %v1404, %v1404
    %v1670 = vmul.f32 %v873, %v873
    %v1671 = vmul.f32 %v1051, %v1051
    %v1672 = vmul.f32 %v1229, %v1229
    %v1673 = vmul.f32 %v1407, %v1407
    %v1674 = vmul.f32 %v875, %v875
    %v1675 = vmul.f32 %v1053, %v1053
    %v1676 = vmul.f32 %v1231, %v1231
    %v1677 = vmul.f32 %v1409, %v1409
    %v1678 = vmul.f32 %v878, %v878
    %v1679 = vmul.f32 %v1056, %v1056
    %v1680 = vmul.f32 %v1234, %v1234
    %v1681 = vmul.f32 %v1412, %v1412
    %v1682 = vmul.f32 %v880, %v880
    %v1683 = vmul.f32 %v1058, %v1058
    %v1684 = vmul.f32 %v1236, %v1236
    %v1685 = vmul.f32 %v1414, %v1414
    %v1686 = vmul.f32 %v883, %v883
    %v1687 = vmul.f32 %v1061, %v1061
    %v1688 = vmul.f32 %v1239, %v1239
    %v1689 = vmul.f32 %v1417, %v1417
    %v1690 = vmul.f32 %v885, %v885
    %v1691 = vmul.f32 %v1063, %v1063
    %v1692 = vmul.f32 %v1241, %v1241
    %v1693 = vmul.f32 %v1419, %v1419
    %v1694 = vmul.f32 %v888, %v888
    %v1695 = vmul.f32 %v1066, %v1066
    %v1696 = vmul.f32 %v1244, %v1244
    %v1697 = vmul.f32 %v1422, %v1422
    %v1698 = vmul.f32 %v890, %v890
    %v1699 = vmul.f32 %v1068, %v1068
    %v1700 = vmul.f32 %v1246, %v1246
    %v1701 = vmul.f32 %v1424, %v1424
    %v1702 = vadd.f32 %v1574, %v1578
    %v1703 = vadd.f32 %v1702, %v1582
    %v1704 = vadd.f32 %v1703, %v1586
    %v1705 = vadd.f32 %v1704, %v1590
    %v1706 = vadd.f32 %v1705, %v1594
    %v1707 = vadd.f32 %v1706, %v1598
    %v1708 = vadd.f32 %v1707, %v1602
    %v1709 = vadd.f32 %v1708, %v1606
    %v1710 = vadd.f32 %v1709, %v1610
    %v1711 = vadd.f32 %v1710, %v1614
    %v1712 = vadd.f32 %v1711, %v1618
    %v1713 = vadd.f32 %v1712, %v1622
    %v1714 = vadd.f32 %v1713, %v1626
    %v1715 = vadd.f32 %v1714, %v1630
    %v1716 = vadd.f32 %v1715, %v1634
    %v1717 = vadd.f32 %v1716, %v1638
    %v1718 = vadd.f32 %v1717, %v1642
    %v1719 = vadd.f32 %v1718, %v1646
    %v1720 = vadd.f32 %v1719, %v1650
    %v1721 = vadd.f32 %v1720, %v1654
    %v1722 = vadd.f32 %v1721, %v1658
    %v1723 = vadd.f32 %v1722, %v1662
    %v1724 = vadd.f32 %v1723, %v1666
    %v1725 = vadd.f32 %v1724, %v1670
    %v1726 = vadd.f32 %v1725, %v1674
    %v1727 = vadd.f32 %v1726, %v1678
    %v1728 = vadd.f32 %v1727, %v1682
    %v1729 = vadd.f32 %v1728, %v1686
    %v1730 = vadd.f32 %v1729, %v1690
    %v1731 = vadd.f32 %v1730, %v1694
    %v1732 = vadd.f32 %v1731, %v1698
    %v1733 = vrot.slane %v1732, 4
    %v1734 = vadd.f32 %v1732, %v1733
    %v1735 = vrot.slane %v1734, 2
    %v1736 = vadd.f32 %v1734, %v1735
    %v1737 = vrot.slane %v1736, 1
    %v1738 = vadd.f32 %v1736, %v1737
    %v1739 = vadd.f32 %v1575, %v1579
    %v1740 = vadd.f32 %v1739, %v1583
    %v1741 = vadd.f32 %v1740, %v1587
    %v1742 = vadd.f32 %v1741, %v1591
    %v1743 = vadd.f32 %v1742, %v1595
    %v1744 = vadd.f32 %v1743, %v1599
    %v1745 = vadd.f32 %v1744, %v1603
    %v1746 = vadd.f32 %v1745, %v1607
    %v1747 = vadd.f32 %v1746, %v1611
    %v1748 = vadd.f32 %v1747, %v1615
    %v1749 = vadd.f32 %v1748, %v1619
    %v1750 = vadd.f32 %v1749, %v1623
    %v1751 = vadd.f32 %v1750, %v1627
    %v1752 = vadd.f32 %v1751, %v1631
    %v1753 = vadd.f32 %v1752, %v1635
    %v1754 = vadd.f32 %v1753, %v1639
    %v1755 = vadd.f32 %v1754, %v1643
    %v1756 = vadd.f32 %v1755, %v1647
    %v1757 = vadd.f32 %v1756, %v1651
    %v1758 = vadd.f32 %v1757, %v1655
    %v1759 = vadd.f32 %v1758, %v1659
    %v1760 = vadd.f32 %v1759, %v1663
    %v1761 = vadd.f32 %v1760, %v1667
    %v1762 = vadd.f32 %v1761, %v1671
    %v1763 = vadd.f32 %v1762, %v1675
    %v1764 = vadd.f32 %v1763, %v1679
    %v1765 = vadd.f32 %v1764, %v1683
    %v1766 = vadd.f32 %v1765, %v1687
    %v1767 = vadd.f32 %v1766, %v1691
    %v1768 = vadd.f32 %v1767, %v1695
    %v1769 = vadd.f32 %v1768, %v1699
    %v1770 = vrot.slane %v1769, 4
    %v1771 = vadd.f32 %v1769, %v1770
    %v1772 = vrot.slane %v1771, 2
    %v1773 = vadd.f32 %v1771, %v1772
    %v1774 = vrot.slane %v1773, 1
    %v1775 = vadd.f32 %v1773, %v1774
    %v1776 = vadd.f32 %v1576, %v1580
    %v1777 = vadd.f32 %v1776, %v1584
    %v1778 = vadd.f32 %v1777, %v1588
    %v1779 = vadd.f32 %v1778, %v1592
    %v1780 = vadd.f32 %v1779, %v1596
    %v1781 = vadd.f32 %v1780, %v1600
    %v1782 = vadd.f32 %v1781, %v1604
    %v1783 = vadd.f32 %v1782, %v1608
    %v1784 = vadd.f32 %v1783, %v1612
    %v1785 = vadd.f32 %v1784, %v1616
    %v1786 = vadd.f32 %v1785, %v1620
    %v1787 = vadd.f32 %v1786, %v1624
    %v1788 = vadd.f32 %v1787, %v1628
    %v1789 = vadd.f32 %v1788, %v1632
    %v1790 = vadd.f32 %v1789, %v1636
    %v1791 = vadd.f32 %v1790, %v1640
    %v1792 = vadd.f32 %v1791, %v1644
    %v1793 = vadd.f32 %v1792, %v1648
    %v1794 = vadd.f32 %v1793, %v1652
    %v1795 = vadd.f32 %v1794, %v1656
    %v1796 = vadd.f32 %v1795, %v1660
    %v1797 = vadd.f32 %v1796, %v1664
    %v1798 = vadd.f32 %v1797, %v1668
    %v1799 = vadd.f32 %v1798, %v1672
    %v1800 = vadd.f32 %v1799, %v1676
    %v1801 = vadd.f32 %v1800, %v1680
    %v1802 = vadd.f32 %v1801, %v1684
    %v1803 = vadd.f32 %v1802, %v1688
    %v1804 = vadd.f32 %v1803, %v1692
    %v1805 = vadd.f32 %v1804, %v1696
    %v1806 = vadd.f32 %v1805, %v1700
    %v1807 = vrot.slane %v1806, 4
    %v1808 = vadd.f32 %v1806, %v1807
    %v1809 = vrot.slane %v1808, 2
    %v1810 = vadd.f32 %v1808, %v1809
    %v1811 = vrot.slane %v1810, 1
    %v1812 = vadd.f32 %v1810, %v1811
    %v1813 = vadd.f32 %v1577, %v1581
    %v1814 = vadd.f32 %v1813, %v1585
    %v1815 = vadd.f32 %v1814, %v1589
    %v1816 = vadd.f32 %v1815, %v1593
    %v1817 = vadd.f32 %v1816, %v1597
    %v1818 = vadd.f32 %v1817, %v1601
    %v1819 = vadd.f32 %v1818, %v1605
    %v1820 = vadd.f32 %v1819, %v1609
    %v1821 = vadd.f32 %v1820, %v1613
    %v1822 = vadd.f32 %v1821, %v1617
    %v1823 = vadd.f32 %v1822, %v1621
    %v1824 = vadd.f32 %v1823, %v1625
    %v1825 = vadd.f32 %v1824, %v1629
    %v1826 = vadd.f32 %v1825, %v1633
    %v1827 = vadd.f32 %v1826, %v1637
    %v1828 = vadd.f32 %v1827, %v1641
    %v1829 = vadd.f32 %v1828, %v1645
    %v1830 = vadd.f32 %v1829, %v1649
    %v1831 = vadd.f32 %v1830, %v1653
    %v1832 = vadd.f32 %v1831, %v1657
    %v1833 = vadd.f32 %v1832, %v1661
    %v1834 = vadd.f32 %v1833, %v1665
    %v1835 = vadd.f32 %v1834, %v1669
    %v1836 = vadd.f32 %v1835, %v1673
    %v1837 = vadd.f32 %v1836, %v1677
    %v1838 = vadd.f32 %v1837, %v1681
    %v1839 = vadd.f32 %v1838, %v1685
    %v1840 = vadd.f32 %v1839, %v1689
    %v1841 = vadd.f32 %v1840, %v1693
    %v1842 = vadd.f32 %v1841, %v1697
    %v1843 = vadd.f32 %v1842, %v1701
    %v1844 = vrot.slane %v1843, 4
    %v1845 = vadd.f32 %v1843, %v1844
    %v1846 = vrot.slane %v1845, 2
    %v1847 = vadd.f32 %v1845, %v1846
    %v1848 = vrot.slane %v1847, 1
    %v1849 = vadd.f32 %v1847, %v1848
    %v1850 = vld [vmem:[#allocation7] sm:$0xff]
    %v1851 = vld [vmem:[#allocation7 + $0x8] sm:$0xff]
    %v1852 = vld [vmem:[#allocation7 + $0x10] sm:$0xff]
    %v1853 = vld [vmem:[#allocation7 + $0x18] sm:$0xff]
    %v1854 = vld [vmem:[#allocation7 + $0x20] sm:$0xff]
    %v1855 = vld [vmem:[#allocation7 + $0x28] sm:$0xff]
    %v1856 = vld [vmem:[#allocation7 + $0x30] sm:$0xff]
    %v1857 = vld [vmem:[#allocation7 + $0x38] sm:$0xff]
    %v1858 = vld [vmem:[#allocation7 + $0x40] sm:$0xff]
    %v1859 = vld [vmem:[#allocation7 + $0x48] sm:$0xff]
    %v1860 = vld [vmem:[#allocation7 + $0x50] sm:$0xff]
    %v1861 = vld [vmem:[#allocation7 + $0x58] sm:$0xff]
    %v1862 = vld [vmem:[#allocation7 + $0x60] sm:$0xff]
    %v1863 = vld [vmem:[#allocation7 + $0x68] sm:$0xff]
    %v1864 = vld [vmem:[#allocation7 + $0x70] sm:$0xff]
    %v1865 = vld [vmem:[#allocation7 + $0x78] sm:$0xff]
    %v1866 = vld [vmem:[#allocation7 + $0x80] sm:$0xff]
    %v1867 = vld [vmem:[#allocation7 + $0x88] sm:$0xff]
    %v1868 = vld [vmem:[#allocation7 + $0x90] sm:$0xff]
    %v1869 = vld [vmem:[#allocation7 + $0x98] sm:$0xff]
    %v1870 = vld [vmem:[#allocation7 + $0xa0] sm:$0xff]
    %v1871 = vld [vmem:[#allocation7 + $0xa8] sm:$0xff]
    %v1872 = vld [vmem:[#allocation7 + $0xb0] sm:$0xff]
    %v1873 = vld [vmem:[#allocation7 + $0xb8] sm:$0xff]
    %v1874 = vld [vmem:[#allocation7 + $0xc0] sm:$0xff]
    %v1875 = vld [vmem:[#allocation7 + $0xc8] sm:$0xff]
    %v1876 = vld [vmem:[#allocation7 + $0xd0] sm:$0xff]
    %v1877 = vld [vmem:[#allocation7 + $0xd8] sm:$0xff]
    %v1878 = vld [vmem:[#allocation7 + $0xe0] sm:$0xff]
    %v1879 = vld [vmem:[#allocation7 + $0xe8] sm:$0xff]
    %v1880 = vld [vmem:[#allocation7 + $0xf0] sm:$0xff]
    %v1881 = vld [vmem:[#allocation7 + $0xf8] sm:$0xff]
    %v1882 = vld [vmem:[#allocation7 + $0x100] sm:$0xff]
    %v1883 = vld [vmem:[#allocation7 + $0x108] sm:$0xff]
    %v1884 = vld [vmem:[#allocation7 + $0x110] sm:$0xff]
    %v1885 = vld [vmem:[#allocation7 + $0x118] sm:$0xff]
    %v1886 = vld [vmem:[#allocation7 + $0x120] sm:$0xff]
    %v1887 = vld [vmem:[#allocation7 + $0x128] sm:$0xff]
    %v1888 = vld [vmem:[#allocation7 + $0x130] sm:$0xff]
    %v1889 = vld [vmem:[#allocation7 + $0x138] sm:$0xff]
    %v1890 = vld [vmem:[#allocation7 + $0x140] sm:$0xff]
    %v1891 = vld [vmem:[#allocation7 + $0x148] sm:$0xff]
    %v1892 = vld [vmem:[#allocation7 + $0x150] sm:$0xff]
    %v1893 = vld [vmem:[#allocation7 + $0x158] sm:$0xff]
    %v1894 = vld [vmem:[#allocation7 + $0x160] sm:$0xff]
    %v1895 = vld [vmem:[#allocation7 + $0x168] sm:$0xff]
    %v1896 = vld [vmem:[#allocation7 + $0x170] sm:$0xff]
    %v1897 = vld [vmem:[#allocation7 + $0x178] sm:$0xff]
    %v1898 = vld [vmem:[#allocation7 + $0x180] sm:$0xff]
    %v1899 = vld [vmem:[#allocation7 + $0x188] sm:$0xff]
    %v1900 = vld [vmem:[#allocation7 + $0x190] sm:$0xff]
    %v1901 = vld [vmem:[#allocation7 + $0x198] sm:$0xff]
    %v1902 = vld [vmem:[#allocation7 + $0x1a0] sm:$0xff]
    %v1903 = vld [vmem:[#allocation7 + $0x1a8] sm:$0xff]
    %v1904 = vld [vmem:[#allocation7 + $0x1b0] sm:$0xff]
    %v1905 = vld [vmem:[#allocation7 + $0x1b8] sm:$0xff]
    %v1906 = vld [vmem:[#allocation7 + $0x1c0] sm:$0xff]
    %v1907 = vld [vmem:[#allocation7 + $0x1c8] sm:$0xff]
    %v1908 = vld [vmem:[#allocation7 + $0x1d0] sm:$0xff]
    %v1909 = vld [vmem:[#allocation7 + $0x1d8] sm:$0xff]
    %v1910 = vld [vmem:[#allocation7 + $0x1e0] sm:$0xff]
    %v1911 = vld [vmem:[#allocation7 + $0x1e8] sm:$0xff]
    %v1912 = vld [vmem:[#allocation7 + $0x1f0] sm:$0xff]
    %v1913 = vld [vmem:[#allocation7 + $0x1f8] sm:$0xff]
    %1914 = vmatpush.msra.mxu0 %v1865
    %1915 = vmatpush.msra.mxu0 %v1864
    %1916 = vmatpush.msra.mxu0 %v1863
    %1917 = vmatpush.msra.mxu0 %v1862
    %1918 = vmatpush.msra.mxu0 %v1861
    %1919 = vmatpush.msra.mxu0 %v1860
    %1920 = vmatpush.msra.mxu0 %v1859
    %1921 = vmatpush.msra.mxu0 %v1858
    %1922 = vmatpush.msra.mxu0 %v1857
    %1923 = vmatpush.msra.mxu0 %v1856
    %1924 = vmatpush.msra.mxu0 %v1855
    %1925 = vmatpush.msra.mxu0 %v1854
    %1926 = vmatpush.msra.mxu0 %v1853
    %1927 = vmatpush.msra.mxu0 %v1852
    %1928 = vmatpush.msra.mxu0 %v1851
    %1929 = vmatpush.msra.mxu0 %v1850
    %1930 = vmatmul.f32.gmra.mxu0 %v1462
    %v1931 = vpop.f32.mrf.mxu0
    %v1932 = vadd.f32 0.0, %v1931
    %1933 = vdwg.mxu0
    %1934 = vmatpush.msra.mxu0 %v1881
    %1935 = vmatpush.msra.mxu0 %v1880
    %1936 = vmatpush.msra.mxu0 %v1879
    %1937 = vmatpush.msra.mxu0 %v1878
    %1938 = vmatpush.msra.mxu0 %v1877
    %1939 = vmatpush.msra.mxu0 %v1876
    %1940 = vmatpush.msra.mxu0 %v1875
    %1941 = vmatpush.msra.mxu0 %v1874
    %1942 = vmatpush.msra.mxu0 %v1873
    %1943 = vmatpush.msra.mxu0 %v1872
    %1944 = vmatpush.msra.mxu0 %v1871
    %1945 = vmatpush.msra.mxu0 %v1870
    %1946 = vmatpush.msra.mxu0 %v1869
    %1947 = vmatpush.msra.mxu0 %v1868
    %1948 = vmatpush.msra.mxu0 %v1867
    %1949 = vmatpush.msra.mxu0 %v1866
    %1950 = vmatmul.f32.gmra.mxu0 %v1499
    %v1951 = vpop.f32.mrf.mxu0
    %v1952 = vadd.f32 %v1932, %v1951
    %1953 = vdwg.mxu0
    %1954 = vmatpush.msra.mxu0 %v1897
    %1955 = vmatpush.msra.mxu0 %v1896
    %1956 = vmatpush.msra.mxu0 %v1895
    %1957 = vmatpush.msra.mxu0 %v1894
    %1958 = vmatpush.msra.mxu0 %v1893
    %1959 = vmatpush.msra.mxu0 %v1892
    %1960 = vmatpush.msra.mxu0 %v1891
    %1961 = vmatpush.msra.mxu0 %v1890
    %1962 = vmatpush.msra.mxu0 %v1889
    %1963 = vmatpush.msra.mxu0 %v1888
    %1964 = vmatpush.msra.mxu0 %v1887
    %1965 = vmatpush.msra.mxu0 %v1886
    %1966 = vmatpush.msra.mxu0 %v1885
    %1967 = vmatpush.msra.mxu0 %v1884
    %1968 = vmatpush.msra.mxu0 %v1883
    %1969 = vmatpush.msra.mxu0 %v1882
    %1970 = vmatmul.f32.gmra.mxu0 %v1536
    %v1971 = vpop.f32.mrf.mxu0
    %v1972 = vadd.f32 %v1952, %v1971
    %1973 = vdwg.mxu0
    %1974 = vmatpush.msra.mxu0 %v1913
    %1975 = vmatpush.msra.mxu0 %v1912
    %1976 = vmatpush.msra.mxu0 %v1911
    %1977 = vmatpush.msra.mxu0 %v1910
    %1978 = vmatpush.msra.mxu0 %v1909
    %1979 = vmatpush.msra.mxu0 %v1908
    %1980 = vmatpush.msra.mxu0 %v1907
    %1981 = vmatpush.msra.mxu0 %v1906
    %1982 = vmatpush.msra.mxu0 %v1905
    %1983 = vmatpush.msra.mxu0 %v1904
    %1984 = vmatpush.msra.mxu0 %v1903
    %1985 = vmatpush.msra.mxu0 %v1902
    %1986 = vmatpush.msra.mxu0 %v1901
    %1987 = vmatpush.msra.mxu0 %v1900
    %1988 = vmatpush.msra.mxu0 %v1899
    %1989 = vmatpush.msra.mxu0 %v1898
    %1990 = vmatmul.f32.gmra.mxu0 %v1573
    %v1991 = vpop.f32.mrf.mxu0
    %v1992 = vadd.f32 %v1972, %v1991
    %1993 = vdwg.mxu0
    %1994 = vmatpush.msra.mxu0 %v1865
    %1995 = vmatpush.msra.mxu0 %v1864
    %1996 = vmatpush.msra.mxu0 %v1863
    %1997 = vmatpush.msra.mxu0 %v1862
    %1998 = vmatpush.msra.mxu0 %v1861
    %1999 = vmatpush.msra.mxu0 %v1860
    %2000 = vmatpush.msra.mxu0 %v1859
    %2001 = vmatpush.msra.mxu0 %v1858
    %2002 = vmatpush.msra.mxu0 %v1857
    %2003 = vmatpush.msra.mxu0 %v1856
    %2004 = vmatpush.msra.mxu0 %v1855
    %2005 = vmatpush.msra.mxu0 %v1854
    %2006 = vmatpush.msra.mxu0 %v1853
    %2007 = vmatpush.msra.mxu0 %v1852
    %2008 = vmatpush.msra.mxu0 %v1851
    %2009 = vmatpush.msra.mxu0 %v1850
    %2010 = vmatmul.f32.gmra.mxu0 %v1738
    %v2011 = vpop.f32.mrf.mxu0
    %v2012 = vadd.f32 0.0, %v2011
    %2013 = vdwg.mxu0
    %2014 = vmatpush.msra.mxu0 %v1881
    %2015 = vmatpush.msra.mxu0 %v1880
    %2016 = vmatpush.msra.mxu0 %v1879
    %2017 = vmatpush.msra.mxu0 %v1878
    %2018 = vmatpush.msra.mxu0 %v1877
    %2019 = vmatpush.msra.mxu0 %v1876
    %2020 = vmatpush.msra.mxu0 %v1875
    %2021 = vmatpush.msra.mxu0 %v1874
    %2022 = vmatpush.msra.mxu0 %v1873
    %2023 = vmatpush.msra.mxu0 %v1872
    %2024 = vmatpush.msra.mxu0 %v1871
    %2025 = vmatpush.msra.mxu0 %v1870
    %2026 = vmatpush.msra.mxu0 %v1869
    %2027 = vmatpush.msra.mxu0 %v1868
    %2028 = vmatpush.msra.mxu0 %v1867
    %2029 = vmatpush.msra.mxu0 %v1866
    %2030 = vmatmul.f32.gmra.mxu0 %v1775
    %v2031 = vpop.f32.mrf.mxu0
    %v2032 = vadd.f32 %v2012, %v2031
    %2033 = vdwg.mxu0
    %2034 = vmatpush.msra.mxu0 %v1897
    %2035 = vmatpush.msra.mxu0 %v1896
    %2036 = vmatpush.msra.mxu0 %v1895
    %2037 = vmatpush.msra.mxu0 %v1894
    %2038 = vmatpush.msra.mxu0 %v1893
    %2039 = vmatpush.msra.mxu0 %v1892
    %2040 = vmatpush.msra.mxu0 %v1891
    %2041 = vmatpush.msra.mxu0 %v1890
    %2042 = vmatpush.msra.mxu0 %v1889
    %2043 = vmatpush.msra.mxu0 %v1888
    %2044 = vmatpush.msra.mxu0 %v1887
    %2045 = vmatpush.msra.mxu0 %v1886
    %2046 = vmatpush.msra.mxu0 %v1885
    %2047 = vmatpush.msra.mxu0 %v1884
    %2048 = vmatpush.msra.mxu0 %v1883
    %2049 = vmatpush.msra.mxu0 %v1882
    %2050 = vmatmul.f32.gmra.mxu0 %v1812
    %v2051 = vpop.f32.mrf.mxu0
    %v2052 = vadd.f32 %v2032, %v2051
    %2053 = vdwg.mxu0
    %2054 = vmatpush.msra.mxu0 %v1913
    %2055 = vmatpush.msra.mxu0 %v1912
    %2056 = vmatpush.msra.mxu0 %v1911
    %2057 = vmatpush.msra.mxu0 %v1910
    %2058 = vmatpush.msra.mxu0 %v1909
    %2059 = vmatpush.msra.mxu0 %v1908
    %2060 = vmatpush.msra.mxu0 %v1907
    %2061 = vmatpush.msra.mxu0 %v1906
    %2062 = vmatpush.msra.mxu0 %v1905
    %2063 = vmatpush.msra.mxu0 %v1904
    %2064 = vmatpush.msra.mxu0 %v1903
    %2065 = vmatpush.msra.mxu0 %v1902
    %2066 = vmatpush.msra.mxu0 %v1901
    %2067 = vmatpush.msra.mxu0 %v1900
    %2068 = vmatpush.msra.mxu0 %v1899
    %2069 = vmatpush.msra.mxu0 %v1898
    %2070 = vmatmul.f32.gmra.mxu0 %v1849
    %v2071 = vpop.f32.mrf.mxu0
    %v2072 = vadd.f32 %v2052, %v2071
    %2073 = vdwg.mxu0
    %v2074 = vrcp.pop 16384.0
    %v2075 = vmul.f32 16384.0, %v2074
    %v2076 = vsub.f32 1.0, %v2075
    %v2077 = vmul.f32 %v2074, %v2076
    %v2078 = vadd.f32 %v2074, %v2077
    %vm2079 = vweird.f32 %v2074
    %v2080 = vsel %vm2079, %v2074, %v2078
    %v2081 = vmul.f32 %v1992, %v2080
    %v2082 = vmul.f32 %v2072, %v2080
    %v2083 = vmul.f32 %v2081, %v2081
    %v2084 = vsub.f32 %v2082, %v2083
    %v2085 = vmax.f32 %v2084, 0.0
    %v2086 = vld [vmem:[%s4] sm:$0x1]
    %v2087 = vadd.f32 %v2085, 1e-05
    %v2088 = vrsqrt.pop %v2087
    %v2089 = vmul.f32 %v2088, %v2087
    %v2090 = vmul.f32 %v2089, %v2088
    %v2091 = vmul.f32 0.5, %v2090
    %v2092 = vsub.f32 1.5, %v2091
    %v2093 = vmul.f32 %v2088, %v2092
    %vm2094 = vweird.f32 %v2087
    %vm2095 = vweird.f32 %v2088
    %vm2096 = vmor %vm2094, %vm2095
    %v2097 = vsel %vm2096, %v2088, %v2093
    %v2098 = vmul.f32 %v2086, %v2097
    %v2099 = vld [vmem:[%s5] sm:$0x1]
    %v2100 = vmul.f32 %v2081, %v2098
    %v2101 = vsub.f32 %v2099, %v2100
    %v2102 = vld [vmem:[#allocation8] sm:$0xff]
    %v2103 = vld [vmem:[#allocation8 + $0x8] sm:$0xff]
    %v2104 = vld [vmem:[#allocation8 + $0x10] sm:$0xff]
    %v2105 = vld [vmem:[#allocation8 + $0x18] sm:$0xff]
    %v2106 = vld [vmem:[#allocation8 + $0x20] sm:$0xff]
    %v2107 = vld [vmem:[#allocation8 + $0x28] sm:$0xff]
    %v2108 = vld [vmem:[#allocation8 + $0x30] sm:$0xff]
    %v2109 = vld [vmem:[#allocation8 + $0x38] sm:$0xff]
    %v2110 = vld [vmem:[#allocation8 + $0x40] sm:$0xff]
    %v2111 = vld [vmem:[#allocation8 + $0x48] sm:$0xff]
    %v2112 = vld [vmem:[#allocation8 + $0x50] sm:$0xff]
    %v2113 = vld [vmem:[#allocation8 + $0x58] sm:$0xff]
    %v2114 = vld [vmem:[#allocation8 + $0x60] sm:$0xff]
    %v2115 = vld [vmem:[#allocation8 + $0x68] sm:$0xff]
    %v2116 = vld [vmem:[#allocation8 + $0x70] sm:$0xff]
    %v2117 = vld [vmem:[#allocation8 + $0x78] sm:$0xff]
    %v2118 = vld [vmem:[#allocation8 + $0x80] sm:$0xff]
    %v2119 = vld [vmem:[#allocation8 + $0x88] sm:$0xff]
    %v2120 = vld [vmem:[#allocation8 + $0x90] sm:$0xff]
    %v2121 = vld [vmem:[#allocation8 + $0x98] sm:$0xff]
    %v2122 = vld [vmem:[#allocation8 + $0xa0] sm:$0xff]
    %v2123 = vld [vmem:[#allocation8 + $0xa8] sm:$0xff]
    %v2124 = vld [vmem:[#allocation8 + $0xb0] sm:$0xff]
    %v2125 = vld [vmem:[#allocation8 + $0xb8] sm:$0xff]
    %v2126 = vld [vmem:[#allocation8 + $0xc0] sm:$0xff]
    %v2127 = vld [vmem:[#allocation8 + $0xc8] sm:$0xff]
    %v2128 = vld [vmem:[#allocation8 + $0xd0] sm:$0xff]
    %v2129 = vld [vmem:[#allocation8 + $0xd8] sm:$0xff]
    %v2130 = vld [vmem:[#allocation8 + $0xe0] sm:$0xff]
    %v2131 = vld [vmem:[#allocation8 + $0xe8] sm:$0xff]
    %v2132 = vld [vmem:[#allocation8 + $0xf0] sm:$0xff]
    %v2133 = vld [vmem:[#allocation8 + $0xf8] sm:$0xff]
    %v2134 = vld [vmem:[#allocation8 + $0x100] sm:$0xff]
    %v2135 = vld [vmem:[#allocation8 + $0x108] sm:$0xff]
    %v2136 = vld [vmem:[#allocation8 + $0x110] sm:$0xff]
    %v2137 = vld [vmem:[#allocation8 + $0x118] sm:$0xff]
    %v2138 = vld [vmem:[#allocation8 + $0x120] sm:$0xff]
    %v2139 = vld [vmem:[#allocation8 + $0x128] sm:$0xff]
    %v2140 = vld [vmem:[#allocation8 + $0x130] sm:$0xff]
    %v2141 = vld [vmem:[#allocation8 + $0x138] sm:$0xff]
    %v2142 = vld [vmem:[#allocation8 + $0x140] sm:$0xff]
    %v2143 = vld [vmem:[#allocation8 + $0x148] sm:$0xff]
    %v2144 = vld [vmem:[#allocation8 + $0x150] sm:$0xff]
    %v2145 = vld [vmem:[#allocation8 + $0x158] sm:$0xff]
    %v2146 = vld [vmem:[#allocation8 + $0x160] sm:$0xff]
    %v2147 = vld [vmem:[#allocation8 + $0x168] sm:$0xff]
    %v2148 = vld [vmem:[#allocation8 + $0x170] sm:$0xff]
    %v2149 = vld [vmem:[#allocation8 + $0x178] sm:$0xff]
    %v2150 = vld [vmem:[#allocation8 + $0x180] sm:$0xff]
    %v2151 = vld [vmem:[#allocation8 + $0x188] sm:$0xff]
    %v2152 = vld [vmem:[#allocation8 + $0x190] sm:$0xff]
    %v2153 = vld [vmem:[#allocation8 + $0x198] sm:$0xff]
    %v2154 = vld [vmem:[#allocation8 + $0x1a0] sm:$0xff]
    %v2155 = vld [vmem:[#allocation8 + $0x1a8] sm:$0xff]
    %v2156 = vld [vmem:[#allocation8 + $0x1b0] sm:$0xff]
    %v2157 = vld [vmem:[#allocation8 + $0x1b8] sm:$0xff]
    %v2158 = vld [vmem:[#allocation8 + $0x1c0] sm:$0xff]
    %v2159 = vld [vmem:[#allocation8 + $0x1c8] sm:$0xff]
    %v2160 = vld [vmem:[#allocation8 + $0x1d0] sm:$0xff]
    %v2161 = vld [vmem:[#allocation8 + $0x1d8] sm:$0xff]
    %v2162 = vld [vmem:[#allocation8 + $0x1e0] sm:$0xff]
    %v2163 = vld [vmem:[#allocation8 + $0x1e8] sm:$0xff]
    %v2164 = vld [vmem:[#allocation8 + $0x1f0] sm:$0xff]
    %v2165 = vld [vmem:[#allocation8 + $0x1f8] sm:$0xff]
    %2166 = vmatpush.msra.mxu0 %v2162
    %2167 = vmatpush.msra.mxu0 %v2158
    %2168 = vmatpush.msra.mxu0 %v2154
    %2169 = vmatpush.msra.mxu0 %v2150
    %2170 = vmatpush.msra.mxu0 %v2146
    %2171 = vmatpush.msra.mxu0 %v2142
    %2172 = vmatpush.msra.mxu0 %v2138
    %2173 = vmatpush.msra.mxu0 %v2134
    %2174 = vmatpush.msra.mxu0 %v2130
    %2175 = vmatpush.msra.mxu0 %v2126
    %2176 = vmatpush.msra.mxu0 %v2122
    %2177 = vmatpush.msra.mxu0 %v2118
    %2178 = vmatpush.msra.mxu0 %v2114
    %2179 = vmatpush.msra.mxu0 %v2110
    %2180 = vmatpush.msra.mxu0 %v2106
    %2181 = vmatpush.msra.mxu0 %v2102
    %2182 = vmatmul.f32.gmra.mxu0 %v2098
    %v2183 = vpop.f32.mrf.mxu0
    %v2184 = vadd.f32 0.0, %v2183
    %2185 = vdwg.mxu0
    %2186 = vmatpush.msra.mxu0 %v2163
    %2187 = vmatpush.msra.mxu0 %v2159
    %2188 = vmatpush.msra.mxu0 %v2155
    %2189 = vmatpush.msra.mxu0 %v2151
    %2190 = vmatpush.msra.mxu0 %v2147
    %2191 = vmatpush.msra.mxu0 %v2143
    %2192 = vmatpush.msra.mxu0 %v2139
    %2193 = vmatpush.msra.mxu0 %v2135
    %2194 = vmatpush.msra.mxu0 %v2131
    %2195 = vmatpush.msra.mxu0 %v2127
    %2196 = vmatpush.msra.mxu0 %v2123
    %2197 = vmatpush.msra.mxu0 %v2119
    %2198 = vmatpush.msra.mxu0 %v2115
    %2199 = vmatpush.msra.mxu0 %v2111
    %2200 = vmatpush.msra.mxu0 %v2107
    %2201 = vmatpush.msra.mxu0 %v2103
    %2202 = vmatmul.f32.gmra.mxu0 %v2098
    %v2203 = vpop.f32.mrf.mxu0
    %v2204 = vadd.f32 0.0, %v2203
    %2205 = vdwg.mxu0
    %2206 = vmatpush.msra.mxu0 %v2164
    %2207 = vmatpush.msra.mxu0 %v2160
    %2208 = vmatpush.msra.mxu0 %v2156
    %2209 = vmatpush.msra.mxu0 %v2152
    %2210 = vmatpush.msra.mxu0 %v2148
    %2211 = vmatpush.msra.mxu0 %v2144
    %2212 = vmatpush.msra.mxu0 %v2140
    %2213 = vmatpush.msra.mxu0 %v2136
    %2214 = vmatpush.msra.mxu0 %v2132
    %2215 = vmatpush.msra.mxu0 %v2128
    %2216 = vmatpush.msra.mxu0 %v2124
    %2217 = vmatpush.msra.mxu0 %v2120
    %2218 = vmatpush.msra.mxu0 %v2116
    %2219 = vmatpush.msra.mxu0 %v2112
    %2220 = vmatpush.msra.mxu0 %v2108
    %2221 = vmatpush.msra.mxu0 %v2104
    %2222 = vmatmul.f32.gmra.mxu0 %v2098
    %v2223 = vpop.f32.mrf.mxu0
    %v2224 = vadd.f32 0.0, %v2223
    %2225 = vdwg.mxu0
    %2226 = vmatpush.msra.mxu0 %v2165
    %2227 = vmatpush.msra.mxu0 %v2161
    %2228 = vmatpush.msra.mxu0 %v2157
    %2229 = vmatpush.msra.mxu0 %v2153
    %2230 = vmatpush.msra.mxu0 %v2149
    %2231 = vmatpush.msra.mxu0 %v2145
    %2232 = vmatpush.msra.mxu0 %v2141
    %2233 = vmatpush.msra.mxu0 %v2137
    %2234 = vmatpush.msra.mxu0 %v2133
    %2235 = vmatpush.msra.mxu0 %v2129
    %2236 = vmatpush.msra.mxu0 %v2125
    %2237 = vmatpush.msra.mxu0 %v2121
    %2238 = vmatpush.msra.mxu0 %v2117
    %2239 = vmatpush.msra.mxu0 %v2113
    %2240 = vmatpush.msra.mxu0 %v2109
    %2241 = vmatpush.msra.mxu0 %v2105
    %2242 = vmatmul.f32.gmra.mxu0 %v2098
    %v2243 = vpop.f32.mrf.mxu0
    %v2244 = vadd.f32 0.0, %v2243
    %2245 = vdwg.mxu0
    %2246 = vmatpush.msra.mxu0 %v2162
    %2247 = vmatpush.msra.mxu0 %v2158
    %2248 = vmatpush.msra.mxu0 %v2154
    %2249 = vmatpush.msra.mxu0 %v2150
    %2250 = vmatpush.msra.mxu0 %v2146
    %2251 = vmatpush.msra.mxu0 %v2142
    %2252 = vmatpush.msra.mxu0 %v2138
    %2253 = vmatpush.msra.mxu0 %v2134
    %2254 = vmatpush.msra.mxu0 %v2130
    %2255 = vmatpush.msra.mxu0 %v2126
    %2256 = vmatpush.msra.mxu0 %v2122
    %2257 = vmatpush.msra.mxu0 %v2118
    %2258 = vmatpush.msra.mxu0 %v2114
    %2259 = vmatpush.msra.mxu0 %v2110
    %2260 = vmatpush.msra.mxu0 %v2106
    %2261 = vmatpush.msra.mxu0 %v2102
    %2262 = vmatmul.f32.gmra.mxu0 %v2101
    %v2263 = vpop.f32.mrf.mxu0
    %v2264 = vadd.f32 0.0, %v2263
    %2265 = vdwg.mxu0
    %2266 = vmatpush.msra.mxu0 %v2163
    %2267 = vmatpush.msra.mxu0 %v2159
    %2268 = vmatpush.msra.mxu0 %v2155
    %2269 = vmatpush.msra.mxu0 %v2151
    %2270 = vmatpush.msra.mxu0 %v2147
    %2271 = vmatpush.msra.mxu0 %v2143
    %2272 = vmatpush.msra.mxu0 %v2139
    %2273 = vmatpush.msra.mxu0 %v2135
    %2274 = vmatpush.msra.mxu0 %v2131
    %2275 = vmatpush.msra.mxu0 %v2127
    %2276 = vmatpush.msra.mxu0 %v2123
    %2277 = vmatpush.msra.mxu0 %v2119
    %2278 = vmatpush.msra.mxu0 %v2115
    %2279 = vmatpush.msra.mxu0 %v2111
    %2280 = vmatpush.msra.mxu0 %v2107
    %2281 = vmatpush.msra.mxu0 %v2103
    %2282 = vmatmul.f32.gmra.mxu0 %v2101
    %v2283 = vpop.f32.mrf.mxu0
    %v2284 = vadd.f32 0.0, %v2283
    %2285 = vdwg.mxu0
    %2286 = vmatpush.msra.mxu0 %v2164
    %2287 = vmatpush.msra.mxu0 %v2160
    %2288 = vmatpush.msra.mxu0 %v2156
    %2289 = vmatpush.msra.mxu0 %v2152
    %2290 = vmatpush.msra.mxu0 %v2148
    %2291 = vmatpush.msra.mxu0 %v2144
    %2292 = vmatpush.msra.mxu0 %v2140
    %2293 = vmatpush.msra.mxu0 %v2136
    %2294 = vmatpush.msra.mxu0 %v2132
    %2295 = vmatpush.msra.mxu0 %v2128
    %2296 = vmatpush.msra.mxu0 %v2124
    %2297 = vmatpush.msra.mxu0 %v2120
    %2298 = vmatpush.msra.mxu0 %v2116
    %2299 = vmatpush.msra.mxu0 %v2112
    %2300 = vmatpush.msra.mxu0 %v2108
    %2301 = vmatpush.msra.mxu0 %v2104
    %2302 = vmatmul.f32.gmra.mxu0 %v2101
    %v2303 = vpop.f32.mrf.mxu0
    %v2304 = vadd.f32 0.0, %v2303
    %2305 = vdwg.mxu0
    %2306 = vmatpush.msra.mxu0 %v2165
    %2307 = vmatpush.msra.mxu0 %v2161
    %2308 = vmatpush.msra.mxu0 %v2157
    %2309 = vmatpush.msra.mxu0 %v2153
    %2310 = vmatpush.msra.mxu0 %v2149
    %2311 = vmatpush.msra.mxu0 %v2145
    %2312 = vmatpush.msra.mxu0 %v2141
    %2313 = vmatpush.msra.mxu0 %v2137
    %2314 = vmatpush.msra.mxu0 %v2133
    %2315 = vmatpush.msra.mxu0 %v2129
    %2316 = vmatpush.msra.mxu0 %v2125
    %2317 = vmatpush.msra.mxu0 %v2121
    %2318 = vmatpush.msra.mxu0 %v2117
    %2319 = vmatpush.msra.mxu0 %v2113
    %2320 = vmatpush.msra.mxu0 %v2109
    %2321 = vmatpush.msra.mxu0 %v2105
    %2322 = vmatmul.f32.gmra.mxu0 %v2101
    %v2323 = vpop.f32.mrf.mxu0
    %v2324 = vadd.f32 0.0, %v2323
    %2325 = vdwg.mxu0
    %v2326 = vperm.slane %v2184, 0
    %v2327 = vperm.slane %v2204, 0
    %v2328 = vperm.slane %v2224, 0
    %v2329 = vperm.slane %v2244, 0
    %v2330 = vmul.f32 %v813, %v2326
    %v2331 = vmul.f32 %v991, %v2327
    %v2332 = vmul.f32 %v1169, %v2328
    %v2333 = vmul.f32 %v1347, %v2329
    %v2334 = vmul.f32 %v815, %v2326
    %v2335 = vmul.f32 %v993, %v2327
    %v2336 = vmul.f32 %v1171, %v2328
    %v2337 = vmul.f32 %v1349, %v2329
    %v2338 = vmul.f32 %v818, %v2326
    %v2339 = vmul.f32 %v996, %v2327
    %v2340 = vmul.f32 %v1174, %v2328
    %v2341 = vmul.f32 %v1352, %v2329
    %v2342 = vmul.f32 %v820, %v2326
    %v2343 = vmul.f32 %v998, %v2327
    %v2344 = vmul.f32 %v1176, %v2328
    %v2345 = vmul.f32 %v1354, %v2329
    %v2346 = vmul.f32 %v823, %v2326
    %v2347 = vmul.f32 %v1001, %v2327
    %v2348 = vmul.f32 %v1179, %v2328
    %v2349 = vmul.f32 %v1357, %v2329
    %v2350 = vmul.f32 %v825, %v2326
    %v2351 = vmul.f32 %v1003, %v2327
    %v2352 = vmul.f32 %v1181, %v2328
    %v2353 = vmul.f32 %v1359, %v2329
    %v2354 = vmul.f32 %v828, %v2326
    %v2355 = vmul.f32 %v1006, %v2327
    %v2356 = vmul.f32 %v1184, %v2328
    %v2357 = vmul.f32 %v1362, %v2329
    %v2358 = vmul.f32 %v830, %v2326
    %v2359 = vmul.f32 %v1008, %v2327
    %v2360 = vmul.f32 %v1186, %v2328
    %v2361 = vmul.f32 %v1364, %v2329
    %v2362 = vmul.f32 %v833, %v2326
    %v2363 = vmul.f32 %v1011, %v2327
    %v2364 = vmul.f32 %v1189, %v2328
    %v2365 = vmul.f32 %v1367, %v2329
    %v2366 = vmul.f32 %v835, %v2326
    %v2367 = vmul.f32 %v1013, %v2327
    %v2368 = vmul.f32 %v1191, %v2328
    %v2369 = vmul.f32 %v1369, %v2329
    %v2370 = vmul.f32 %v838, %v2326
    %v2371 = vmul.f32 %v1016, %v2327
    %v2372 = vmul.f32 %v1194, %v2328
    %v2373 = vmul.f32 %v1372, %v2329
    %v2374 = vmul.f32 %v840, %v2326
    %v2375 = vmul.f32 %v1018, %v2327
    %v2376 = vmul.f32 %v1196, %v2328
    %v2377 = vmul.f32 %v1374, %v2329
    %v2378 = vmul.f32 %v843, %v2326
    %v2379 = vmul.f32 %v1021, %v2327
    %v2380 = vmul.f32 %v1199, %v2328
    %v2381 = vmul.f32 %v1377, %v2329
    %v2382 = vmul.f32 %v845, %v2326
    %v2383 = vmul.f32 %v1023, %v2327
    %v2384 = vmul.f32 %v1201, %v2328
    %v2385 = vmul.f32 %v1379, %v2329
    %v2386 = vmul.f32 %v848, %v2326
    %v2387 = vmul.f32 %v1026, %v2327
    %v2388 = vmul.f32 %v1204, %v2328
    %v2389 = vmul.f32 %v1382, %v2329
    %v2390 = vmul.f32 %v850, %v2326
    %v2391 = vmul.f32 %v1028, %v2327
    %v2392 = vmul.f32 %v1206, %v2328
    %v2393 = vmul.f32 %v1384, %v2329
    %v2394 = vmul.f32 %v853, %v2326
    %v2395 = vmul.f32 %v1031, %v2327
    %v2396 = vmul.f32 %v1209, %v2328
    %v2397 = vmul.f32 %v1387, %v2329
    %v2398 = vmul.f32 %v855, %v2326
    %v2399 = vmul.f32 %v1033, %v2327
    %v2400 = vmul.f32 %v1211, %v2328
    %v2401 = vmul.f32 %v1389, %v2329
    %v2402 = vmul.f32 %v858, %v2326
    %v2403 = vmul.f32 %v1036, %v2327
    %v2404 = vmul.f32 %v1214, %v2328
    %v2405 = vmul.f32 %v1392, %v2329
    %v2406 = vmul.f32 %v860, %v2326
    %v2407 = vmul.f32 %v1038, %v2327
    %v2408 = vmul.f32 %v1216, %v2328
    %v2409 = vmul.f32 %v1394, %v2329
    %v2410 = vmul.f32 %v863, %v2326
    %v2411 = vmul.f32 %v1041, %v2327
    %v2412 = vmul.f32 %v1219, %v2328
    %v2413 = vmul.f32 %v1397, %v2329
    %v2414 = vmul.f32 %v865, %v2326
    %v2415 = vmul.f32 %v1043, %v2327
    %v2416 = vmul.f32 %v1221, %v2328
    %v2417 = vmul.f32 %v1399, %v2329
    %v2418 = vmul.f32 %v868, %v2326
    %v2419 = vmul.f32 %v1046, %v2327
    %v2420 = vmul.f32 %v1224, %v2328
    %v2421 = vmul.f32 %v1402, %v2329
    %v2422 = vmul.f32 %v870, %v2326
    %v2423 = vmul.f32 %v1048, %v2327
    %v2424 = vmul.f32 %v1226, %v2328
    %v2425 = vmul.f32 %v1404, %v2329
    %v2426 = vmul.f32 %v873, %v2326
    %v2427 = vmul.f32 %v1051, %v2327
    %v2428 = vmul.f32 %v1229, %v2328
    %v2429 = vmul.f32 %v1407, %v2329
    %v2430 = vmul.f32 %v875, %v2326
    %v2431 = vmul.f32 %v1053, %v2327
    %v2432 = vmul.f32 %v1231, %v2328
    %v2433 = vmul.f32 %v1409, %v2329
    %v2434 = vmul.f32 %v878, %v2326
    %v2435 = vmul.f32 %v1056, %v2327
    %v2436 = vmul.f32 %v1234, %v2328
    %v2437 = vmul.f32 %v1412, %v2329
    %v2438 = vmul.f32 %v880, %v2326
    %v2439 = vmul.f32 %v1058, %v2327
    %v2440 = vmul.f32 %v1236, %v2328
    %v2441 = vmul.f32 %v1414, %v2329
    %v2442 = vmul.f32 %v883, %v2326
    %v2443 = vmul.f32 %v1061, %v2327
    %v2444 = vmul.f32 %v1239, %v2328
    %v2445 = vmul.f32 %v1417, %v2329
    %v2446 = vmul.f32 %v885, %v2326
    %v2447 = vmul.f32 %v1063, %v2327
    %v2448 = vmul.f32 %v1241, %v2328
    %v2449 = vmul.f32 %v1419, %v2329
    %v2450 = vmul.f32 %v888, %v2326
    %v2451 = vmul.f32 %v1066, %v2327
    %v2452 = vmul.f32 %v1244, %v2328
    %v2453 = vmul.f32 %v1422, %v2329
    %v2454 = vmul.f32 %v890, %v2326
    %v2455 = vmul.f32 %v1068, %v2327
    %v2456 = vmul.f32 %v1246, %v2328
    %v2457 = vmul.f32 %v1424, %v2329
    %v2458 = vperm.slane %v2264, 0
    %v2459 = vperm.slane %v2284, 0
    %v2460 = vperm.slane %v2304, 0
    %v2461 = vperm.slane %v2324, 0
    %v2462 = vadd.f32 %v2330, %v2458
    %v2463 = vadd.f32 %v2331, %v2459
    %v2464 = vadd.f32 %v2332, %v2460
    %v2465 = vadd.f32 %v2333, %v2461
    %v2466 = vadd.f32 %v2334, %v2458
    %v2467 = vadd.f32 %v2335, %v2459
    %v2468 = vadd.f32 %v2336, %v2460
    %v2469 = vadd.f32 %v2337, %v2461
    %v2470 = vadd.f32 %v2338, %v2458
    %v2471 = vadd.f32 %v2339, %v2459
    %v2472 = vadd.f32 %v2340, %v2460
    %v2473 = vadd.f32 %v2341, %v2461
    %v2474 = vadd.f32 %v2342, %v2458
    %v2475 = vadd.f32 %v2343, %v2459
    %v2476 = vadd.f32 %v2344, %v2460
    %v2477 = vadd.f32 %v2345, %v2461
    %v2478 = vadd.f32 %v2346, %v2458
    %v2479 = vadd.f32 %v2347, %v2459
    %v2480 = vadd.f32 %v2348, %v2460
    %v2481 = vadd.f32 %v2349, %v2461
    %v2482 = vadd.f32 %v2350, %v2458
    %v2483 = vadd.f32 %v2351, %v2459
    %v2484 = vadd.f32 %v2352, %v2460
    %v2485 = vadd.f32 %v2353, %v2461
    %v2486 = vadd.f32 %v2354, %v2458
    %v2487 = vadd.f32 %v2355, %v2459
    %v2488 = vadd.f32 %v2356, %v2460
    %v2489 = vadd.f32 %v2357, %v2461
    %v2490 = vadd.f32 %v2358, %v2458
    %v2491 = vadd.f32 %v2359, %v2459
    %v2492 = vadd.f32 %v2360, %v2460
    %v2493 = vadd.f32 %v2361, %v2461
    %v2494 = vadd.f32 %v2362, %v2458
    %v2495 = vadd.f32 %v2363, %v2459
    %v2496 = vadd.f32 %v2364, %v2460
    %v2497 = vadd.f32 %v2365, %v2461
    %v2498 = vadd.f32 %v2366, %v2458
    %v2499 = vadd.f32 %v2367, %v2459
    %v2500 = vadd.f32 %v2368, %v2460
    %v2501 = vadd.f32 %v2369, %v2461
    %v2502 = vadd.f32 %v2370, %v2458
    %v2503 = vadd.f32 %v2371, %v2459
    %v2504 = vadd.f32 %v2372, %v2460
    %v2505 = vadd.f32 %v2373, %v2461
    %v2506 = vadd.f32 %v2374, %v2458
    %v2507 = vadd.f32 %v2375, %v2459
    %v2508 = vadd.f32 %v2376, %v2460
    %v2509 = vadd.f32 %v2377, %v2461
    %v2510 = vadd.f32 %v2378, %v2458
    %v2511 = vadd.f32 %v2379, %v2459
    %v2512 = vadd.f32 %v2380, %v2460
    %v2513 = vadd.f32 %v2381, %v2461
    %v2514 = vadd.f32 %v2382, %v2458
    %v2515 = vadd.f32 %v2383, %v2459
    %v2516 = vadd.f32 %v2384, %v2460
    %v2517 = vadd.f32 %v2385, %v2461
    %v2518 = vadd.f32 %v2386, %v2458
    %v2519 = vadd.f32 %v2387, %v2459
    %v2520 = vadd.f32 %v2388, %v2460
    %v2521 = vadd.f32 %v2389, %v2461
    %v2522 = vadd.f32 %v2390, %v2458
    %v2523 = vadd.f32 %v2391, %v2459
    %v2524 = vadd.f32 %v2392, %v2460
    %v2525 = vadd.f32 %v2393, %v2461
    %v2526 = vadd.f32 %v2394, %v2458
    %v2527 = vadd.f32 %v2395, %v2459
    %v2528 = vadd.f32 %v2396, %v2460
    %v2529 = vadd.f32 %v2397, %v2461
    %v2530 = vadd.f32 %v2398, %v2458
    %v2531 = vadd.f32 %v2399, %v2459
    %v2532 = vadd.f32 %v2400, %v2460
    %v2533 = vadd.f32 %v2401, %v2461
    %v2534 = vadd.f32 %v2402, %v2458
    %v2535 = vadd.f32 %v2403, %v2459
    %v2536 = vadd.f32 %v2404, %v2460
    %v2537 = vadd.f32 %v2405, %v2461
    %v2538 = vadd.f32 %v2406, %v2458
    %v2539 = vadd.f32 %v2407, %v2459
    %v2540 = vadd.f32 %v2408, %v2460
    %v2541 = vadd.f32 %v2409, %v2461
    %v2542 = vadd.f32 %v2410, %v2458
    %v2543 = vadd.f32 %v2411, %v2459
    %v2544 = vadd.f32 %v2412, %v2460
    %v2545 = vadd.f32 %v2413, %v2461
    %v2546 = vadd.f32 %v2414, %v2458
    %v2547 = vadd.f32 %v2415, %v2459
    %v2548 = vadd.f32 %v2416, %v2460
    %v2549 = vadd.f32 %v2417, %v2461
    %v2550 = vadd.f32 %v2418, %v2458
    %v2551 = vadd.f32 %v2419, %v2459
    %v2552 = vadd.f32 %v2420, %v2460
    %v2553 = vadd.f32 %v2421, %v2461
    %v2554 = vadd.f32 %v2422, %v2458
    %v2555 = vadd.f32 %v2423, %v2459
    %v2556 = vadd.f32 %v2424, %v2460
    %v2557 = vadd.f32 %v2425, %v2461
    %v2558 = vadd.f32 %v2426, %v2458
    %v2559 = vadd.f32 %v2427, %v2459
    %v2560 = vadd.f32 %v2428, %v2460
    %v2561 = vadd.f32 %v2429, %v2461
    %v2562 = vadd.f32 %v2430, %v2458
    %v2563 = vadd.f32 %v2431, %v2459
    %v2564 = vadd.f32 %v2432, %v2460
    %v2565 = vadd.f32 %v2433, %v2461
    %v2566 = vadd.f32 %v2434, %v2458
    %v2567 = vadd.f32 %v2435, %v2459
    %v2568 = vadd.f32 %v2436, %v2460
    %v2569 = vadd.f32 %v2437, %v2461
    %v2570 = vadd.f32 %v2438, %v2458
    %v2571 = vadd.f32 %v2439, %v2459
    %v2572 = vadd.f32 %v2440, %v2460
    %v2573 = vadd.f32 %v2441, %v2461
    %v2574 = vadd.f32 %v2442, %v2458
    %v2575 = vadd.f32 %v2443, %v2459
    %v2576 = vadd.f32 %v2444, %v2460
    %v2577 = vadd.f32 %v2445, %v2461
    %v2578 = vadd.f32 %v2446, %v2458
    %v2579 = vadd.f32 %v2447, %v2459
    %v2580 = vadd.f32 %v2448, %v2460
    %v2581 = vadd.f32 %v2449, %v2461
    %v2582 = vadd.f32 %v2450, %v2458
    %v2583 = vadd.f32 %v2451, %v2459
    %v2584 = vadd.f32 %v2452, %v2460
    %v2585 = vadd.f32 %v2453, %v2461
    %v2586 = vadd.f32 %v2454, %v2458
    %v2587 = vadd.f32 %v2455, %v2459
    %v2588 = vadd.f32 %v2456, %v2460
    %v2589 = vadd.f32 %v2457, %v2461
    %v2590 = vmul.f32 %v2462, 0.2
    %v2591 = vmul.f32 %v2463, 0.2
    %v2592 = vmul.f32 %v2464, 0.2
    %v2593 = vmul.f32 %v2465, 0.2
    %v2594 = vmul.f32 %v2466, 0.2
    %v2595 = vmul.f32 %v2467, 0.2
    %v2596 = vmul.f32 %v2468, 0.2
    %v2597 = vmul.f32 %v2469, 0.2
    %v2598 = vmul.f32 %v2470, 0.2
    %v2599 = vmul.f32 %v2471, 0.2
    %v2600 = vmul.f32 %v2472, 0.2
    %v2601 = vmul.f32 %v2473, 0.2
    %v2602 = vmul.f32 %v2474, 0.2
    %v2603 = vmul.f32 %v2475, 0.2
    %v2604 = vmul.f32 %v2476, 0.2
    %v2605 = vmul.f32 %v2477, 0.2
    %v2606 = vmul.f32 %v2478, 0.2
    %v2607 = vmul.f32 %v2479, 0.2
    %v2608 = vmul.f32 %v2480, 0.2
    %v2609 = vmul.f32 %v2481, 0.2
    %v2610 = vmul.f32 %v2482, 0.2
    %v2611 = vmul.f32 %v2483, 0.2
    %v2612 = vmul.f32 %v2484, 0.2
    %v2613 = vmul.f32 %v2485, 0.2
    %v2614 = vmul.f32 %v2486, 0.2
    %v2615 = vmul.f32 %v2487, 0.2
    %v2616 = vmul.f32 %v2488, 0.2
    %v2617 = vmul.f32 %v2489, 0.2
    %v2618 = vmul.f32 %v2490, 0.2
    %v2619 = vmul.f32 %v2491, 0.2
    %v2620 = vmul.f32 %v2492, 0.2
    %v2621 = vmul.f32 %v2493, 0.2
    %v2622 = vmul.f32 %v2494, 0.2
    %v2623 = vmul.f32 %v2495, 0.2
    %v2624 = vmul.f32 %v2496, 0.2
    %v2625 = vmul.f32 %v2497, 0.2
    %v2626 = vmul.f32 %v2498, 0.2
    %v2627 = vmul.f32 %v2499, 0.2
    %v2628 = vmul.f32 %v2500, 0.2
    %v2629 = vmul.f32 %v2501, 0.2
    %v2630 = vmul.f32 %v2502, 0.2
    %v2631 = vmul.f32 %v2503, 0.2
    %v2632 = vmul.f32 %v2504, 0.2
    %v2633 = vmul.f32 %v2505, 0.2
    %v2634 = vmul.f32 %v2506, 0.2
    %v2635 = vmul.f32 %v2507, 0.2
    %v2636 = vmul.f32 %v2508, 0.2
    %v2637 = vmul.f32 %v2509, 0.2
    %v2638 = vmul.f32 %v2510, 0.2
    %v2639 = vmul.f32 %v2511, 0.2
    %v2640 = vmul.f32 %v2512, 0.2
    %v2641 = vmul.f32 %v2513, 0.2
    %v2642 = vmul.f32 %v2514, 0.2
    %v2643 = vmul.f32 %v2515, 0.2
    %v2644 = vmul.f32 %v2516, 0.2
    %v2645 = vmul.f32 %v2517, 0.2
    %v2646 = vmul.f32 %v2518, 0.2
    %v2647 = vmul.f32 %v2519, 0.2
    %v2648 = vmul.f32 %v2520, 0.2
    %v2649 = vmul.f32 %v2521, 0.2
    %v2650 = vmul.f32 %v2522, 0.2
    %v2651 = vmul.f32 %v2523, 0.2
    %v2652 = vmul.f32 %v2524, 0.2
    %v2653 = vmul.f32 %v2525, 0.2
    %v2654 = vmul.f32 %v2526, 0.2
    %v2655 = vmul.f32 %v2527, 0.2
    %v2656 = vmul.f32 %v2528, 0.2
    %v2657 = vmul.f32 %v2529, 0.2
    %v2658 = vmul.f32 %v2530, 0.2
    %v2659 = vmul.f32 %v2531, 0.2
    %v2660 = vmul.f32 %v2532, 0.2
    %v2661 = vmul.f32 %v2533, 0.2
    %v2662 = vmul.f32 %v2534, 0.2
    %v2663 = vmul.f32 %v2535, 0.2
    %v2664 = vmul.f32 %v2536, 0.2
    %v2665 = vmul.f32 %v2537, 0.2
    %v2666 = vmul.f32 %v2538, 0.2
    %v2667 = vmul.f32 %v2539, 0.2
    %v2668 = vmul.f32 %v2540, 0.2
    %v2669 = vmul.f32 %v2541, 0.2
    %v2670 = vmul.f32 %v2542, 0.2
    %v2671 = vmul.f32 %v2543, 0.2
    %v2672 = vmul.f32 %v2544, 0.2
    %v2673 = vmul.f32 %v2545, 0.2
    %v2674 = vmul.f32 %v2546, 0.2
    %v2675 = vmul.f32 %v2547, 0.2
    %v2676 = vmul.f32 %v2548, 0.2
    %v2677 = vmul.f32 %v2549, 0.2
    %v2678 = vmul.f32 %v2550, 0.2
    %v2679 = vmul.f32 %v2551, 0.2
    %v2680 = vmul.f32 %v2552, 0.2
    %v2681 = vmul.f32 %v2553, 0.2
    %v2682 = vmul.f32 %v2554, 0.2
    %v2683 = vmul.f32 %v2555, 0.2
    %v2684 = vmul.f32 %v2556, 0.2
    %v2685 = vmul.f32 %v2557, 0.2
    %v2686 = vmul.f32 %v2558, 0.2
    %v2687 = vmul.f32 %v2559, 0.2
    %v2688 = vmul.f32 %v2560, 0.2
    %v2689 = vmul.f32 %v2561, 0.2
    %v2690 = vmul.f32 %v2562, 0.2
    %v2691 = vmul.f32 %v2563, 0.2
    %v2692 = vmul.f32 %v2564, 0.2
    %v2693 = vmul.f32 %v2565, 0.2
    %v2694 = vmul.f32 %v2566, 0.2
    %v2695 = vmul.f32 %v2567, 0.2
    %v2696 = vmul.f32 %v2568, 0.2
    %v2697 = vmul.f32 %v2569, 0.2
    %v2698 = vmul.f32 %v2570, 0.2
    %v2699 = vmul.f32 %v2571, 0.2
    %v2700 = vmul.f32 %v2572, 0.2
    %v2701 = vmul.f32 %v2573, 0.2
    %v2702 = vmul.f32 %v2574, 0.2
    %v2703 = vmul.f32 %v2575, 0.2
    %v2704 = vmul.f32 %v2576, 0.2
    %v2705 = vmul.f32 %v2577, 0.2
    %v2706 = vmul.f32 %v2578, 0.2
    %v2707 = vmul.f32 %v2579, 0.2
    %v2708 = vmul.f32 %v2580, 0.2
    %v2709 = vmul.f32 %v2581, 0.2
    %v2710 = vmul.f32 %v2582, 0.2
    %v2711 = vmul.f32 %v2583, 0.2
    %v2712 = vmul.f32 %v2584, 0.2
    %v2713 = vmul.f32 %v2585, 0.2
    %v2714 = vmul.f32 %v2586, 0.2
    %v2715 = vmul.f32 %v2587, 0.2
    %v2716 = vmul.f32 %v2588, 0.2
    %v2717 = vmul.f32 %v2589, 0.2
    %v2718 = vmax.f32 %v2462, %v2590
    %v2719 = vmax.f32 %v2463, %v2591
    %v2720 = vmax.f32 %v2464, %v2592
    %v2721 = vmax.f32 %v2465, %v2593
    %v2722 = vmax.f32 %v2466, %v2594
    %v2723 = vmax.f32 %v2467, %v2595
    %v2724 = vmax.f32 %v2468, %v2596
    %v2725 = vmax.f32 %v2469, %v2597
    %v2726 = vmax.f32 %v2470, %v2598
    %v2727 = vmax.f32 %v2471, %v2599
    %v2728 = vmax.f32 %v2472, %v2600
    %v2729 = vmax.f32 %v2473, %v2601
    %v2730 = vmax.f32 %v2474, %v2602
    %v2731 = vmax.f32 %v2475, %v2603
    %v2732 = vmax.f32 %v2476, %v2604
    %v2733 = vmax.f32 %v2477, %v2605
    %v2734 = vmax.f32 %v2478, %v2606
    %v2735 = vmax.f32 %v2479, %v2607
    %v2736 = vmax.f32 %v2480, %v2608
    %v2737 = vmax.f32 %v2481, %v2609
    %v2738 = vmax.f32 %v2482, %v2610
    %v2739 = vmax.f32 %v2483, %v2611
    %v2740 = vmax.f32 %v2484, %v2612
    %v2741 = vmax.f32 %v2485, %v2613
    %v2742 = vmax.f32 %v2486, %v2614
    %v2743 = vmax.f32 %v2487, %v2615
    %v2744 = vmax.f32 %v2488, %v2616
    %v2745 = vmax.f32 %v2489, %v2617
    %v2746 = vmax.f32 %v2490, %v2618
    %v2747 = vmax.f32 %v2491, %v2619
    %v2748 = vmax.f32 %v2492, %v2620
    %v2749 = vmax.f32 %v2493, %v2621
    %v2750 = vmax.f32 %v2494, %v2622
    %v2751 = vmax.f32 %v2495, %v2623
    %v2752 = vmax.f32 %v2496, %v2624
    %v2753 = vmax.f32 %v2497, %v2625
    %v2754 = vmax.f32 %v2498, %v2626
    %v2755 = vmax.f32 %v2499, %v2627
    %v2756 = vmax.f32 %v2500, %v2628
    %v2757 = vmax.f32 %v2501, %v2629
    %v2758 = vmax.f32 %v2502, %v2630
    %v2759 = vmax.f32 %v2503, %v2631
    %v2760 = vmax.f32 %v2504, %v2632
    %v2761 = vmax.f32 %v2505, %v2633
    %v2762 = vmax.f32 %v2506, %v2634
    %v2763 = vmax.f32 %v2507, %v2635
    %v2764 = vmax.f32 %v2508, %v2636
    %v2765 = vmax.f32 %v2509, %v2637
    %v2766 = vmax.f32 %v2510, %v2638
    %v2767 = vmax.f32 %v2511, %v2639
    %v2768 = vmax.f32 %v2512, %v2640
    %v2769 = vmax.f32 %v2513, %v2641
    %v2770 = vmax.f32 %v2514, %v2642
    %v2771 = vmax.f32 %v2515, %v2643
    %v2772 = vmax.f32 %v2516, %v2644
    %v2773 = vmax.f32 %v2517, %v2645
    %v2774 = vmax.f32 %v2518, %v2646
    %v2775 = vmax.f32 %v2519, %v2647
    %v2776 = vmax.f32 %v2520, %v2648
    %v2777 = vmax.f32 %v2521, %v2649
    %v2778 = vmax.f32 %v2522, %v2650
    %v2779 = vmax.f32 %v2523, %v2651
    %v2780 = vmax.f32 %v2524, %v2652
    %v2781 = vmax.f32 %v2525, %v2653
    %v2782 = vmax.f32 %v2526, %v2654
    %v2783 = vmax.f32 %v2527, %v2655
    %v2784 = vmax.f32 %v2528, %v2656
    %v2785 = vmax.f32 %v2529, %v2657
    %v2786 = vmax.f32 %v2530, %v2658
    %v2787 = vmax.f32 %v2531, %v2659
    %v2788 = vmax.f32 %v2532, %v2660
    %v2789 = vmax.f32 %v2533, %v2661
    %v2790 = vmax.f32 %v2534, %v2662
    %v2791 = vmax.f32 %v2535, %v2663
    %v2792 = vmax.f32 %v2536, %v2664
    %v2793 = vmax.f32 %v2537, %v2665
    %v2794 = vmax.f32 %v2538, %v2666
    %v2795 = vmax.f32 %v2539, %v2667
    %v2796 = vmax.f32 %v2540, %v2668
    %v2797 = vmax.f32 %v2541, %v2669
    %v2798 = vmax.f32 %v2542, %v2670
    %v2799 = vmax.f32 %v2543, %v2671
    %v2800 = vmax.f32 %v2544, %v2672
    %v2801 = vmax.f32 %v2545, %v2673
    %v2802 = vmax.f32 %v2546, %v2674
    %v2803 = vmax.f32 %v2547, %v2675
    %v2804 = vmax.f32 %v2548, %v2676
    %v2805 = vmax.f32 %v2549, %v2677
    %v2806 = vmax.f32 %v2550, %v2678
    %v2807 = vmax.f32 %v2551, %v2679
    %v2808 = vmax.f32 %v2552, %v2680
    %v2809 = vmax.f32 %v2553, %v2681
    %v2810 = vmax.f32 %v2554, %v2682
    %v2811 = vmax.f32 %v2555, %v2683
    %v2812 = vmax.f32 %v2556, %v2684
    %v2813 = vmax.f32 %v2557, %v2685
    %v2814 = vmax.f32 %v2558, %v2686
    %v2815 = vmax.f32 %v2559, %v2687
    %v2816 = vmax.f32 %v2560, %v2688
    %v2817 = vmax.f32 %v2561, %v2689
    %v2818 = vmax.f32 %v2562, %v2690
    %v2819 = vmax.f32 %v2563, %v2691
    %v2820 = vmax.f32 %v2564, %v2692
    %v2821 = vmax.f32 %v2565, %v2693
    %v2822 = vmax.f32 %v2566, %v2694
    %v2823 = vmax.f32 %v2567, %v2695
    %v2824 = vmax.f32 %v2568, %v2696
    %v2825 = vmax.f32 %v2569, %v2697
    %v2826 = vmax.f32 %v2570, %v2698
    %v2827 = vmax.f32 %v2571, %v2699
    %v2828 = vmax.f32 %v2572, %v2700
    %v2829 = vmax.f32 %v2573, %v2701
    %v2830 = vmax.f32 %v2574, %v2702
    %v2831 = vmax.f32 %v2575, %v2703
    %v2832 = vmax.f32 %v2576, %v2704
    %v2833 = vmax.f32 %v2577, %v2705
    %v2834 = vmax.f32 %v2578, %v2706
    %v2835 = vmax.f32 %v2579, %v2707
    %v2836 = vmax.f32 %v2580, %v2708
    %v2837 = vmax.f32 %v2581, %v2709
    %v2838 = vmax.f32 %v2582, %v2710
    %v2839 = vmax.f32 %v2583, %v2711
    %v2840 = vmax.f32 %v2584, %v2712
    %v2841 = vmax.f32 %v2585, %v2713
    %v2842 = vmax.f32 %v2586, %v2714
    %v2843 = vmax.f32 %v2587, %v2715
    %v2844 = vmax.f32 %v2588, %v2716
    %v2845 = vmax.f32 %v2589, %v2717
    %v2846 = vpack.c.bf16 %v2722, %v2718
    %v2847 = vpack.c.bf16 %v2723, %v2719
    %v2848 = vpack.c.bf16 %v2724, %v2720
    %v2849 = vpack.c.bf16 %v2725, %v2721
    %v2850 = vpack.c.bf16 %v2730, %v2726
    %v2851 = vpack.c.bf16 %v2731, %v2727
    %v2852 = vpack.c.bf16 %v2732, %v2728
    %v2853 = vpack.c.bf16 %v2733, %v2729
    %v2854 = vpack.c.bf16 %v2738, %v2734
    %v2855 = vpack.c.bf16 %v2739, %v2735
    %v2856 = vpack.c.bf16 %v2740, %v2736
    %v2857 = vpack.c.bf16 %v2741, %v2737
    %v2858 = vpack.c.bf16 %v2746, %v2742
    %v2859 = vpack.c.bf16 %v2747, %v2743
    %v2860 = vpack.c.bf16 %v2748, %v2744
    %v2861 = vpack.c.bf16 %v2749, %v2745
    %v2862 = vpack.c.bf16 %v2754, %v2750
    %v2863 = vpack.c.bf16 %v2755, %v2751
    %v2864 = vpack.c.bf16 %v2756, %v2752
    %v2865 = vpack.c.bf16 %v2757, %v2753
    %v2866 = vpack.c.bf16 %v2762, %v2758
    %v2867 = vpack.c.bf16 %v2763, %v2759
    %v2868 = vpack.c.bf16 %v2764, %v2760
    %v2869 = vpack.c.bf16 %v2765, %v2761
    %v2870 = vpack.c.bf16 %v2770, %v2766
    %v2871 = vpack.c.bf16 %v2771, %v2767
    %v2872 = vpack.c.bf16 %v2772, %v2768
    %v2873 = vpack.c.bf16 %v2773, %v2769
    %v2874 = vpack.c.bf16 %v2778, %v2774
    %v2875 = vpack.c.bf16 %v2779, %v2775
    %v2876 = vpack.c.bf16 %v2780, %v2776
    %v2877 = vpack.c.bf16 %v2781, %v2777
    %v2878 = vpack.c.bf16 %v2786, %v2782
    %v2879 = vpack.c.bf16 %v2787, %v2783
    %v2880 = vpack.c.bf16 %v2788, %v2784
    %v2881 = vpack.c.bf16 %v2789, %v2785
    %v2882 = vpack.c.bf16 %v2794, %v2790
    %v2883 = vpack.c.bf16 %v2795, %v2791
    %v2884 = vpack.c.bf16 %v2796, %v2792
    %v2885 = vpack.c.bf16 %v2797, %v2793
    %v2886 = vpack.c.bf16 %v2802, %v2798
    %v2887 = vpack.c.bf16 %v2803, %v2799
    %v2888 = vpack.c.bf16 %v2804, %v2800
    %v2889 = vpack.c.bf16 %v2805, %v2801
    %v2890 = vpack.c.bf16 %v2810, %v2806
    %v2891 = vpack.c.bf16 %v2811, %v2807
    %v2892 = vpack.c.bf16 %v2812, %v2808
    %v2893 = vpack.c.bf16 %v2813, %v2809
    %v2894 = vpack.c.bf16 %v2818, %v2814
    %v2895 = vpack.c.bf16 %v2819, %v2815
    %v2896 = vpack.c.bf16 %v2820, %v2816
    %v2897 = vpack.c.bf16 %v2821, %v2817
    %v2898 = vpack.c.bf16 %v2826, %v2822
    %v2899 = vpack.c.bf16 %v2827, %v2823
    %v2900 = vpack.c.bf16 %v2828, %v2824
    %v2901 = vpack.c.bf16 %v2829, %v2825
    %v2902 = vpack.c.bf16 %v2834, %v2830
    %v2903 = vpack.c.bf16 %v2835, %v2831
    %v2904 = vpack.c.bf16 %v2836, %v2832
    %v2905 = vpack.c.bf16 %v2837, %v2833
    %v2906 = vpack.c.bf16 %v2842, %v2838
    %v2907 = vpack.c.bf16 %v2843, %v2839
    %v2908 = vpack.c.bf16 %v2844, %v2840
    %v2909 = vpack.c.bf16 %v2845, %v2841
    %v2910 = vld [vmem:[#allocation10] sm:$0xff]
    %v2911 = vld [vmem:[#allocation10 + $0x8] sm:$0xff]
    %v2912 = vld [vmem:[#allocation10 + $0x10] sm:$0xff]
    %v2913 = vld [vmem:[#allocation10 + $0x18] sm:$0xff]
    %v2914 = vld [vmem:[#allocation10 + $0x20] sm:$0xff]
    %v2915 = vld [vmem:[#allocation10 + $0x28] sm:$0xff]
    %v2916 = vld [vmem:[#allocation10 + $0x30] sm:$0xff]
    %v2917 = vld [vmem:[#allocation10 + $0x38] sm:$0xff]
    %v2918 = vld [vmem:[#allocation10 + $0x40] sm:$0xff]
    %v2919 = vld [vmem:[#allocation10 + $0x48] sm:$0xff]
    %v2920 = vld [vmem:[#allocation10 + $0x50] sm:$0xff]
    %v2921 = vld [vmem:[#allocation10 + $0x58] sm:$0xff]
    %v2922 = vld [vmem:[#allocation10 + $0x60] sm:$0xff]
    %v2923 = vld [vmem:[#allocation10 + $0x68] sm:$0xff]
    %v2924 = vld [vmem:[#allocation10 + $0x70] sm:$0xff]
    %v2925 = vld [vmem:[#allocation10 + $0x78] sm:$0xff]
    %v2926 = vld [vmem:[#allocation10 + $0x80] sm:$0xff]
    %v2927 = vld [vmem:[#allocation10 + $0x88] sm:$0xff]
    %v2928 = vld [vmem:[#allocation10 + $0x90] sm:$0xff]
    %v2929 = vld [vmem:[#allocation10 + $0x98] sm:$0xff]
    %v2930 = vld [vmem:[#allocation10 + $0xa0] sm:$0xff]
    %v2931 = vld [vmem:[#allocation10 + $0xa8] sm:$0xff]
    %v2932 = vld [vmem:[#allocation10 + $0xb0] sm:$0xff]
    %v2933 = vld [vmem:[#allocation10 + $0xb8] sm:$0xff]
    %v2934 = vld [vmem:[#allocation10 + $0xc0] sm:$0xff]
    %v2935 = vld [vmem:[#allocation10 + $0xc8] sm:$0xff]
    %v2936 = vld [vmem:[#allocation10 + $0xd0] sm:$0xff]
    %v2937 = vld [vmem:[#allocation10 + $0xd8] sm:$0xff]
    %v2938 = vld [vmem:[#allocation10 + $0xe0] sm:$0xff]
    %v2939 = vld [vmem:[#allocation10 + $0xe8] sm:$0xff]
    %v2940 = vld [vmem:[#allocation10 + $0xf0] sm:$0xff]
    %v2941 = vld [vmem:[#allocation10 + $0xf8] sm:$0xff]
    %v2942 = vld [vmem:[#allocation10 + $0x100] sm:$0xff]
    %v2943 = vld [vmem:[#allocation10 + $0x108] sm:$0xff]
    %v2944 = vld [vmem:[#allocation10 + $0x110] sm:$0xff]
    %v2945 = vld [vmem:[#allocation10 + $0x118] sm:$0xff]
    %v2946 = vld [vmem:[#allocation10 + $0x120] sm:$0xff]
    %v2947 = vld [vmem:[#allocation10 + $0x128] sm:$0xff]
    %v2948 = vld [vmem:[#allocation10 + $0x130] sm:$0xff]
    %v2949 = vld [vmem:[#allocation10 + $0x138] sm:$0xff]
    %v2950 = vld [vmem:[#allocation10 + $0x140] sm:$0xff]
    %v2951 = vld [vmem:[#allocation10 + $0x148] sm:$0xff]
    %v2952 = vld [vmem:[#allocation10 + $0x150] sm:$0xff]
    %v2953 = vld [vmem:[#allocation10 + $0x158] sm:$0xff]
    %v2954 = vld [vmem:[#allocation10 + $0x160] sm:$0xff]
    %v2955 = vld [vmem:[#allocation10 + $0x168] sm:$0xff]
    %v2956 = vld [vmem:[#allocation10 + $0x170] sm:$0xff]
    %v2957 = vld [vmem:[#allocation10 + $0x178] sm:$0xff]
    %v2958 = vld [vmem:[#allocation10 + $0x180] sm:$0xff]
    %v2959 = vld [vmem:[#allocation10 + $0x188] sm:$0xff]
    %v2960 = vld [vmem:[#allocation10 + $0x190] sm:$0xff]
    %v2961 = vld [vmem:[#allocation10 + $0x198] sm:$0xff]
    %v2962 = vld [vmem:[#allocation10 + $0x1a0] sm:$0xff]
    %v2963 = vld [vmem:[#allocation10 + $0x1a8] sm:$0xff]
    %v2964 = vld [vmem:[#allocation10 + $0x1b0] sm:$0xff]
    %v2965 = vld [vmem:[#allocation10 + $0x1b8] sm:$0xff]
    %v2966 = vld [vmem:[#allocation10 + $0x1c0] sm:$0xff]
    %v2967 = vld [vmem:[#allocation10 + $0x1c8] sm:$0xff]
    %v2968 = vld [vmem:[#allocation10 + $0x1d0] sm:$0xff]
    %v2969 = vld [vmem:[#allocation10 + $0x1d8] sm:$0xff]
    %v2970 = vld [vmem:[#allocation10 + $0x1e0] sm:$0xff]
    %v2971 = vld [vmem:[#allocation10 + $0x1e8] sm:$0xff]
    %v2972 = vld [vmem:[#allocation10 + $0x1f0] sm:$0xff]
    %v2973 = vld [vmem:[#allocation10 + $0x1f8] sm:$0xff]
    %v3038 = vunpack.c.l.b16 %v2910
    %v3039 = vunpack.c.h.b16 %v2910
    %v3040 = vunpack.c.l.b16 %v2911
    %v3041 = vunpack.c.h.b16 %v2911
    %v3042 = vunpack.c.l.b16 %v2912
    %v3043 = vunpack.c.h.b16 %v2912
    %v3044 = vunpack.c.l.b16 %v2913
    %v3045 = vunpack.c.h.b16 %v2913
    %v3046 = vunpack.c.l.b16 %v2914
    %v3047 = vunpack.c.h.b16 %v2914
    %v3048 = vunpack.c.l.b16 %v2915
    %v3049 = vunpack.c.h.b16 %v2915
    %v3050 = vunpack.c.l.b16 %v2916
    %v3051 = vunpack.c.h.b16 %v2916
    %v3052 = vunpack.c.l.b16 %v2917
    %v3053 = vunpack.c.h.b16 %v2917
    %v3054 = vunpack.c.l.b16 %v2918
    %v3055 = vunpack.c.h.b16 %v2918
    %v3056 = vunpack.c.l.b16 %v2919
    %v3057 = vunpack.c.h.b16 %v2919
    %v3058 = vunpack.c.l.b16 %v2920
    %v3059 = vunpack.c.h.b16 %v2920
    %v3060 = vunpack.c.l.b16 %v2921
    %v3061 = vunpack.c.h.b16 %v2921
    %v3062 = vunpack.c.l.b16 %v2922
    %v3063 = vunpack.c.h.b16 %v2922
    %v3064 = vunpack.c.l.b16 %v2923
    %v3065 = vunpack.c.h.b16 %v2923
    %v3066 = vunpack.c.l.b16 %v2924
    %v3067 = vunpack.c.h.b16 %v2924
    %v3068 = vunpack.c.l.b16 %v2925
    %v3069 = vunpack.c.h.b16 %v2925
    %v3070 = vunpack.c.l.b16 %v2926
    %v3071 = vunpack.c.h.b16 %v2926
    %v3072 = vunpack.c.l.b16 %v2927
    %v3073 = vunpack.c.h.b16 %v2927
    %v3074 = vunpack.c.l.b16 %v2928
    %v3075 = vunpack.c.h.b16 %v2928
    %v3076 = vunpack.c.l.b16 %v2929
    %v3077 = vunpack.c.h.b16 %v2929
    %v3078 = vunpack.c.l.b16 %v2930
    %v3079 = vunpack.c.h.b16 %v2930
    %v3080 = vunpack.c.l.b16 %v2931
    %v3081 = vunpack.c.h.b16 %v2931
    %v3082 = vunpack.c.l.b16 %v2932
    %v3083 = vunpack.c.h.b16 %v2932
    %v3084 = vunpack.c.l.b16 %v2933
    %v3085 = vunpack.c.h.b16 %v2933
    %v3086 = vunpack.c.l.b16 %v2934
    %v3087 = vunpack.c.h.b16 %v2934
    %v3088 = vunpack.c.l.b16 %v2935
    %v3089 = vunpack.c.h.b16 %v2935
    %v3090 = vunpack.c.l.b16 %v2936
    %v3091 = vunpack.c.h.b16 %v2936
    %v3092 = vunpack.c.l.b16 %v2937
    %v3093 = vunpack.c.h.b16 %v2937
    %v3094 = vunpack.c.l.b16 %v2938
    %v3095 = vunpack.c.h.b16 %v2938
    %v3096 = vunpack.c.l.b16 %v2939
    %v3097 = vunpack.c.h.b16 %v2939
    %v3098 = vunpack.c.l.b16 %v2940
    %v3099 = vunpack.c.h.b16 %v2940
    %v3100 = vunpack.c.l.b16 %v2941
    %v3101 = vunpack.c.h.b16 %v2941
    %v3102 = vunpack.c.l.b16 %v2942
    %v3103 = vunpack.c.h.b16 %v2942
    %v3104 = vunpack.c.l.b16 %v2943
    %v3105 = vunpack.c.h.b16 %v2943
    %v3106 = vunpack.c.l.b16 %v2944
    %v3107 = vunpack.c.h.b16 %v2944
    %v3108 = vunpack.c.l.b16 %v2945
    %v3109 = vunpack.c.h.b16 %v2945
    %v3110 = vunpack.c.l.b16 %v2946
    %v3111 = vunpack.c.h.b16 %v2946
    %v3112 = vunpack.c.l.b16 %v2947
    %v3113 = vunpack.c.h.b16 %v2947
    %v3114 = vunpack.c.l.b16 %v2948
    %v3115 = vunpack.c.h.b16 %v2948
    %v3116 = vunpack.c.l.b16 %v2949
    %v3117 = vunpack.c.h.b16 %v2949
    %v3118 = vunpack.c.l.b16 %v2950
    %v3119 = vunpack.c.h.b16 %v2950
    %v3120 = vunpack.c.l.b16 %v2951
    %v3121 = vunpack.c.h.b16 %v2951
    %v3122 = vunpack.c.l.b16 %v2952
    %v3123 = vunpack.c.h.b16 %v2952
    %v3124 = vunpack.c.l.b16 %v2953
    %v3125 = vunpack.c.h.b16 %v2953
    %v3126 = vunpack.c.l.b16 %v2954
    %v3127 = vunpack.c.h.b16 %v2954
    %v3128 = vunpack.c.l.b16 %v2955
    %v3129 = vunpack.c.h.b16 %v2955
    %v3130 = vunpack.c.l.b16 %v2956
    %v3131 = vunpack.c.h.b16 %v2956
    %v3132 = vunpack.c.l.b16 %v2957
    %v3133 = vunpack.c.h.b16 %v2957
    %v3134 = vunpack.c.l.b16 %v2958
    %v3135 = vunpack.c.h.b16 %v2958
    %v3136 = vunpack.c.l.b16 %v2959
    %v3137 = vunpack.c.h.b16 %v2959
    %v3138 = vunpack.c.l.b16 %v2960
    %v3139 = vunpack.c.h.b16 %v2960
    %v3140 = vunpack.c.l.b16 %v2961
    %v3141 = vunpack.c.h.b16 %v2961
    %v3142 = vunpack.c.l.b16 %v2962
    %v3143 = vunpack.c.h.b16 %v2962
    %v3144 = vunpack.c.l.b16 %v2963
    %v3145 = vunpack.c.h.b16 %v2963
    %v3146 = vunpack.c.l.b16 %v2964
    %v3147 = vunpack.c.h.b16 %v2964
    %v3148 = vunpack.c.l.b16 %v2965
    %v3149 = vunpack.c.h.b16 %v2965
    %v3150 = vunpack.c.l.b16 %v2966
    %v3151 = vunpack.c.h.b16 %v2966
    %v3152 = vunpack.c.l.b16 %v2967
    %v3153 = vunpack.c.h.b16 %v2967
    %v3154 = vunpack.c.l.b16 %v2968
    %v3155 = vunpack.c.h.b16 %v2968
    %v3156 = vunpack.c.l.b16 %v2969
    %v3157 = vunpack.c.h.b16 %v2969
    %v3158 = vunpack.c.l.b16 %v2970
    %v3159 = vunpack.c.h.b16 %v2970
    %v3160 = vunpack.c.l.b16 %v2971
    %v3161 = vunpack.c.h.b16 %v2971
    %v3162 = vunpack.c.l.b16 %v2972
    %v3163 = vunpack.c.h.b16 %v2972
    %v3164 = vunpack.c.l.b16 %v2973
    %v3165 = vunpack.c.h.b16 %v2973
    %v3166 = vpack.c.b16 %v3040, %v3038
    %v3167 = vpack.c.b16 %v3041, %v3039
    %v3168 = vpack.c.b16 %v3044, %v3042
    %v3169 = vpack.c.b16 %v3045, %v3043
    %v3170 = vpack.c.b16 %v3048, %v3046
    %v3171 = vpack.c.b16 %v3049, %v3047
    %v3172 = vpack.c.b16 %v3052, %v3050
    %v3173 = vpack.c.b16 %v3053, %v3051
    %v3174 = vpack.c.b16 %v3056, %v3054
    %v3175 = vpack.c.b16 %v3057, %v3055
    %v3176 = vpack.c.b16 %v3060, %v3058
    %v3177 = vpack.c.b16 %v3061, %v3059
    %v3178 = vpack.c.b16 %v3064, %v3062
    %v3179 = vpack.c.b16 %v3065, %v3063
    %v3180 = vpack.c.b16 %v3068, %v3066
    %v3181 = vpack.c.b16 %v3069, %v3067
    %v3182 = vpack.c.b16 %v3072, %v3070
    %v3183 = vpack.c.b16 %v3073, %v3071
    %v3184 = vpack.c.b16 %v3076, %v3074
    %v3185 = vpack.c.b16 %v3077, %v3075
    %v3186 = vpack.c.b16 %v3080, %v3078
    %v3187 = vpack.c.b16 %v3081, %v3079
    %v3188 = vpack.c.b16 %v3084, %v3082
    %v3189 = vpack.c.b16 %v3085, %v3083
    %v3190 = vpack.c.b16 %v3088, %v3086
    %v3191 = vpack.c.b16 %v3089, %v3087
    %v3192 = vpack.c.b16 %v3092, %v3090
    %v3193 = vpack.c.b16 %v3093, %v3091
    %v3194 = vpack.c.b16 %v3096, %v3094
    %v3195 = vpack.c.b16 %v3097, %v3095
    %v3196 = vpack.c.b16 %v3100, %v3098
    %v3197 = vpack.c.b16 %v3101, %v3099
    %v3198 = vpack.c.b16 %v3104, %v3102
    %v3199 = vpack.c.b16 %v3105, %v3103
    %v3200 = vpack.c.b16 %v3108, %v3106
    %v3201 = vpack.c.b16 %v3109, %v3107
    %v3202 = vpack.c.b16 %v3112, %v3110
    %v3203 = vpack.c.b16 %v3113, %v3111
    %v3204 = vpack.c.b16 %v3116, %v3114
    %v3205 = vpack.c.b16 %v3117, %v3115
    %v3206 = vpack.c.b16 %v3120, %v3118
    %v3207 = vpack.c.b16 %v3121, %v3119
    %v3208 = vpack.c.b16 %v3124, %v3122
    %v3209 = vpack.c.b16 %v3125, %v3123
    %v3210 = vpack.c.b16 %v3128, %v3126
    %v3211 = vpack.c.b16 %v3129, %v3127
    %v3212 = vpack.c.b16 %v3132, %v3130
    %v3213 = vpack.c.b16 %v3133, %v3131
    %v3214 = vpack.c.b16 %v3136, %v3134
    %v3215 = vpack.c.b16 %v3137, %v3135
    %v3216 = vpack.c.b16 %v3140, %v3138
    %v3217 = vpack.c.b16 %v3141, %v3139
    %v3218 = vpack.c.b16 %v3144, %v3142
    %v3219 = vpack.c.b16 %v3145, %v3143
    %v3220 = vpack.c.b16 %v3148, %v3146
    %v3221 = vpack.c.b16 %v3149, %v3147
    %v3222 = vpack.c.b16 %v3152, %v3150
    %v3223 = vpack.c.b16 %v3153, %v3151
    %v3224 = vpack.c.b16 %v3156, %v3154
    %v3225 = vpack.c.b16 %v3157, %v3155
    %v3226 = vpack.c.b16 %v3160, %v3158
    %v3227 = vpack.c.b16 %v3161, %v3159
    %v3228 = vpack.c.b16 %v3164, %v3162
    %v3229 = vpack.c.b16 %v3165, %v3163
    %3294 = vmatpush.bf16.msra.mxu0 %v3180
    %3295 = vmatpush.bf16.msra.mxu0 %v3178
    %3296 = vmatpush.bf16.msra.mxu0 %v3176
    %3297 = vmatpush.bf16.msra.mxu0 %v3174
    %3298 = vmatpush.bf16.msra.mxu0 %v3172
    %3299 = vmatpush.bf16.msra.mxu0 %v3170
    %3300 = vmatpush.bf16.msra.mxu0 %v3168
    %3301 = vmatpush.bf16.msra.mxu0 %v3166
    %3302 = vmatmul.bf16.gmra.mxu0 %v2846
    %v3303 = vpop.f32.mrf.mxu0
    %v3304 = vadd.f32 0.0, %v3303
    %v3305 = vpop.f32.mrf.mxu0
    %v3306 = vadd.f32 0.0, %v3305
    %3307 = vmatmul.bf16.gmra.mxu0 %v2850
    %v3308 = vpop.f32.mrf.mxu0
    %v3309 = vadd.f32 0.0, %v3308
    %v3310 = vpop.f32.mrf.mxu0
    %v3311 = vadd.f32 0.0, %v3310
    %3312 = vmatmul.bf16.gmra.mxu0 %v2854
    %v3313 = vpop.f32.mrf.mxu0
    %v3314 = vadd.f32 0.0, %v3313
    %v3315 = vpop.f32.mrf.mxu0
    %v3316 = vadd.f32 0.0, %v3315
    %3317 = vmatmul.bf16.gmra.mxu0 %v2858
    %v3318 = vpop.f32.mrf.mxu0
    %v3319 = vadd.f32 0.0, %v3318
    %v3320 = vpop.f32.mrf.mxu0
    %v3321 = vadd.f32 0.0, %v3320
    %3322 = vmatmul.bf16.gmra.mxu0 %v2862
    %v3323 = vpop.f32.mrf.mxu0
    %v3324 = vadd.f32 0.0, %v3323
    %v3325 = vpop.f32.mrf.mxu0
    %v3326 = vadd.f32 0.0, %v3325
    %3327 = vmatmul.bf16.gmra.mxu0 %v2866
    %v3328 = vpop.f32.mrf.mxu0
    %v3329 = vadd.f32 0.0, %v3328
    %v3330 = vpop.f32.mrf.mxu0
    %v3331 = vadd.f32 0.0, %v3330
    %3332 = vmatmul.bf16.gmra.mxu0 %v2870
    %v3333 = vpop.f32.mrf.mxu0
    %v3334 = vadd.f32 0.0, %v3333
    %v3335 = vpop.f32.mrf.mxu0
    %v3336 = vadd.f32 0.0, %v3335
    %3337 = vmatmul.bf16.gmra.mxu0 %v2874
    %v3338 = vpop.f32.mrf.mxu0
    %v3339 = vadd.f32 0.0, %v3338
    %v3340 = vpop.f32.mrf.mxu0
    %v3341 = vadd.f32 0.0, %v3340
    %3342 = vmatmul.bf16.gmra.mxu0 %v2878
    %v3343 = vpop.f32.mrf.mxu0
    %v3344 = vadd.f32 0.0, %v3343
    %v3345 = vpop.f32.mrf.mxu0
    %v3346 = vadd.f32 0.0, %v3345
    %3347 = vmatmul.bf16.gmra.mxu0 %v2882
    %v3348 = vpop.f32.mrf.mxu0
    %v3349 = vadd.f32 0.0, %v3348
    %v3350 = vpop.f32.mrf.mxu0
    %v3351 = vadd.f32 0.0, %v3350
    %3352 = vmatmul.bf16.gmra.mxu0 %v2886
    %v3353 = vpop.f32.mrf.mxu0
    %v3354 = vadd.f32 0.0, %v3353
    %v3355 = vpop.f32.mrf.mxu0
    %v3356 = vadd.f32 0.0, %v3355
    %3357 = vmatmul.bf16.gmra.mxu0 %v2890
    %v3358 = vpop.f32.mrf.mxu0
    %v3359 = vadd.f32 0.0, %v3358
    %v3360 = vpop.f32.mrf.mxu0
    %v3361 = vadd.f32 0.0, %v3360
    %3362 = vmatmul.bf16.gmra.mxu0 %v2894
    %v3363 = vpop.f32.mrf.mxu0
    %v3364 = vadd.f32 0.0, %v3363
    %v3365 = vpop.f32.mrf.mxu0
    %v3366 = vadd.f32 0.0, %v3365
    %3367 = vmatmul.bf16.gmra.mxu0 %v2898
    %v3368 = vpop.f32.mrf.mxu0
    %v3369 = vadd.f32 0.0, %v3368
    %v3370 = vpop.f32.mrf.mxu0
    %v3371 = vadd.f32 0.0, %v3370
    %3372 = vmatmul.bf16.gmra.mxu0 %v2902
    %v3373 = vpop.f32.mrf.mxu0
    %v3374 = vadd.f32 0.0, %v3373
    %v3375 = vpop.f32.mrf.mxu0
    %v3376 = vadd.f32 0.0, %v3375
    %3377 = vmatmul.bf16.gmra.mxu0 %v2906
    %v3378 = vpop.f32.mrf.mxu0
    %v3379 = vadd.f32 0.0, %v3378
    %v3380 = vpop.f32.mrf.mxu0
    %v3381 = vadd.f32 0.0, %v3380
    %3382 = vdwg.mxu0
    %3383 = vmatpush.bf16.msra.mxu0 %v3196
    %3384 = vmatpush.bf16.msra.mxu0 %v3194
    %3385 = vmatpush.bf16.msra.mxu0 %v3192
    %3386 = vmatpush.bf16.msra.mxu0 %v3190
    %3387 = vmatpush.bf16.msra.mxu0 %v3188
    %3388 = vmatpush.bf16.msra.mxu0 %v3186
    %3389 = vmatpush.bf16.msra.mxu0 %v3184
    %3390 = vmatpush.bf16.msra.mxu0 %v3182
    %3391 = vmatmul.bf16.gmra.mxu0 %v2847
    %v3392 = vpop.f32.mrf.mxu0
    %v3393 = vadd.f32 %v3304, %v3392
    %v3394 = vpop.f32.mrf.mxu0
    %v3395 = vadd.f32 %v3306, %v3394
    %3396 = vmatmul.bf16.gmra.mxu0 %v2851
    %v3397 = vpop.f32.mrf.mxu0
    %v3398 = vadd.f32 %v3309, %v3397
    %v3399 = vpop.f32.mrf.mxu0
    %v3400 = vadd.f32 %v3311, %v3399
    %3401 = vmatmul.bf16.gmra.mxu0 %v2855
    %v3402 = vpop.f32.mrf.mxu0
    %v3403 = vadd.f32 %v3314, %v3402
    %v3404 = vpop.f32.mrf.mxu0
    %v3405 = vadd.f32 %v3316, %v3404
    %3406 = vmatmul.bf16.gmra.mxu0 %v2859
    %v3407 = vpop.f32.mrf.mxu0
    %v3408 = vadd.f32 %v3319, %v3407
    %v3409 = vpop.f32.mrf.mxu0
    %v3410 = vadd.f32 %v3321, %v3409
    %3411 = vmatmul.bf16.gmra.mxu0 %v2863
    %v3412 = vpop.f32.mrf.mxu0
    %v3413 = vadd.f32 %v3324, %v3412
    %v3414 = vpop.f32.mrf.mxu0
    %v3415 = vadd.f32 %v3326, %v3414
    %3416 = vmatmul.bf16.gmra.mxu0 %v2867
    %v3417 = vpop.f32.mrf.mxu0
    %v3418 = vadd.f32 %v3329, %v3417
    %v3419 = vpop.f32.mrf.mxu0
    %v3420 = vadd.f32 %v3331, %v3419
    %3421 = vmatmul.bf16.gmra.mxu0 %v2871
    %v3422 = vpop.f32.mrf.mxu0
    %v3423 = vadd.f32 %v3334, %v3422
    %v3424 = vpop.f32.mrf.mxu0
    %v3425 = vadd.f32 %v3336, %v3424
    %3426 = vmatmul.bf16.gmra.mxu0 %v2875
    %v3427 = vpop.f32.mrf.mxu0
    %v3428 = vadd.f32 %v3339, %v3427
    %v3429 = vpop.f32.mrf.mxu0
    %v3430 = vadd.f32 %v3341, %v3429
    %3431 = vmatmul.bf16.gmra.mxu0 %v2879
    %v3432 = vpop.f32.mrf.mxu0
    %v3433 = vadd.f32 %v3344, %v3432
    %v3434 = vpop.f32.mrf.mxu0
    %v3435 = vadd.f32 %v3346, %v3434
    %3436 = vmatmul.bf16.gmra.mxu0 %v2883
    %v3437 = vpop.f32.mrf.mxu0
    %v3438 = vadd.f32 %v3349, %v3437
    %v3439 = vpop.f32.mrf.mxu0
    %v3440 = vadd.f32 %v3351, %v3439
    %3441 = vmatmul.bf16.gmra.mxu0 %v2887
    %v3442 = vpop.f32.mrf.mxu0
    %v3443 = vadd.f32 %v3354, %v3442
    %v3444 = vpop.f32.mrf.mxu0
    %v3445 = vadd.f32 %v3356, %v3444
    %3446 = vmatmul.bf16.gmra.mxu0 %v2891
    %v3447 = vpop.f32.mrf.mxu0
    %v3448 = vadd.f32 %v3359, %v3447
    %v3449 = vpop.f32.mrf.mxu0
    %v3450 = vadd.f32 %v3361, %v3449
    %3451 = vmatmul.bf16.gmra.mxu0 %v2895
    %v3452 = vpop.f32.mrf.mxu0
    %v3453 = vadd.f32 %v3364, %v3452
    %v3454 = vpop.f32.mrf.mxu0
    %v3455 = vadd.f32 %v3366, %v3454
    %3456 = vmatmul.bf16.gmra.mxu0 %v2899
    %v3457 = vpop.f32.mrf.mxu0
    %v3458 = vadd.f32 %v3369, %v3457
    %v3459 = vpop.f32.mrf.mxu0
    %v3460 = vadd.f32 %v3371, %v3459
    %3461 = vmatmul.bf16.gmra.mxu0 %v2903
    %v3462 = vpop.f32.mrf.mxu0
    %v3463 = vadd.f32 %v3374, %v3462
    %v3464 = vpop.f32.mrf.mxu0
    %v3465 = vadd.f32 %v3376, %v3464
    %3466 = vmatmul.bf16.gmra.mxu0 %v2907
    %v3467 = vpop.f32.mrf.mxu0
    %v3468 = vadd.f32 %v3379, %v3467
    %v3469 = vpop.f32.mrf.mxu0
    %v3470 = vadd.f32 %v3381, %v3469
    %3471 = vdwg.mxu0
    %3472 = vmatpush.bf16.msra.mxu0 %v3212
    %3473 = vmatpush.bf16.msra.mxu0 %v3210
    %3474 = vmatpush.bf16.msra.mxu0 %v3208
    %3475 = vmatpush.bf16.msra.mxu0 %v3206
    %3476 = vmatpush.bf16.msra.mxu0 %v3204
    %3477 = vmatpush.bf16.msra.mxu0 %v3202
    %3478 = vmatpush.bf16.msra.mxu0 %v3200
    %3479 = vmatpush.bf16.msra.mxu0 %v3198
    %3480 = vmatmul.bf16.gmra.mxu0 %v2848
    %v3481 = vpop.f32.mrf.mxu0
    %v3482 = vadd.f32 %v3393, %v3481
    %v3483 = vpop.f32.mrf.mxu0
    %v3484 = vadd.f32 %v3395, %v3483
    %3485 = vmatmul.bf16.gmra.mxu0 %v2852
    %v3486 = vpop.f32.mrf.mxu0
    %v3487 = vadd.f32 %v3398, %v3486
    %v3488 = vpop.f32.mrf.mxu0
    %v3489 = vadd.f32 %v3400, %v3488
    %3490 = vmatmul.bf16.gmra.mxu0 %v2856
    %v3491 = vpop.f32.mrf.mxu0
    %v3492 = vadd.f32 %v3403, %v3491
    %v3493 = vpop.f32.mrf.mxu0
    %v3494 = vadd.f32 %v3405, %v3493
    %3495 = vmatmul.bf16.gmra.mxu0 %v2860
    %v3496 = vpop.f32.mrf.mxu0
    %v3497 = vadd.f32 %v3408, %v3496
    %v3498 = vpop.f32.mrf.mxu0
    %v3499 = vadd.f32 %v3410, %v3498
    %3500 = vmatmul.bf16.gmra.mxu0 %v2864
    %v3501 = vpop.f32.mrf.mxu0
    %v3502 = vadd.f32 %v3413, %v3501
    %v3503 = vpop.f32.mrf.mxu0
    %v3504 = vadd.f32 %v3415, %v3503
    %3505 = vmatmul.bf16.gmra.mxu0 %v2868
    %v3506 = vpop.f32.mrf.mxu0
    %v3507 = vadd.f32 %v3418, %v3506
    %v3508 = vpop.f32.mrf.mxu0
    %v3509 = vadd.f32 %v3420, %v3508
    %3510 = vmatmul.bf16.gmra.mxu0 %v2872
    %v3511 = vpop.f32.mrf.mxu0
    %v3512 = vadd.f32 %v3423, %v3511
    %v3513 = vpop.f32.mrf.mxu0
    %v3514 = vadd.f32 %v3425, %v3513
    %3515 = vmatmul.bf16.gmra.mxu0 %v2876
    %v3516 = vpop.f32.mrf.mxu0
    %v3517 = vadd.f32 %v3428, %v3516
    %v3518 = vpop.f32.mrf.mxu0
    %v3519 = vadd.f32 %v3430, %v3518
    %3520 = vmatmul.bf16.gmra.mxu0 %v2880
    %v3521 = vpop.f32.mrf.mxu0
    %v3522 = vadd.f32 %v3433, %v3521
    %v3523 = vpop.f32.mrf.mxu0
    %v3524 = vadd.f32 %v3435, %v3523
    %3525 = vmatmul.bf16.gmra.mxu0 %v2884
    %v3526 = vpop.f32.mrf.mxu0
    %v3527 = vadd.f32 %v3438, %v3526
    %v3528 = vpop.f32.mrf.mxu0
    %v3529 = vadd.f32 %v3440, %v3528
    %3530 = vmatmul.bf16.gmra.mxu0 %v2888
    %v3531 = vpop.f32.mrf.mxu0
    %v3532 = vadd.f32 %v3443, %v3531
    %v3533 = vpop.f32.mrf.mxu0
    %v3534 = vadd.f32 %v3445, %v3533
    %3535 = vmatmul.bf16.gmra.mxu0 %v2892
    %v3536 = vpop.f32.mrf.mxu0
    %v3537 = vadd.f32 %v3448, %v3536
    %v3538 = vpop.f32.mrf.mxu0
    %v3539 = vadd.f32 %v3450, %v3538
    %3540 = vmatmul.bf16.gmra.mxu0 %v2896
    %v3541 = vpop.f32.mrf.mxu0
    %v3542 = vadd.f32 %v3453, %v3541
    %v3543 = vpop.f32.mrf.mxu0
    %v3544 = vadd.f32 %v3455, %v3543
    %3545 = vmatmul.bf16.gmra.mxu0 %v2900
    %v3546 = vpop.f32.mrf.mxu0
    %v3547 = vadd.f32 %v3458, %v3546
    %v3548 = vpop.f32.mrf.mxu0
    %v3549 = vadd.f32 %v3460, %v3548
    %3550 = vmatmul.bf16.gmra.mxu0 %v2904
    %v3551 = vpop.f32.mrf.mxu0
    %v3552 = vadd.f32 %v3463, %v3551
    %v3553 = vpop.f32.mrf.mxu0
    %v3554 = vadd.f32 %v3465, %v3553
    %3555 = vmatmul.bf16.gmra.mxu0 %v2908
    %v3556 = vpop.f32.mrf.mxu0
    %v3557 = vadd.f32 %v3468, %v3556
    %v3558 = vpop.f32.mrf.mxu0
    %v3559 = vadd.f32 %v3470, %v3558
    %3560 = vdwg.mxu0
    %3561 = vmatpush.bf16.msra.mxu0 %v3228
    %3562 = vmatpush.bf16.msra.mxu0 %v3226
    %3563 = vmatpush.bf16.msra.mxu0 %v3224
    %3564 = vmatpush.bf16.msra.mxu0 %v3222
    %3565 = vmatpush.bf16.msra.mxu0 %v3220
    %3566 = vmatpush.bf16.msra.mxu0 %v3218
    %3567 = vmatpush.bf16.msra.mxu0 %v3216
    %3568 = vmatpush.bf16.msra.mxu0 %v3214
    %3569 = vmatmul.bf16.gmra.mxu0 %v2849
    %v3570 = vpop.f32.mrf.mxu0
    %v3571 = vadd.f32 %v3482, %v3570
    %v3572 = vpop.f32.mrf.mxu0
    %v3573 = vadd.f32 %v3484, %v3572
    %3574 = vmatmul.bf16.gmra.mxu0 %v2853
    %v3575 = vpop.f32.mrf.mxu0
    %v3576 = vadd.f32 %v3487, %v3575
    %v3577 = vpop.f32.mrf.mxu0
    %v3578 = vadd.f32 %v3489, %v3577
    %3579 = vmatmul.bf16.gmra.mxu0 %v2857
    %v3580 = vpop.f32.mrf.mxu0
    %v3581 = vadd.f32 %v3492, %v3580
    %v3582 = vpop.f32.mrf.mxu0
    %v3583 = vadd.f32 %v3494, %v3582
    %3584 = vmatmul.bf16.gmra.mxu0 %v2861
    %v3585 = vpop.f32.mrf.mxu0
    %v3586 = vadd.f32 %v3497, %v3585
    %v3587 = vpop.f32.mrf.mxu0
    %v3588 = vadd.f32 %v3499, %v3587
    %3589 = vmatmul.bf16.gmra.mxu0 %v2865
    %v3590 = vpop.f32.mrf.mxu0
    %v3591 = vadd.f32 %v3502, %v3590
    %v3592 = vpop.f32.mrf.mxu0
    %v3593 = vadd.f32 %v3504, %v3592
    %3594 = vmatmul.bf16.gmra.mxu0 %v2869
    %v3595 = vpop.f32.mrf.mxu0
    %v3596 = vadd.f32 %v3507, %v3595
    %v3597 = vpop.f32.mrf.mxu0
    %v3598 = vadd.f32 %v3509, %v3597
    %3599 = vmatmul.bf16.gmra.mxu0 %v2873
    %v3600 = vpop.f32.mrf.mxu0
    %v3601 = vadd.f32 %v3512, %v3600
    %v3602 = vpop.f32.mrf.mxu0
    %v3603 = vadd.f32 %v3514, %v3602
    %3604 = vmatmul.bf16.gmra.mxu0 %v2877
    %v3605 = vpop.f32.mrf.mxu0
    %v3606 = vadd.f32 %v3517, %v3605
    %v3607 = vpop.f32.mrf.mxu0
    %v3608 = vadd.f32 %v3519, %v3607
    %3609 = vmatmul.bf16.gmra.mxu0 %v2881
    %v3610 = vpop.f32.mrf.mxu0
    %v3611 = vadd.f32 %v3522, %v3610
    %v3612 = vpop.f32.mrf.mxu0
    %v3613 = vadd.f32 %v3524, %v3612
    %3614 = vmatmul.bf16.gmra.mxu0 %v2885
    %v3615 = vpop.f32.mrf.mxu0
    %v3616 = vadd.f32 %v3527, %v3615
    %v3617 = vpop.f32.mrf.mxu0
    %v3618 = vadd.f32 %v3529, %v3617
    %3619 = vmatmul.bf16.gmra.mxu0 %v2889
    %v3620 = vpop.f32.mrf.mxu0
    %v3621 = vadd.f32 %v3532, %v3620
    %v3622 = vpop.f32.mrf.mxu0
    %v3623 = vadd.f32 %v3534, %v3622
    %3624 = vmatmul.bf16.gmra.mxu0 %v2893
    %v3625 = vpop.f32.mrf.mxu0
    %v3626 = vadd.f32 %v3537, %v3625
    %v3627 = vpop.f32.mrf.mxu0
    %v3628 = vadd.f32 %v3539, %v3627
    %3629 = vmatmul.bf16.gmra.mxu0 %v2897
    %v3630 = vpop.f32.mrf.mxu0
    %v3631 = vadd.f32 %v3542, %v3630
    %v3632 = vpop.f32.mrf.mxu0
    %v3633 = vadd.f32 %v3544, %v3632
    %3634 = vmatmul.bf16.gmra.mxu0 %v2901
    %v3635 = vpop.f32.mrf.mxu0
    %v3636 = vadd.f32 %v3547, %v3635
    %v3637 = vpop.f32.mrf.mxu0
    %v3638 = vadd.f32 %v3549, %v3637
    %3639 = vmatmul.bf16.gmra.mxu0 %v2905
    %v3640 = vpop.f32.mrf.mxu0
    %v3641 = vadd.f32 %v3552, %v3640
    %v3642 = vpop.f32.mrf.mxu0
    %v3643 = vadd.f32 %v3554, %v3642
    %3644 = vmatmul.bf16.gmra.mxu0 %v2909
    %v3645 = vpop.f32.mrf.mxu0
    %v3646 = vadd.f32 %v3557, %v3645
    %v3647 = vpop.f32.mrf.mxu0
    %v3648 = vadd.f32 %v3559, %v3647
    %3649 = vdwg.mxu0
    %3650 = vmatpush.bf16.msra.mxu0 %v3181
    %3651 = vmatpush.bf16.msra.mxu0 %v3179
    %3652 = vmatpush.bf16.msra.mxu0 %v3177
    %3653 = vmatpush.bf16.msra.mxu0 %v3175
    %3654 = vmatpush.bf16.msra.mxu0 %v3173
    %3655 = vmatpush.bf16.msra.mxu0 %v3171
    %3656 = vmatpush.bf16.msra.mxu0 %v3169
    %3657 = vmatpush.bf16.msra.mxu0 %v3167
    %3658 = vmatmul.bf16.gmra.mxu0 %v2846
    %v3659 = vpop.f32.mrf.mxu0
    %v3660 = vadd.f32 0.0, %v3659
    %v3661 = vpop.f32.mrf.mxu0
    %v3662 = vadd.f32 0.0, %v3661
    %3663 = vmatmul.bf16.gmra.mxu0 %v2850
    %v3664 = vpop.f32.mrf.mxu0
    %v3665 = vadd.f32 0.0, %v3664
    %v3666 = vpop.f32.mrf.mxu0
    %v3667 = vadd.f32 0.0, %v3666
    %3668 = vmatmul.bf16.gmra.mxu0 %v2854
    %v3669 = vpop.f32.mrf.mxu0
    %v3670 = vadd.f32 0.0, %v3669
    %v3671 = vpop.f32.mrf.mxu0
    %v3672 = vadd.f32 0.0, %v3671
    %3673 = vmatmul.bf16.gmra.mxu0 %v2858
    %v3674 = vpop.f32.mrf.mxu0
    %v3675 = vadd.f32 0.0, %v3674
    %v3676 = vpop.f32.mrf.mxu0
    %v3677 = vadd.f32 0.0, %v3676
    %3678 = vmatmul.bf16.gmra.mxu0 %v2862
    %v3679 = vpop.f32.mrf.mxu0
    %v3680 = vadd.f32 0.0, %v3679
    %v3681 = vpop.f32.mrf.mxu0
    %v3682 = vadd.f32 0.0, %v3681
    %3683 = vmatmul.bf16.gmra.mxu0 %v2866
    %v3684 = vpop.f32.mrf.mxu0
    %v3685 = vadd.f32 0.0, %v3684
    %v3686 = vpop.f32.mrf.mxu0
    %v3687 = vadd.f32 0.0, %v3686
    %3688 = vmatmul.bf16.gmra.mxu0 %v2870
    %v3689 = vpop.f32.mrf.mxu0
    %v3690 = vadd.f32 0.0, %v3689
    %v3691 = vpop.f32.mrf.mxu0
    %v3692 = vadd.f32 0.0, %v3691
    %3693 = vmatmul.bf16.gmra.mxu0 %v2874
    %v3694 = vpop.f32.mrf.mxu0
    %v3695 = vadd.f32 0.0, %v3694
    %v3696 = vpop.f32.mrf.mxu0
    %v3697 = vadd.f32 0.0, %v3696
    %3698 = vmatmul.bf16.gmra.mxu0 %v2878
    %v3699 = vpop.f32.mrf.mxu0
    %v3700 = vadd.f32 0.0, %v3699
    %v3701 = vpop.f32.mrf.mxu0
    %v3702 = vadd.f32 0.0, %v3701
    %3703 = vmatmul.bf16.gmra.mxu0 %v2882
    %v3704 = vpop.f32.mrf.mxu0
    %v3705 = vadd.f32 0.0, %v3704
    %v3706 = vpop.f32.mrf.mxu0
    %v3707 = vadd.f32 0.0, %v3706
    %3708 = vmatmul.bf16.gmra.mxu0 %v2886
    %v3709 = vpop.f32.mrf.mxu0
    %v3710 = vadd.f32 0.0, %v3709
    %v3711 = vpop.f32.mrf.mxu0
    %v3712 = vadd.f32 0.0, %v3711
    %3713 = vmatmul.bf16.gmra.mxu0 %v2890
    %v3714 = vpop.f32.mrf.mxu0
    %v3715 = vadd.f32 0.0, %v3714
    %v3716 = vpop.f32.mrf.mxu0
    %v3717 = vadd.f32 0.0, %v3716
    %3718 = vmatmul.bf16.gmra.mxu0 %v2894
    %v3719 = vpop.f32.mrf.mxu0
    %v3720 = vadd.f32 0.0, %v3719
    %v3721 = vpop.f32.mrf.mxu0
    %v3722 = vadd.f32 0.0, %v3721
    %3723 = vmatmul.bf16.gmra.mxu0 %v2898
    %v3724 = vpop.f32.mrf.mxu0
    %v3725 = vadd.f32 0.0, %v3724
    %v3726 = vpop.f32.mrf.mxu0
    %v3727 = vadd.f32 0.0, %v3726
    %3728 = vmatmul.bf16.gmra.mxu0 %v2902
    %v3729 = vpop.f32.mrf.mxu0
    %v3730 = vadd.f32 0.0, %v3729
    %v3731 = vpop.f32.mrf.mxu0
    %v3732 = vadd.f32 0.0, %v3731
    %3733 = vmatmul.bf16.gmra.mxu0 %v2906
    %v3734 = vpop.f32.mrf.mxu0
    %v3735 = vadd.f32 0.0, %v3734
    %v3736 = vpop.f32.mrf.mxu0
    %v3737 = vadd.f32 0.0, %v3736
    %3738 = vdwg.mxu0
    %3739 = vmatpush.bf16.msra.mxu0 %v3197
    %3740 = vmatpush.bf16.msra.mxu0 %v3195
    %3741 = vmatpush.bf16.msra.mxu0 %v3193
    %3742 = vmatpush.bf16.msra.mxu0 %v3191
    %3743 = vmatpush.bf16.msra.mxu0 %v3189
    %3744 = vmatpush.bf16.msra.mxu0 %v3187
    %3745 = vmatpush.bf16.msra.mxu0 %v3185
    %3746 = vmatpush.bf16.msra.mxu0 %v3183
    %3747 = vmatmul.bf16.gmra.mxu0 %v2847
    %v3748 = vpop.f32.mrf.mxu0
    %v3749 = vadd.f32 %v3660, %v3748
    %v3750 = vpop.f32.mrf.mxu0
    %v3751 = vadd.f32 %v3662, %v3750
    %3752 = vmatmul.bf16.gmra.mxu0 %v2851
    %v3753 = vpop.f32.mrf.mxu0
    %v3754 = vadd.f32 %v3665, %v3753
    %v3755 = vpop.f32.mrf.mxu0
    %v3756 = vadd.f32 %v3667, %v3755
    %3757 = vmatmul.bf16.gmra.mxu0 %v2855
    %v3758 = vpop.f32.mrf.mxu0
    %v3759 = vadd.f32 %v3670, %v3758
    %v3760 = vpop.f32.mrf.mxu0
    %v3761 = vadd.f32 %v3672, %v3760
    %3762 = vmatmul.bf16.gmra.mxu0 %v2859
    %v3763 = vpop.f32.mrf.mxu0
    %v3764 = vadd.f32 %v3675, %v3763
    %v3765 = vpop.f32.mrf.mxu0
    %v3766 = vadd.f32 %v3677, %v3765
    %3767 = vmatmul.bf16.gmra.mxu0 %v2863
    %v3768 = vpop.f32.mrf.mxu0
    %v3769 = vadd.f32 %v3680, %v3768
    %v3770 = vpop.f32.mrf.mxu0
    %v3771 = vadd.f32 %v3682, %v3770
    %3772 = vmatmul.bf16.gmra.mxu0 %v2867
    %v3773 = vpop.f32.mrf.mxu0
    %v3774 = vadd.f32 %v3685, %v3773
    %v3775 = vpop.f32.mrf.mxu0
    %v3776 = vadd.f32 %v3687, %v3775
    %3777 = vmatmul.bf16.gmra.mxu0 %v2871
    %v3778 = vpop.f32.mrf.mxu0
    %v3779 = vadd.f32 %v3690, %v3778
    %v3780 = vpop.f32.mrf.mxu0
    %v3781 = vadd.f32 %v3692, %v3780
    %3782 = vmatmul.bf16.gmra.mxu0 %v2875
    %v3783 = vpop.f32.mrf.mxu0
    %v3784 = vadd.f32 %v3695, %v3783
    %v3785 = vpop.f32.mrf.mxu0
    %v3786 = vadd.f32 %v3697, %v3785
    %3787 = vmatmul.bf16.gmra.mxu0 %v2879
    %v3788 = vpop.f32.mrf.mxu0
    %v3789 = vadd.f32 %v3700, %v3788
    %v3790 = vpop.f32.mrf.mxu0
    %v3791 = vadd.f32 %v3702, %v3790
    %3792 = vmatmul.bf16.gmra.mxu0 %v2883
    %v3793 = vpop.f32.mrf.mxu0
    %v3794 = vadd.f32 %v3705, %v3793
    %v3795 = vpop.f32.mrf.mxu0
    %v3796 = vadd.f32 %v3707, %v3795
    %3797 = vmatmul.bf16.gmra.mxu0 %v2887
    %v3798 = vpop.f32.mrf.mxu0
    %v3799 = vadd.f32 %v3710, %v3798
    %v3800 = vpop.f32.mrf.mxu0
    %v3801 = vadd.f32 %v3712, %v3800
    %3802 = vmatmul.bf16.gmra.mxu0 %v2891
    %v3803 = vpop.f32.mrf.mxu0
    %v3804 = vadd.f32 %v3715, %v3803
    %v3805 = vpop.f32.mrf.mxu0
    %v3806 = vadd.f32 %v3717, %v3805
    %3807 = vmatmul.bf16.gmra.mxu0 %v2895
    %v3808 = vpop.f32.mrf.mxu0
    %v3809 = vadd.f32 %v3720, %v3808
    %v3810 = vpop.f32.mrf.mxu0
    %v3811 = vadd.f32 %v3722, %v3810
    %3812 = vmatmul.bf16.gmra.mxu0 %v2899
    %v3813 = vpop.f32.mrf.mxu0
    %v3814 = vadd.f32 %v3725, %v3813
    %v3815 = vpop.f32.mrf.mxu0
    %v3816 = vadd.f32 %v3727, %v3815
    %3817 = vmatmul.bf16.gmra.mxu0 %v2903
    %v3818 = vpop.f32.mrf.mxu0
    %v3819 = vadd.f32 %v3730, %v3818
    %v3820 = vpop.f32.mrf.mxu0
    %v3821 = vadd.f32 %v3732, %v3820
    %3822 = vmatmul.bf16.gmra.mxu0 %v2907
    %v3823 = vpop.f32.mrf.mxu0
    %v3824 = vadd.f32 %v3735, %v3823
    %v3825 = vpop.f32.mrf.mxu0
    %v3826 = vadd.f32 %v3737, %v3825
    %3827 = vdwg.mxu0
    %3828 = vmatpush.bf16.msra.mxu0 %v3213
    %3829 = vmatpush.bf16.msra.mxu0 %v3211
    %3830 = vmatpush.bf16.msra.mxu0 %v3209
    %3831 = vmatpush.bf16.msra.mxu0 %v3207
    %3832 = vmatpush.bf16.msra.mxu0 %v3205
    %3833 = vmatpush.bf16.msra.mxu0 %v3203
    %3834 = vmatpush.bf16.msra.mxu0 %v3201
    %3835 = vmatpush.bf16.msra.mxu0 %v3199
    %3836 = vmatmul.bf16.gmra.mxu0 %v2848
    %v3837 = vpop.f32.mrf.mxu0
    %v3838 = vadd.f32 %v3749, %v3837
    %v3839 = vpop.f32.mrf.mxu0
    %v3840 = vadd.f32 %v3751, %v3839
    %3841 = vmatmul.bf16.gmra.mxu0 %v2852
    %v3842 = vpop.f32.mrf.mxu0
    %v3843 = vadd.f32 %v3754, %v3842
    %v3844 = vpop.f32.mrf.mxu0
    %v3845 = vadd.f32 %v3756, %v3844
    %3846 = vmatmul.bf16.gmra.mxu0 %v2856
    %v3847 = vpop.f32.mrf.mxu0
    %v3848 = vadd.f32 %v3759, %v3847
    %v3849 = vpop.f32.mrf.mxu0
    %v3850 = vadd.f32 %v3761, %v3849
    %3851 = vmatmul.bf16.gmra.mxu0 %v2860
    %v3852 = vpop.f32.mrf.mxu0
    %v3853 = vadd.f32 %v3764, %v3852
    %v3854 = vpop.f32.mrf.mxu0
    %v3855 = vadd.f32 %v3766, %v3854
    %3856 = vmatmul.bf16.gmra.mxu0 %v2864
    %v3857 = vpop.f32.mrf.mxu0
    %v3858 = vadd.f32 %v3769, %v3857
    %v3859 = vpop.f32.mrf.mxu0
    %v3860 = vadd.f32 %v3771, %v3859
    %3861 = vmatmul.bf16.gmra.mxu0 %v2868
    %v3862 = vpop.f32.mrf.mxu0
    %v3863 = vadd.f32 %v3774, %v3862
    %v3864 = vpop.f32.mrf.mxu0
    %v3865 = vadd.f32 %v3776, %v3864
    %3866 = vmatmul.bf16.gmra.mxu0 %v2872
    %v3867 = vpop.f32.mrf.mxu0
    %v3868 = vadd.f32 %v3779, %v3867
    %v3869 = vpop.f32.mrf.mxu0
    %v3870 = vadd.f32 %v3781, %v3869
    %3871 = vmatmul.bf16.gmra.mxu0 %v2876
    %v3872 = vpop.f32.mrf.mxu0
    %v3873 = vadd.f32 %v3784, %v3872
    %v3874 = vpop.f32.mrf.mxu0
    %v3875 = vadd.f32 %v3786, %v3874
    %3876 = vmatmul.bf16.gmra.mxu0 %v2880
    %v3877 = vpop.f32.mrf.mxu0
    %v3878 = vadd.f32 %v3789, %v3877
    %v3879 = vpop.f32.mrf.mxu0
    %v3880 = vadd.f32 %v3791, %v3879
    %3881 = vmatmul.bf16.gmra.mxu0 %v2884
    %v3882 = vpop.f32.mrf.mxu0
    %v3883 = vadd.f32 %v3794, %v3882
    %v3884 = vpop.f32.mrf.mxu0
    %v3885 = vadd.f32 %v3796, %v3884
    %3886 = vmatmul.bf16.gmra.mxu0 %v2888
    %v3887 = vpop.f32.mrf.mxu0
    %v3888 = vadd.f32 %v3799, %v3887
    %v3889 = vpop.f32.mrf.mxu0
    %v3890 = vadd.f32 %v3801, %v3889
    %3891 = vmatmul.bf16.gmra.mxu0 %v2892
    %v3892 = vpop.f32.mrf.mxu0
    %v3893 = vadd.f32 %v3804, %v3892
    %v3894 = vpop.f32.mrf.mxu0
    %v3895 = vadd.f32 %v3806, %v3894
    %3896 = vmatmul.bf16.gmra.mxu0 %v2896
    %v3897 = vpop.f32.mrf.mxu0
    %v3898 = vadd.f32 %v3809, %v3897
    %v3899 = vpop.f32.mrf.mxu0
    %v3900 = vadd.f32 %v3811, %v3899
    %3901 = vmatmul.bf16.gmra.mxu0 %v2900
    %v3902 = vpop.f32.mrf.mxu0
    %v3903 = vadd.f32 %v3814, %v3902
    %v3904 = vpop.f32.mrf.mxu0
    %v3905 = vadd.f32 %v3816, %v3904
    %3906 = vmatmul.bf16.gmra.mxu0 %v2904
    %v3907 = vpop.f32.mrf.mxu0
    %v3908 = vadd.f32 %v3819, %v3907
    %v3909 = vpop.f32.mrf.mxu0
    %v3910 = vadd.f32 %v3821, %v3909
    %3911 = vmatmul.bf16.gmra.mxu0 %v2908
    %v3912 = vpop.f32.mrf.mxu0
    %v3913 = vadd.f32 %v3824, %v3912
    %v3914 = vpop.f32.mrf.mxu0
    %v3915 = vadd.f32 %v3826, %v3914
    %3916 = vdwg.mxu0
    %3917 = vmatpush.bf16.msra.mxu0 %v3229
    %3918 = vmatpush.bf16.msra.mxu0 %v3227
    %3919 = vmatpush.bf16.msra.mxu0 %v3225
    %3920 = vmatpush.bf16.msra.mxu0 %v3223
    %3921 = vmatpush.bf16.msra.mxu0 %v3221
    %3922 = vmatpush.bf16.msra.mxu0 %v3219
    %3923 = vmatpush.bf16.msra.mxu0 %v3217
    %3924 = vmatpush.bf16.msra.mxu0 %v3215
    %3925 = vmatmul.bf16.gmra.mxu0 %v2849
    %v3926 = vpop.f32.mrf.mxu0
    %v3927 = vadd.f32 %v3838, %v3926
    %v3928 = vpop.f32.mrf.mxu0
    %v3929 = vadd.f32 %v3840, %v3928
    %3930 = vmatmul.bf16.gmra.mxu0 %v2853
    %v3931 = vpop.f32.mrf.mxu0
    %v3932 = vadd.f32 %v3843, %v3931
    %v3933 = vpop.f32.mrf.mxu0
    %v3934 = vadd.f32 %v3845, %v3933
    %3935 = vmatmul.bf16.gmra.mxu0 %v2857
    %v3936 = vpop.f32.mrf.mxu0
    %v3937 = vadd.f32 %v3848, %v3936
    %v3938 = vpop.f32.mrf.mxu0
    %v3939 = vadd.f32 %v3850, %v3938
    %3940 = vmatmul.bf16.gmra.mxu0 %v2861
    %v3941 = vpop.f32.mrf.mxu0
    %v3942 = vadd.f32 %v3853, %v3941
    %v3943 = vpop.f32.mrf.mxu0
    %v3944 = vadd.f32 %v3855, %v3943
    %3945 = vmatmul.bf16.gmra.mxu0 %v2865
    %v3946 = vpop.f32.mrf.mxu0
    %v3947 = vadd.f32 %v3858, %v3946
    %v3948 = vpop.f32.mrf.mxu0
    %v3949 = vadd.f32 %v3860, %v3948
    %3950 = vmatmul.bf16.gmra.mxu0 %v2869
    %v3951 = vpop.f32.mrf.mxu0
    %v3952 = vadd.f32 %v3863, %v3951
    %v3953 = vpop.f32.mrf.mxu0
    %v3954 = vadd.f32 %v3865, %v3953
    %3955 = vmatmul.bf16.gmra.mxu0 %v2873
    %v3956 = vpop.f32.mrf.mxu0
    %v3957 = vadd.f32 %v3868, %v3956
    %v3958 = vpop.f32.mrf.mxu0
    %v3959 = vadd.f32 %v3870, %v3958
    %3960 = vmatmul.bf16.gmra.mxu0 %v2877
    %v3961 = vpop.f32.mrf.mxu0
    %v3962 = vadd.f32 %v3873, %v3961
    %v3963 = vpop.f32.mrf.mxu0
    %v3964 = vadd.f32 %v3875, %v3963
    %3965 = vmatmul.bf16.gmra.mxu0 %v2881
    %v3966 = vpop.f32.mrf.mxu0
    %v3967 = vadd.f32 %v3878, %v3966
    %v3968 = vpop.f32.mrf.mxu0
    %v3969 = vadd.f32 %v3880, %v3968
    %3970 = vmatmul.bf16.gmra.mxu0 %v2885
    %v3971 = vpop.f32.mrf.mxu0
    %v3972 = vadd.f32 %v3883, %v3971
    %v3973 = vpop.f32.mrf.mxu0
    %v3974 = vadd.f32 %v3885, %v3973
    %3975 = vmatmul.bf16.gmra.mxu0 %v2889
    %v3976 = vpop.f32.mrf.mxu0
    %v3977 = vadd.f32 %v3888, %v3976
    %v3978 = vpop.f32.mrf.mxu0
    %v3979 = vadd.f32 %v3890, %v3978
    %3980 = vmatmul.bf16.gmra.mxu0 %v2893
    %v3981 = vpop.f32.mrf.mxu0
    %v3982 = vadd.f32 %v3893, %v3981
    %v3983 = vpop.f32.mrf.mxu0
    %v3984 = vadd.f32 %v3895, %v3983
    %3985 = vmatmul.bf16.gmra.mxu0 %v2897
    %v3986 = vpop.f32.mrf.mxu0
    %v3987 = vadd.f32 %v3898, %v3986
    %v3988 = vpop.f32.mrf.mxu0
    %v3989 = vadd.f32 %v3900, %v3988
    %3990 = vmatmul.bf16.gmra.mxu0 %v2901
    %v3991 = vpop.f32.mrf.mxu0
    %v3992 = vadd.f32 %v3903, %v3991
    %v3993 = vpop.f32.mrf.mxu0
    %v3994 = vadd.f32 %v3905, %v3993
    %3995 = vmatmul.bf16.gmra.mxu0 %v2905
    %v3996 = vpop.f32.mrf.mxu0
    %v3997 = vadd.f32 %v3908, %v3996
    %v3998 = vpop.f32.mrf.mxu0
    %v3999 = vadd.f32 %v3910, %v3998
    %4000 = vmatmul.bf16.gmra.mxu0 %v2909
    %v4001 = vpop.f32.mrf.mxu0
    %v4002 = vadd.f32 %v3913, %v4001
    %v4003 = vpop.f32.mrf.mxu0
    %v4004 = vadd.f32 %v3915, %v4003
    %4005 = vdwg.mxu0
    %v4006 = vadd.f32 %v3571, %v3573
    %v4007 = vadd.f32 %v4006, %v3576
    %v4008 = vadd.f32 %v4007, %v3578
    %v4009 = vadd.f32 %v4008, %v3581
    %v4010 = vadd.f32 %v4009, %v3583
    %v4011 = vadd.f32 %v4010, %v3586
    %v4012 = vadd.f32 %v4011, %v3588
    %v4013 = vadd.f32 %v4012, %v3591
    %v4014 = vadd.f32 %v4013, %v3593
    %v4015 = vadd.f32 %v4014, %v3596
    %v4016 = vadd.f32 %v4015, %v3598
    %v4017 = vadd.f32 %v4016, %v3601
    %v4018 = vadd.f32 %v4017, %v3603
    %v4019 = vadd.f32 %v4018, %v3606
    %v4020 = vadd.f32 %v4019, %v3608
    %v4021 = vadd.f32 %v4020, %v3611
    %v4022 = vadd.f32 %v4021, %v3613
    %v4023 = vadd.f32 %v4022, %v3616
    %v4024 = vadd.f32 %v4023, %v3618
    %v4025 = vadd.f32 %v4024, %v3621
    %v4026 = vadd.f32 %v4025, %v3623
    %v4027 = vadd.f32 %v4026, %v3626
    %v4028 = vadd.f32 %v4027, %v3628
    %v4029 = vadd.f32 %v4028, %v3631
    %v4030 = vadd.f32 %v4029, %v3633
    %v4031 = vadd.f32 %v4030, %v3636
    %v4032 = vadd.f32 %v4031, %v3638
    %v4033 = vadd.f32 %v4032, %v3641
    %v4034 = vadd.f32 %v4033, %v3643
    %v4035 = vadd.f32 %v4034, %v3646
    %v4036 = vadd.f32 %v4035, %v3648
    %v4037 = vrot.slane %v4036, 4
    %v4038 = vadd.f32 %v4036, %v4037
    %v4039 = vrot.slane %v4038, 2
    %v4040 = vadd.f32 %v4038, %v4039
    %v4041 = vrot.slane %v4040, 1
    %v4042 = vadd.f32 %v4040, %v4041
    %v4043 = vadd.f32 %v3927, %v3929
    %v4044 = vadd.f32 %v4043, %v3932
    %v4045 = vadd.f32 %v4044, %v3934
    %v4046 = vadd.f32 %v4045, %v3937
    %v4047 = vadd.f32 %v4046, %v3939
    %v4048 = vadd.f32 %v4047, %v3942
    %v4049 = vadd.f32 %v4048, %v3944
    %v4050 = vadd.f32 %v4049, %v3947
    %v4051 = vadd.f32 %v4050, %v3949
    %v4052 = vadd.f32 %v4051, %v3952
    %v4053 = vadd.f32 %v4052, %v3954
    %v4054 = vadd.f32 %v4053, %v3957
    %v4055 = vadd.f32 %v4054, %v3959
    %v4056 = vadd.f32 %v4055, %v3962
    %v4057 = vadd.f32 %v4056, %v3964
    %v4058 = vadd.f32 %v4057, %v3967
    %v4059 = vadd.f32 %v4058, %v3969
    %v4060 = vadd.f32 %v4059, %v3972
    %v4061 = vadd.f32 %v4060, %v3974
    %v4062 = vadd.f32 %v4061, %v3977
    %v4063 = vadd.f32 %v4062, %v3979
    %v4064 = vadd.f32 %v4063, %v3982
    %v4065 = vadd.f32 %v4064, %v3984
    %v4066 = vadd.f32 %v4065, %v3987
    %v4067 = vadd.f32 %v4066, %v3989
    %v4068 = vadd.f32 %v4067, %v3992
    %v4069 = vadd.f32 %v4068, %v3994
    %v4070 = vadd.f32 %v4069, %v3997
    %v4071 = vadd.f32 %v4070, %v3999
    %v4072 = vadd.f32 %v4071, %v4002
    %v4073 = vadd.f32 %v4072, %v4004
    %v4074 = vrot.slane %v4073, 4
    %v4075 = vadd.f32 %v4073, %v4074
    %v4076 = vrot.slane %v4075, 2
    %v4077 = vadd.f32 %v4075, %v4076
    %v4078 = vrot.slane %v4077, 1
    %v4079 = vadd.f32 %v4077, %v4078
    %v4080 = vmul.f32 %v3571, %v3571
    %v4081 = vmul.f32 %v3927, %v3927
    %v4082 = vmul.f32 %v3573, %v3573
    %v4083 = vmul.f32 %v3929, %v3929
    %v4084 = vmul.f32 %v3576, %v3576
    %v4085 = vmul.f32 %v3932, %v3932
    %v4086 = vmul.f32 %v3578, %v3578
    %v4087 = vmul.f32 %v3934, %v3934
    %v4088 = vmul.f32 %v3581, %v3581
    %v4089 = vmul.f32 %v3937, %v3937
    %v4090 = vmul.f32 %v3583, %v3583
    %v4091 = vmul.f32 %v3939, %v3939
    %v4092 = vmul.f32 %v3586, %v3586
    %v4093 = vmul.f32 %v3942, %v3942
    %v4094 = vmul.f32 %v3588, %v3588
    %v4095 = vmul.f32 %v3944, %v3944
    %v4096 = vmul.f32 %v3591, %v3591
    %v4097 = vmul.f32 %v3947, %v3947
    %v4098 = vmul.f32 %v3593, %v3593
    %v4099 = vmul.f32 %v3949, %v3949
    %v4100 = vmul.f32 %v3596, %v3596
    %v4101 = vmul.f32 %v3952, %v3952
    %v4102 = vmul.f32 %v3598, %v3598
    %v4103 = vmul.f32 %v3954, %v3954
    %v4104 = vmul.f32 %v3601, %v3601
    %v4105 = vmul.f32 %v3957, %v3957
    %v4106 = vmul.f32 %v3603, %v3603
    %v4107 = vmul.f32 %v3959, %v3959
    %v4108 = vmul.f32 %v3606, %v3606
    %v4109 = vmul.f32 %v3962, %v3962
    %v4110 = vmul.f32 %v3608, %v3608
    %v4111 = vmul.f32 %v3964, %v3964
    %v4112 = vmul.f32 %v3611, %v3611
    %v4113 = vmul.f32 %v3967, %v3967
    %v4114 = vmul.f32 %v3613, %v3613
    %v4115 = vmul.f32 %v3969, %v3969
    %v4116 = vmul.f32 %v3616, %v3616
    %v4117 = vmul.f32 %v3972, %v3972
    %v4118 = vmul.f32 %v3618, %v3618
    %v4119 = vmul.f32 %v3974, %v3974
    %v4120 = vmul.f32 %v3621, %v3621
    %v4121 = vmul.f32 %v3977, %v3977
    %v4122 = vmul.f32 %v3623, %v3623
    %v4123 = vmul.f32 %v3979, %v3979
    %v4124 = vmul.f32 %v3626, %v3626
    %v4125 = vmul.f32 %v3982, %v3982
    %v4126 = vmul.f32 %v3628, %v3628
    %v4127 = vmul.f32 %v3984, %v3984
    %v4128 = vmul.f32 %v3631, %v3631
    %v4129 = vmul.f32 %v3987, %v3987
    %v4130 = vmul.f32 %v3633, %v3633
    %v4131 = vmul.f32 %v3989, %v3989
    %v4132 = vmul.f32 %v3636, %v3636
    %v4133 = vmul.f32 %v3992, %v3992
    %v4134 = vmul.f32 %v3638, %v3638
    %v4135 = vmul.f32 %v3994, %v3994
    %v4136 = vmul.f32 %v3641, %v3641
    %v4137 = vmul.f32 %v3997, %v3997
    %v4138 = vmul.f32 %v3643, %v3643
    %v4139 = vmul.f32 %v3999, %v3999
    %v4140 = vmul.f32 %v3646, %v3646
    %v4141 = vmul.f32 %v4002, %v4002
    %v4142 = vmul.f32 %v3648, %v3648
    %v4143 = vmul.f32 %v4004, %v4004
    %v4144 = vadd.f32 %v4080, %v4082
    %v4145 = vadd.f32 %v4144, %v4084
    %v4146 = vadd.f32 %v4145, %v4086
    %v4147 = vadd.f32 %v4146, %v4088
    %v4148 = vadd.f32 %v4147, %v4090
    %v4149 = vadd.f32 %v4148, %v4092
    %v4150 = vadd.f32 %v4149, %v4094
    %v4151 = vadd.f32 %v4150, %v4096
    %v4152 = vadd.f32 %v4151, %v4098
    %v4153 = vadd.f32 %v4152, %v4100
    %v4154 = vadd.f32 %v4153, %v4102
    %v4155 = vadd.f32 %v4154, %v4104
    %v4156 = vadd.f32 %v4155, %v4106
    %v4157 = vadd.f32 %v4156, %v4108
    %v4158 = vadd.f32 %v4157, %v4110
    %v4159 = vadd.f32 %v4158, %v4112
    %v4160 = vadd.f32 %v4159, %v4114
    %v4161 = vadd.f32 %v4160, %v4116
    %v4162 = vadd.f32 %v4161, %v4118
    %v4163 = vadd.f32 %v4162, %v4120
    %v4164 = vadd.f32 %v4163, %v4122
    %v4165 = vadd.f32 %v4164, %v4124
    %v4166 = vadd.f32 %v4165, %v4126
    %v4167 = vadd.f32 %v4166, %v4128
    %v4168 = vadd.f32 %v4167, %v4130
    %v4169 = vadd.f32 %v4168, %v4132
    %v4170 = vadd.f32 %v4169, %v4134
    %v4171 = vadd.f32 %v4170, %v4136
    %v4172 = vadd.f32 %v4171, %v4138
    %v4173 = vadd.f32 %v4172, %v4140
    %v4174 = vadd.f32 %v4173, %v4142
    %v4175 = vrot.slane %v4174, 4
    %v4176 = vadd.f32 %v4174, %v4175
    %v4177 = vrot.slane %v4176, 2
    %v4178 = vadd.f32 %v4176, %v4177
    %v4179 = vrot.slane %v4178, 1
    %v4180 = vadd.f32 %v4178, %v4179
    %v4181 = vadd.f32 %v4081, %v4083
    %v4182 = vadd.f32 %v4181, %v4085
    %v4183 = vadd.f32 %v4182, %v4087
    %v4184 = vadd.f32 %v4183, %v4089
    %v4185 = vadd.f32 %v4184, %v4091
    %v4186 = vadd.f32 %v4185, %v4093
    %v4187 = vadd.f32 %v4186, %v4095
    %v4188 = vadd.f32 %v4187, %v4097
    %v4189 = vadd.f32 %v4188, %v4099
    %v4190 = vadd.f32 %v4189, %v4101
    %v4191 = vadd.f32 %v4190, %v4103
    %v4192 = vadd.f32 %v4191, %v4105
    %v4193 = vadd.f32 %v4192, %v4107
    %v4194 = vadd.f32 %v4193, %v4109
    %v4195 = vadd.f32 %v4194, %v4111
    %v4196 = vadd.f32 %v4195, %v4113
    %v4197 = vadd.f32 %v4196, %v4115
    %v4198 = vadd.f32 %v4197, %v4117
    %v4199 = vadd.f32 %v4198, %v4119
    %v4200 = vadd.f32 %v4199, %v4121
    %v4201 = vadd.f32 %v4200, %v4123
    %v4202 = vadd.f32 %v4201, %v4125
    %v4203 = vadd.f32 %v4202, %v4127
    %v4204 = vadd.f32 %v4203, %v4129
    %v4205 = vadd.f32 %v4204, %v4131
    %v4206 = vadd.f32 %v4205, %v4133
    %v4207 = vadd.f32 %v4206, %v4135
    %v4208 = vadd.f32 %v4207, %v4137
    %v4209 = vadd.f32 %v4208, %v4139
    %v4210 = vadd.f32 %v4209, %v4141
    %v4211 = vadd.f32 %v4210, %v4143
    %v4212 = vrot.slane %v4211, 4
    %v4213 = vadd.f32 %v4211, %v4212
    %v4214 = vrot.slane %v4213, 2
    %v4215 = vadd.f32 %v4213, %v4214
    %v4216 = vrot.slane %v4215, 1
    %v4217 = vadd.f32 %v4215, %v4216
    %v4218 = vld [vmem:[#allocation11] sm:$0xff]
    %v4219 = vld [vmem:[#allocation11 + $0x8] sm:$0xff]
    %v4220 = vld [vmem:[#allocation11 + $0x10] sm:$0xff]
    %v4221 = vld [vmem:[#allocation11 + $0x18] sm:$0xff]
    %v4222 = vld [vmem:[#allocation11 + $0x20] sm:$0xff]
    %v4223 = vld [vmem:[#allocation11 + $0x28] sm:$0xff]
    %v4224 = vld [vmem:[#allocation11 + $0x30] sm:$0xff]
    %v4225 = vld [vmem:[#allocation11 + $0x38] sm:$0xff]
    %v4226 = vld [vmem:[#allocation11 + $0x40] sm:$0xff]
    %v4227 = vld [vmem:[#allocation11 + $0x48] sm:$0xff]
    %v4228 = vld [vmem:[#allocation11 + $0x50] sm:$0xff]
    %v4229 = vld [vmem:[#allocation11 + $0x58] sm:$0xff]
    %v4230 = vld [vmem:[#allocation11 + $0x60] sm:$0xff]
    %v4231 = vld [vmem:[#allocation11 + $0x68] sm:$0xff]
    %v4232 = vld [vmem:[#allocation11 + $0x70] sm:$0xff]
    %v4233 = vld [vmem:[#allocation11 + $0x78] sm:$0xff]
    %v4234 = vld [vmem:[#allocation11 + $0x80] sm:$0xff]
    %v4235 = vld [vmem:[#allocation11 + $0x88] sm:$0xff]
    %v4236 = vld [vmem:[#allocation11 + $0x90] sm:$0xff]
    %v4237 = vld [vmem:[#allocation11 + $0x98] sm:$0xff]
    %v4238 = vld [vmem:[#allocation11 + $0xa0] sm:$0xff]
    %v4239 = vld [vmem:[#allocation11 + $0xa8] sm:$0xff]
    %v4240 = vld [vmem:[#allocation11 + $0xb0] sm:$0xff]
    %v4241 = vld [vmem:[#allocation11 + $0xb8] sm:$0xff]
    %v4242 = vld [vmem:[#allocation11 + $0xc0] sm:$0xff]
    %v4243 = vld [vmem:[#allocation11 + $0xc8] sm:$0xff]
    %v4244 = vld [vmem:[#allocation11 + $0xd0] sm:$0xff]
    %v4245 = vld [vmem:[#allocation11 + $0xd8] sm:$0xff]
    %v4246 = vld [vmem:[#allocation11 + $0xe0] sm:$0xff]
    %v4247 = vld [vmem:[#allocation11 + $0xe8] sm:$0xff]
    %v4248 = vld [vmem:[#allocation11 + $0xf0] sm:$0xff]
    %v4249 = vld [vmem:[#allocation11 + $0xf8] sm:$0xff]
    %4250 = vmatpush.msra.mxu0 %v4233
    %4251 = vmatpush.msra.mxu0 %v4232
    %4252 = vmatpush.msra.mxu0 %v4231
    %4253 = vmatpush.msra.mxu0 %v4230
    %4254 = vmatpush.msra.mxu0 %v4229
    %4255 = vmatpush.msra.mxu0 %v4228
    %4256 = vmatpush.msra.mxu0 %v4227
    %4257 = vmatpush.msra.mxu0 %v4226
    %4258 = vmatpush.msra.mxu0 %v4225
    %4259 = vmatpush.msra.mxu0 %v4224
    %4260 = vmatpush.msra.mxu0 %v4223
    %4261 = vmatpush.msra.mxu0 %v4222
    %4262 = vmatpush.msra.mxu0 %v4221
    %4263 = vmatpush.msra.mxu0 %v4220
    %4264 = vmatpush.msra.mxu0 %v4219
    %4265 = vmatpush.msra.mxu0 %v4218
    %4266 = vmatmul.f32.gmra.mxu0 %v4042
    %v4267 = vpop.f32.mrf.mxu0
    %v4268 = vadd.f32 0.0, %v4267
    %4269 = vdwg.mxu0
    %4270 = vmatpush.msra.mxu0 %v4249
    %4271 = vmatpush.msra.mxu0 %v4248
    %4272 = vmatpush.msra.mxu0 %v4247
    %4273 = vmatpush.msra.mxu0 %v4246
    %4274 = vmatpush.msra.mxu0 %v4245
    %4275 = vmatpush.msra.mxu0 %v4244
    %4276 = vmatpush.msra.mxu0 %v4243
    %4277 = vmatpush.msra.mxu0 %v4242
    %4278 = vmatpush.msra.mxu0 %v4241
    %4279 = vmatpush.msra.mxu0 %v4240
    %4280 = vmatpush.msra.mxu0 %v4239
    %4281 = vmatpush.msra.mxu0 %v4238
    %4282 = vmatpush.msra.mxu0 %v4237
    %4283 = vmatpush.msra.mxu0 %v4236
    %4284 = vmatpush.msra.mxu0 %v4235
    %4285 = vmatpush.msra.mxu0 %v4234
    %4286 = vmatmul.f32.gmra.mxu0 %v4079
    %v4287 = vpop.f32.mrf.mxu0
    %v4288 = vadd.f32 %v4268, %v4287
    %4289 = vdwg.mxu0
    %4290 = vmatpush.msra.mxu0 %v4233
    %4291 = vmatpush.msra.mxu0 %v4232
    %4292 = vmatpush.msra.mxu0 %v4231
    %4293 = vmatpush.msra.mxu0 %v4230
    %4294 = vmatpush.msra.mxu0 %v4229
    %4295 = vmatpush.msra.mxu0 %v4228
    %4296 = vmatpush.msra.mxu0 %v4227
    %4297 = vmatpush.msra.mxu0 %v4226
    %4298 = vmatpush.msra.mxu0 %v4225
    %4299 = vmatpush.msra.mxu0 %v4224
    %4300 = vmatpush.msra.mxu0 %v4223
    %4301 = vmatpush.msra.mxu0 %v4222
    %4302 = vmatpush.msra.mxu0 %v4221
    %4303 = vmatpush.msra.mxu0 %v4220
    %4304 = vmatpush.msra.mxu0 %v4219
    %4305 = vmatpush.msra.mxu0 %v4218
    %4306 = vmatmul.f32.gmra.mxu0 %v4180
    %v4307 = vpop.f32.mrf.mxu0
    %v4308 = vadd.f32 0.0, %v4307
    %4309 = vdwg.mxu0
    %4310 = vmatpush.msra.mxu0 %v4249
    %4311 = vmatpush.msra.mxu0 %v4248
    %4312 = vmatpush.msra.mxu0 %v4247
    %4313 = vmatpush.msra.mxu0 %v4246
    %4314 = vmatpush.msra.mxu0 %v4245
    %4315 = vmatpush.msra.mxu0 %v4244
    %4316 = vmatpush.msra.mxu0 %v4243
    %4317 = vmatpush.msra.mxu0 %v4242
    %4318 = vmatpush.msra.mxu0 %v4241
    %4319 = vmatpush.msra.mxu0 %v4240
    %4320 = vmatpush.msra.mxu0 %v4239
    %4321 = vmatpush.msra.mxu0 %v4238
    %4322 = vmatpush.msra.mxu0 %v4237
    %4323 = vmatpush.msra.mxu0 %v4236
    %4324 = vmatpush.msra.mxu0 %v4235
    %4325 = vmatpush.msra.mxu0 %v4234
    %4326 = vmatmul.f32.gmra.mxu0 %v4217
    %v4327 = vpop.f32.mrf.mxu0
    %v4328 = vadd.f32 %v4308, %v4327
    %4329 = vdwg.mxu0
    %v4330 = vrcp.pop 4096.0
    %v4331 = vmul.f32 4096.0, %v4330
    %v4332 = vsub.f32 1.0, %v4331
    %v4333 = vmul.f32 %v4330, %v4332
    %v4334 = vadd.f32 %v4330, %v4333
    %vm4335 = vweird.f32 %v4330
    %v4336 = vsel %vm4335, %v4330, %v4334
    %v4337 = vmul.f32 %v4288, %v4336
    %v4338 = vmul.f32 %v4328, %v4336
    %v4339 = vmul.f32 %v4337, %v4337
    %v4340 = vsub.f32 %v4338, %v4339
    %v4341 = vmax.f32 %v4340, 0.0
    %v4342 = vld [vmem:[%s9] sm:$0x1]
    %v4343 = vadd.f32 %v4341, 1e-05
    %v4344 = vrsqrt.pop %v4343
    %v4345 = vmul.f32 %v4344, %v4343
    %v4346 = vmul.f32 %v4345, %v4344
    %v4347 = vmul.f32 0.5, %v4346
    %v4348 = vsub.f32 1.5, %v4347
    %v4349 = vmul.f32 %v4344, %v4348
    %vm4350 = vweird.f32 %v4343
    %vm4351 = vweird.f32 %v4344
    %vm4352 = vmor %vm4350, %vm4351
    %v4353 = vsel %vm4352, %v4344, %v4349
    %v4354 = vmul.f32 %v4342, %v4353
    %v4355 = vld [vmem:[%s10] sm:$0x1]
    %v4356 = vmul.f32 %v4337, %v4354
    %v4357 = vsub.f32 %v4355, %v4356
    %v4358 = vld [vmem:[#allocation13] sm:$0xff]
    %v4359 = vld [vmem:[#allocation13 + $0x8] sm:$0xff]
    %v4360 = vld [vmem:[#allocation13 + $0x10] sm:$0xff]
    %v4361 = vld [vmem:[#allocation13 + $0x18] sm:$0xff]
    %v4362 = vld [vmem:[#allocation13 + $0x20] sm:$0xff]
    %v4363 = vld [vmem:[#allocation13 + $0x28] sm:$0xff]
    %v4364 = vld [vmem:[#allocation13 + $0x30] sm:$0xff]
    %v4365 = vld [vmem:[#allocation13 + $0x38] sm:$0xff]
    %v4366 = vld [vmem:[#allocation13 + $0x40] sm:$0xff]
    %v4367 = vld [vmem:[#allocation13 + $0x48] sm:$0xff]
    %v4368 = vld [vmem:[#allocation13 + $0x50] sm:$0xff]
    %v4369 = vld [vmem:[#allocation13 + $0x58] sm:$0xff]
    %v4370 = vld [vmem:[#allocation13 + $0x60] sm:$0xff]
    %v4371 = vld [vmem:[#allocation13 + $0x68] sm:$0xff]
    %v4372 = vld [vmem:[#allocation13 + $0x70] sm:$0xff]
    %v4373 = vld [vmem:[#allocation13 + $0x78] sm:$0xff]
    %v4374 = vld [vmem:[#allocation13 + $0x80] sm:$0xff]
    %v4375 = vld [vmem:[#allocation13 + $0x88] sm:$0xff]
    %v4376 = vld [vmem:[#allocation13 + $0x90] sm:$0xff]
    %v4377 = vld [vmem:[#allocation13 + $0x98] sm:$0xff]
    %v4378 = vld [vmem:[#allocation13 + $0xa0] sm:$0xff]
    %v4379 = vld [vmem:[#allocation13 + $0xa8] sm:$0xff]
    %v4380 = vld [vmem:[#allocation13 + $0xb0] sm:$0xff]
    %v4381 = vld [vmem:[#allocation13 + $0xb8] sm:$0xff]
    %v4382 = vld [vmem:[#allocation13 + $0xc0] sm:$0xff]
    %v4383 = vld [vmem:[#allocation13 + $0xc8] sm:$0xff]
    %v4384 = vld [vmem:[#allocation13 + $0xd0] sm:$0xff]
    %v4385 = vld [vmem:[#allocation13 + $0xd8] sm:$0xff]
    %v4386 = vld [vmem:[#allocation13 + $0xe0] sm:$0xff]
    %v4387 = vld [vmem:[#allocation13 + $0xe8] sm:$0xff]
    %v4388 = vld [vmem:[#allocation13 + $0xf0] sm:$0xff]
    %v4389 = vld [vmem:[#allocation13 + $0xf8] sm:$0xff]
    %4390 = vmatpush.msra.mxu0 %v4388
    %4391 = vmatpush.msra.mxu0 %v4386
    %4392 = vmatpush.msra.mxu0 %v4384
    %4393 = vmatpush.msra.mxu0 %v4382
    %4394 = vmatpush.msra.mxu0 %v4380
    %4395 = vmatpush.msra.mxu0 %v4378
    %4396 = vmatpush.msra.mxu0 %v4376
    %4397 = vmatpush.msra.mxu0 %v4374
    %4398 = vmatpush.msra.mxu0 %v4372
    %4399 = vmatpush.msra.mxu0 %v4370
    %4400 = vmatpush.msra.mxu0 %v4368
    %4401 = vmatpush.msra.mxu0 %v4366
    %4402 = vmatpush.msra.mxu0 %v4364
    %4403 = vmatpush.msra.mxu0 %v4362
    %4404 = vmatpush.msra.mxu0 %v4360
    %4405 = vmatpush.msra.mxu0 %v4358
    %4406 = vmatmul.f32.gmra.mxu0 %v4354
    %v4407 = vpop.f32.mrf.mxu0
    %v4408 = vadd.f32 0.0, %v4407
    %4409 = vdwg.mxu0
    %4410 = vmatpush.msra.mxu0 %v4389
    %4411 = vmatpush.msra.mxu0 %v4387
    %4412 = vmatpush.msra.mxu0 %v4385
    %4413 = vmatpush.msra.mxu0 %v4383
    %4414 = vmatpush.msra.mxu0 %v4381
    %4415 = vmatpush.msra.mxu0 %v4379
    %4416 = vmatpush.msra.mxu0 %v4377
    %4417 = vmatpush.msra.mxu0 %v4375
    %4418 = vmatpush.msra.mxu0 %v4373
    %4419 = vmatpush.msra.mxu0 %v4371
    %4420 = vmatpush.msra.mxu0 %v4369
    %4421 = vmatpush.msra.mxu0 %v4367
    %4422 = vmatpush.msra.mxu0 %v4365
    %4423 = vmatpush.msra.mxu0 %v4363
    %4424 = vmatpush.msra.mxu0 %v4361
    %4425 = vmatpush.msra.mxu0 %v4359
    %4426 = vmatmul.f32.gmra.mxu0 %v4354
    %v4427 = vpop.f32.mrf.mxu0
    %v4428 = vadd.f32 0.0, %v4427
    %4429 = vdwg.mxu0
    %4430 = vmatpush.msra.mxu0 %v4388
    %4431 = vmatpush.msra.mxu0 %v4386
    %4432 = vmatpush.msra.mxu0 %v4384
    %4433 = vmatpush.msra.mxu0 %v4382
    %4434 = vmatpush.msra.mxu0 %v4380
    %4435 = vmatpush.msra.mxu0 %v4378
    %4436 = vmatpush.msra.mxu0 %v4376
    %4437 = vmatpush.msra.mxu0 %v4374
    %4438 = vmatpush.msra.mxu0 %v4372
    %4439 = vmatpush.msra.mxu0 %v4370
    %4440 = vmatpush.msra.mxu0 %v4368
    %4441 = vmatpush.msra.mxu0 %v4366
    %4442 = vmatpush.msra.mxu0 %v4364
    %4443 = vmatpush.msra.mxu0 %v4362
    %4444 = vmatpush.msra.mxu0 %v4360
    %4445 = vmatpush.msra.mxu0 %v4358
    %4446 = vmatmul.f32.gmra.mxu0 %v4357
    %v4447 = vpop.f32.mrf.mxu0
    %v4448 = vadd.f32 0.0, %v4447
    %4449 = vdwg.mxu0
    %4450 = vmatpush.msra.mxu0 %v4389
    %4451 = vmatpush.msra.mxu0 %v4387
    %4452 = vmatpush.msra.mxu0 %v4385
    %4453 = vmatpush.msra.mxu0 %v4383
    %4454 = vmatpush.msra.mxu0 %v4381
    %4455 = vmatpush.msra.mxu0 %v4379
    %4456 = vmatpush.msra.mxu0 %v4377
    %4457 = vmatpush.msra.mxu0 %v4375
    %4458 = vmatpush.msra.mxu0 %v4373
    %4459 = vmatpush.msra.mxu0 %v4371
    %4460 = vmatpush.msra.mxu0 %v4369
    %4461 = vmatpush.msra.mxu0 %v4367
    %4462 = vmatpush.msra.mxu0 %v4365
    %4463 = vmatpush.msra.mxu0 %v4363
    %4464 = vmatpush.msra.mxu0 %v4361
    %4465 = vmatpush.msra.mxu0 %v4359
    %4466 = vmatmul.f32.gmra.mxu0 %v4357
    %v4467 = vpop.f32.mrf.mxu0
    %v4468 = vadd.f32 0.0, %v4467
    %4469 = vdwg.mxu0
    %v4470 = vperm.slane %v4408, 0
    %v4471 = vperm.slane %v4428, 0
    %v4472 = vmul.f32 %v3571, %v4470
    %v4473 = vmul.f32 %v3927, %v4471
    %v4474 = vmul.f32 %v3573, %v4470
    %v4475 = vmul.f32 %v3929, %v4471
    %v4476 = vmul.f32 %v3576, %v4470
    %v4477 = vmul.f32 %v3932, %v4471
    %v4478 = vmul.f32 %v3578, %v4470
    %v4479 = vmul.f32 %v3934, %v4471
    %v4480 = vmul.f32 %v3581, %v4470
    %v4481 = vmul.f32 %v3937, %v4471
    %v4482 = vmul.f32 %v3583, %v4470
    %v4483 = vmul.f32 %v3939, %v4471
    %v4484 = vmul.f32 %v3586, %v4470
    %v4485 = vmul.f32 %v3942, %v4471
    %v4486 = vmul.f32 %v3588, %v4470
    %v4487 = vmul.f32 %v3944, %v4471
    %v4488 = vmul.f32 %v3591, %v4470
    %v4489 = vmul.f32 %v3947, %v4471
    %v4490 = vmul.f32 %v3593, %v4470
    %v4491 = vmul.f32 %v3949, %v4471
    %v4492 = vmul.f32 %v3596, %v4470
    %v4493 = vmul.f32 %v3952, %v4471
    %v4494 = vmul.f32 %v3598, %v4470
    %v4495 = vmul.f32 %v3954, %v4471
    %v4496 = vmul.f32 %v3601, %v4470
    %v4497 = vmul.f32 %v3957, %v4471
    %v4498 = vmul.f32 %v3603, %v4470
    %v4499 = vmul.f32 %v3959, %v4471
    %v4500 = vmul.f32 %v3606, %v4470
    %v4501 = vmul.f32 %v3962, %v4471
    %v4502 = vmul.f32 %v3608, %v4470
    %v4503 = vmul.f32 %v3964, %v4471
    %v4504 = vmul.f32 %v3611, %v4470
    %v4505 = vmul.f32 %v3967, %v4471
    %v4506 = vmul.f32 %v3613, %v4470
    %v4507 = vmul.f32 %v3969, %v4471
    %v4508 = vmul.f32 %v3616, %v4470
    %v4509 = vmul.f32 %v3972, %v4471
    %v4510 = vmul.f32 %v3618, %v4470
    %v4511 = vmul.f32 %v3974, %v4471
    %v4512 = vmul.f32 %v3621, %v4470
    %v4513 = vmul.f32 %v3977, %v4471
    %v4514 = vmul.f32 %v3623, %v4470
    %v4515 = vmul.f32 %v3979, %v4471
    %v4516 = vmul.f32 %v3626, %v4470
    %v4517 = vmul.f32 %v3982, %v4471
    %v4518 = vmul.f32 %v3628, %v4470
    %v4519 = vmul.f32 %v3984, %v4471
    %v4520 = vmul.f32 %v3631, %v4470
    %v4521 = vmul.f32 %v3987, %v4471
    %v4522 = vmul.f32 %v3633, %v4470
    %v4523 = vmul.f32 %v3989, %v4471
    %v4524 = vmul.f32 %v3636, %v4470
    %v4525 = vmul.f32 %v3992, %v4471
    %v4526 = vmul.f32 %v3638, %v4470
    %v4527 = vmul.f32 %v3994, %v4471
    %v4528 = vmul.f32 %v3641, %v4470
    %v4529 = vmul.f32 %v3997, %v4471
    %v4530 = vmul.f32 %v3643, %v4470
    %v4531 = vmul.f32 %v3999, %v4471
    %v4532 = vmul.f32 %v3646, %v4470
    %v4533 = vmul.f32 %v4002, %v4471
    %v4534 = vmul.f32 %v3648, %v4470
    %v4535 = vmul.f32 %v4004, %v4471
    %v4536 = vperm.slane %v4448, 0
    %v4537 = vperm.slane %v4468, 0
    %v4538 = vadd.f32 %v4472, %v4536
    %v4539 = vadd.f32 %v4473, %v4537
    %v4540 = vadd.f32 %v4474, %v4536
    %v4541 = vadd.f32 %v4475, %v4537
    %v4542 = vadd.f32 %v4476, %v4536
    %v4543 = vadd.f32 %v4477, %v4537
    %v4544 = vadd.f32 %v4478, %v4536
    %v4545 = vadd.f32 %v4479, %v4537
    %v4546 = vadd.f32 %v4480, %v4536
    %v4547 = vadd.f32 %v4481, %v4537
    %v4548 = vadd.f32 %v4482, %v4536
    %v4549 = vadd.f32 %v4483, %v4537
    %v4550 = vadd.f32 %v4484, %v4536
    %v4551 = vadd.f32 %v4485, %v4537
    %v4552 = vadd.f32 %v4486, %v4536
    %v4553 = vadd.f32 %v4487, %v4537
    %v4554 = vadd.f32 %v4488, %v4536
    %v4555 = vadd.f32 %v4489, %v4537
    %v4556 = vadd.f32 %v4490, %v4536
    %v4557 = vadd.f32 %v4491, %v4537
    %v4558 = vadd.f32 %v4492, %v4536
    %v4559 = vadd.f32 %v4493, %v4537
    %v4560 = vadd.f32 %v4494, %v4536
    %v4561 = vadd.f32 %v4495, %v4537
    %v4562 = vadd.f32 %v4496, %v4536
    %v4563 = vadd.f32 %v4497, %v4537
    %v4564 = vadd.f32 %v4498, %v4536
    %v4565 = vadd.f32 %v4499, %v4537
    %v4566 = vadd.f32 %v4500, %v4536
    %v4567 = vadd.f32 %v4501, %v4537
    %v4568 = vadd.f32 %v4502, %v4536
    %v4569 = vadd.f32 %v4503, %v4537
    %v4570 = vadd.f32 %v4504, %v4536
    %v4571 = vadd.f32 %v4505, %v4537
    %v4572 = vadd.f32 %v4506, %v4536
    %v4573 = vadd.f32 %v4507, %v4537
    %v4574 = vadd.f32 %v4508, %v4536
    %v4575 = vadd.f32 %v4509, %v4537
    %v4576 = vadd.f32 %v4510, %v4536
    %v4577 = vadd.f32 %v4511, %v4537
    %v4578 = vadd.f32 %v4512, %v4536
    %v4579 = vadd.f32 %v4513, %v4537
    %v4580 = vadd.f32 %v4514, %v4536
    %v4581 = vadd.f32 %v4515, %v4537
    %v4582 = vadd.f32 %v4516, %v4536
    %v4583 = vadd.f32 %v4517, %v4537
    %v4584 = vadd.f32 %v4518, %v4536
    %v4585 = vadd.f32 %v4519, %v4537
    %v4586 = vadd.f32 %v4520, %v4536
    %v4587 = vadd.f32 %v4521, %v4537
    %v4588 = vadd.f32 %v4522, %v4536
    %v4589 = vadd.f32 %v4523, %v4537
    %v4590 = vadd.f32 %v4524, %v4536
    %v4591 = vadd.f32 %v4525, %v4537
    %v4592 = vadd.f32 %v4526, %v4536
    %v4593 = vadd.f32 %v4527, %v4537
    %v4594 = vadd.f32 %v4528, %v4536
    %v4595 = vadd.f32 %v4529, %v4537
    %v4596 = vadd.f32 %v4530, %v4536
    %v4597 = vadd.f32 %v4531, %v4537
    %v4598 = vadd.f32 %v4532, %v4536
    %v4599 = vadd.f32 %v4533, %v4537
    %v4600 = vadd.f32 %v4534, %v4536
    %v4601 = vadd.f32 %v4535, %v4537
    %v4602 = vmul.f32 %v4538, 0.2
    %v4603 = vmul.f32 %v4539, 0.2
    %v4604 = vmul.f32 %v4540, 0.2
    %v4605 = vmul.f32 %v4541, 0.2
    %v4606 = vmul.f32 %v4542, 0.2
    %v4607 = vmul.f32 %v4543, 0.2
    %v4608 = vmul.f32 %v4544, 0.2
    %v4609 = vmul.f32 %v4545, 0.2
    %v4610 = vmul.f32 %v4546, 0.2
    %v4611 = vmul.f32 %v4547, 0.2
    %v4612 = vmul.f32 %v4548, 0.2
    %v4613 = vmul.f32 %v4549, 0.2
    %v4614 = vmul.f32 %v4550, 0.2
    %v4615 = vmul.f32 %v4551, 0.2
    %v4616 = vmul.f32 %v4552, 0.2
    %v4617 = vmul.f32 %v4553, 0.2
    %v4618 = vmul.f32 %v4554, 0.2
    %v4619 = vmul.f32 %v4555, 0.2
    %v4620 = vmul.f32 %v4556, 0.2
    %v4621 = vmul.f32 %v4557, 0.2
    %v4622 = vmul.f32 %v4558, 0.2
    %v4623 = vmul.f32 %v4559, 0.2
    %v4624 = vmul.f32 %v4560, 0.2
    %v4625 = vmul.f32 %v4561, 0.2
    %v4626 = vmul.f32 %v4562, 0.2
    %v4627 = vmul.f32 %v4563, 0.2
    %v4628 = vmul.f32 %v4564, 0.2
    %v4629 = vmul.f32 %v4565, 0.2
    %v4630 = vmul.f32 %v4566, 0.2
    %v4631 = vmul.f32 %v4567, 0.2
    %v4632 = vmul.f32 %v4568, 0.2
    %v4633 = vmul.f32 %v4569, 0.2
    %v4634 = vmul.f32 %v4570, 0.2
    %v4635 = vmul.f32 %v4571, 0.2
    %v4636 = vmul.f32 %v4572, 0.2
    %v4637 = vmul.f32 %v4573, 0.2
    %v4638 = vmul.f32 %v4574, 0.2
    %v4639 = vmul.f32 %v4575, 0.2
    %v4640 = vmul.f32 %v4576, 0.2
    %v4641 = vmul.f32 %v4577, 0.2
    %v4642 = vmul.f32 %v4578, 0.2
    %v4643 = vmul.f32 %v4579, 0.2
    %v4644 = vmul.f32 %v4580, 0.2
    %v4645 = vmul.f32 %v4581, 0.2
    %v4646 = vmul.f32 %v4582, 0.2
    %v4647 = vmul.f32 %v4583, 0.2
    %v4648 = vmul.f32 %v4584, 0.2
    %v4649 = vmul.f32 %v4585, 0.2
    %v4650 = vmul.f32 %v4586, 0.2
    %v4651 = vmul.f32 %v4587, 0.2
    %v4652 = vmul.f32 %v4588, 0.2
    %v4653 = vmul.f32 %v4589, 0.2
    %v4654 = vmul.f32 %v4590, 0.2
    %v4655 = vmul.f32 %v4591, 0.2
    %v4656 = vmul.f32 %v4592, 0.2
    %v4657 = vmul.f32 %v4593, 0.2
    %v4658 = vmul.f32 %v4594, 0.2
    %v4659 = vmul.f32 %v4595, 0.2
    %v4660 = vmul.f32 %v4596, 0.2
    %v4661 = vmul.f32 %v4597, 0.2
    %v4662 = vmul.f32 %v4598, 0.2
    %v4663 = vmul.f32 %v4599, 0.2
    %v4664 = vmul.f32 %v4600, 0.2
    %v4665 = vmul.f32 %v4601, 0.2
    %v4666 = vmax.f32 %v4538, %v4602
    %v4667 = vmax.f32 %v4539, %v4603
    %v4668 = vmax.f32 %v4540, %v4604
    %v4669 = vmax.f32 %v4541, %v4605
    %v4670 = vmax.f32 %v4542, %v4606
    %v4671 = vmax.f32 %v4543, %v4607
    %v4672 = vmax.f32 %v4544, %v4608
    %v4673 = vmax.f32 %v4545, %v4609
    %v4674 = vmax.f32 %v4546, %v4610
    %v4675 = vmax.f32 %v4547, %v4611
    %v4676 = vmax.f32 %v4548, %v4612
    %v4677 = vmax.f32 %v4549, %v4613
    %v4678 = vmax.f32 %v4550, %v4614
    %v4679 = vmax.f32 %v4551, %v4615
    %v4680 = vmax.f32 %v4552, %v4616
    %v4681 = vmax.f32 %v4553, %v4617
    %v4682 = vmax.f32 %v4554, %v4618
    %v4683 = vmax.f32 %v4555, %v4619
    %v4684 = vmax.f32 %v4556, %v4620
    %v4685 = vmax.f32 %v4557, %v4621
    %v4686 = vmax.f32 %v4558, %v4622
    %v4687 = vmax.f32 %v4559, %v4623
    %v4688 = vmax.f32 %v4560, %v4624
    %v4689 = vmax.f32 %v4561, %v4625
    %v4690 = vmax.f32 %v4562, %v4626
    %v4691 = vmax.f32 %v4563, %v4627
    %v4692 = vmax.f32 %v4564, %v4628
    %v4693 = vmax.f32 %v4565, %v4629
    %v4694 = vmax.f32 %v4566, %v4630
    %v4695 = vmax.f32 %v4567, %v4631
    %v4696 = vmax.f32 %v4568, %v4632
    %v4697 = vmax.f32 %v4569, %v4633
    %v4698 = vmax.f32 %v4570, %v4634
    %v4699 = vmax.f32 %v4571, %v4635
    %v4700 = vmax.f32 %v4572, %v4636
    %v4701 = vmax.f32 %v4573, %v4637
    %v4702 = vmax.f32 %v4574, %v4638
    %v4703 = vmax.f32 %v4575, %v4639
    %v4704 = vmax.f32 %v4576, %v4640
    %v4705 = vmax.f32 %v4577, %v4641
    %v4706 = vmax.f32 %v4578, %v4642
    %v4707 = vmax.f32 %v4579, %v4643
    %v4708 = vmax.f32 %v4580, %v4644
    %v4709 = vmax.f32 %v4581, %v4645
    %v4710 = vmax.f32 %v4582, %v4646
    %v4711 = vmax.f32 %v4583, %v4647
    %v4712 = vmax.f32 %v4584, %v4648
    %v4713 = vmax.f32 %v4585, %v4649
    %v4714 = vmax.f32 %v4586, %v4650
    %v4715 = vmax.f32 %v4587, %v4651
    %v4716 = vmax.f32 %v4588, %v4652
    %v4717 = vmax.f32 %v4589, %v4653
    %v4718 = vmax.f32 %v4590, %v4654
    %v4719 = vmax.f32 %v4591, %v4655
    %v4720 = vmax.f32 %v4592, %v4656
    %v4721 = vmax.f32 %v4593, %v4657
    %v4722 = vmax.f32 %v4594, %v4658
    %v4723 = vmax.f32 %v4595, %v4659
    %v4724 = vmax.f32 %v4596, %v4660
    %v4725 = vmax.f32 %v4597, %v4661
    %v4726 = vmax.f32 %v4598, %v4662
    %v4727 = vmax.f32 %v4599, %v4663
    %v4728 = vmax.f32 %v4600, %v4664
    %v4729 = vmax.f32 %v4601, %v4665
    %v4730 = vpack.c.bf16 %v4668, %v4666
    %v4731 = vpack.c.bf16 %v4669, %v4667
    %v4732 = vpack.c.bf16 %v4672, %v4670
    %v4733 = vpack.c.bf16 %v4673, %v4671
    %v4734 = vpack.c.bf16 %v4676, %v4674
    %v4735 = vpack.c.bf16 %v4677, %v4675
    %v4736 = vpack.c.bf16 %v4680, %v4678
    %v4737 = vpack.c.bf16 %v4681, %v4679
    %v4738 = vpack.c.bf16 %v4684, %v4682
    %v4739 = vpack.c.bf16 %v4685, %v4683
    %v4740 = vpack.c.bf16 %v4688, %v4686
    %v4741 = vpack.c.bf16 %v4689, %v4687
    %v4742 = vpack.c.bf16 %v4692, %v4690
    %v4743 = vpack.c.bf16 %v4693, %v4691
    %v4744 = vpack.c.bf16 %v4696, %v4694
    %v4745 = vpack.c.bf16 %v4697, %v4695
    %v4746 = vpack.c.bf16 %v4700, %v4698
    %v4747 = vpack.c.bf16 %v4701, %v4699
    %v4748 = vpack.c.bf16 %v4704, %v4702
    %v4749 = vpack.c.bf16 %v4705, %v4703
    %v4750 = vpack.c.bf16 %v4708, %v4706
    %v4751 = vpack.c.bf16 %v4709, %v4707
    %v4752 = vpack.c.bf16 %v4712, %v4710
    %v4753 = vpack.c.bf16 %v4713, %v4711
    %v4754 = vpack.c.bf16 %v4716, %v4714
    %v4755 = vpack.c.bf16 %v4717, %v4715
    %v4756 = vpack.c.bf16 %v4720, %v4718
    %v4757 = vpack.c.bf16 %v4721, %v4719
    %v4758 = vpack.c.bf16 %v4724, %v4722
    %v4759 = vpack.c.bf16 %v4725, %v4723
    %v4760 = vpack.c.bf16 %v4728, %v4726
    %v4761 = vpack.c.bf16 %v4729, %v4727
    %v4762 = vld [vmem:[#allocation14] sm:$0xf]
    %v4763 = vld [vmem:[#allocation14 + $0x4] sm:$0xf]
    %v4764 = vld [vmem:[#allocation14 + $0x8] sm:$0xf]
    %v4765 = vld [vmem:[#allocation14 + $0xc] sm:$0xf]
    %v4766 = vld [vmem:[#allocation14 + $0x10] sm:$0xf]
    %v4767 = vld [vmem:[#allocation14 + $0x14] sm:$0xf]
    %v4768 = vld [vmem:[#allocation14 + $0x18] sm:$0xf]
    %v4769 = vld [vmem:[#allocation14 + $0x1c] sm:$0xf]
    %v4770 = vld [vmem:[#allocation14 + $0x20] sm:$0xf]
    %v4771 = vld [vmem:[#allocation14 + $0x24] sm:$0xf]
    %v4772 = vld [vmem:[#allocation14 + $0x28] sm:$0xf]
    %v4773 = vld [vmem:[#allocation14 + $0x2c] sm:$0xf]
    %v4774 = vld [vmem:[#allocation14 + $0x30] sm:$0xf]
    %v4775 = vld [vmem:[#allocation14 + $0x34] sm:$0xf]
    %v4776 = vld [vmem:[#allocation14 + $0x38] sm:$0xf]
    %v4777 = vld [vmem:[#allocation14 + $0x3c] sm:$0xf]
    %v4778 = vld [vmem:[#allocation14 + $0x40] sm:$0xf]
    %v4779 = vld [vmem:[#allocation14 + $0x44] sm:$0xf]
    %v4780 = vld [vmem:[#allocation14 + $0x48] sm:$0xf]
    %v4781 = vld [vmem:[#allocation14 + $0x4c] sm:$0xf]
    %v4782 = vld [vmem:[#allocation14 + $0x50] sm:$0xf]
    %v4783 = vld [vmem:[#allocation14 + $0x54] sm:$0xf]
    %v4784 = vld [vmem:[#allocation14 + $0x58] sm:$0xf]
    %v4785 = vld [vmem:[#allocation14 + $0x5c] sm:$0xf]
    %v4786 = vld [vmem:[#allocation14 + $0x60] sm:$0xf]
    %v4787 = vld [vmem:[#allocation14 + $0x64] sm:$0xf]
    %v4788 = vld [vmem:[#allocation14 + $0x68] sm:$0xf]
    %v4789 = vld [vmem:[#allocation14 + $0x6c] sm:$0xf]
    %v4790 = vld [vmem:[#allocation14 + $0x70] sm:$0xf]
    %v4791 = vld [vmem:[#allocation14 + $0x74] sm:$0xf]
    %v4792 = vld [vmem:[#allocation14 + $0x78] sm:$0xf]
    %v4793 = vld [vmem:[#allocation14 + $0x7c] sm:$0xf]
    %v4826 = vunpack.c.l.b16 %v4762
    %v4827 = vunpack.c.l.b16 %v4763
    %v4828 = vunpack.c.l.b16 %v4764
    %v4829 = vunpack.c.l.b16 %v4765
    %v4830 = vunpack.c.l.b16 %v4766
    %v4831 = vunpack.c.l.b16 %v4767
    %v4832 = vunpack.c.l.b16 %v4768
    %v4833 = vunpack.c.l.b16 %v4769
    %v4834 = vunpack.c.l.b16 %v4770
    %v4835 = vunpack.c.l.b16 %v4771
    %v4836 = vunpack.c.l.b16 %v4772
    %v4837 = vunpack.c.l.b16 %v4773
    %v4838 = vunpack.c.l.b16 %v4774
    %v4839 = vunpack.c.l.b16 %v4775
    %v4840 = vunpack.c.l.b16 %v4776
    %v4841 = vunpack.c.l.b16 %v4777
    %v4842 = vunpack.c.l.b16 %v4778
    %v4843 = vunpack.c.l.b16 %v4779
    %v4844 = vunpack.c.l.b16 %v4780
    %v4845 = vunpack.c.l.b16 %v4781
    %v4846 = vunpack.c.l.b16 %v4782
    %v4847 = vunpack.c.l.b16 %v4783
    %v4848 = vunpack.c.l.b16 %v4784
    %v4849 = vunpack.c.l.b16 %v4785
    %v4850 = vunpack.c.l.b16 %v4786
    %v4851 = vunpack.c.l.b16 %v4787
    %v4852 = vunpack.c.l.b16 %v4788
    %v4853 = vunpack.c.l.b16 %v4789
    %v4854 = vunpack.c.l.b16 %v4790
    %v4855 = vunpack.c.l.b16 %v4791
    %v4856 = vunpack.c.l.b16 %v4792
    %v4857 = vunpack.c.l.b16 %v4793
    %v4858 = vpack.c.b16 %v4827, %v4826
    %v4859 = vpack.c.b16 %v4829, %v4828
    %v4860 = vpack.c.b16 %v4831, %v4830
    %v4861 = vpack.c.b16 %v4833, %v4832
    %v4862 = vpack.c.b16 %v4835, %v4834
    %v4863 = vpack.c.b16 %v4837, %v4836
    %v4864 = vpack.c.b16 %v4839, %v4838
    %v4865 = vpack.c.b16 %v4841, %v4840
    %v4866 = vpack.c.b16 %v4843, %v4842
    %v4867 = vpack.c.b16 %v4845, %v4844
    %v4868 = vpack.c.b16 %v4847, %v4846
    %v4869 = vpack.c.b16 %v4849, %v4848
    %v4870 = vpack.c.b16 %v4851, %v4850
    %v4871 = vpack.c.b16 %v4853, %v4852
    %v4872 = vpack.c.b16 %v4855, %v4854
    %v4873 = vpack.c.b16 %v4857, %v4856
    %4890 = vmatpush.bf16.msra.mxu0 %v4865
    %4891 = vmatpush.bf16.msra.mxu0 %v4864
    %4892 = vmatpush.bf16.msra.mxu0 %v4863
    %4893 = vmatpush.bf16.msra.mxu0 %v4862
    %4894 = vmatpush.bf16.msra.mxu0 %v4861
    %4895 = vmatpush.bf16.msra.mxu0 %v4860
    %4896 = vmatpush.bf16.msra.mxu0 %v4859
    %4897 = vmatpush.bf16.msra.mxu0 %v4858
    %4898 = vmatmul.bf16.gmra.mxu0 %v4730
    %v4899 = vpop.f32.mrf.mxu0
    %v4900 = vadd.f32 0.0, %v4899
    %v4901 = vpop.f32.mrf.mxu0
    %v4902 = vadd.f32 0.0, %v4901
    %4903 = vmatmul.bf16.gmra.mxu0 %v4732
    %v4904 = vpop.f32.mrf.mxu0
    %v4905 = vadd.f32 0.0, %v4904
    %v4906 = vpop.f32.mrf.mxu0
    %v4907 = vadd.f32 0.0, %v4906
    %4908 = vmatmul.bf16.gmra.mxu0 %v4734
    %v4909 = vpop.f32.mrf.mxu0
    %v4910 = vadd.f32 0.0, %v4909
    %v4911 = vpop.f32.mrf.mxu0
    %v4912 = vadd.f32 0.0, %v4911
    %4913 = vmatmul.bf16.gmra.mxu0 %v4736
    %v4914 = vpop.f32.mrf.mxu0
    %v4915 = vadd.f32 0.0, %v4914
    %v4916 = vpop.f32.mrf.mxu0
    %v4917 = vadd.f32 0.0, %v4916
    %4918 = vmatmul.bf16.gmra.mxu0 %v4738
    %v4919 = vpop.f32.mrf.mxu0
    %v4920 = vadd.f32 0.0, %v4919
    %v4921 = vpop.f32.mrf.mxu0
    %v4922 = vadd.f32 0.0, %v4921
    %4923 = vmatmul.bf16.gmra.mxu0 %v4740
    %v4924 = vpop.f32.mrf.mxu0
    %v4925 = vadd.f32 0.0, %v4924
    %v4926 = vpop.f32.mrf.mxu0
    %v4927 = vadd.f32 0.0, %v4926
    %4928 = vmatmul.bf16.gmra.mxu0 %v4742
    %v4929 = vpop.f32.mrf.mxu0
    %v4930 = vadd.f32 0.0, %v4929
    %v4931 = vpop.f32.mrf.mxu0
    %v4932 = vadd.f32 0.0, %v4931
    %4933 = vmatmul.bf16.gmra.mxu0 %v4744
    %v4934 = vpop.f32.mrf.mxu0
    %v4935 = vadd.f32 0.0, %v4934
    %v4936 = vpop.f32.mrf.mxu0
    %v4937 = vadd.f32 0.0, %v4936
    %4938 = vmatmul.bf16.gmra.mxu0 %v4746
    %v4939 = vpop.f32.mrf.mxu0
    %v4940 = vadd.f32 0.0, %v4939
    %v4941 = vpop.f32.mrf.mxu0
    %v4942 = vadd.f32 0.0, %v4941
    %4943 = vmatmul.bf16.gmra.mxu0 %v4748
    %v4944 = vpop.f32.mrf.mxu0
    %v4945 = vadd.f32 0.0, %v4944
    %v4946 = vpop.f32.mrf.mxu0
    %v4947 = vadd.f32 0.0, %v4946
    %4948 = vmatmul.bf16.gmra.mxu0 %v4750
    %v4949 = vpop.f32.mrf.mxu0
    %v4950 = vadd.f32 0.0, %v4949
    %v4951 = vpop.f32.mrf.mxu0
    %v4952 = vadd.f32 0.0, %v4951
    %4953 = vmatmul.bf16.gmra.mxu0 %v4752
    %v4954 = vpop.f32.mrf.mxu0
    %v4955 = vadd.f32 0.0, %v4954
    %v4956 = vpop.f32.mrf.mxu0
    %v4957 = vadd.f32 0.0, %v4956
    %4958 = vmatmul.bf16.gmra.mxu0 %v4754
    %v4959 = vpop.f32.mrf.mxu0
    %v4960 = vadd.f32 0.0, %v4959
    %v4961 = vpop.f32.mrf.mxu0
    %v4962 = vadd.f32 0.0, %v4961
    %4963 = vmatmul.bf16.gmra.mxu0 %v4756
    %v4964 = vpop.f32.mrf.mxu0
    %v4965 = vadd.f32 0.0, %v4964
    %v4966 = vpop.f32.mrf.mxu0
    %v4967 = vadd.f32 0.0, %v4966
    %4968 = vmatmul.bf16.gmra.mxu0 %v4758
    %v4969 = vpop.f32.mrf.mxu0
    %v4970 = vadd.f32 0.0, %v4969
    %v4971 = vpop.f32.mrf.mxu0
    %v4972 = vadd.f32 0.0, %v4971
    %4973 = vmatmul.bf16.gmra.mxu0 %v4760
    %v4974 = vpop.f32.mrf.mxu0
    %v4975 = vadd.f32 0.0, %v4974
    %v4976 = vpop.f32.mrf.mxu0
    %v4977 = vadd.f32 0.0, %v4976
    %4978 = vdwg.mxu0
    %4979 = vmatpush.bf16.msra.mxu0 %v4873
    %4980 = vmatpush.bf16.msra.mxu0 %v4872
    %4981 = vmatpush.bf16.msra.mxu0 %v4871
    %4982 = vmatpush.bf16.msra.mxu0 %v4870
    %4983 = vmatpush.bf16.msra.mxu0 %v4869
    %4984 = vmatpush.bf16.msra.mxu0 %v4868
    %4985 = vmatpush.bf16.msra.mxu0 %v4867
    %4986 = vmatpush.bf16.msra.mxu0 %v4866
    %4987 = vmatmul.bf16.gmra.mxu0 %v4731
    %v4988 = vpop.f32.mrf.mxu0
    %v4989 = vadd.f32 %v4900, %v4988
    %v4990 = vpop.f32.mrf.mxu0
    %v4991 = vadd.f32 %v4902, %v4990
    %4992 = vmatmul.bf16.gmra.mxu0 %v4733
    %v4993 = vpop.f32.mrf.mxu0
    %v4994 = vadd.f32 %v4905, %v4993
    %v4995 = vpop.f32.mrf.mxu0
    %v4996 = vadd.f32 %v4907, %v4995
    %4997 = vmatmul.bf16.gmra.mxu0 %v4735
    %v4998 = vpop.f32.mrf.mxu0
    %v4999 = vadd.f32 %v4910, %v4998
    %v5000 = vpop.f32.mrf.mxu0
    %v5001 = vadd.f32 %v4912, %v5000
    %5002 = vmatmul.bf16.gmra.mxu0 %v4737
    %v5003 = vpop.f32.mrf.mxu0
    %v5004 = vadd.f32 %v4915, %v5003
    %v5005 = vpop.f32.mrf.mxu0
    %v5006 = vadd.f32 %v4917, %v5005
    %5007 = vmatmul.bf16.gmra.mxu0 %v4739
    %v5008 = vpop.f32.mrf.mxu0
    %v5009 = vadd.f32 %v4920, %v5008
    %v5010 = vpop.f32.mrf.mxu0
    %v5011 = vadd.f32 %v4922, %v5010
    %5012 = vmatmul.bf16.gmra.mxu0 %v4741
    %v5013 = vpop.f32.mrf.mxu0
    %v5014 = vadd.f32 %v4925, %v5013
    %v5015 = vpop.f32.mrf.mxu0
    %v5016 = vadd.f32 %v4927, %v5015
    %5017 = vmatmul.bf16.gmra.mxu0 %v4743
    %v5018 = vpop.f32.mrf.mxu0
    %v5019 = vadd.f32 %v4930, %v5018
    %v5020 = vpop.f32.mrf.mxu0
    %v5021 = vadd.f32 %v4932, %v5020
    %5022 = vmatmul.bf16.gmra.mxu0 %v4745
    %v5023 = vpop.f32.mrf.mxu0
    %v5024 = vadd.f32 %v4935, %v5023
    %v5025 = vpop.f32.mrf.mxu0
    %v5026 = vadd.f32 %v4937, %v5025
    %5027 = vmatmul.bf16.gmra.mxu0 %v4747
    %v5028 = vpop.f32.mrf.mxu0
    %v5029 = vadd.f32 %v4940, %v5028
    %v5030 = vpop.f32.mrf.mxu0
    %v5031 = vadd.f32 %v4942, %v5030
    %5032 = vmatmul.bf16.gmra.mxu0 %v4749
    %v5033 = vpop.f32.mrf.mxu0
    %v5034 = vadd.f32 %v4945, %v5033
    %v5035 = vpop.f32.mrf.mxu0
    %v5036 = vadd.f32 %v4947, %v5035
    %5037 = vmatmul.bf16.gmra.mxu0 %v4751
    %v5038 = vpop.f32.mrf.mxu0
    %v5039 = vadd.f32 %v4950, %v5038
    %v5040 = vpop.f32.mrf.mxu0
    %v5041 = vadd.f32 %v4952, %v5040
    %5042 = vmatmul.bf16.gmra.mxu0 %v4753
    %v5043 = vpop.f32.mrf.mxu0
    %v5044 = vadd.f32 %v4955, %v5043
    %v5045 = vpop.f32.mrf.mxu0
    %v5046 = vadd.f32 %v4957, %v5045
    %5047 = vmatmul.bf16.gmra.mxu0 %v4755
    %v5048 = vpop.f32.mrf.mxu0
    %v5049 = vadd.f32 %v4960, %v5048
    %v5050 = vpop.f32.mrf.mxu0
    %v5051 = vadd.f32 %v4962, %v5050
    %5052 = vmatmul.bf16.gmra.mxu0 %v4757
    %v5053 = vpop.f32.mrf.mxu0
    %v5054 = vadd.f32 %v4965, %v5053
    %v5055 = vpop.f32.mrf.mxu0
    %v5056 = vadd.f32 %v4967, %v5055
    %5057 = vmatmul.bf16.gmra.mxu0 %v4759
    %v5058 = vpop.f32.mrf.mxu0
    %v5059 = vadd.f32 %v4970, %v5058
    %v5060 = vpop.f32.mrf.mxu0
    %v5061 = vadd.f32 %v4972, %v5060
    %5062 = vmatmul.bf16.gmra.mxu0 %v4761
    %v5063 = vpop.f32.mrf.mxu0
    %v5064 = vadd.f32 %v4975, %v5063
    %v5065 = vpop.f32.mrf.mxu0
    %v5066 = vadd.f32 %v4977, %v5065
    %5067 = vdwg.mxu0
    %v5068 = vadd.f32 %v4989, %v4991
    %v5069 = vadd.f32 %v5068, %v4994
    %v5070 = vadd.f32 %v5069, %v4996
    %v5071 = vadd.f32 %v5070, %v4999
    %v5072 = vadd.f32 %v5071, %v5001
    %v5073 = vadd.f32 %v5072, %v5004
    %v5074 = vadd.f32 %v5073, %v5006
    %v5075 = vadd.f32 %v5074, %v5009
    %v5076 = vadd.f32 %v5075, %v5011
    %v5077 = vadd.f32 %v5076, %v5014
    %v5078 = vadd.f32 %v5077, %v5016
    %v5079 = vadd.f32 %v5078, %v5019
    %v5080 = vadd.f32 %v5079, %v5021
    %v5081 = vadd.f32 %v5080, %v5024
    %v5082 = vadd.f32 %v5081, %v5026
    %v5083 = vadd.f32 %v5082, %v5029
    %v5084 = vadd.f32 %v5083, %v5031
    %v5085 = vadd.f32 %v5084, %v5034
    %v5086 = vadd.f32 %v5085, %v5036
    %v5087 = vadd.f32 %v5086, %v5039
    %v5088 = vadd.f32 %v5087, %v5041
    %v5089 = vadd.f32 %v5088, %v5044
    %v5090 = vadd.f32 %v5089, %v5046
    %v5091 = vadd.f32 %v5090, %v5049
    %v5092 = vadd.f32 %v5091, %v5051
    %v5093 = vadd.f32 %v5092, %v5054
    %v5094 = vadd.f32 %v5093, %v5056
    %v5095 = vadd.f32 %v5094, %v5059
    %v5096 = vadd.f32 %v5095, %v5061
    %v5097 = vadd.f32 %v5096, %v5064
    %v5098 = vadd.f32 %v5097, %v5066
    %v5099 = vrot.slane %v5098, 4
    %v5100 = vadd.f32 %v5098, %v5099
    %v5101 = vrot.slane %v5100, 2
    %v5102 = vadd.f32 %v5100, %v5101
    %v5103 = vrot.slane %v5102, 1
    %v5104 = vadd.f32 %v5102, %v5103
    %v5105 = vmul.f32 %v4989, %v4989
    %v5106 = vmul.f32 %v4991, %v4991
    %v5107 = vmul.f32 %v4994, %v4994
    %v5108 = vmul.f32 %v4996, %v4996
    %v5109 = vmul.f32 %v4999, %v4999
    %v5110 = vmul.f32 %v5001, %v5001
    %v5111 = vmul.f32 %v5004, %v5004
    %v5112 = vmul.f32 %v5006, %v5006
    %v5113 = vmul.f32 %v5009, %v5009
    %v5114 = vmul.f32 %v5011, %v5011
    %v5115 = vmul.f32 %v5014, %v5014
    %v5116 = vmul.f32 %v5016, %v5016
    %v5117 = vmul.f32 %v5019, %v5019
    %v5118 = vmul.f32 %v5021, %v5021
    %v5119 = vmul.f32 %v5024, %v5024
    %v5120 = vmul.f32 %v5026, %v5026
    %v5121 = vmul.f32 %v5029, %v5029
    %v5122 = vmul.f32 %v5031, %v5031
    %v5123 = vmul.f32 %v5034, %v5034
    %v5124 = vmul.f32 %v5036, %v5036
    %v5125 = vmul.f32 %v5039, %v5039
    %v5126 = vmul.f32 %v5041, %v5041
    %v5127 = vmul.f32 %v5044, %v5044
    %v5128 = vmul.f32 %v5046, %v5046
    %v5129 = vmul.f32 %v5049, %v5049
    %v5130 = vmul.f32 %v5051, %v5051
    %v5131 = vmul.f32 %v5054, %v5054
    %v5132 = vmul.f32 %v5056, %v5056
    %v5133 = vmul.f32 %v5059, %v5059
    %v5134 = vmul.f32 %v5061, %v5061
    %v5135 = vmul.f32 %v5064, %v5064
    %v5136 = vmul.f32 %v5066, %v5066
    %v5137 = vadd.f32 %v5105, %v5106
    %v5138 = vadd.f32 %v5137, %v5107
    %v5139 = vadd.f32 %v5138, %v5108
    %v5140 = vadd.f32 %v5139, %v5109
    %v5141 = vadd.f32 %v5140, %v5110
    %v5142 = vadd.f32 %v5141, %v5111
    %v5143 = vadd.f32 %v5142, %v5112
    %v5144 = vadd.f32 %v5143, %v5113
    %v5145 = vadd.f32 %v5144, %v5114
    %v5146 = vadd.f32 %v5145, %v5115
    %v5147 = vadd.f32 %v5146, %v5116
    %v5148 = vadd.f32 %v5147, %v5117
    %v5149 = vadd.f32 %v5148, %v5118
    %v5150 = vadd.f32 %v5149, %v5119
    %v5151 = vadd.f32 %v5150, %v5120
    %v5152 = vadd.f32 %v5151, %v5121
    %v5153 = vadd.f32 %v5152, %v5122
    %v5154 = vadd.f32 %v5153, %v5123
    %v5155 = vadd.f32 %v5154, %v5124
    %v5156 = vadd.f32 %v5155, %v5125
    %v5157 = vadd.f32 %v5156, %v5126
    %v5158 = vadd.f32 %v5157, %v5127
    %v5159 = vadd.f32 %v5158, %v5128
    %v5160 = vadd.f32 %v5159, %v5129
    %v5161 = vadd.f32 %v5160, %v5130
    %v5162 = vadd.f32 %v5161, %v5131
    %v5163 = vadd.f32 %v5162, %v5132
    %v5164 = vadd.f32 %v5163, %v5133
    %v5165 = vadd.f32 %v5164, %v5134
    %v5166 = vadd.f32 %v5165, %v5135
    %v5167 = vadd.f32 %v5166, %v5136
    %v5168 = vrot.slane %v5167, 4
    %v5169 = vadd.f32 %v5167, %v5168
    %v5170 = vrot.slane %v5169, 2
    %v5171 = vadd.f32 %v5169, %v5170
    %v5172 = vrot.slane %v5171, 1
    %v5173 = vadd.f32 %v5171, %v5172
    %v5174 = vld [vmem:[#allocation16] sm:$0xff]
    %v5175 = vld [vmem:[#allocation16 + $0x8] sm:$0xff]
    %v5176 = vld [vmem:[#allocation16 + $0x10] sm:$0xff]
    %v5177 = vld [vmem:[#allocation16 + $0x18] sm:$0xff]
    %v5178 = vld [vmem:[#allocation16 + $0x20] sm:$0xff]
    %v5179 = vld [vmem:[#allocation16 + $0x28] sm:$0xff]
    %v5180 = vld [vmem:[#allocation16 + $0x30] sm:$0xff]
    %v5181 = vld [vmem:[#allocation16 + $0x38] sm:$0xff]
    %v5182 = vld [vmem:[#allocation16 + $0x40] sm:$0xff]
    %v5183 = vld [vmem:[#allocation16 + $0x48] sm:$0xff]
    %v5184 = vld [vmem:[#allocation16 + $0x50] sm:$0xff]
    %v5185 = vld [vmem:[#allocation16 + $0x58] sm:$0xff]
    %v5186 = vld [vmem:[#allocation16 + $0x60] sm:$0xff]
    %v5187 = vld [vmem:[#allocation16 + $0x68] sm:$0xff]
    %v5188 = vld [vmem:[#allocation16 + $0x70] sm:$0xff]
    %v5189 = vld [vmem:[#allocation16 + $0x78] sm:$0xff]
    %5190 = vmatpush.msra.mxu0 %v5189
    %5191 = vmatpush.msra.mxu0 %v5188
    %5192 = vmatpush.msra.mxu0 %v5187
    %5193 = vmatpush.msra.mxu0 %v5186
    %5194 = vmatpush.msra.mxu0 %v5185
    %5195 = vmatpush.msra.mxu0 %v5184
    %5196 = vmatpush.msra.mxu0 %v5183
    %5197 = vmatpush.msra.mxu0 %v5182
    %5198 = vmatpush.msra.mxu0 %v5181
    %5199 = vmatpush.msra.mxu0 %v5180
    %5200 = vmatpush.msra.mxu0 %v5179
    %5201 = vmatpush.msra.mxu0 %v5178
    %5202 = vmatpush.msra.mxu0 %v5177
    %5203 = vmatpush.msra.mxu0 %v5176
    %5204 = vmatpush.msra.mxu0 %v5175
    %5205 = vmatpush.msra.mxu0 %v5174
    %5206 = vmatmul.f32.gmra.mxu0 %v5104
    %v5207 = vpop.f32.mrf.mxu0
    %v5208 = vadd.f32 0.0, %v5207
    %5209 = vdwg.mxu0
    %5210 = vmatpush.msra.mxu0 %v5189
    %5211 = vmatpush.msra.mxu0 %v5188
    %5212 = vmatpush.msra.mxu0 %v5187
    %5213 = vmatpush.msra.mxu0 %v5186
    %5214 = vmatpush.msra.mxu0 %v5185
    %5215 = vmatpush.msra.mxu0 %v5184
    %5216 = vmatpush.msra.mxu0 %v5183
    %5217 = vmatpush.msra.mxu0 %v5182
    %5218 = vmatpush.msra.mxu0 %v5181
    %5219 = vmatpush.msra.mxu0 %v5180
    %5220 = vmatpush.msra.mxu0 %v5179
    %5221 = vmatpush.msra.mxu0 %v5178
    %5222 = vmatpush.msra.mxu0 %v5177
    %5223 = vmatpush.msra.mxu0 %v5176
    %5224 = vmatpush.msra.mxu0 %v5175
    %5225 = vmatpush.msra.mxu0 %v5174
    %5226 = vmatmul.f32.gmra.mxu0 %v5173
    %v5227 = vpop.f32.mrf.mxu0
    %v5228 = vadd.f32 0.0, %v5227
    %5229 = vdwg.mxu0
    %v5230 = vrcp.pop 1024.0
    %v5231 = vmul.f32 1024.0, %v5230
    %v5232 = vsub.f32 1.0, %v5231
    %v5233 = vmul.f32 %v5230, %v5232
    %v5234 = vadd.f32 %v5230, %v5233
    %vm5235 = vweird.f32 %v5230
    %v5236 = vsel %vm5235, %v5230, %v5234
    %v5237 = vmul.f32 %v5208, %v5236
    %v5238 = vmul.f32 %v5228, %v5236
    %v5239 = vmul.f32 %v5237, %v5237
    %v5240 = vsub.f32 %v5238, %v5239
    %v5241 = vmax.f32 %v5240, 0.0
    %v5242 = vld [vmem:[%s14] sm:$0x1]
    %v5243 = vadd.f32 %v5241, 1e-05
    %v5244 = vrsqrt.pop %v5243
    %v5245 = vmul.f32 %v5244, %v5243
    %v5246 = vmul.f32 %v5245, %v5244
    %v5247 = vmul.f32 0.5, %v5246
    %v5248 = vsub.f32 1.5, %v5247
    %v5249 = vmul.f32 %v5244, %v5248
    %vm5250 = vweird.f32 %v5243
    %vm5251 = vweird.f32 %v5244
    %vm5252 = vmor %vm5250, %vm5251
    %v5253 = vsel %vm5252, %v5244, %v5249
    %v5254 = vmul.f32 %v5242, %v5253
    %v5255 = vld [vmem:[%s15] sm:$0x1]
    %v5256 = vmul.f32 %v5237, %v5254
    %v5257 = vsub.f32 %v5255, %v5256
    %v5258 = vld [vmem:[#allocation17] sm:$0xff]
    %v5259 = vld [vmem:[#allocation17 + $0x8] sm:$0xff]
    %v5260 = vld [vmem:[#allocation17 + $0x10] sm:$0xff]
    %v5261 = vld [vmem:[#allocation17 + $0x18] sm:$0xff]
    %v5262 = vld [vmem:[#allocation17 + $0x20] sm:$0xff]
    %v5263 = vld [vmem:[#allocation17 + $0x28] sm:$0xff]
    %v5264 = vld [vmem:[#allocation17 + $0x30] sm:$0xff]
    %v5265 = vld [vmem:[#allocation17 + $0x38] sm:$0xff]
    %v5266 = vld [vmem:[#allocation17 + $0x40] sm:$0xff]
    %v5267 = vld [vmem:[#allocation17 + $0x48] sm:$0xff]
    %v5268 = vld [vmem:[#allocation17 + $0x50] sm:$0xff]
    %v5269 = vld [vmem:[#allocation17 + $0x58] sm:$0xff]
    %v5270 = vld [vmem:[#allocation17 + $0x60] sm:$0xff]
    %v5271 = vld [vmem:[#allocation17 + $0x68] sm:$0xff]
    %v5272 = vld [vmem:[#allocation17 + $0x70] sm:$0xff]
    %v5273 = vld [vmem:[#allocation17 + $0x78] sm:$0xff]
    %5274 = vmatpush.msra.mxu0 %v5273
    %5275 = vmatpush.msra.mxu0 %v5272
    %5276 = vmatpush.msra.mxu0 %v5271
    %5277 = vmatpush.msra.mxu0 %v5270
    %5278 = vmatpush.msra.mxu0 %v5269
    %5279 = vmatpush.msra.mxu0 %v5268
    %5280 = vmatpush.msra.mxu0 %v5267
    %5281 = vmatpush.msra.mxu0 %v5266
    %5282 = vmatpush.msra.mxu0 %v5265
    %5283 = vmatpush.msra.mxu0 %v5264
    %5284 = vmatpush.msra.mxu0 %v5263
    %5285 = vmatpush.msra.mxu0 %v5262
    %5286 = vmatpush.msra.mxu0 %v5261
    %5287 = vmatpush.msra.mxu0 %v5260
    %5288 = vmatpush.msra.mxu0 %v5259
    %5289 = vmatpush.msra.mxu0 %v5258
    %5290 = vmatmul.f32.gmra.mxu0 %v5254
    %v5291 = vpop.f32.mrf.mxu0
    %v5292 = vadd.f32 0.0, %v5291
    %5293 = vdwg.mxu0
    %5294 = vmatpush.msra.mxu0 %v5273
    %5295 = vmatpush.msra.mxu0 %v5272
    %5296 = vmatpush.msra.mxu0 %v5271
    %5297 = vmatpush.msra.mxu0 %v5270
    %5298 = vmatpush.msra.mxu0 %v5269
    %5299 = vmatpush.msra.mxu0 %v5268
    %5300 = vmatpush.msra.mxu0 %v5267
    %5301 = vmatpush.msra.mxu0 %v5266
    %5302 = vmatpush.msra.mxu0 %v5265
    %5303 = vmatpush.msra.mxu0 %v5264
    %5304 = vmatpush.msra.mxu0 %v5263
    %5305 = vmatpush.msra.mxu0 %v5262
    %5306 = vmatpush.msra.mxu0 %v5261
    %5307 = vmatpush.msra.mxu0 %v5260
    %5308 = vmatpush.msra.mxu0 %v5259
    %5309 = vmatpush.msra.mxu0 %v5258
    %5310 = vmatmul.f32.gmra.mxu0 %v5257
    %v5311 = vpop.f32.mrf.mxu0
    %v5312 = vadd.f32 0.0, %v5311
    %5313 = vdwg.mxu0
    %v5314 = vperm.slane %v5292, 0
    %v5315 = vmul.f32 %v4989, %v5314
    %v5316 = vmul.f32 %v4991, %v5314
    %v5317 = vmul.f32 %v4994, %v5314
    %v5318 = vmul.f32 %v4996, %v5314
    %v5319 = vmul.f32 %v4999, %v5314
    %v5320 = vmul.f32 %v5001, %v5314
    %v5321 = vmul.f32 %v5004, %v5314
    %v5322 = vmul.f32 %v5006, %v5314
    %v5323 = vmul.f32 %v5009, %v5314
    %v5324 = vmul.f32 %v5011, %v5314
    %v5325 = vmul.f32 %v5014, %v5314
    %v5326 = vmul.f32 %v5016, %v5314
    %v5327 = vmul.f32 %v5019, %v5314
    %v5328 = vmul.f32 %v5021, %v5314
    %v5329 = vmul.f32 %v5024, %v5314
    %v5330 = vmul.f32 %v5026, %v5314
    %v5331 = vmul.f32 %v5029, %v5314
    %v5332 = vmul.f32 %v5031, %v5314
    %v5333 = vmul.f32 %v5034, %v5314
    %v5334 = vmul.f32 %v5036, %v5314
    %v5335 = vmul.f32 %v5039, %v5314
    %v5336 = vmul.f32 %v5041, %v5314
    %v5337 = vmul.f32 %v5044, %v5314
    %v5338 = vmul.f32 %v5046, %v5314
    %v5339 = vmul.f32 %v5049, %v5314
    %v5340 = vmul.f32 %v5051, %v5314
    %v5341 = vmul.f32 %v5054, %v5314
    %v5342 = vmul.f32 %v5056, %v5314
    %v5343 = vmul.f32 %v5059, %v5314
    %v5344 = vmul.f32 %v5061, %v5314
    %v5345 = vmul.f32 %v5064, %v5314
    %v5346 = vmul.f32 %v5066, %v5314
    %v5347 = vperm.slane %v5312, 0
    %v5348 = vadd.f32 %v5315, %v5347
    %v5349 = vadd.f32 %v5316, %v5347
    %v5350 = vadd.f32 %v5317, %v5347
    %v5351 = vadd.f32 %v5318, %v5347
    %v5352 = vadd.f32 %v5319, %v5347
    %v5353 = vadd.f32 %v5320, %v5347
    %v5354 = vadd.f32 %v5321, %v5347
    %v5355 = vadd.f32 %v5322, %v5347
    %v5356 = vadd.f32 %v5323, %v5347
    %v5357 = vadd.f32 %v5324, %v5347
    %v5358 = vadd.f32 %v5325, %v5347
    %v5359 = vadd.f32 %v5326, %v5347
    %v5360 = vadd.f32 %v5327, %v5347
    %v5361 = vadd.f32 %v5328, %v5347
    %v5362 = vadd.f32 %v5329, %v5347
    %v5363 = vadd.f32 %v5330, %v5347
    %v5364 = vadd.f32 %v5331, %v5347
    %v5365 = vadd.f32 %v5332, %v5347
    %v5366 = vadd.f32 %v5333, %v5347
    %v5367 = vadd.f32 %v5334, %v5347
    %v5368 = vadd.f32 %v5335, %v5347
    %v5369 = vadd.f32 %v5336, %v5347
    %v5370 = vadd.f32 %v5337, %v5347
    %v5371 = vadd.f32 %v5338, %v5347
    %v5372 = vadd.f32 %v5339, %v5347
    %v5373 = vadd.f32 %v5340, %v5347
    %v5374 = vadd.f32 %v5341, %v5347
    %v5375 = vadd.f32 %v5342, %v5347
    %v5376 = vadd.f32 %v5343, %v5347
    %v5377 = vadd.f32 %v5344, %v5347
    %v5378 = vadd.f32 %v5345, %v5347
    %v5379 = vadd.f32 %v5346, %v5347
    %v5380 = vmul.f32 %v5348, 0.2
    %v5381 = vmul.f32 %v5349, 0.2
    %v5382 = vmul.f32 %v5350, 0.2
    %v5383 = vmul.f32 %v5351, 0.2
    %v5384 = vmul.f32 %v5352, 0.2
    %v5385 = vmul.f32 %v5353, 0.2
    %v5386 = vmul.f32 %v5354, 0.2
    %v5387 = vmul.f32 %v5355, 0.2
    %v5388 = vmul.f32 %v5356, 0.2
    %v5389 = vmul.f32 %v5357, 0.2
    %v5390 = vmul.f32 %v5358, 0.2
    %v5391 = vmul.f32 %v5359, 0.2
    %v5392 = vmul.f32 %v5360, 0.2
    %v5393 = vmul.f32 %v5361, 0.2
    %v5394 = vmul.f32 %v5362, 0.2
    %v5395 = vmul.f32 %v5363, 0.2
    %v5396 = vmul.f32 %v5364, 0.2
    %v5397 = vmul.f32 %v5365, 0.2
    %v5398 = vmul.f32 %v5366, 0.2
    %v5399 = vmul.f32 %v5367, 0.2
    %v5400 = vmul.f32 %v5368, 0.2
    %v5401 = vmul.f32 %v5369, 0.2
    %v5402 = vmul.f32 %v5370, 0.2
    %v5403 = vmul.f32 %v5371, 0.2
    %v5404 = vmul.f32 %v5372, 0.2
    %v5405 = vmul.f32 %v5373, 0.2
    %v5406 = vmul.f32 %v5374, 0.2
    %v5407 = vmul.f32 %v5375, 0.2
    %v5408 = vmul.f32 %v5376, 0.2
    %v5409 = vmul.f32 %v5377, 0.2
    %v5410 = vmul.f32 %v5378, 0.2
    %v5411 = vmul.f32 %v5379, 0.2
    %v5412 = vmax.f32 %v5348, %v5380
    %v5413 = vmax.f32 %v5349, %v5381
    %v5414 = vmax.f32 %v5350, %v5382
    %v5415 = vmax.f32 %v5351, %v5383
    %v5416 = vmax.f32 %v5352, %v5384
    %v5417 = vmax.f32 %v5353, %v5385
    %v5418 = vmax.f32 %v5354, %v5386
    %v5419 = vmax.f32 %v5355, %v5387
    %v5420 = vmax.f32 %v5356, %v5388
    %v5421 = vmax.f32 %v5357, %v5389
    %v5422 = vmax.f32 %v5358, %v5390
    %v5423 = vmax.f32 %v5359, %v5391
    %v5424 = vmax.f32 %v5360, %v5392
    %v5425 = vmax.f32 %v5361, %v5393
    %v5426 = vmax.f32 %v5362, %v5394
    %v5427 = vmax.f32 %v5363, %v5395
    %v5428 = vmax.f32 %v5364, %v5396
    %v5429 = vmax.f32 %v5365, %v5397
    %v5430 = vmax.f32 %v5366, %v5398
    %v5431 = vmax.f32 %v5367, %v5399
    %v5432 = vmax.f32 %v5368, %v5400
    %v5433 = vmax.f32 %v5369, %v5401
    %v5434 = vmax.f32 %v5370, %v5402
    %v5435 = vmax.f32 %v5371, %v5403
    %v5436 = vmax.f32 %v5372, %v5404
    %v5437 = vmax.f32 %v5373, %v5405
    %v5438 = vmax.f32 %v5374, %v5406
    %v5439 = vmax.f32 %v5375, %v5407
    %v5440 = vmax.f32 %v5376, %v5408
    %v5441 = vmax.f32 %v5377, %v5409
    %v5442 = vmax.f32 %v5378, %v5410
    %v5443 = vmax.f32 %v5379, %v5411
    %5444 = vst [vmem:[#allocation21] sm:$0xff] %v5412
    %5445 = vst [vmem:[#allocation21 + $0x8] sm:$0xff] %v5413
    %5446 = vst [vmem:[#allocation21 + $0x10] sm:$0xff] %v5414
    %5447 = vst [vmem:[#allocation21 + $0x18] sm:$0xff] %v5415
    %5448 = vst [vmem:[#allocation21 + $0x20] sm:$0xff] %v5416
    %5449 = vst [vmem:[#allocation21 + $0x28] sm:$0xff] %v5417
    %5450 = vst [vmem:[#allocation21 + $0x30] sm:$0xff] %v5418
    %5451 = vst [vmem:[#allocation21 + $0x38] sm:$0xff] %v5419
    %5452 = vst [vmem:[#allocation21 + $0x40] sm:$0xff] %v5420
    %5453 = vst [vmem:[#allocation21 + $0x48] sm:$0xff] %v5421
    %5454 = vst [vmem:[#allocation21 + $0x50] sm:$0xff] %v5422
    %5455 = vst [vmem:[#allocation21 + $0x58] sm:$0xff] %v5423
    %5456 = vst [vmem:[#allocation21 + $0x60] sm:$0xff] %v5424
    %5457 = vst [vmem:[#allocation21 + $0x68] sm:$0xff] %v5425
    %5458 = vst [vmem:[#allocation21 + $0x70] sm:$0xff] %v5426
    %5459 = vst [vmem:[#allocation21 + $0x78] sm:$0xff] %v5427
    %5460 = vst [vmem:[#allocation21 + $0x80] sm:$0xff] %v5428
    %5461 = vst [vmem:[#allocation21 + $0x88] sm:$0xff] %v5429
    %5462 = vst [vmem:[#allocation21 + $0x90] sm:$0xff] %v5430
    %5463 = vst [vmem:[#allocation21 + $0x98] sm:$0xff] %v5431
    %5464 = vst [vmem:[#allocation21 + $0xa0] sm:$0xff] %v5432
    %5465 = vst [vmem:[#allocation21 + $0xa8] sm:$0xff] %v5433
    %5466 = vst [vmem:[#allocation21 + $0xb0] sm:$0xff] %v5434
    %5467 = vst [vmem:[#allocation21 + $0xb8] sm:$0xff] %v5435
    %5468 = vst [vmem:[#allocation21 + $0xc0] sm:$0xff] %v5436
    %5469 = vst [vmem:[#allocation21 + $0xc8] sm:$0xff] %v5437
    %5470 = vst [vmem:[#allocation21 + $0xd0] sm:$0xff] %v5438
    %5471 = vst [vmem:[#allocation21 + $0xd8] sm:$0xff] %v5439
    %5472 = vst [vmem:[#allocation21 + $0xe0] sm:$0xff] %v5440
    %5473 = vst [vmem:[#allocation21 + $0xe8] sm:$0xff] %v5441
    %5474 = vst [vmem:[#allocation21 + $0xf0] sm:$0xff] %v5442
    %5475 = vst [vmem:[#allocation21 + $0xf8] sm:$0xff] %v5443
    %v5476 = vpack.c.bf16 %v5413, %v5412
    %v5477 = vpack.c.bf16 %v5415, %v5414
    %v5478 = vpack.c.bf16 %v5417, %v5416
    %v5479 = vpack.c.bf16 %v5419, %v5418
    %v5480 = vpack.c.bf16 %v5421, %v5420
    %v5481 = vpack.c.bf16 %v5423, %v5422
    %v5482 = vpack.c.bf16 %v5425, %v5424
    %v5483 = vpack.c.bf16 %v5427, %v5426
    %v5484 = vpack.c.bf16 %v5429, %v5428
    %v5485 = vpack.c.bf16 %v5431, %v5430
    %v5486 = vpack.c.bf16 %v5433, %v5432
    %v5487 = vpack.c.bf16 %v5435, %v5434
    %v5488 = vpack.c.bf16 %v5437, %v5436
    %v5489 = vpack.c.bf16 %v5439, %v5438
    %v5490 = vpack.c.bf16 %v5441, %v5440
    %v5491 = vpack.c.bf16 %v5443, %v5442
    %v5492 = vld [vmem:[#allocation19] sm:$0xf]
    %v5493 = vld [vmem:[#allocation19 + $0x4] sm:$0xf]
    %v5494 = vld [vmem:[#allocation19 + $0x8] sm:$0xf]
    %v5495 = vld [vmem:[#allocation19 + $0xc] sm:$0xf]
    %v5496 = vld [vmem:[#allocation19 + $0x10] sm:$0xf]
    %v5497 = vld [vmem:[#allocation19 + $0x14] sm:$0xf]
    %v5498 = vld [vmem:[#allocation19 + $0x18] sm:$0xf]
    %v5499 = vld [vmem:[#allocation19 + $0x1c] sm:$0xf]
    %v5500 = vld [vmem:[#allocation19 + $0x20] sm:$0xf]
    %v5501 = vld [vmem:[#allocation19 + $0x24] sm:$0xf]
    %v5502 = vld [vmem:[#allocation19 + $0x28] sm:$0xf]
    %v5503 = vld [vmem:[#allocation19 + $0x2c] sm:$0xf]
    %v5504 = vld [vmem:[#allocation19 + $0x30] sm:$0xf]
    %v5505 = vld [vmem:[#allocation19 + $0x34] sm:$0xf]
    %v5506 = vld [vmem:[#allocation19 + $0x38] sm:$0xf]
    %v5507 = vld [vmem:[#allocation19 + $0x3c] sm:$0xf]
    %v5508 = vld [vmem:[%s17] sm:$0x1]
    %v5510 = vperm.slane %v5508, 0
    %v5528 = vunpack.c.l.b16 %v5492
    %v5529 = vunpack.c.l.b16 %v5493
    %v5530 = vunpack.c.l.b16 %v5494
    %v5531 = vunpack.c.l.b16 %v5495
    %v5532 = vunpack.c.l.b16 %v5496
    %v5533 = vunpack.c.l.b16 %v5497
    %v5534 = vunpack.c.l.b16 %v5498
    %v5535 = vunpack.c.l.b16 %v5499
    %v5536 = vunpack.c.l.b16 %v5500
    %v5537 = vunpack.c.l.b16 %v5501
    %v5538 = vunpack.c.l.b16 %v5502
    %v5539 = vunpack.c.l.b16 %v5503
    %v5540 = vunpack.c.l.b16 %v5504
    %v5541 = vunpack.c.l.b16 %v5505
    %v5542 = vunpack.c.l.b16 %v5506
    %v5543 = vunpack.c.l.b16 %v5507
    %v5544 = vpack.c.b16 %v5529, %v5528
    %v5545 = vpack.c.b16 %v5531, %v5530
    %v5546 = vpack.c.b16 %v5533, %v5532
    %v5547 = vpack.c.b16 %v5535, %v5534
    %v5548 = vpack.c.b16 %v5537, %v5536
    %v5549 = vpack.c.b16 %v5539, %v5538
    %v5550 = vpack.c.b16 %v5541, %v5540
    %v5551 = vpack.c.b16 %v5543, %v5542
    %5560 = vmatpush.bf16.msra.mxu0 %v5551
    %5561 = vmatpush.bf16.msra.mxu0 %v5550
    %5562 = vmatpush.bf16.msra.mxu0 %v5549
    %5563 = vmatpush.bf16.msra.mxu0 %v5548
    %5564 = vmatpush.bf16.msra.mxu0 %v5547
    %5565 = vmatpush.bf16.msra.mxu0 %v5546
    %5566 = vmatpush.bf16.msra.mxu0 %v5545
    %5567 = vmatpush.bf16.msra.mxu0 %v5544
    %5568 = vmatmul.bf16.gmra.mxu0 %v5476
    %v5569 = vpop.f32.mrf.mxu0
    %v5570 = vadd.f32 %v5510, %v5569
    %v5571 = vpop.f32.mrf.mxu0
    %v5572 = vadd.f32 %v5510, %v5571
    %5573 = vmatmul.bf16.gmra.mxu0 %v5477
    %v5574 = vpop.f32.mrf.mxu0
    %v5575 = vadd.f32 %v5510, %v5574
    %v5576 = vpop.f32.mrf.mxu0
    %v5577 = vadd.f32 %v5510, %v5576
    %5578 = vmatmul.bf16.gmra.mxu0 %v5478
    %v5579 = vpop.f32.mrf.mxu0
    %v5580 = vadd.f32 %v5510, %v5579
    %v5581 = vpop.f32.mrf.mxu0
    %v5582 = vadd.f32 %v5510, %v5581
    %5583 = vmatmul.bf16.gmra.mxu0 %v5479
    %v5584 = vpop.f32.mrf.mxu0
    %v5585 = vadd.f32 %v5510, %v5584
    %v5586 = vpop.f32.mrf.mxu0
    %v5587 = vadd.f32 %v5510, %v5586
    %5588 = vmatmul.bf16.gmra.mxu0 %v5480
    %v5589 = vpop.f32.mrf.mxu0
    %v5590 = vadd.f32 %v5510, %v5589
    %v5591 = vpop.f32.mrf.mxu0
    %v5592 = vadd.f32 %v5510, %v5591
    %5593 = vmatmul.bf16.gmra.mxu0 %v5481
    %v5594 = vpop.f32.mrf.mxu0
    %v5595 = vadd.f32 %v5510, %v5594
    %v5596 = vpop.f32.mrf.mxu0
    %v5597 = vadd.f32 %v5510, %v5596
    %5598 = vmatmul.bf16.gmra.mxu0 %v5482
    %v5599 = vpop.f32.mrf.mxu0
    %v5600 = vadd.f32 %v5510, %v5599
    %v5601 = vpop.f32.mrf.mxu0
    %v5602 = vadd.f32 %v5510, %v5601
    %5603 = vmatmul.bf16.gmra.mxu0 %v5483
    %v5604 = vpop.f32.mrf.mxu0
    %v5605 = vadd.f32 %v5510, %v5604
    %v5606 = vpop.f32.mrf.mxu0
    %v5607 = vadd.f32 %v5510, %v5606
    %5608 = vmatmul.bf16.gmra.mxu0 %v5484
    %v5609 = vpop.f32.mrf.mxu0
    %v5610 = vadd.f32 %v5510, %v5609
    %v5611 = vpop.f32.mrf.mxu0
    %v5612 = vadd.f32 %v5510, %v5611
    %5613 = vmatmul.bf16.gmra.mxu0 %v5485
    %v5614 = vpop.f32.mrf.mxu0
    %v5615 = vadd.f32 %v5510, %v5614
    %v5616 = vpop.f32.mrf.mxu0
    %v5617 = vadd.f32 %v5510, %v5616
    %5618 = vmatmul.bf16.gmra.mxu0 %v5486
    %v5619 = vpop.f32.mrf.mxu0
    %v5620 = vadd.f32 %v5510, %v5619
    %v5621 = vpop.f32.mrf.mxu0
    %v5622 = vadd.f32 %v5510, %v5621
    %5623 = vmatmul.bf16.gmra.mxu0 %v5487
    %v5624 = vpop.f32.mrf.mxu0
    %v5625 = vadd.f32 %v5510, %v5624
    %v5626 = vpop.f32.mrf.mxu0
    %v5627 = vadd.f32 %v5510, %v5626
    %5628 = vmatmul.bf16.gmra.mxu0 %v5488
    %v5629 = vpop.f32.mrf.mxu0
    %v5630 = vadd.f32 %v5510, %v5629
    %v5631 = vpop.f32.mrf.mxu0
    %v5632 = vadd.f32 %v5510, %v5631
    %5633 = vmatmul.bf16.gmra.mxu0 %v5489
    %v5634 = vpop.f32.mrf.mxu0
    %v5635 = vadd.f32 %v5510, %v5634
    %v5636 = vpop.f32.mrf.mxu0
    %v5637 = vadd.f32 %v5510, %v5636
    %5638 = vmatmul.bf16.gmra.mxu0 %v5490
    %v5639 = vpop.f32.mrf.mxu0
    %v5640 = vadd.f32 %v5510, %v5639
    %v5641 = vpop.f32.mrf.mxu0
    %v5642 = vadd.f32 %v5510, %v5641
    %5643 = vmatmul.bf16.gmra.mxu0 %v5491
    %v5644 = vpop.f32.mrf.mxu0
    %v5645 = vadd.f32 %v5510, %v5644
    %v5646 = vpop.f32.mrf.mxu0
    %v5647 = vadd.f32 %v5510, %v5646
    %5648 = vdwg.mxu0
    %v5649 = vsub.f32 0.0, %v5570
    %v5650 = vsub.f32 0.0, %v5572
    %v5651 = vsub.f32 0.0, %v5575
    %v5652 = vsub.f32 0.0, %v5577
    %v5653 = vsub.f32 0.0, %v5580
    %v5654 = vsub.f32 0.0, %v5582
    %v5655 = vsub.f32 0.0, %v5585
    %v5656 = vsub.f32 0.0, %v5587
    %v5657 = vsub.f32 0.0, %v5590
    %v5658 = vsub.f32 0.0, %v5592
    %v5659 = vsub.f32 0.0, %v5595
    %v5660 = vsub.f32 0.0, %v5597
    %v5661 = vsub.f32 0.0, %v5600
    %v5662 = vsub.f32 0.0, %v5602
    %v5663 = vsub.f32 0.0, %v5605
    %v5664 = vsub.f32 0.0, %v5607
    %v5665 = vsub.f32 0.0, %v5610
    %v5666 = vsub.f32 0.0, %v5612
    %v5667 = vsub.f32 0.0, %v5615
    %v5668 = vsub.f32 0.0, %v5617
    %v5669 = vsub.f32 0.0, %v5620
    %v5670 = vsub.f32 0.0, %v5622
    %v5671 = vsub.f32 0.0, %v5625
    %v5672 = vsub.f32 0.0, %v5627
    %v5673 = vsub.f32 0.0, %v5630
    %v5674 = vsub.f32 0.0, %v5632
    %v5675 = vsub.f32 0.0, %v5635
    %v5676 = vsub.f32 0.0, %v5637
    %v5677 = vsub.f32 0.0, %v5640
    %v5678 = vsub.f32 0.0, %v5642
    %v5679 = vsub.f32 0.0, %v5645
    %v5680 = vsub.f32 0.0, %v5647
    %v5681 = vmul.f32 %v5649, 1.442695
    %v5682 = vpow.pop %v5681
    %v5683 = vmul.f32 %v5650, 1.442695
    %v5684 = vpow.pop %v5683
    %v5685 = vmul.f32 %v5651, 1.442695
    %v5686 = vpow.pop %v5685
    %v5687 = vmul.f32 %v5652, 1.442695
    %v5688 = vpow.pop %v5687
    %v5689 = vmul.f32 %v5653, 1.442695
    %v5690 = vpow.pop %v5689
    %v5691 = vmul.f32 %v5654, 1.442695
    %v5692 = vpow.pop %v5691
    %v5693 = vmul.f32 %v5655, 1.442695
    %v5694 = vpow.pop %v5693
    %v5695 = vmul.f32 %v5656, 1.442695
    %v5696 = vpow.pop %v5695
    %v5697 = vmul.f32 %v5657, 1.442695
    %v5698 = vpow.pop %v5697
    %v5699 = vmul.f32 %v5658, 1.442695
    %v5700 = vpow.pop %v5699
    %v5701 = vmul.f32 %v5659, 1.442695
    %v5702 = vpow.pop %v5701
    %v5703 = vmul.f32 %v5660, 1.442695
    %v5704 = vpow.pop %v5703
    %v5705 = vmul.f32 %v5661, 1.442695
    %v5706 = vpow.pop %v5705
    %v5707 = vmul.f32 %v5662, 1.442695
    %v5708 = vpow.pop %v5707
    %v5709 = vmul.f32 %v5663, 1.442695
    %v5710 = vpow.pop %v5709
    %v5711 = vmul.f32 %v5664, 1.442695
    %v5712 = vpow.pop %v5711
    %v5713 = vmul.f32 %v5665, 1.442695
    %v5714 = vpow.pop %v5713
    %v5715 = vmul.f32 %v5666, 1.442695
    %v5716 = vpow.pop %v5715
    %v5717 = vmul.f32 %v5667, 1.442695
    %v5718 = vpow.pop %v5717
    %v5719 = vmul.f32 %v5668, 1.442695
    %v5720 = vpow.pop %v5719
    %v5721 = vmul.f32 %v5669, 1.442695
    %v5722 = vpow.pop %v5721
    %v5723 = vmul.f32 %v5670, 1.442695
    %v5724 = vpow.pop %v5723
    %v5725 = vmul.f32 %v5671, 1.442695
    %v5726 = vpow.pop %v5725
    %v5727 = vmul.f32 %v5672, 1.442695
    %v5728 = vpow.pop %v5727
    %v5729 = vmul.f32 %v5673, 1.442695
    %v5730 = vpow.pop %v5729
    %v5731 = vmul.f32 %v5674, 1.442695
    %v5732 = vpow.pop %v5731
    %v5733 = vmul.f32 %v5675, 1.442695
    %v5734 = vpow.pop %v5733
    %v5735 = vmul.f32 %v5676, 1.442695
    %v5736 = vpow.pop %v5735
    %v5737 = vmul.f32 %v5677, 1.442695
    %v5738 = vpow.pop %v5737
    %v5739 = vmul.f32 %v5678, 1.442695
    %v5740 = vpow.pop %v5739
    %v5741 = vmul.f32 %v5679, 1.442695
    %v5742 = vpow.pop %v5741
    %v5743 = vmul.f32 %v5680, 1.442695
    %v5744 = vpow.pop %v5743
    %v5745 = vadd.f32 %v5682, 1.0
    %v5746 = vadd.f32 %v5684, 1.0
    %v5747 = vadd.f32 %v5686, 1.0
    %v5748 = vadd.f32 %v5688, 1.0
    %v5749 = vadd.f32 %v5690, 1.0
    %v5750 = vadd.f32 %v5692, 1.0
    %v5751 = vadd.f32 %v5694, 1.0
    %v5752 = vadd.f32 %v5696, 1.0
    %v5753 = vadd.f32 %v5698, 1.0
    %v5754 = vadd.f32 %v5700, 1.0
    %v5755 = vadd.f32 %v5702, 1.0
    %v5756 = vadd.f32 %v5704, 1.0
    %v5757 = vadd.f32 %v5706, 1.0
    %v5758 = vadd.f32 %v5708, 1.0
    %v5759 = vadd.f32 %v5710, 1.0
    %v5760 = vadd.f32 %v5712, 1.0
    %v5761 = vadd.f32 %v5714, 1.0
    %v5762 = vadd.f32 %v5716, 1.0
    %v5763 = vadd.f32 %v5718, 1.0
    %v5764 = vadd.f32 %v5720, 1.0
    %v5765 = vadd.f32 %v5722, 1.0
    %v5766 = vadd.f32 %v5724, 1.0
    %v5767 = vadd.f32 %v5726, 1.0
    %v5768 = vadd.f32 %v5728, 1.0
    %v5769 = vadd.f32 %v5730, 1.0
    %v5770 = vadd.f32 %v5732, 1.0
    %v5771 = vadd.f32 %v5734, 1.0
    %v5772 = vadd.f32 %v5736, 1.0
    %v5773 = vadd.f32 %v5738, 1.0
    %v5774 = vadd.f32 %v5740, 1.0
    %v5775 = vadd.f32 %v5742, 1.0
    %v5776 = vadd.f32 %v5744, 1.0
    %v5777 = vrcp.pop %v5745
    %v5778 = vmul.f32 %v5745, %v5777
    %v5779 = vsub.f32 1.0, %v5778
    %v5780 = vmul.f32 %v5777, %v5779
    %v5781 = vadd.f32 %v5777, %v5780
    %vm5782 = vweird.f32 %v5745
    %vm5783 = vweird.f32 %v5777
    %vm5784 = vmor %vm5782, %vm5783
    %v5785 = vsel %vm5784, %v5777, %v5781
    %v5786 = vand.u32 2147483647, %v5745
    %vm5787 = vcmp.eq.f32.partialorder %v5786, 8.507059e+37
    %v5788 = vand.u32 %v5745, 2147483648
    %v5789 = vor.u32 1.1754944e-38, %v5788
    %v5790 = vsel %vm5787, %v5789, %v5785
    %v5791 = vmul.f32 1.0, %v5790
    %v5792 = vrcp.pop %v5746
    %v5793 = vmul.f32 %v5746, %v5792
    %v5794 = vsub.f32 1.0, %v5793
    %v5795 = vmul.f32 %v5792, %v5794
    %v5796 = vadd.f32 %v5792, %v5795
    %vm5797 = vweird.f32 %v5746
    %vm5798 = vweird.f32 %v5792
    %vm5799 = vmor %vm5797, %vm5798
    %v5800 = vsel %vm5799, %v5792, %v5796
    %v5801 = vand.u32 2147483647, %v5746
    %vm5802 = vcmp.eq.f32.partialorder %v5801, 8.507059e+37
    %v5803 = vand.u32 %v5746, 2147483648
    %v5804 = vor.u32 1.1754944e-38, %v5803
    %v5805 = vsel %vm5802, %v5804, %v5800
    %v5806 = vmul.f32 1.0, %v5805
    %v5807 = vrcp.pop %v5747
    %v5808 = vmul.f32 %v5747, %v5807
    %v5809 = vsub.f32 1.0, %v5808
    %v5810 = vmul.f32 %v5807, %v5809
    %v5811 = vadd.f32 %v5807, %v5810
    %vm5812 = vweird.f32 %v5747
    %vm5813 = vweird.f32 %v5807
    %vm5814 = vmor %vm5812, %vm5813
    %v5815 = vsel %vm5814, %v5807, %v5811
    %v5816 = vand.u32 2147483647, %v5747
    %vm5817 = vcmp.eq.f32.partialorder %v5816, 8.507059e+37
    %v5818 = vand.u32 %v5747, 2147483648
    %v5819 = vor.u32 1.1754944e-38, %v5818
    %v5820 = vsel %vm5817, %v5819, %v5815
    %v5821 = vmul.f32 1.0, %v5820
    %v5822 = vrcp.pop %v5748
    %v5823 = vmul.f32 %v5748, %v5822
    %v5824 = vsub.f32 1.0, %v5823
    %v5825 = vmul.f32 %v5822, %v5824
    %v5826 = vadd.f32 %v5822, %v5825
    %vm5827 = vweird.f32 %v5748
    %vm5828 = vweird.f32 %v5822
    %vm5829 = vmor %vm5827, %vm5828
    %v5830 = vsel %vm5829, %v5822, %v5826
    %v5831 = vand.u32 2147483647, %v5748
    %vm5832 = vcmp.eq.f32.partialorder %v5831, 8.507059e+37
    %v5833 = vand.u32 %v5748, 2147483648
    %v5834 = vor.u32 1.1754944e-38, %v5833
    %v5835 = vsel %vm5832, %v5834, %v5830
    %v5836 = vmul.f32 1.0, %v5835
    %v5837 = vrcp.pop %v5749
    %v5838 = vmul.f32 %v5749, %v5837
    %v5839 = vsub.f32 1.0, %v5838
    %v5840 = vmul.f32 %v5837, %v5839
    %v5841 = vadd.f32 %v5837, %v5840
    %vm5842 = vweird.f32 %v5749
    %vm5843 = vweird.f32 %v5837
    %vm5844 = vmor %vm5842, %vm5843
    %v5845 = vsel %vm5844, %v5837, %v5841
    %v5846 = vand.u32 2147483647, %v5749
    %vm5847 = vcmp.eq.f32.partialorder %v5846, 8.507059e+37
    %v5848 = vand.u32 %v5749, 2147483648
    %v5849 = vor.u32 1.1754944e-38, %v5848
    %v5850 = vsel %vm5847, %v5849, %v5845
    %v5851 = vmul.f32 1.0, %v5850
    %v5852 = vrcp.pop %v5750
    %v5853 = vmul.f32 %v5750, %v5852
    %v5854 = vsub.f32 1.0, %v5853
    %v5855 = vmul.f32 %v5852, %v5854
    %v5856 = vadd.f32 %v5852, %v5855
    %vm5857 = vweird.f32 %v5750
    %vm5858 = vweird.f32 %v5852
    %vm5859 = vmor %vm5857, %vm5858
    %v5860 = vsel %vm5859, %v5852, %v5856
    %v5861 = vand.u32 2147483647, %v5750
    %vm5862 = vcmp.eq.f32.partialorder %v5861, 8.507059e+37
    %v5863 = vand.u32 %v5750, 2147483648
    %v5864 = vor.u32 1.1754944e-38, %v5863
    %v5865 = vsel %vm5862, %v5864, %v5860
    %v5866 = vmul.f32 1.0, %v5865
    %v5867 = vrcp.pop %v5751
    %v5868 = vmul.f32 %v5751, %v5867
    %v5869 = vsub.f32 1.0, %v5868
    %v5870 = vmul.f32 %v5867, %v5869
    %v5871 = vadd.f32 %v5867, %v5870
    %vm5872 = vweird.f32 %v5751
    %vm5873 = vweird.f32 %v5867
    %vm5874 = vmor %vm5872, %vm5873
    %v5875 = vsel %vm5874, %v5867, %v5871
    %v5876 = vand.u32 2147483647, %v5751
    %vm5877 = vcmp.eq.f32.partialorder %v5876, 8.507059e+37
    %v5878 = vand.u32 %v5751, 2147483648
    %v5879 = vor.u32 1.1754944e-38, %v5878
    %v5880 = vsel %vm5877, %v5879, %v5875
    %v5881 = vmul.f32 1.0, %v5880
    %v5882 = vrcp.pop %v5752
    %v5883 = vmul.f32 %v5752, %v5882
    %v5884 = vsub.f32 1.0, %v5883
    %v5885 = vmul.f32 %v5882, %v5884
    %v5886 = vadd.f32 %v5882, %v5885
    %vm5887 = vweird.f32 %v5752
    %vm5888 = vweird.f32 %v5882
    %vm5889 = vmor %vm5887, %vm5888
    %v5890 = vsel %vm5889, %v5882, %v5886
    %v5891 = vand.u32 2147483647, %v5752
    %vm5892 = vcmp.eq.f32.partialorder %v5891, 8.507059e+37
    %v5893 = vand.u32 %v5752, 2147483648
    %v5894 = vor.u32 1.1754944e-38, %v5893
    %v5895 = vsel %vm5892, %v5894, %v5890
    %v5896 = vmul.f32 1.0, %v5895
    %v5897 = vrcp.pop %v5753
    %v5898 = vmul.f32 %v5753, %v5897
    %v5899 = vsub.f32 1.0, %v5898
    %v5900 = vmul.f32 %v5897, %v5899
    %v5901 = vadd.f32 %v5897, %v5900
    %vm5902 = vweird.f32 %v5753
    %vm5903 = vweird.f32 %v5897
    %vm5904 = vmor %vm5902, %vm5903
    %v5905 = vsel %vm5904, %v5897, %v5901
    %v5906 = vand.u32 2147483647, %v5753
    %vm5907 = vcmp.eq.f32.partialorder %v5906, 8.507059e+37
    %v5908 = vand.u32 %v5753, 2147483648
    %v5909 = vor.u32 1.1754944e-38, %v5908
    %v5910 = vsel %vm5907, %v5909, %v5905
    %v5911 = vmul.f32 1.0, %v5910
    %v5912 = vrcp.pop %v5754
    %v5913 = vmul.f32 %v5754, %v5912
    %v5914 = vsub.f32 1.0, %v5913
    %v5915 = vmul.f32 %v5912, %v5914
    %v5916 = vadd.f32 %v5912, %v5915
    %vm5917 = vweird.f32 %v5754
    %vm5918 = vweird.f32 %v5912
    %vm5919 = vmor %vm5917, %vm5918
    %v5920 = vsel %vm5919, %v5912, %v5916
    %v5921 = vand.u32 2147483647, %v5754
    %vm5922 = vcmp.eq.f32.partialorder %v5921, 8.507059e+37
    %v5923 = vand.u32 %v5754, 2147483648
    %v5924 = vor.u32 1.1754944e-38, %v5923
    %v5925 = vsel %vm5922, %v5924, %v5920
    %v5926 = vmul.f32 1.0, %v5925
    %v5927 = vrcp.pop %v5755
    %v5928 = vmul.f32 %v5755, %v5927
    %v5929 = vsub.f32 1.0, %v5928
    %v5930 = vmul.f32 %v5927, %v5929
    %v5931 = vadd.f32 %v5927, %v5930
    %vm5932 = vweird.f32 %v5755
    %vm5933 = vweird.f32 %v5927
    %vm5934 = vmor %vm5932, %vm5933
    %v5935 = vsel %vm5934, %v5927, %v5931
    %v5936 = vand.u32 2147483647, %v5755
    %vm5937 = vcmp.eq.f32.partialorder %v5936, 8.507059e+37
    %v5938 = vand.u32 %v5755, 2147483648
    %v5939 = vor.u32 1.1754944e-38, %v5938
    %v5940 = vsel %vm5937, %v5939, %v5935
    %v5941 = vmul.f32 1.0, %v5940
    %v5942 = vrcp.pop %v5756
    %v5943 = vmul.f32 %v5756, %v5942
    %v5944 = vsub.f32 1.0, %v5943
    %v5945 = vmul.f32 %v5942, %v5944
    %v5946 = vadd.f32 %v5942, %v5945
    %vm5947 = vweird.f32 %v5756
    %vm5948 = vweird.f32 %v5942
    %vm5949 = vmor %vm5947, %vm5948
    %v5950 = vsel %vm5949, %v5942, %v5946
    %v5951 = vand.u32 2147483647, %v5756
    %vm5952 = vcmp.eq.f32.partialorder %v5951, 8.507059e+37
    %v5953 = vand.u32 %v5756, 2147483648
    %v5954 = vor.u32 1.1754944e-38, %v5953
    %v5955 = vsel %vm5952, %v5954, %v5950
    %v5956 = vmul.f32 1.0, %v5955
    %v5957 = vrcp.pop %v5757
    %v5958 = vmul.f32 %v5757, %v5957
    %v5959 = vsub.f32 1.0, %v5958
    %v5960 = vmul.f32 %v5957, %v5959
    %v5961 = vadd.f32 %v5957, %v5960
    %vm5962 = vweird.f32 %v5757
    %vm5963 = vweird.f32 %v5957
    %vm5964 = vmor %vm5962, %vm5963
    %v5965 = vsel %vm5964, %v5957, %v5961
    %v5966 = vand.u32 2147483647, %v5757
    %vm5967 = vcmp.eq.f32.partialorder %v5966, 8.507059e+37
    %v5968 = vand.u32 %v5757, 2147483648
    %v5969 = vor.u32 1.1754944e-38, %v5968
    %v5970 = vsel %vm5967, %v5969, %v5965
    %v5971 = vmul.f32 1.0, %v5970
    %v5972 = vrcp.pop %v5758
    %v5973 = vmul.f32 %v5758, %v5972
    %v5974 = vsub.f32 1.0, %v5973
    %v5975 = vmul.f32 %v5972, %v5974
    %v5976 = vadd.f32 %v5972, %v5975
    %vm5977 = vweird.f32 %v5758
    %vm5978 = vweird.f32 %v5972
    %vm5979 = vmor %vm5977, %vm5978
    %v5980 = vsel %vm5979, %v5972, %v5976
    %v5981 = vand.u32 2147483647, %v5758
    %vm5982 = vcmp.eq.f32.partialorder %v5981, 8.507059e+37
    %v5983 = vand.u32 %v5758, 2147483648
    %v5984 = vor.u32 1.1754944e-38, %v5983
    %v5985 = vsel %vm5982, %v5984, %v5980
    %v5986 = vmul.f32 1.0, %v5985
    %v5987 = vrcp.pop %v5759
    %v5988 = vmul.f32 %v5759, %v5987
    %v5989 = vsub.f32 1.0, %v5988
    %v5990 = vmul.f32 %v5987, %v5989
    %v5991 = vadd.f32 %v5987, %v5990
    %vm5992 = vweird.f32 %v5759
    %vm5993 = vweird.f32 %v5987
    %vm5994 = vmor %vm5992, %vm5993
    %v5995 = vsel %vm5994, %v5987, %v5991
    %v5996 = vand.u32 2147483647, %v5759
    %vm5997 = vcmp.eq.f32.partialorder %v5996, 8.507059e+37
    %v5998 = vand.u32 %v5759, 2147483648
    %v5999 = vor.u32 1.1754944e-38, %v5998
    %v6000 = vsel %vm5997, %v5999, %v5995
    %v6001 = vmul.f32 1.0, %v6000
    %v6002 = vrcp.pop %v5760
    %v6003 = vmul.f32 %v5760, %v6002
    %v6004 = vsub.f32 1.0, %v6003
    %v6005 = vmul.f32 %v6002, %v6004
    %v6006 = vadd.f32 %v6002, %v6005
    %vm6007 = vweird.f32 %v5760
    %vm6008 = vweird.f32 %v6002
    %vm6009 = vmor %vm6007, %vm6008
    %v6010 = vsel %vm6009, %v6002, %v6006
    %v6011 = vand.u32 2147483647, %v5760
    %vm6012 = vcmp.eq.f32.partialorder %v6011, 8.507059e+37
    %v6013 = vand.u32 %v5760, 2147483648
    %v6014 = vor.u32 1.1754944e-38, %v6013
    %v6015 = vsel %vm6012, %v6014, %v6010
    %v6016 = vmul.f32 1.0, %v6015
    %v6017 = vrcp.pop %v5761
    %v6018 = vmul.f32 %v5761, %v6017
    %v6019 = vsub.f32 1.0, %v6018
    %v6020 = vmul.f32 %v6017, %v6019
    %v6021 = vadd.f32 %v6017, %v6020
    %vm6022 = vweird.f32 %v5761
    %vm6023 = vweird.f32 %v6017
    %vm6024 = vmor %vm6022, %vm6023
    %v6025 = vsel %vm6024, %v6017, %v6021
    %v6026 = vand.u32 2147483647, %v5761
    %vm6027 = vcmp.eq.f32.partialorder %v6026, 8.507059e+37
    %v6028 = vand.u32 %v5761, 2147483648
    %v6029 = vor.u32 1.1754944e-38, %v6028
    %v6030 = vsel %vm6027, %v6029, %v6025
    %v6031 = vmul.f32 1.0, %v6030
    %v6032 = vrcp.pop %v5762
    %v6033 = vmul.f32 %v5762, %v6032
    %v6034 = vsub.f32 1.0, %v6033
    %v6035 = vmul.f32 %v6032, %v6034
    %v6036 = vadd.f32 %v6032, %v6035
    %vm6037 = vweird.f32 %v5762
    %vm6038 = vweird.f32 %v6032
    %vm6039 = vmor %vm6037, %vm6038
    %v6040 = vsel %vm6039, %v6032, %v6036
    %v6041 = vand.u32 2147483647, %v5762
    %vm6042 = vcmp.eq.f32.partialorder %v6041, 8.507059e+37
    %v6043 = vand.u32 %v5762, 2147483648
    %v6044 = vor.u32 1.1754944e-38, %v6043
    %v6045 = vsel %vm6042, %v6044, %v6040
    %v6046 = vmul.f32 1.0, %v6045
    %v6047 = vrcp.pop %v5763
    %v6048 = vmul.f32 %v5763, %v6047
    %v6049 = vsub.f32 1.0, %v6048
    %v6050 = vmul.f32 %v6047, %v6049
    %v6051 = vadd.f32 %v6047, %v6050
    %vm6052 = vweird.f32 %v5763
    %vm6053 = vweird.f32 %v6047
    %vm6054 = vmor %vm6052, %vm6053
    %v6055 = vsel %vm6054, %v6047, %v6051
    %v6056 = vand.u32 2147483647, %v5763
    %vm6057 = vcmp.eq.f32.partialorder %v6056, 8.507059e+37
    %v6058 = vand.u32 %v5763, 2147483648
    %v6059 = vor.u32 1.1754944e-38, %v6058
    %v6060 = vsel %vm6057, %v6059, %v6055
    %v6061 = vmul.f32 1.0, %v6060
    %v6062 = vrcp.pop %v5764
    %v6063 = vmul.f32 %v5764, %v6062
    %v6064 = vsub.f32 1.0, %v6063
    %v6065 = vmul.f32 %v6062, %v6064
    %v6066 = vadd.f32 %v6062, %v6065
    %vm6067 = vweird.f32 %v5764
    %vm6068 = vweird.f32 %v6062
    %vm6069 = vmor %vm6067, %vm6068
    %v6070 = vsel %vm6069, %v6062, %v6066
    %v6071 = vand.u32 2147483647, %v5764
    %vm6072 = vcmp.eq.f32.partialorder %v6071, 8.507059e+37
    %v6073 = vand.u32 %v5764, 2147483648
    %v6074 = vor.u32 1.1754944e-38, %v6073
    %v6075 = vsel %vm6072, %v6074, %v6070
    %v6076 = vmul.f32 1.0, %v6075
    %v6077 = vrcp.pop %v5765
    %v6078 = vmul.f32 %v5765, %v6077
    %v6079 = vsub.f32 1.0, %v6078
    %v6080 = vmul.f32 %v6077, %v6079
    %v6081 = vadd.f32 %v6077, %v6080
    %vm6082 = vweird.f32 %v5765
    %vm6083 = vweird.f32 %v6077
    %vm6084 = vmor %vm6082, %vm6083
    %v6085 = vsel %vm6084, %v6077, %v6081
    %v6086 = vand.u32 2147483647, %v5765
    %vm6087 = vcmp.eq.f32.partialorder %v6086, 8.507059e+37
    %v6088 = vand.u32 %v5765, 2147483648
    %v6089 = vor.u32 1.1754944e-38, %v6088
    %v6090 = vsel %vm6087, %v6089, %v6085
    %v6091 = vmul.f32 1.0, %v6090
    %v6092 = vrcp.pop %v5766
    %v6093 = vmul.f32 %v5766, %v6092
    %v6094 = vsub.f32 1.0, %v6093
    %v6095 = vmul.f32 %v6092, %v6094
    %v6096 = vadd.f32 %v6092, %v6095
    %vm6097 = vweird.f32 %v5766
    %vm6098 = vweird.f32 %v6092
    %vm6099 = vmor %vm6097, %vm6098
    %v6100 = vsel %vm6099, %v6092, %v6096
    %v6101 = vand.u32 2147483647, %v5766
    %vm6102 = vcmp.eq.f32.partialorder %v6101, 8.507059e+37
    %v6103 = vand.u32 %v5766, 2147483648
    %v6104 = vor.u32 1.1754944e-38, %v6103
    %v6105 = vsel %vm6102, %v6104, %v6100
    %v6106 = vmul.f32 1.0, %v6105
    %v6107 = vrcp.pop %v5767
    %v6108 = vmul.f32 %v5767, %v6107
    %v6109 = vsub.f32 1.0, %v6108
    %v6110 = vmul.f32 %v6107, %v6109
    %v6111 = vadd.f32 %v6107, %v6110
    %vm6112 = vweird.f32 %v5767
    %vm6113 = vweird.f32 %v6107
    %vm6114 = vmor %vm6112, %vm6113
    %v6115 = vsel %vm6114, %v6107, %v6111
    %v6116 = vand.u32 2147483647, %v5767
    %vm6117 = vcmp.eq.f32.partialorder %v6116, 8.507059e+37
    %v6118 = vand.u32 %v5767, 2147483648
    %v6119 = vor.u32 1.1754944e-38, %v6118
    %v6120 = vsel %vm6117, %v6119, %v6115
    %v6121 = vmul.f32 1.0, %v6120
    %v6122 = vrcp.pop %v5768
    %v6123 = vmul.f32 %v5768, %v6122
    %v6124 = vsub.f32 1.0, %v6123
    %v6125 = vmul.f32 %v6122, %v6124
    %v6126 = vadd.f32 %v6122, %v6125
    %vm6127 = vweird.f32 %v5768
    %vm6128 = vweird.f32 %v6122
    %vm6129 = vmor %vm6127, %vm6128
    %v6130 = vsel %vm6129, %v6122, %v6126
    %v6131 = vand.u32 2147483647, %v5768
    %vm6132 = vcmp.eq.f32.partialorder %v6131, 8.507059e+37
    %v6133 = vand.u32 %v5768, 2147483648
    %v6134 = vor.u32 1.1754944e-38, %v6133
    %v6135 = vsel %vm6132, %v6134, %v6130
    %v6136 = vmul.f32 1.0, %v6135
    %v6137 = vrcp.pop %v5769
    %v6138 = vmul.f32 %v5769, %v6137
    %v6139 = vsub.f32 1.0, %v6138
    %v6140 = vmul.f32 %v6137, %v6139
    %v6141 = vadd.f32 %v6137, %v6140
    %vm6142 = vweird.f32 %v5769
    %vm6143 = vweird.f32 %v6137
    %vm6144 = vmor %vm6142, %vm6143
    %v6145 = vsel %vm6144, %v6137, %v6141
    %v6146 = vand.u32 2147483647, %v5769
    %vm6147 = vcmp.eq.f32.partialorder %v6146, 8.507059e+37
    %v6148 = vand.u32 %v5769, 2147483648
    %v6149 = vor.u32 1.1754944e-38, %v6148
    %v6150 = vsel %vm6147, %v6149, %v6145
    %v6151 = vmul.f32 1.0, %v6150
    %v6152 = vrcp.pop %v5770
    %v6153 = vmul.f32 %v5770, %v6152
    %v6154 = vsub.f32 1.0, %v6153
    %v6155 = vmul.f32 %v6152, %v6154
    %v6156 = vadd.f32 %v6152, %v6155
    %vm6157 = vweird.f32 %v5770
    %vm6158 = vweird.f32 %v6152
    %vm6159 = vmor %vm6157, %vm6158
    %v6160 = vsel %vm6159, %v6152, %v6156
    %v6161 = vand.u32 2147483647, %v5770
    %vm6162 = vcmp.eq.f32.partialorder %v6161, 8.507059e+37
    %v6163 = vand.u32 %v5770, 2147483648
    %v6164 = vor.u32 1.1754944e-38, %v6163
    %v6165 = vsel %vm6162, %v6164, %v6160
    %v6166 = vmul.f32 1.0, %v6165
    %v6167 = vrcp.pop %v5771
    %v6168 = vmul.f32 %v5771, %v6167
    %v6169 = vsub.f32 1.0, %v6168
    %v6170 = vmul.f32 %v6167, %v6169
    %v6171 = vadd.f32 %v6167, %v6170
    %vm6172 = vweird.f32 %v5771
    %vm6173 = vweird.f32 %v6167
    %vm6174 = vmor %vm6172, %vm6173
    %v6175 = vsel %vm6174, %v6167, %v6171
    %v6176 = vand.u32 2147483647, %v5771
    %vm6177 = vcmp.eq.f32.partialorder %v6176, 8.507059e+37
    %v6178 = vand.u32 %v5771, 2147483648
    %v6179 = vor.u32 1.1754944e-38, %v6178
    %v6180 = vsel %vm6177, %v6179, %v6175
    %v6181 = vmul.f32 1.0, %v6180
    %v6182 = vrcp.pop %v5772
    %v6183 = vmul.f32 %v5772, %v6182
    %v6184 = vsub.f32 1.0, %v6183
    %v6185 = vmul.f32 %v6182, %v6184
    %v6186 = vadd.f32 %v6182, %v6185
    %vm6187 = vweird.f32 %v5772
    %vm6188 = vweird.f32 %v6182
    %vm6189 = vmor %vm6187, %vm6188
    %v6190 = vsel %vm6189, %v6182, %v6186
    %v6191 = vand.u32 2147483647, %v5772
    %vm6192 = vcmp.eq.f32.partialorder %v6191, 8.507059e+37
    %v6193 = vand.u32 %v5772, 2147483648
    %v6194 = vor.u32 1.1754944e-38, %v6193
    %v6195 = vsel %vm6192, %v6194, %v6190
    %v6196 = vmul.f32 1.0, %v6195
    %v6197 = vrcp.pop %v5773
    %v6198 = vmul.f32 %v5773, %v6197
    %v6199 = vsub.f32 1.0, %v6198
    %v6200 = vmul.f32 %v6197, %v6199
    %v6201 = vadd.f32 %v6197, %v6200
    %vm6202 = vweird.f32 %v5773
    %vm6203 = vweird.f32 %v6197
    %vm6204 = vmor %vm6202, %vm6203
    %v6205 = vsel %vm6204, %v6197, %v6201
    %v6206 = vand.u32 2147483647, %v5773
    %vm6207 = vcmp.eq.f32.partialorder %v6206, 8.507059e+37
    %v6208 = vand.u32 %v5773, 2147483648
    %v6209 = vor.u32 1.1754944e-38, %v6208
    %v6210 = vsel %vm6207, %v6209, %v6205
    %v6211 = vmul.f32 1.0, %v6210
    %v6212 = vrcp.pop %v5774
    %v6213 = vmul.f32 %v5774, %v6212
    %v6214 = vsub.f32 1.0, %v6213
    %v6215 = vmul.f32 %v6212, %v6214
    %v6216 = vadd.f32 %v6212, %v6215
    %vm6217 = vweird.f32 %v5774
    %vm6218 = vweird.f32 %v6212
    %vm6219 = vmor %vm6217, %vm6218
    %v6220 = vsel %vm6219, %v6212, %v6216
    %v6221 = vand.u32 2147483647, %v5774
    %vm6222 = vcmp.eq.f32.partialorder %v6221, 8.507059e+37
    %v6223 = vand.u32 %v5774, 2147483648
    %v6224 = vor.u32 1.1754944e-38, %v6223
    %v6225 = vsel %vm6222, %v6224, %v6220
    %v6226 = vmul.f32 1.0, %v6225
    %v6227 = vrcp.pop %v5775
    %v6228 = vmul.f32 %v5775, %v6227
    %v6229 = vsub.f32 1.0, %v6228
    %v6230 = vmul.f32 %v6227, %v6229
    %v6231 = vadd.f32 %v6227, %v6230
    %vm6232 = vweird.f32 %v5775
    %vm6233 = vweird.f32 %v6227
    %vm6234 = vmor %vm6232, %vm6233
    %v6235 = vsel %vm6234, %v6227, %v6231
    %v6236 = vand.u32 2147483647, %v5775
    %vm6237 = vcmp.eq.f32.partialorder %v6236, 8.507059e+37
    %v6238 = vand.u32 %v5775, 2147483648
    %v6239 = vor.u32 1.1754944e-38, %v6238
    %v6240 = vsel %vm6237, %v6239, %v6235
    %v6241 = vmul.f32 1.0, %v6240
    %v6242 = vrcp.pop %v5776
    %v6243 = vmul.f32 %v5776, %v6242
    %v6244 = vsub.f32 1.0, %v6243
    %v6245 = vmul.f32 %v6242, %v6244
    %v6246 = vadd.f32 %v6242, %v6245
    %vm6247 = vweird.f32 %v5776
    %vm6248 = vweird.f32 %v6242
    %vm6249 = vmor %vm6247, %vm6248
    %v6250 = vsel %vm6249, %v6242, %v6246
    %v6251 = vand.u32 2147483647, %v5776
    %vm6252 = vcmp.eq.f32.partialorder %v6251, 8.507059e+37
    %v6253 = vand.u32 %v5776, 2147483648
    %v6254 = vor.u32 1.1754944e-38, %v6253
    %v6255 = vsel %vm6252, %v6254, %v6250
    %v6256 = vmul.f32 1.0, %v6255
    %6257 = vst [vmem:[#allocation20] sm:$0xff] %v5791
    %6258 = vst [vmem:[#allocation20 + $0x8] sm:$0xff] %v5806
    %6259 = vst [vmem:[#allocation20 + $0x10] sm:$0xff] %v5821
    %6260 = vst [vmem:[#allocation20 + $0x18] sm:$0xff] %v5836
    %6261 = vst [vmem:[#allocation20 + $0x20] sm:$0xff] %v5851
    %6262 = vst [vmem:[#allocation20 + $0x28] sm:$0xff] %v5866
    %6263 = vst [vmem:[#allocation20 + $0x30] sm:$0xff] %v5881
    %6264 = vst [vmem:[#allocation20 + $0x38] sm:$0xff] %v5896
    %6265 = vst [vmem:[#allocation20 + $0x40] sm:$0xff] %v5911
    %6266 = vst [vmem:[#allocation20 + $0x48] sm:$0xff] %v5926
    %6267 = vst [vmem:[#allocation20 + $0x50] sm:$0xff] %v5941
    %6268 = vst [vmem:[#allocation20 + $0x58] sm:$0xff] %v5956
    %6269 = vst [vmem:[#allocation20 + $0x60] sm:$0xff] %v5971
    %6270 = vst [vmem:[#allocation20 + $0x68] sm:$0xff] %v5986
    %6271 = vst [vmem:[#allocation20 + $0x70] sm:$0xff] %v6001
    %6272 = vst [vmem:[#allocation20 + $0x78] sm:$0xff] %v6016
    %6273 = vst [vmem:[#allocation20 + $0x80] sm:$0xff] %v6031
    %6274 = vst [vmem:[#allocation20 + $0x88] sm:$0xff] %v6046
    %6275 = vst [vmem:[#allocation20 + $0x90] sm:$0xff] %v6061
    %6276 = vst [vmem:[#allocation20 + $0x98] sm:$0xff] %v6076
    %6277 = vst [vmem:[#allocation20 + $0xa0] sm:$0xff] %v6091
    %6278 = vst [vmem:[#allocation20 + $0xa8] sm:$0xff] %v6106
    %6279 = vst [vmem:[#allocation20 + $0xb0] sm:$0xff] %v6121
    %6280 = vst [vmem:[#allocation20 + $0xb8] sm:$0xff] %v6136
    %6281 = vst [vmem:[#allocation20 + $0xc0] sm:$0xff] %v6151
    %6282 = vst [vmem:[#allocation20 + $0xc8] sm:$0xff] %v6166
    %6283 = vst [vmem:[#allocation20 + $0xd0] sm:$0xff] %v6181
    %6284 = vst [vmem:[#allocation20 + $0xd8] sm:$0xff] %v6196
    %6285 = vst [vmem:[#allocation20 + $0xe0] sm:$0xff] %v6211
    %6286 = vst [vmem:[#allocation20 + $0xe8] sm:$0xff] %v6226
    %6287 = vst [vmem:[#allocation20 + $0xf0] sm:$0xff] %v6241
    %6288 = vst [vmem:[#allocation20 + $0xf8] sm:$0xff] %v6256
    // Predicated region
    $region118: #{tpu_custom_call.1} parent=1 // pred_check
      _
    $region119: #{tpu_custom_call.1} parent=1 // pred_check_branch
      %6290 = sbr.rel (0) target = $region121
    $region120: #{tpu_custom_call.1} parent=1 // pred_region
      %6292 = vsyncadd [#allocation4], 0
      %s6293 = sshll.u32 [#allocation20], 4
      %s6294 = int_to_ptr.vmem [resolvable:$true] %s6293
      %s6295 = sshll.u32 %s18, 4
      %s6296 = int_to_ptr.hbm [resolvable:$true] %s6295
      %6301 = dma.vmem_to_hbm [thread:$0]  %s6294, 4096, %s6296, [#allocation4], 128, 128, 8
    $region121: #{tpu_custom_call.1} parent=1 // pred_fallthru
      _
    // Predicated region
    $region122: #{tpu_custom_call.1} parent=1 // pred_check
      _
    $region123: #{tpu_custom_call.1} parent=1 // pred_check_branch
      %6303 = sbr.rel (0) target = $region125
    $region124: #{tpu_custom_call.1} parent=1 // pred_region
      %6305 = vsyncadd [#allocation22], 0
      %s6306 = sshll.u32 [#allocation21], 4
      %s6307 = int_to_ptr.vmem [resolvable:$true] %s6306
      %s6308 = sshll.u32 %s19, 4
      %s6309 = int_to_ptr.hbm [resolvable:$true] %s6308
      %6314 = dma.vmem_to_hbm [thread:$0]  %s6307, 4096, %s6309, [#allocation22], 128, 128, 8
    $region125: #{tpu_custom_call.1} parent=1 // pred_fallthru
      _
    // Predicated region
    $region126: #{tpu_custom_call.1} parent=1 // pred_check
      _
    $region127: #{tpu_custom_call.1} parent=1 // pred_check_branch
      %6316 = sbr.rel (0) target = $region129
    $region128: #{tpu_custom_call.1} parent=1 // pred_region
      %6318 = dma.done [#allocation4], 4096
    $region129: #{tpu_custom_call.1} parent=1 // pred_fallthru
      _
    // Predicated region
    $region130: #{tpu_custom_call.1} parent=1 // pred_check
      _
    $region131: #{tpu_custom_call.1} parent=1 // pred_check_branch
      %6320 = sbr.rel (0) target = $region133
    $region132: #{tpu_custom_call.1} parent=1 // pred_region
      %6322 = dma.done [#allocation22], 4096
    $region133: #{tpu_custom_call.1} parent=1 // pred_fallthru
      _
    %6323 = vsyncpa [#allocation3], 1
    %6324 = vsyncpa [#allocation6], 1
    %6325 = vsyncpa [#allocation9], 1
    %6326 = vsyncpa [#allocation12], 1
    %6327 = vsyncpa [#allocation15], 1
    %6328 = vsyncpa [#allocation18], 1
    %6329 = vsyncpa [#allocation4], 1
    %6330 = vsyncpa [#allocation22], 1

</llo_original>
